<compile_context>
chip_gen: v5e
topology: v5e:2x2
jax: 0.10.0
libtpu: 0.0.40
codegen_flags: <defaults>
</compile_context>

<pallas_src>
import functools

import jax
import jax.numpy as jnp
from jax.experimental import pallas as pl
from jax.experimental.pallas import tpu as pltpu

FILTERS = 600          # Conv1d out_channels
KSIZE = 5              # Conv1d kernel size
CONV_PAD = 2           # Conv1d padding
LANE = 128
F_PAD = 640            # FILTERS rounded up to a lane multiple (5 * 128)
K_PAD = 8              # conv taps padded to 8 (taps >= KSIZE have zero weight)
MAX_BATCH_TILE = 128   # batch rows (lanes) per grid step at large batch
POS_GROUP = 8          # conv output positions folded per tree-max group


def _round_up(n, m):
    return (n + m - 1) // m * m


def _pick_batch_tile(batch):
    b8 = _round_up(max(batch, 1), 8)
    if b8 >= 2 * MAX_BATCH_TILE:
        return MAX_BATCH_TILE      # >=2 parallel grid steps (v7x: both cores)
    return b8                      # single tile; lane dim == full array dim


def _only_product_kernel(embT_ref, wconvT_ref, bconv_ref, wlT_ref, bl_ref,
                         out_ref, *, n_pos):
    """Fused conv + global max-pool + bias/ReLU + linear for one batch tile.

    embT_ref  : (E_IN, Bt)   bf16, transposed zero-padded embeddings
                              (row r holds emb[:, r - CONV_PAD])
    wconvT_ref: (F_PAD, K_PAD) f32 conv weight (cols >= KSIZE and rows >=
                              FILTERS are zero)
    bconv_ref : (F_PAD, 1)    f32 conv bias column
    wlT_ref   : (U_PAD, F_PAD) f32 linear weight (padded rows/cols zero)
    bl_ref    : (U_PAD, 1)    f32 linear bias column
    out_ref   : (U_PAD, Bt)   f32 transposed logits
    """
    # bf16 over HBM, f32 in VMEM: one widening pass, then all window slices
    # operate on a plain f32 value.
    x = embT_ref[...].astype(jnp.float32)                    # (E_IN, Bt)
    wT = wconvT_ref[...]                                     # (F_PAD, K_PAD)

    pooled = None
    for g0 in range(0, n_pos, POS_GROUP):
        cnt = min(POS_GROUP, n_pos - g0)
        # One small MXU matmul per output position: the 8-row window includes
        # 3 extra rows that hit zero weight columns (exact).
        vals = [
            jnp.dot(wT, x[g0 + i:g0 + i + K_PAD, :],
                    preferred_element_type=jnp.float32)      # (F_PAD, Bt)
            for i in range(cnt)
        ]
        # Pairwise (tree) max inside the group, then a single fold into the
        # running max -> log-depth chains and ~8x less read-modify-write on
        # the running accumulator.
        while len(vals) > 1:
            nxt = [jnp.maximum(vals[j], vals[j + 1])
                   for j in range(0, len(vals) - 1, 2)]
            if len(vals) % 2:
                nxt.append(vals[-1])
            vals = nxt
        pooled = vals[0] if pooled is None else jnp.maximum(pooled, vals[0])

    # Conv bias + ReLU after the pool (exact: ReLU monotone, bias
    # position-invariant).  bconv is a column -> lane broadcast.
    pooled = jnp.maximum(pooled + bconv_ref[...], 0.0)        # (F_PAD, Bt)

    # Linear: 640-deep contraction on the MXU, lane-dense (U_PAD, Bt) output.
    out = jnp.dot(wlT_ref[...], pooled,
                  preferred_element_type=jnp.float32) + bl_ref[...]
    out_ref[...] = out.astype(out_ref.dtype)


def only_product_forward(product, params):
    """product: (B,) int32 product ids -> (B, user_num) float32 logits."""
    # Thin JAX glue: embedding gather (data-dependent) + transpose + pad.
    emb = params["embed"][product]                            # (B, E) f32
    B, E = emb.shape
    user_num = params["user_num"]
    u_pad = params["wlT"].shape[0]

    bt = _pick_batch_tile(B)
    b_pad = _round_up(B, bt)
    n_tiles = b_pad // bt
    e_in = _round_up(E + K_PAD, 8)        # conv-pad + right slack, 8-aligned

    # Transposed, zero-padded embeddings: positions on sublanes, batch on
    # lanes (lane-dense DMA); cast to bf16 to halve streamed input traffic.
    embT = jnp.pad(emb.T.astype(jnp.bfloat16),
                   ((CONV_PAD, e_in - E - CONV_PAD), (0, b_pad - B)))

    kernel = functools.partial(_only_product_kernel, n_pos=E)

    out_t = pl.pallas_call(
        kernel,
        out_shape=jax.ShapeDtypeStruct((u_pad, b_pad), jnp.float32),
        grid_spec=pltpu.PrefetchScalarGridSpec(
            num_scalar_prefetch=0,
            grid=(n_tiles,),
            in_specs=[
                pl.BlockSpec((e_in, bt), lambda i: (0, i)),
                pl.BlockSpec((F_PAD, K_PAD), lambda i: (0, 0)),
                pl.BlockSpec((F_PAD, 1), lambda i: (0, 0)),
                pl.BlockSpec((u_pad, F_PAD), lambda i: (0, 0)),
                pl.BlockSpec((u_pad, 1), lambda i: (0, 0)),
            ],
            out_specs=pl.BlockSpec((u_pad, bt), lambda i: (0, i)),
        ),
        compiler_params=pltpu.CompilerParams(
            dimension_semantics=("parallel",),
            vmem_limit_bytes=48 * 1024 * 1024),
    )(embT, params["wconvT"], params["bconv"], params["wlT"], params["bl"])

    # Padded user rows / padded batch columns are inert garbage; slice off.
    return out_t[:user_num, :B].T


def init_params(key, embedding_dim, user_num, product_num):
    ks = jax.random.split(key, 5)

    def nrm(k, shape, scale):
        return (scale * jax.random.normal(k, shape)).astype(jnp.float32)

    u_pad = _round_up(user_num, LANE)

    # Conv weight stored as (F_PAD, K_PAD) == torch conv.weight[:, 0, :],
    # zero padded; padded rows/cols stay inert through ReLU/max/linear.
    wconvT = jnp.zeros((F_PAD, K_PAD), jnp.float32)
    wconvT = wconvT.at[:FILTERS, :KSIZE].set(nrm(ks[1], (FILTERS, KSIZE), 0.2))
    bconv = jnp.zeros((F_PAD, 1), jnp.float32)
    bconv = bconv.at[:FILTERS, 0].set(nrm(ks[2], (FILTERS,), 0.2))
    # Linear weight stored as torch linear.weight (user_num, 600), zero padded.
    wlT = jnp.zeros((u_pad, F_PAD), jnp.float32)
    wlT = wlT.at[:user_num, :FILTERS].set(nrm(ks[3], (user_num, FILTERS), 0.1))
    bl = jnp.zeros((u_pad, 1), jnp.float32)
    bl = bl.at[:user_num, 0].set(nrm(ks[4], (user_num,), 0.1))

    return dict(
        embed=nrm(ks[0], (product_num, embedding_dim), 1.0),
        wconvT=wconvT, bconv=bconv, wlT=wlT, bl=bl,
        user_num=user_num,
    )


def reference_forward(product, params):
    """Pure-JAX f32 reference with the original PyTorch module's semantics."""
    emb = params["embed"][product]                            # (B, E)
    B, E = emb.shape
    user_num = params["user_num"]
    wconv = params["wconvT"][:FILTERS, :KSIZE]                # (600, 5)
    bconv = params["bconv"][:FILTERS, 0]
    wl = params["wlT"][:user_num, :FILTERS]                   # (user_num, 600)
    bl = params["bl"][:user_num, 0]

    emb_padded = jnp.pad(emb, ((0, 0), (CONV_PAD, CONV_PAD)))
    win = jnp.stack([emb_padded[:, i:i + E] for i in range(KSIZE)], -1)  # (B,E,5)
    conv = jnp.einsum("bek,fk->bef", win, wconv) + bconv                 # (B,E,600)
    conv = jnp.maximum(conv, 0.0)
    pooled = jnp.max(conv, axis=1)                                       # (B,600)
    return pooled @ wl.T + bl


if __name__ == "__main__":
    key = jax.random.PRNGKey(0)
    B, embedding_dim = 2, 32
    product_num, user_num = 10, 16

    k_prod, k_params = jax.random.split(key, 2)
    product = jax.random.randint(k_prod, (B,), 0, product_num, dtype=jnp.int32)
    params = init_params(k_params, embedding_dim, user_num, product_num)

    out = only_product_forward(product, params)
    jax.block_until_ready(out)
    assert out.shape == (B, user_num), out.shape

    ref = reference_forward(product, params)
    assert jnp.allclose(out, ref, rtol=2e-2, atol=2e-2), (
        float(jnp.max(jnp.abs(out - ref))))
    print("KERNEL_OK")
</pallas_src>

<mosaic_0001>
module attributes {stable_mosaic.version = 11 : i64} {
  func.func @_only_product_kernel(%arg0: i32, %arg1: memref<40x8xbf16, #tpu.memory_space<vmem>>, %arg2: memref<640x8xf32, #tpu.memory_space<vmem>>, %arg3: memref<640x1xf32, #tpu.memory_space<vmem>>, %arg4: memref<128x640xf32, #tpu.memory_space<vmem>>, %arg5: memref<128x1xf32, #tpu.memory_space<vmem>>, %arg6: memref<128x8xf32, #tpu.memory_space<vmem>>) attributes {dimension_semantics = [#tpu.dimension_semantics<parallel>], iteration_bounds = array<i64: 1>, scalar_prefetch = 0 : i64, scratch_operands = 0 : i64, tpu.core_type = #tpu.core_type<tc>, window_params = [{transform_indices = @transform_0, window_bounds = array<i64: 40, 8>}, {pipeline_mode = #tpu.pipeline_mode<synchronous>, transform_indices = @transform_1, window_bounds = array<i64: 640, 8>}, {pipeline_mode = #tpu.pipeline_mode<synchronous>, transform_indices = @transform_2, window_bounds = array<i64: 640, 1>}, {pipeline_mode = #tpu.pipeline_mode<synchronous>, transform_indices = @transform_3, window_bounds = array<i64: 128, 640>}, {pipeline_mode = #tpu.pipeline_mode<synchronous>, transform_indices = @transform_4, window_bounds = array<i64: 128, 1>}, {transform_indices = @transform_5, window_bounds = array<i64: 128, 8>}]} {
    %c0 = arith.constant 0 : index
    %c0_0 = arith.constant 0 : index
    %0 = vector.load %arg1[%c0, %c0_0] : memref<40x8xbf16, #tpu.memory_space<vmem>>, vector<40x8xbf16>
    %1 = arith.extf %0 : vector<40x8xbf16> to vector<40x8xf32>
    %c0_1 = arith.constant 0 : index
    %c0_2 = arith.constant 0 : index
    %2 = vector.load %arg2[%c0_1, %c0_2] : memref<640x8xf32, #tpu.memory_space<vmem>>, vector<640x8xf32>
    %3 = vector.extract_strided_slice %1 {offsets = [0, 0], sizes = [8, 8], strides = [1, 1]} : vector<40x8xf32> to vector<8x8xf32>
    %cst = arith.constant dense<0.000000e+00> : vector<640x8xf32>
    %4 = tpu.matmul %2, %3, %cst {dimension_numbers = #tpu.dot_dimension_numbers<[1], [0], [0], [1], [0, 0, 1, 1], [], []>} : vector<640x8xf32>, vector<8x8xf32>, vector<640x8xf32> -> vector<640x8xf32>
    %5 = vector.extract_strided_slice %1 {offsets = [1, 0], sizes = [8, 8], strides = [1, 1]} : vector<40x8xf32> to vector<8x8xf32>
    %cst_3 = arith.constant dense<0.000000e+00> : vector<640x8xf32>
    %6 = tpu.matmul %2, %5, %cst_3 {dimension_numbers = #tpu.dot_dimension_numbers<[1], [0], [0], [1], [0, 0, 1, 1], [], []>} : vector<640x8xf32>, vector<8x8xf32>, vector<640x8xf32> -> vector<640x8xf32>
    %7 = vector.extract_strided_slice %1 {offsets = [2, 0], sizes = [8, 8], strides = [1, 1]} : vector<40x8xf32> to vector<8x8xf32>
    %cst_4 = arith.constant dense<0.000000e+00> : vector<640x8xf32>
    %8 = tpu.matmul %2, %7, %cst_4 {dimension_numbers = #tpu.dot_dimension_numbers<[1], [0], [0], [1], [0, 0, 1, 1], [], []>} : vector<640x8xf32>, vector<8x8xf32>, vector<640x8xf32> -> vector<640x8xf32>
    %9 = vector.extract_strided_slice %1 {offsets = [3, 0], sizes = [8, 8], strides = [1, 1]} : vector<40x8xf32> to vector<8x8xf32>
    %cst_5 = arith.constant dense<0.000000e+00> : vector<640x8xf32>
    %10 = tpu.matmul %2, %9, %cst_5 {dimension_numbers = #tpu.dot_dimension_numbers<[1], [0], [0], [1], [0, 0, 1, 1], [], []>} : vector<640x8xf32>, vector<8x8xf32>, vector<640x8xf32> -> vector<640x8xf32>
    %11 = vector.extract_strided_slice %1 {offsets = [4, 0], sizes = [8, 8], strides = [1, 1]} : vector<40x8xf32> to vector<8x8xf32>
    %cst_6 = arith.constant dense<0.000000e+00> : vector<640x8xf32>
    %12 = tpu.matmul %2, %11, %cst_6 {dimension_numbers = #tpu.dot_dimension_numbers<[1], [0], [0], [1], [0, 0, 1, 1], [], []>} : vector<640x8xf32>, vector<8x8xf32>, vector<640x8xf32> -> vector<640x8xf32>
    %13 = vector.extract_strided_slice %1 {offsets = [5, 0], sizes = [8, 8], strides = [1, 1]} : vector<40x8xf32> to vector<8x8xf32>
    %cst_7 = arith.constant dense<0.000000e+00> : vector<640x8xf32>
    %14 = tpu.matmul %2, %13, %cst_7 {dimension_numbers = #tpu.dot_dimension_numbers<[1], [0], [0], [1], [0, 0, 1, 1], [], []>} : vector<640x8xf32>, vector<8x8xf32>, vector<640x8xf32> -> vector<640x8xf32>
    %15 = vector.extract_strided_slice %1 {offsets = [6, 0], sizes = [8, 8], strides = [1, 1]} : vector<40x8xf32> to vector<8x8xf32>
    %cst_8 = arith.constant dense<0.000000e+00> : vector<640x8xf32>
    %16 = tpu.matmul %2, %15, %cst_8 {dimension_numbers = #tpu.dot_dimension_numbers<[1], [0], [0], [1], [0, 0, 1, 1], [], []>} : vector<640x8xf32>, vector<8x8xf32>, vector<640x8xf32> -> vector<640x8xf32>
    %17 = vector.extract_strided_slice %1 {offsets = [7, 0], sizes = [8, 8], strides = [1, 1]} : vector<40x8xf32> to vector<8x8xf32>
    %cst_9 = arith.constant dense<0.000000e+00> : vector<640x8xf32>
    %18 = tpu.matmul %2, %17, %cst_9 {dimension_numbers = #tpu.dot_dimension_numbers<[1], [0], [0], [1], [0, 0, 1, 1], [], []>} : vector<640x8xf32>, vector<8x8xf32>, vector<640x8xf32> -> vector<640x8xf32>
    %19 = arith.maximumf %4, %6 : vector<640x8xf32>
    %20 = arith.maximumf %8, %10 : vector<640x8xf32>
    %21 = arith.maximumf %12, %14 : vector<640x8xf32>
    %22 = arith.maximumf %16, %18 : vector<640x8xf32>
    %23 = arith.maximumf %19, %20 : vector<640x8xf32>
    %24 = arith.maximumf %21, %22 : vector<640x8xf32>
    %25 = arith.maximumf %23, %24 : vector<640x8xf32>
    %26 = vector.extract_strided_slice %1 {offsets = [8, 0], sizes = [8, 8], strides = [1, 1]} : vector<40x8xf32> to vector<8x8xf32>
    %cst_10 = arith.constant dense<0.000000e+00> : vector<640x8xf32>
    %27 = tpu.matmul %2, %26, %cst_10 {dimension_numbers = #tpu.dot_dimension_numbers<[1], [0], [0], [1], [0, 0, 1, 1], [], []>} : vector<640x8xf32>, vector<8x8xf32>, vector<640x8xf32> -> vector<640x8xf32>
    %28 = vector.extract_strided_slice %1 {offsets = [9, 0], sizes = [8, 8], strides = [1, 1]} : vector<40x8xf32> to vector<8x8xf32>
    %cst_11 = arith.constant dense<0.000000e+00> : vector<640x8xf32>
    %29 = tpu.matmul %2, %28, %cst_11 {dimension_numbers = #tpu.dot_dimension_numbers<[1], [0], [0], [1], [0, 0, 1, 1], [], []>} : vector<640x8xf32>, vector<8x8xf32>, vector<640x8xf32> -> vector<640x8xf32>
    %30 = vector.extract_strided_slice %1 {offsets = [10, 0], sizes = [8, 8], strides = [1, 1]} : vector<40x8xf32> to vector<8x8xf32>
    %cst_12 = arith.constant dense<0.000000e+00> : vector<640x8xf32>
    %31 = tpu.matmul %2, %30, %cst_12 {dimension_numbers = #tpu.dot_dimension_numbers<[1], [0], [0], [1], [0, 0, 1, 1], [], []>} : vector<640x8xf32>, vector<8x8xf32>, vector<640x8xf32> -> vector<640x8xf32>
    %32 = vector.extract_strided_slice %1 {offsets = [11, 0], sizes = [8, 8], strides = [1, 1]} : vector<40x8xf32> to vector<8x8xf32>
    %cst_13 = arith.constant dense<0.000000e+00> : vector<640x8xf32>
    %33 = tpu.matmul %2, %32, %cst_13 {dimension_numbers = #tpu.dot_dimension_numbers<[1], [0], [0], [1], [0, 0, 1, 1], [], []>} : vector<640x8xf32>, vector<8x8xf32>, vector<640x8xf32> -> vector<640x8xf32>
    %34 = vector.extract_strided_slice %1 {offsets = [12, 0], sizes = [8, 8], strides = [1, 1]} : vector<40x8xf32> to vector<8x8xf32>
    %cst_14 = arith.constant dense<0.000000e+00> : vector<640x8xf32>
    %35 = tpu.matmul %2, %34, %cst_14 {dimension_numbers = #tpu.dot_dimension_numbers<[1], [0], [0], [1], [0, 0, 1, 1], [], []>} : vector<640x8xf32>, vector<8x8xf32>, vector<640x8xf32> -> vector<640x8xf32>
    %36 = vector.extract_strided_slice %1 {offsets = [13, 0], sizes = [8, 8], strides = [1, 1]} : vector<40x8xf32> to vector<8x8xf32>
    %cst_15 = arith.constant dense<0.000000e+00> : vector<640x8xf32>
    %37 = tpu.matmul %2, %36, %cst_15 {dimension_numbers = #tpu.dot_dimension_numbers<[1], [0], [0], [1], [0, 0, 1, 1], [], []>} : vector<640x8xf32>, vector<8x8xf32>, vector<640x8xf32> -> vector<640x8xf32>
    %38 = vector.extract_strided_slice %1 {offsets = [14, 0], sizes = [8, 8], strides = [1, 1]} : vector<40x8xf32> to vector<8x8xf32>
    %cst_16 = arith.constant dense<0.000000e+00> : vector<640x8xf32>
    %39 = tpu.matmul %2, %38, %cst_16 {dimension_numbers = #tpu.dot_dimension_numbers<[1], [0], [0], [1], [0, 0, 1, 1], [], []>} : vector<640x8xf32>, vector<8x8xf32>, vector<640x8xf32> -> vector<640x8xf32>
    %40 = vector.extract_strided_slice %1 {offsets = [15, 0], sizes = [8, 8], strides = [1, 1]} : vector<40x8xf32> to vector<8x8xf32>
    %cst_17 = arith.constant dense<0.000000e+00> : vector<640x8xf32>
    %41 = tpu.matmul %2, %40, %cst_17 {dimension_numbers = #tpu.dot_dimension_numbers<[1], [0], [0], [1], [0, 0, 1, 1], [], []>} : vector<640x8xf32>, vector<8x8xf32>, vector<640x8xf32> -> vector<640x8xf32>
    %42 = arith.maximumf %27, %29 : vector<640x8xf32>
    %43 = arith.maximumf %31, %33 : vector<640x8xf32>
    %44 = arith.maximumf %35, %37 : vector<640x8xf32>
    %45 = arith.maximumf %39, %41 : vector<640x8xf32>
    %46 = arith.maximumf %42, %43 : vector<640x8xf32>
    %47 = arith.maximumf %44, %45 : vector<640x8xf32>
    %48 = arith.maximumf %46, %47 : vector<640x8xf32>
    %49 = arith.maximumf %25, %48 : vector<640x8xf32>
    %50 = vector.extract_strided_slice %1 {offsets = [16, 0], sizes = [8, 8], strides = [1, 1]} : vector<40x8xf32> to vector<8x8xf32>
    %cst_18 = arith.constant dense<0.000000e+00> : vector<640x8xf32>
    %51 = tpu.matmul %2, %50, %cst_18 {dimension_numbers = #tpu.dot_dimension_numbers<[1], [0], [0], [1], [0, 0, 1, 1], [], []>} : vector<640x8xf32>, vector<8x8xf32>, vector<640x8xf32> -> vector<640x8xf32>
    %52 = vector.extract_strided_slice %1 {offsets = [17, 0], sizes = [8, 8], strides = [1, 1]} : vector<40x8xf32> to vector<8x8xf32>
    %cst_19 = arith.constant dense<0.000000e+00> : vector<640x8xf32>
    %53 = tpu.matmul %2, %52, %cst_19 {dimension_numbers = #tpu.dot_dimension_numbers<[1], [0], [0], [1], [0, 0, 1, 1], [], []>} : vector<640x8xf32>, vector<8x8xf32>, vector<640x8xf32> -> vector<640x8xf32>
    %54 = vector.extract_strided_slice %1 {offsets = [18, 0], sizes = [8, 8], strides = [1, 1]} : vector<40x8xf32> to vector<8x8xf32>
    %cst_20 = arith.constant dense<0.000000e+00> : vector<640x8xf32>
    %55 = tpu.matmul %2, %54, %cst_20 {dimension_numbers = #tpu.dot_dimension_numbers<[1], [0], [0], [1], [0, 0, 1, 1], [], []>} : vector<640x8xf32>, vector<8x8xf32>, vector<640x8xf32> -> vector<640x8xf32>
    %56 = vector.extract_strided_slice %1 {offsets = [19, 0], sizes = [8, 8], strides = [1, 1]} : vector<40x8xf32> to vector<8x8xf32>
    %cst_21 = arith.constant dense<0.000000e+00> : vector<640x8xf32>
    %57 = tpu.matmul %2, %56, %cst_21 {dimension_numbers = #tpu.dot_dimension_numbers<[1], [0], [0], [1], [0, 0, 1, 1], [], []>} : vector<640x8xf32>, vector<8x8xf32>, vector<640x8xf32> -> vector<640x8xf32>
    %58 = vector.extract_strided_slice %1 {offsets = [20, 0], sizes = [8, 8], strides = [1, 1]} : vector<40x8xf32> to vector<8x8xf32>
    %cst_22 = arith.constant dense<0.000000e+00> : vector<640x8xf32>
    %59 = tpu.matmul %2, %58, %cst_22 {dimension_numbers = #tpu.dot_dimension_numbers<[1], [0], [0], [1], [0, 0, 1, 1], [], []>} : vector<640x8xf32>, vector<8x8xf32>, vector<640x8xf32> -> vector<640x8xf32>
    %60 = vector.extract_strided_slice %1 {offsets = [21, 0], sizes = [8, 8], strides = [1, 1]} : vector<40x8xf32> to vector<8x8xf32>
    %cst_23 = arith.constant dense<0.000000e+00> : vector<640x8xf32>
    %61 = tpu.matmul %2, %60, %cst_23 {dimension_numbers = #tpu.dot_dimension_numbers<[1], [0], [0], [1], [0, 0, 1, 1], [], []>} : vector<640x8xf32>, vector<8x8xf32>, vector<640x8xf32> -> vector<640x8xf32>
    %62 = vector.extract_strided_slice %1 {offsets = [22, 0], sizes = [8, 8], strides = [1, 1]} : vector<40x8xf32> to vector<8x8xf32>
    %cst_24 = arith.constant dense<0.000000e+00> : vector<640x8xf32>
    %63 = tpu.matmul %2, %62, %cst_24 {dimension_numbers = #tpu.dot_dimension_numbers<[1], [0], [0], [1], [0, 0, 1, 1], [], []>} : vector<640x8xf32>, vector<8x8xf32>, vector<640x8xf32> -> vector<640x8xf32>
    %64 = vector.extract_strided_slice %1 {offsets = [23, 0], sizes = [8, 8], strides = [1, 1]} : vector<40x8xf32> to vector<8x8xf32>
    %cst_25 = arith.constant dense<0.000000e+00> : vector<640x8xf32>
    %65 = tpu.matmul %2, %64, %cst_25 {dimension_numbers = #tpu.dot_dimension_numbers<[1], [0], [0], [1], [0, 0, 1, 1], [], []>} : vector<640x8xf32>, vector<8x8xf32>, vector<640x8xf32> -> vector<640x8xf32>
    %66 = arith.maximumf %51, %53 : vector<640x8xf32>
    %67 = arith.maximumf %55, %57 : vector<640x8xf32>
    %68 = arith.maximumf %59, %61 : vector<640x8xf32>
    %69 = arith.maximumf %63, %65 : vector<640x8xf32>
    %70 = arith.maximumf %66, %67 : vector<640x8xf32>
    %71 = arith.maximumf %68, %69 : vector<640x8xf32>
    %72 = arith.maximumf %70, %71 : vector<640x8xf32>
    %73 = arith.maximumf %49, %72 : vector<640x8xf32>
    %74 = vector.extract_strided_slice %1 {offsets = [24, 0], sizes = [8, 8], strides = [1, 1]} : vector<40x8xf32> to vector<8x8xf32>
    %cst_26 = arith.constant dense<0.000000e+00> : vector<640x8xf32>
    %75 = tpu.matmul %2, %74, %cst_26 {dimension_numbers = #tpu.dot_dimension_numbers<[1], [0], [0], [1], [0, 0, 1, 1], [], []>} : vector<640x8xf32>, vector<8x8xf32>, vector<640x8xf32> -> vector<640x8xf32>
    %76 = vector.extract_strided_slice %1 {offsets = [25, 0], sizes = [8, 8], strides = [1, 1]} : vector<40x8xf32> to vector<8x8xf32>
    %cst_27 = arith.constant dense<0.000000e+00> : vector<640x8xf32>
    %77 = tpu.matmul %2, %76, %cst_27 {dimension_numbers = #tpu.dot_dimension_numbers<[1], [0], [0], [1], [0, 0, 1, 1], [], []>} : vector<640x8xf32>, vector<8x8xf32>, vector<640x8xf32> -> vector<640x8xf32>
    %78 = vector.extract_strided_slice %1 {offsets = [26, 0], sizes = [8, 8], strides = [1, 1]} : vector<40x8xf32> to vector<8x8xf32>
    %cst_28 = arith.constant dense<0.000000e+00> : vector<640x8xf32>
    %79 = tpu.matmul %2, %78, %cst_28 {dimension_numbers = #tpu.dot_dimension_numbers<[1], [0], [0], [1], [0, 0, 1, 1], [], []>} : vector<640x8xf32>, vector<8x8xf32>, vector<640x8xf32> -> vector<640x8xf32>
    %80 = vector.extract_strided_slice %1 {offsets = [27, 0], sizes = [8, 8], strides = [1, 1]} : vector<40x8xf32> to vector<8x8xf32>
    %cst_29 = arith.constant dense<0.000000e+00> : vector<640x8xf32>
    %81 = tpu.matmul %2, %80, %cst_29 {dimension_numbers = #tpu.dot_dimension_numbers<[1], [0], [0], [1], [0, 0, 1, 1], [], []>} : vector<640x8xf32>, vector<8x8xf32>, vector<640x8xf32> -> vector<640x8xf32>
    %82 = vector.extract_strided_slice %1 {offsets = [28, 0], sizes = [8, 8], strides = [1, 1]} : vector<40x8xf32> to vector<8x8xf32>
    %cst_30 = arith.constant dense<0.000000e+00> : vector<640x8xf32>
    %83 = tpu.matmul %2, %82, %cst_30 {dimension_numbers = #tpu.dot_dimension_numbers<[1], [0], [0], [1], [0, 0, 1, 1], [], []>} : vector<640x8xf32>, vector<8x8xf32>, vector<640x8xf32> -> vector<640x8xf32>
    %84 = vector.extract_strided_slice %1 {offsets = [29, 0], sizes = [8, 8], strides = [1, 1]} : vector<40x8xf32> to vector<8x8xf32>
    %cst_31 = arith.constant dense<0.000000e+00> : vector<640x8xf32>
    %85 = tpu.matmul %2, %84, %cst_31 {dimension_numbers = #tpu.dot_dimension_numbers<[1], [0], [0], [1], [0, 0, 1, 1], [], []>} : vector<640x8xf32>, vector<8x8xf32>, vector<640x8xf32> -> vector<640x8xf32>
    %86 = vector.extract_strided_slice %1 {offsets = [30, 0], sizes = [8, 8], strides = [1, 1]} : vector<40x8xf32> to vector<8x8xf32>
    %cst_32 = arith.constant dense<0.000000e+00> : vector<640x8xf32>
    %87 = tpu.matmul %2, %86, %cst_32 {dimension_numbers = #tpu.dot_dimension_numbers<[1], [0], [0], [1], [0, 0, 1, 1], [], []>} : vector<640x8xf32>, vector<8x8xf32>, vector<640x8xf32> -> vector<640x8xf32>
    %88 = vector.extract_strided_slice %1 {offsets = [31, 0], sizes = [8, 8], strides = [1, 1]} : vector<40x8xf32> to vector<8x8xf32>
    %cst_33 = arith.constant dense<0.000000e+00> : vector<640x8xf32>
    %89 = tpu.matmul %2, %88, %cst_33 {dimension_numbers = #tpu.dot_dimension_numbers<[1], [0], [0], [1], [0, 0, 1, 1], [], []>} : vector<640x8xf32>, vector<8x8xf32>, vector<640x8xf32> -> vector<640x8xf32>
    %90 = arith.maximumf %75, %77 : vector<640x8xf32>
    %91 = arith.maximumf %79, %81 : vector<640x8xf32>
    %92 = arith.maximumf %83, %85 : vector<640x8xf32>
    %93 = arith.maximumf %87, %89 : vector<640x8xf32>
    %94 = arith.maximumf %90, %91 : vector<640x8xf32>
    %95 = arith.maximumf %92, %93 : vector<640x8xf32>
    %96 = arith.maximumf %94, %95 : vector<640x8xf32>
    %97 = arith.maximumf %73, %96 : vector<640x8xf32>
    %c0_34 = arith.constant 0 : index
    %c0_35 = arith.constant 0 : index
    %98 = vector.load %arg3[%c0_34, %c0_35] : memref<640x1xf32, #tpu.memory_space<vmem>>, vector<640x1xf32>
    %99 = vector.broadcast %98 : vector<640x1xf32> to vector<640x8xf32>
    %100 = arith.addf %97, %99 : vector<640x8xf32>
    %cst_36 = arith.constant 0.000000e+00 : f32
    %101 = vector.broadcast %cst_36 : f32 to vector<640x8xf32>
    %102 = arith.maximumf %100, %101 : vector<640x8xf32>
    %c0_37 = arith.constant 0 : index
    %c0_38 = arith.constant 0 : index
    %103 = vector.load %arg4[%c0_37, %c0_38] : memref<128x640xf32, #tpu.memory_space<vmem>>, vector<128x640xf32>
    %cst_39 = arith.constant dense<0.000000e+00> : vector<128x8xf32>
    %104 = tpu.matmul %103, %102, %cst_39 {dimension_numbers = #tpu.dot_dimension_numbers<[1], [0], [0], [1], [0, 0, 1, 1], [], []>} : vector<128x640xf32>, vector<640x8xf32>, vector<128x8xf32> -> vector<128x8xf32>
    %c0_40 = arith.constant 0 : index
    %c0_41 = arith.constant 0 : index
    %105 = vector.load %arg5[%c0_40, %c0_41] : memref<128x1xf32, #tpu.memory_space<vmem>>, vector<128x1xf32>
    %106 = vector.broadcast %105 : vector<128x1xf32> to vector<128x8xf32>
    %107 = arith.addf %104, %106 : vector<128x8xf32>
    %c0_42 = arith.constant 0 : index
    %c0_43 = arith.constant 0 : index
    %108 = vector.load %arg6[%c0_42, %c0_43] : memref<128x8xf32, #tpu.memory_space<vmem>>, vector<128x8xf32>
    tpu.vector_store %arg6[%c0_42, %c0_43], %107 {strides = array<i32>} : memref<128x8xf32, #tpu.memory_space<vmem>>, vector<128x8xf32>,
    return
  }
  func.func @transform_0(%arg0: i32) -> (i32, i32) {
    %c0_i32 = arith.constant 0 : i32
    %c0_i32_0 = arith.constant 0 : i32
    return %c0_i32, %arg0 : i32, i32
  }
  func.func @transform_1(%arg0: i32) -> (i32, i32) {
    %c0_i32 = arith.constant 0 : i32
    %c0_i32_0 = arith.constant 0 : i32
    %c0_i32_1 = arith.constant 0 : i32
    return %c0_i32, %c0_i32_0 : i32, i32
  }
  func.func @transform_2(%arg0: i32) -> (i32, i32) {
    %c0_i32 = arith.constant 0 : i32
    %c0_i32_0 = arith.constant 0 : i32
    %c0_i32_1 = arith.constant 0 : i32
    return %c0_i32, %c0_i32_0 : i32, i32
  }
  func.func @transform_3(%arg0: i32) -> (i32, i32) {
    %c0_i32 = arith.constant 0 : i32
    %c0_i32_0 = arith.constant 0 : i32
    %c0_i32_1 = arith.constant 0 : i32
    return %c0_i32, %c0_i32_0 : i32, i32
  }
  func.func @transform_4(%arg0: i32) -> (i32, i32) {
    %c0_i32 = arith.constant 0 : i32
    %c0_i32_0 = arith.constant 0 : i32
    %c0_i32_1 = arith.constant 0 : i32
    return %c0_i32, %c0_i32_0 : i32, i32
  }
  func.func @transform_5(%arg0: i32) -> (i32, i32) {
    %c0_i32 = arith.constant 0 : i32
    %c0_i32_0 = arith.constant 0 : i32
    return %c0_i32, %arg0 : i32, i32
  }
}

</mosaic_0001>

<llo_original>
// kernel: tpu_custom_call.1
$region0: #{tpu_custom_call.1}
  #allocation0 [shape = 'u32[]', space=smem, size = 0x4, offset = 0x4, fixed_abs, tag = 'smem constant byte address 0x4 - core index']
  #allocation1 [shape = 'u32[72,128]{1,0:T(1,128)}', space=vmem, size = 0x9000, scoped, tag = 'internal scratch']
  %s0 = inlined_call_operand.vmem [shape: bf16[40,8], index: 0, kind: input, shape index: {}]
  %s1 = inlined_call_operand.vmem [shape: f32[640,8], index: 1, kind: input, shape index: {}]
  %s2 = inlined_call_operand.vmem [shape: f32[640,1], index: 2, kind: input, shape index: {}]
  %s3 = inlined_call_operand.vmem [shape: f32[128,640], index: 3, kind: input, shape index: {}]
  %s4 = inlined_call_operand.vmem [shape: f32[128,1], index: 4, kind: input, shape index: {}]
  %s5 = inlined_call_operand.vmem [shape: f32[128,8], index: 5, kind: output, shape index: {}]
  %s6 = sld [smem:[#allocation0]]
  $region30: #{tpu_custom_call.1} parent=0
    _
  %s8 = ssub.s32 1, %s6
  %s9 = scalar_select 0, %s8, %s6
  // Predicated region
  $region2: #{tpu_custom_call.1} parent=0 // pred_check
    _
  $region3: #{tpu_custom_call.1} parent=0 // pred_check_branch
    %11 = sbr.rel (0) target = $region5
  $region4: #{tpu_custom_call.1} parent=0 // pred_region
    _
  $region5: #{tpu_custom_call.1} parent=0 // pred_fallthru
    _
  // Predicated region
  $region6: #{tpu_custom_call.1} parent=0 // pred_check
    _
  $region7: #{tpu_custom_call.1} parent=0 // pred_check_branch
    %13 = sbr.rel (0) target = $region9
  $region8: #{tpu_custom_call.1} parent=0 // pred_region
    _
  $region9: #{tpu_custom_call.1} parent=0 // pred_fallthru
    _
  // Predicated region
  $region10: #{tpu_custom_call.1} parent=0 // pred_check
    _
  $region11: #{tpu_custom_call.1} parent=0 // pred_check_branch
    %15 = sbr.rel (0) target = $region13
  $region12: #{tpu_custom_call.1} parent=0 // pred_region
    _
  $region13: #{tpu_custom_call.1} parent=0 // pred_fallthru
    _
  // Predicated region
  $region14: #{tpu_custom_call.1} parent=0 // pred_check
    _
  $region15: #{tpu_custom_call.1} parent=0 // pred_check_branch
    %17 = sbr.rel (0) target = $region17
  $region16: #{tpu_custom_call.1} parent=0 // pred_region
    _
  $region17: #{tpu_custom_call.1} parent=0 // pred_fallthru
    _
  // Predicated region
  $region18: #{tpu_custom_call.1} parent=0 // pred_check
    _
  $region19: #{tpu_custom_call.1} parent=0 // pred_check_branch
    %19 = sbr.rel (0) target = $region21
  $region20: #{tpu_custom_call.1} parent=0 // pred_region
    _
  $region21: #{tpu_custom_call.1} parent=0 // pred_fallthru
    _
  %v20 = vld [vmem:[%s0] sm:$0xf]
  %v21 = vld [vmem:[%s0 + $0x4] sm:$0xf]
  %v22 = vld [vmem:[%s0 + $0x8] sm:$0xf]
  %v23 = vld [vmem:[%s0 + $0xc] sm:$0xf]
  %v24 = vld [vmem:[%s0 + $0x10] sm:$0xf]
  %v25 = vunpack.c.l.bf16 %v20
  %v26 = vunpack.c.l.bf16 %v21
  %v27 = vunpack.c.l.bf16 %v22
  %v28 = vunpack.c.l.bf16 %v23
  %v29 = vunpack.c.l.bf16 %v24
  %v30 = vld [vmem:[%s1] sm:$0xff]
  %v31 = vld [vmem:[%s1 + $0x8] sm:$0xff]
  %v32 = vld [vmem:[%s1 + $0x10] sm:$0xff]
  %v33 = vld [vmem:[%s1 + $0x18] sm:$0xff]
  %v34 = vld [vmem:[%s1 + $0x20] sm:$0xff]
  %v35 = vld [vmem:[%s1 + $0x28] sm:$0xff]
  %v36 = vld [vmem:[%s1 + $0x30] sm:$0xff]
  %v37 = vld [vmem:[%s1 + $0x38] sm:$0xff]
  %v38 = vld [vmem:[%s1 + $0x40] sm:$0xff]
  %v39 = vld [vmem:[%s1 + $0x48] sm:$0xff]
  %v40 = vld [vmem:[%s1 + $0x50] sm:$0xff]
  %v41 = vld [vmem:[%s1 + $0x58] sm:$0xff]
  %v42 = vld [vmem:[%s1 + $0x60] sm:$0xff]
  %v43 = vld [vmem:[%s1 + $0x68] sm:$0xff]
  %v44 = vld [vmem:[%s1 + $0x70] sm:$0xff]
  %v45 = vld [vmem:[%s1 + $0x78] sm:$0xff]
  %v46 = vld [vmem:[%s1 + $0x80] sm:$0xff]
  %v47 = vld [vmem:[%s1 + $0x88] sm:$0xff]
  %v48 = vld [vmem:[%s1 + $0x90] sm:$0xff]
  %v49 = vld [vmem:[%s1 + $0x98] sm:$0xff]
  %v50 = vld [vmem:[%s1 + $0xa0] sm:$0xff]
  %v51 = vld [vmem:[%s1 + $0xa8] sm:$0xff]
  %v52 = vld [vmem:[%s1 + $0xb0] sm:$0xff]
  %v53 = vld [vmem:[%s1 + $0xb8] sm:$0xff]
  %v54 = vld [vmem:[%s1 + $0xc0] sm:$0xff]
  %v55 = vld [vmem:[%s1 + $0xc8] sm:$0xff]
  %v56 = vld [vmem:[%s1 + $0xd0] sm:$0xff]
  %v57 = vld [vmem:[%s1 + $0xd8] sm:$0xff]
  %v58 = vld [vmem:[%s1 + $0xe0] sm:$0xff]
  %v59 = vld [vmem:[%s1 + $0xe8] sm:$0xff]
  %v60 = vld [vmem:[%s1 + $0xf0] sm:$0xff]
  %v61 = vld [vmem:[%s1 + $0xf8] sm:$0xff]
  %v62 = vld [vmem:[%s1 + $0x100] sm:$0xff]
  %v63 = vld [vmem:[%s1 + $0x108] sm:$0xff]
  %v64 = vld [vmem:[%s1 + $0x110] sm:$0xff]
  %v65 = vld [vmem:[%s1 + $0x118] sm:$0xff]
  %v66 = vld [vmem:[%s1 + $0x120] sm:$0xff]
  %v67 = vld [vmem:[%s1 + $0x128] sm:$0xff]
  %v68 = vld [vmem:[%s1 + $0x130] sm:$0xff]
  %v69 = vld [vmem:[%s1 + $0x138] sm:$0xff]
  %v70 = vld [vmem:[%s1 + $0x140] sm:$0xff]
  %v71 = vld [vmem:[%s1 + $0x148] sm:$0xff]
  %v72 = vld [vmem:[%s1 + $0x150] sm:$0xff]
  %v73 = vld [vmem:[%s1 + $0x158] sm:$0xff]
  %v74 = vld [vmem:[%s1 + $0x160] sm:$0xff]
  %v75 = vld [vmem:[%s1 + $0x168] sm:$0xff]
  %v76 = vld [vmem:[%s1 + $0x170] sm:$0xff]
  %v77 = vld [vmem:[%s1 + $0x178] sm:$0xff]
  %v78 = vld [vmem:[%s1 + $0x180] sm:$0xff]
  %v79 = vld [vmem:[%s1 + $0x188] sm:$0xff]
  %v80 = vld [vmem:[%s1 + $0x190] sm:$0xff]
  %v81 = vld [vmem:[%s1 + $0x198] sm:$0xff]
  %v82 = vld [vmem:[%s1 + $0x1a0] sm:$0xff]
  %v83 = vld [vmem:[%s1 + $0x1a8] sm:$0xff]
  %v84 = vld [vmem:[%s1 + $0x1b0] sm:$0xff]
  %v85 = vld [vmem:[%s1 + $0x1b8] sm:$0xff]
  %v86 = vld [vmem:[%s1 + $0x1c0] sm:$0xff]
  %v87 = vld [vmem:[%s1 + $0x1c8] sm:$0xff]
  %v88 = vld [vmem:[%s1 + $0x1d0] sm:$0xff]
  %v89 = vld [vmem:[%s1 + $0x1d8] sm:$0xff]
  %v90 = vld [vmem:[%s1 + $0x1e0] sm:$0xff]
  %v91 = vld [vmem:[%s1 + $0x1e8] sm:$0xff]
  %v92 = vld [vmem:[%s1 + $0x1f0] sm:$0xff]
  %v93 = vld [vmem:[%s1 + $0x1f8] sm:$0xff]
  %v94 = vld [vmem:[%s1 + $0x200] sm:$0xff]
  %v95 = vld [vmem:[%s1 + $0x208] sm:$0xff]
  %v96 = vld [vmem:[%s1 + $0x210] sm:$0xff]
  %v97 = vld [vmem:[%s1 + $0x218] sm:$0xff]
  %v98 = vld [vmem:[%s1 + $0x220] sm:$0xff]
  %v99 = vld [vmem:[%s1 + $0x228] sm:$0xff]
  %v100 = vld [vmem:[%s1 + $0x230] sm:$0xff]
  %v101 = vld [vmem:[%s1 + $0x238] sm:$0xff]
  %v102 = vld [vmem:[%s1 + $0x240] sm:$0xff]
  %v103 = vld [vmem:[%s1 + $0x248] sm:$0xff]
  %v104 = vld [vmem:[%s1 + $0x250] sm:$0xff]
  %v105 = vld [vmem:[%s1 + $0x258] sm:$0xff]
  %v106 = vld [vmem:[%s1 + $0x260] sm:$0xff]
  %v107 = vld [vmem:[%s1 + $0x268] sm:$0xff]
  %v108 = vld [vmem:[%s1 + $0x270] sm:$0xff]
  %v109 = vld [vmem:[%s1 + $0x278] sm:$0xff]
  %vm110 = vcmask 64512
  %v112 = vsel %vm110, %v30, 0
  %v115 = vsel %vm110, %v31, 0
  %v118 = vsel %vm110, %v32, 0
  %v121 = vsel %vm110, %v33, 0
  %v124 = vsel %vm110, %v34, 0
  %v127 = vsel %vm110, %v35, 0
  %v130 = vsel %vm110, %v36, 0
  %v133 = vsel %vm110, %v37, 0
  %v136 = vsel %vm110, %v38, 0
  %v139 = vsel %vm110, %v39, 0
  %v142 = vsel %vm110, %v40, 0
  %v145 = vsel %vm110, %v41, 0
  %v148 = vsel %vm110, %v42, 0
  %v151 = vsel %vm110, %v43, 0
  %v154 = vsel %vm110, %v44, 0
  %v157 = vsel %vm110, %v45, 0
  %v160 = vsel %vm110, %v46, 0
  %v163 = vsel %vm110, %v47, 0
  %v166 = vsel %vm110, %v48, 0
  %v169 = vsel %vm110, %v49, 0
  %v172 = vsel %vm110, %v50, 0
  %v175 = vsel %vm110, %v51, 0
  %v178 = vsel %vm110, %v52, 0
  %v181 = vsel %vm110, %v53, 0
  %v184 = vsel %vm110, %v54, 0
  %v187 = vsel %vm110, %v55, 0
  %v190 = vsel %vm110, %v56, 0
  %v193 = vsel %vm110, %v57, 0
  %v196 = vsel %vm110, %v58, 0
  %v199 = vsel %vm110, %v59, 0
  %v202 = vsel %vm110, %v60, 0
  %v205 = vsel %vm110, %v61, 0
  %v208 = vsel %vm110, %v62, 0
  %v211 = vsel %vm110, %v63, 0
  %v214 = vsel %vm110, %v64, 0
  %v217 = vsel %vm110, %v65, 0
  %v220 = vsel %vm110, %v66, 0
  %v223 = vsel %vm110, %v67, 0
  %v226 = vsel %vm110, %v68, 0
  %v229 = vsel %vm110, %v69, 0
  %v232 = vsel %vm110, %v70, 0
  %v235 = vsel %vm110, %v71, 0
  %v238 = vsel %vm110, %v72, 0
  %v241 = vsel %vm110, %v73, 0
  %v244 = vsel %vm110, %v74, 0
  %v247 = vsel %vm110, %v75, 0
  %v250 = vsel %vm110, %v76, 0
  %v253 = vsel %vm110, %v77, 0
  %v256 = vsel %vm110, %v78, 0
  %v259 = vsel %vm110, %v79, 0
  %v262 = vsel %vm110, %v80, 0
  %v265 = vsel %vm110, %v81, 0
  %v268 = vsel %vm110, %v82, 0
  %v271 = vsel %vm110, %v83, 0
  %v274 = vsel %vm110, %v84, 0
  %v277 = vsel %vm110, %v85, 0
  %v280 = vsel %vm110, %v86, 0
  %v283 = vsel %vm110, %v87, 0
  %v286 = vsel %vm110, %v88, 0
  %v289 = vsel %vm110, %v89, 0
  %v292 = vsel %vm110, %v90, 0
  %v295 = vsel %vm110, %v91, 0
  %v298 = vsel %vm110, %v92, 0
  %v301 = vsel %vm110, %v93, 0
  %v304 = vsel %vm110, %v94, 0
  %v307 = vsel %vm110, %v95, 0
  %v310 = vsel %vm110, %v96, 0
  %v313 = vsel %vm110, %v97, 0
  %v316 = vsel %vm110, %v98, 0
  %v319 = vsel %vm110, %v99, 0
  %v322 = vsel %vm110, %v100, 0
  %v325 = vsel %vm110, %v101, 0
  %v328 = vsel %vm110, %v102, 0
  %v331 = vsel %vm110, %v103, 0
  %v334 = vsel %vm110, %v104, 0
  %v337 = vsel %vm110, %v105, 0
  %v340 = vsel %vm110, %v106, 0
  %v343 = vsel %vm110, %v107, 0
  %v346 = vsel %vm110, %v108, 0
  %v349 = vsel %vm110, %v109, 0
  %351 = vmatpush.msra.mxu0 0.0
  %352 = vmatpush.msra.mxu0 0.0
  %353 = vmatpush.msra.mxu0 0.0
  %354 = vmatpush.msra.mxu0 0.0
  %355 = vmatpush.msra.mxu0 0.0
  %356 = vmatpush.msra.mxu0 0.0
  %357 = vmatpush.msra.mxu0 0.0
  %358 = vmatpush.msra.mxu0 0.0
  %359 = vmatpush.msra.mxu0 0.0
  %360 = vmatpush.msra.mxu0 0.0
  %361 = vmatpush.msra.mxu0 0.0
  %362 = vmatpush.msra.mxu0 0.0
  %363 = vmatpush.msra.mxu0 0.0
  %364 = vmatpush.msra.mxu0 0.0
  %365 = vmatpush.msra.mxu0 0.0
  %366 = vmatpush.msra.mxu0 %v25
  %367 = vmatmul.f32.gmra.mxu0 %v112
  %v368 = vpop.f32.mrf.mxu0
  %v369 = vadd.f32 0.0, %v368
  %370 = vmatmul.f32.gmra.mxu0 %v115
  %v371 = vpop.f32.mrf.mxu0
  %v372 = vadd.f32 0.0, %v371
  %373 = vmatmul.f32.gmra.mxu0 %v118
  %v374 = vpop.f32.mrf.mxu0
  %v375 = vadd.f32 0.0, %v374
  %376 = vmatmul.f32.gmra.mxu0 %v121
  %v377 = vpop.f32.mrf.mxu0
  %v378 = vadd.f32 0.0, %v377
  %379 = vmatmul.f32.gmra.mxu0 %v124
  %v380 = vpop.f32.mrf.mxu0
  %v381 = vadd.f32 0.0, %v380
  %382 = vmatmul.f32.gmra.mxu0 %v127
  %v383 = vpop.f32.mrf.mxu0
  %v384 = vadd.f32 0.0, %v383
  %385 = vmatmul.f32.gmra.mxu0 %v130
  %v386 = vpop.f32.mrf.mxu0
  %v387 = vadd.f32 0.0, %v386
  %388 = vmatmul.f32.gmra.mxu0 %v133
  %v389 = vpop.f32.mrf.mxu0
  %v390 = vadd.f32 0.0, %v389
  %391 = vmatmul.f32.gmra.mxu0 %v136
  %v392 = vpop.f32.mrf.mxu0
  %v393 = vadd.f32 0.0, %v392
  %394 = vmatmul.f32.gmra.mxu0 %v139
  %v395 = vpop.f32.mrf.mxu0
  %v396 = vadd.f32 0.0, %v395
  %397 = vmatmul.f32.gmra.mxu0 %v142
  %v398 = vpop.f32.mrf.mxu0
  %v399 = vadd.f32 0.0, %v398
  %400 = vmatmul.f32.gmra.mxu0 %v145
  %v401 = vpop.f32.mrf.mxu0
  %v402 = vadd.f32 0.0, %v401
  %403 = vmatmul.f32.gmra.mxu0 %v148
  %v404 = vpop.f32.mrf.mxu0
  %v405 = vadd.f32 0.0, %v404
  %406 = vmatmul.f32.gmra.mxu0 %v151
  %v407 = vpop.f32.mrf.mxu0
  %v408 = vadd.f32 0.0, %v407
  %409 = vmatmul.f32.gmra.mxu0 %v154
  %v410 = vpop.f32.mrf.mxu0
  %v411 = vadd.f32 0.0, %v410
  %412 = vmatmul.f32.gmra.mxu0 %v157
  %v413 = vpop.f32.mrf.mxu0
  %v414 = vadd.f32 0.0, %v413
  %415 = vmatmul.f32.gmra.mxu0 %v160
  %v416 = vpop.f32.mrf.mxu0
  %v417 = vadd.f32 0.0, %v416
  %418 = vmatmul.f32.gmra.mxu0 %v163
  %v419 = vpop.f32.mrf.mxu0
  %v420 = vadd.f32 0.0, %v419
  %421 = vmatmul.f32.gmra.mxu0 %v166
  %v422 = vpop.f32.mrf.mxu0
  %v423 = vadd.f32 0.0, %v422
  %424 = vmatmul.f32.gmra.mxu0 %v169
  %v425 = vpop.f32.mrf.mxu0
  %v426 = vadd.f32 0.0, %v425
  %427 = vmatmul.f32.gmra.mxu0 %v172
  %v428 = vpop.f32.mrf.mxu0
  %v429 = vadd.f32 0.0, %v428
  %430 = vmatmul.f32.gmra.mxu0 %v175
  %v431 = vpop.f32.mrf.mxu0
  %v432 = vadd.f32 0.0, %v431
  %433 = vmatmul.f32.gmra.mxu0 %v178
  %v434 = vpop.f32.mrf.mxu0
  %v435 = vadd.f32 0.0, %v434
  %436 = vmatmul.f32.gmra.mxu0 %v181
  %v437 = vpop.f32.mrf.mxu0
  %v438 = vadd.f32 0.0, %v437
  %439 = vmatmul.f32.gmra.mxu0 %v184
  %v440 = vpop.f32.mrf.mxu0
  %v441 = vadd.f32 0.0, %v440
  %442 = vmatmul.f32.gmra.mxu0 %v187
  %v443 = vpop.f32.mrf.mxu0
  %v444 = vadd.f32 0.0, %v443
  %445 = vmatmul.f32.gmra.mxu0 %v190
  %v446 = vpop.f32.mrf.mxu0
  %v447 = vadd.f32 0.0, %v446
  %448 = vmatmul.f32.gmra.mxu0 %v193
  %v449 = vpop.f32.mrf.mxu0
  %v450 = vadd.f32 0.0, %v449
  %451 = vmatmul.f32.gmra.mxu0 %v196
  %v452 = vpop.f32.mrf.mxu0
  %v453 = vadd.f32 0.0, %v452
  %454 = vmatmul.f32.gmra.mxu0 %v199
  %v455 = vpop.f32.mrf.mxu0
  %v456 = vadd.f32 0.0, %v455
  %457 = vmatmul.f32.gmra.mxu0 %v202
  %v458 = vpop.f32.mrf.mxu0
  %v459 = vadd.f32 0.0, %v458
  %460 = vmatmul.f32.gmra.mxu0 %v205
  %v461 = vpop.f32.mrf.mxu0
  %v462 = vadd.f32 0.0, %v461
  %463 = vmatmul.f32.gmra.mxu0 %v208
  %v464 = vpop.f32.mrf.mxu0
  %v465 = vadd.f32 0.0, %v464
  %466 = vmatmul.f32.gmra.mxu0 %v211
  %v467 = vpop.f32.mrf.mxu0
  %v468 = vadd.f32 0.0, %v467
  %469 = vmatmul.f32.gmra.mxu0 %v214
  %v470 = vpop.f32.mrf.mxu0
  %v471 = vadd.f32 0.0, %v470
  %472 = vmatmul.f32.gmra.mxu0 %v217
  %v473 = vpop.f32.mrf.mxu0
  %v474 = vadd.f32 0.0, %v473
  %475 = vmatmul.f32.gmra.mxu0 %v220
  %v476 = vpop.f32.mrf.mxu0
  %v477 = vadd.f32 0.0, %v476
  %478 = vmatmul.f32.gmra.mxu0 %v223
  %v479 = vpop.f32.mrf.mxu0
  %v480 = vadd.f32 0.0, %v479
  %481 = vmatmul.f32.gmra.mxu0 %v226
  %v482 = vpop.f32.mrf.mxu0
  %v483 = vadd.f32 0.0, %v482
  %484 = vmatmul.f32.gmra.mxu0 %v229
  %v485 = vpop.f32.mrf.mxu0
  %v486 = vadd.f32 0.0, %v485
  %487 = vmatmul.f32.gmra.mxu0 %v232
  %v488 = vpop.f32.mrf.mxu0
  %v489 = vadd.f32 0.0, %v488
  %490 = vmatmul.f32.gmra.mxu0 %v235
  %v491 = vpop.f32.mrf.mxu0
  %v492 = vadd.f32 0.0, %v491
  %493 = vmatmul.f32.gmra.mxu0 %v238
  %v494 = vpop.f32.mrf.mxu0
  %v495 = vadd.f32 0.0, %v494
  %496 = vmatmul.f32.gmra.mxu0 %v241
  %v497 = vpop.f32.mrf.mxu0
  %v498 = vadd.f32 0.0, %v497
  %499 = vmatmul.f32.gmra.mxu0 %v244
  %v500 = vpop.f32.mrf.mxu0
  %v501 = vadd.f32 0.0, %v500
  %502 = vmatmul.f32.gmra.mxu0 %v247
  %v503 = vpop.f32.mrf.mxu0
  %v504 = vadd.f32 0.0, %v503
  %505 = vmatmul.f32.gmra.mxu0 %v250
  %v506 = vpop.f32.mrf.mxu0
  %v507 = vadd.f32 0.0, %v506
  %508 = vmatmul.f32.gmra.mxu0 %v253
  %v509 = vpop.f32.mrf.mxu0
  %v510 = vadd.f32 0.0, %v509
  %511 = vmatmul.f32.gmra.mxu0 %v256
  %v512 = vpop.f32.mrf.mxu0
  %v513 = vadd.f32 0.0, %v512
  %514 = vmatmul.f32.gmra.mxu0 %v259
  %v515 = vpop.f32.mrf.mxu0
  %v516 = vadd.f32 0.0, %v515
  %517 = vmatmul.f32.gmra.mxu0 %v262
  %v518 = vpop.f32.mrf.mxu0
  %v519 = vadd.f32 0.0, %v518
  %520 = vmatmul.f32.gmra.mxu0 %v265
  %v521 = vpop.f32.mrf.mxu0
  %v522 = vadd.f32 0.0, %v521
  %523 = vmatmul.f32.gmra.mxu0 %v268
  %v524 = vpop.f32.mrf.mxu0
  %v525 = vadd.f32 0.0, %v524
  %526 = vmatmul.f32.gmra.mxu0 %v271
  %v527 = vpop.f32.mrf.mxu0
  %v528 = vadd.f32 0.0, %v527
  %529 = vmatmul.f32.gmra.mxu0 %v274
  %v530 = vpop.f32.mrf.mxu0
  %v531 = vadd.f32 0.0, %v530
  %532 = vmatmul.f32.gmra.mxu0 %v277
  %v533 = vpop.f32.mrf.mxu0
  %v534 = vadd.f32 0.0, %v533
  %535 = vmatmul.f32.gmra.mxu0 %v280
  %v536 = vpop.f32.mrf.mxu0
  %v537 = vadd.f32 0.0, %v536
  %538 = vmatmul.f32.gmra.mxu0 %v283
  %v539 = vpop.f32.mrf.mxu0
  %v540 = vadd.f32 0.0, %v539
  %541 = vmatmul.f32.gmra.mxu0 %v286
  %v542 = vpop.f32.mrf.mxu0
  %v543 = vadd.f32 0.0, %v542
  %544 = vmatmul.f32.gmra.mxu0 %v289
  %v545 = vpop.f32.mrf.mxu0
  %v546 = vadd.f32 0.0, %v545
  %547 = vmatmul.f32.gmra.mxu0 %v292
  %v548 = vpop.f32.mrf.mxu0
  %v549 = vadd.f32 0.0, %v548
  %550 = vmatmul.f32.gmra.mxu0 %v295
  %v551 = vpop.f32.mrf.mxu0
  %v552 = vadd.f32 0.0, %v551
  %553 = vmatmul.f32.gmra.mxu0 %v298
  %v554 = vpop.f32.mrf.mxu0
  %v555 = vadd.f32 0.0, %v554
  %556 = vmatmul.f32.gmra.mxu0 %v301
  %v557 = vpop.f32.mrf.mxu0
  %v558 = vadd.f32 0.0, %v557
  %559 = vmatmul.f32.gmra.mxu0 %v304
  %v560 = vpop.f32.mrf.mxu0
  %v561 = vadd.f32 0.0, %v560
  %562 = vmatmul.f32.gmra.mxu0 %v307
  %v563 = vpop.f32.mrf.mxu0
  %v564 = vadd.f32 0.0, %v563
  %565 = vmatmul.f32.gmra.mxu0 %v310
  %v566 = vpop.f32.mrf.mxu0
  %v567 = vadd.f32 0.0, %v566
  %568 = vmatmul.f32.gmra.mxu0 %v313
  %v569 = vpop.f32.mrf.mxu0
  %v570 = vadd.f32 0.0, %v569
  %571 = vmatmul.f32.gmra.mxu0 %v316
  %v572 = vpop.f32.mrf.mxu0
  %v573 = vadd.f32 0.0, %v572
  %574 = vmatmul.f32.gmra.mxu0 %v319
  %v575 = vpop.f32.mrf.mxu0
  %v576 = vadd.f32 0.0, %v575
  %577 = vmatmul.f32.gmra.mxu0 %v322
  %v578 = vpop.f32.mrf.mxu0
  %v579 = vadd.f32 0.0, %v578
  %580 = vmatmul.f32.gmra.mxu0 %v325
  %v581 = vpop.f32.mrf.mxu0
  %v582 = vadd.f32 0.0, %v581
  %583 = vmatmul.f32.gmra.mxu0 %v328
  %v584 = vpop.f32.mrf.mxu0
  %v585 = vadd.f32 0.0, %v584
  %586 = vmatmul.f32.gmra.mxu0 %v331
  %v587 = vpop.f32.mrf.mxu0
  %v588 = vadd.f32 0.0, %v587
  %589 = vmatmul.f32.gmra.mxu0 %v334
  %v590 = vpop.f32.mrf.mxu0
  %v591 = vadd.f32 0.0, %v590
  %592 = vmatmul.f32.gmra.mxu0 %v337
  %v593 = vpop.f32.mrf.mxu0
  %v594 = vadd.f32 0.0, %v593
  %595 = vmatmul.f32.gmra.mxu0 %v340
  %v596 = vpop.f32.mrf.mxu0
  %v597 = vadd.f32 0.0, %v596
  %598 = vmatmul.f32.gmra.mxu0 %v343
  %v599 = vpop.f32.mrf.mxu0
  %v600 = vadd.f32 0.0, %v599
  %601 = vmatmul.f32.gmra.mxu0 %v346
  %v602 = vpop.f32.mrf.mxu0
  %v603 = vadd.f32 0.0, %v602
  %604 = vmatmul.f32.gmra.mxu0 %v349
  %v605 = vpop.f32.mrf.mxu0
  %v606 = vadd.f32 0.0, %v605
  %607 = vdwg.mxu0
  %vm610 = vcmask 1046528
  %v611 = vrot.slane %v25, 1
  %v612 = vrot.slane %v26, 1
  %v613 = vsel %vm610, %v611, %v612
  %615 = vmatpush.msra.mxu0 0.0
  %616 = vmatpush.msra.mxu0 0.0
  %617 = vmatpush.msra.mxu0 0.0
  %618 = vmatpush.msra.mxu0 0.0
  %619 = vmatpush.msra.mxu0 0.0
  %620 = vmatpush.msra.mxu0 0.0
  %621 = vmatpush.msra.mxu0 0.0
  %622 = vmatpush.msra.mxu0 0.0
  %623 = vmatpush.msra.mxu0 0.0
  %624 = vmatpush.msra.mxu0 0.0
  %625 = vmatpush.msra.mxu0 0.0
  %626 = vmatpush.msra.mxu0 0.0
  %627 = vmatpush.msra.mxu0 0.0
  %628 = vmatpush.msra.mxu0 0.0
  %629 = vmatpush.msra.mxu0 0.0
  %630 = vmatpush.msra.mxu0 %v613
  %631 = vmatmul.f32.gmra.mxu0 %v112
  %v632 = vpop.f32.mrf.mxu0
  %v633 = vadd.f32 0.0, %v632
  %634 = vmatmul.f32.gmra.mxu0 %v115
  %v635 = vpop.f32.mrf.mxu0
  %v636 = vadd.f32 0.0, %v635
  %637 = vmatmul.f32.gmra.mxu0 %v118
  %v638 = vpop.f32.mrf.mxu0
  %v639 = vadd.f32 0.0, %v638
  %640 = vmatmul.f32.gmra.mxu0 %v121
  %v641 = vpop.f32.mrf.mxu0
  %v642 = vadd.f32 0.0, %v641
  %643 = vmatmul.f32.gmra.mxu0 %v124
  %v644 = vpop.f32.mrf.mxu0
  %v645 = vadd.f32 0.0, %v644
  %646 = vmatmul.f32.gmra.mxu0 %v127
  %v647 = vpop.f32.mrf.mxu0
  %v648 = vadd.f32 0.0, %v647
  %649 = vmatmul.f32.gmra.mxu0 %v130
  %v650 = vpop.f32.mrf.mxu0
  %v651 = vadd.f32 0.0, %v650
  %652 = vmatmul.f32.gmra.mxu0 %v133
  %v653 = vpop.f32.mrf.mxu0
  %v654 = vadd.f32 0.0, %v653
  %655 = vmatmul.f32.gmra.mxu0 %v136
  %v656 = vpop.f32.mrf.mxu0
  %v657 = vadd.f32 0.0, %v656
  %658 = vmatmul.f32.gmra.mxu0 %v139
  %v659 = vpop.f32.mrf.mxu0
  %v660 = vadd.f32 0.0, %v659
  %661 = vmatmul.f32.gmra.mxu0 %v142
  %v662 = vpop.f32.mrf.mxu0
  %v663 = vadd.f32 0.0, %v662
  %664 = vmatmul.f32.gmra.mxu0 %v145
  %v665 = vpop.f32.mrf.mxu0
  %v666 = vadd.f32 0.0, %v665
  %667 = vmatmul.f32.gmra.mxu0 %v148
  %v668 = vpop.f32.mrf.mxu0
  %v669 = vadd.f32 0.0, %v668
  %670 = vmatmul.f32.gmra.mxu0 %v151
  %v671 = vpop.f32.mrf.mxu0
  %v672 = vadd.f32 0.0, %v671
  %673 = vmatmul.f32.gmra.mxu0 %v154
  %v674 = vpop.f32.mrf.mxu0
  %v675 = vadd.f32 0.0, %v674
  %676 = vmatmul.f32.gmra.mxu0 %v157
  %v677 = vpop.f32.mrf.mxu0
  %v678 = vadd.f32 0.0, %v677
  %679 = vmatmul.f32.gmra.mxu0 %v160
  %v680 = vpop.f32.mrf.mxu0
  %v681 = vadd.f32 0.0, %v680
  %682 = vmatmul.f32.gmra.mxu0 %v163
  %v683 = vpop.f32.mrf.mxu0
  %v684 = vadd.f32 0.0, %v683
  %685 = vmatmul.f32.gmra.mxu0 %v166
  %v686 = vpop.f32.mrf.mxu0
  %v687 = vadd.f32 0.0, %v686
  %688 = vmatmul.f32.gmra.mxu0 %v169
  %v689 = vpop.f32.mrf.mxu0
  %v690 = vadd.f32 0.0, %v689
  %691 = vmatmul.f32.gmra.mxu0 %v172
  %v692 = vpop.f32.mrf.mxu0
  %v693 = vadd.f32 0.0, %v692
  %694 = vmatmul.f32.gmra.mxu0 %v175
  %v695 = vpop.f32.mrf.mxu0
  %v696 = vadd.f32 0.0, %v695
  %697 = vmatmul.f32.gmra.mxu0 %v178
  %v698 = vpop.f32.mrf.mxu0
  %v699 = vadd.f32 0.0, %v698
  %700 = vmatmul.f32.gmra.mxu0 %v181
  %v701 = vpop.f32.mrf.mxu0
  %v702 = vadd.f32 0.0, %v701
  %703 = vmatmul.f32.gmra.mxu0 %v184
  %v704 = vpop.f32.mrf.mxu0
  %v705 = vadd.f32 0.0, %v704
  %706 = vmatmul.f32.gmra.mxu0 %v187
  %v707 = vpop.f32.mrf.mxu0
  %v708 = vadd.f32 0.0, %v707
  %709 = vmatmul.f32.gmra.mxu0 %v190
  %v710 = vpop.f32.mrf.mxu0
  %v711 = vadd.f32 0.0, %v710
  %712 = vmatmul.f32.gmra.mxu0 %v193
  %v713 = vpop.f32.mrf.mxu0
  %v714 = vadd.f32 0.0, %v713
  %715 = vmatmul.f32.gmra.mxu0 %v196
  %v716 = vpop.f32.mrf.mxu0
  %v717 = vadd.f32 0.0, %v716
  %718 = vmatmul.f32.gmra.mxu0 %v199
  %v719 = vpop.f32.mrf.mxu0
  %v720 = vadd.f32 0.0, %v719
  %721 = vmatmul.f32.gmra.mxu0 %v202
  %v722 = vpop.f32.mrf.mxu0
  %v723 = vadd.f32 0.0, %v722
  %724 = vmatmul.f32.gmra.mxu0 %v205
  %v725 = vpop.f32.mrf.mxu0
  %v726 = vadd.f32 0.0, %v725
  %727 = vmatmul.f32.gmra.mxu0 %v208
  %v728 = vpop.f32.mrf.mxu0
  %v729 = vadd.f32 0.0, %v728
  %730 = vmatmul.f32.gmra.mxu0 %v211
  %v731 = vpop.f32.mrf.mxu0
  %v732 = vadd.f32 0.0, %v731
  %733 = vmatmul.f32.gmra.mxu0 %v214
  %v734 = vpop.f32.mrf.mxu0
  %v735 = vadd.f32 0.0, %v734
  %736 = vmatmul.f32.gmra.mxu0 %v217
  %v737 = vpop.f32.mrf.mxu0
  %v738 = vadd.f32 0.0, %v737
  %739 = vmatmul.f32.gmra.mxu0 %v220
  %v740 = vpop.f32.mrf.mxu0
  %v741 = vadd.f32 0.0, %v740
  %742 = vmatmul.f32.gmra.mxu0 %v223
  %v743 = vpop.f32.mrf.mxu0
  %v744 = vadd.f32 0.0, %v743
  %745 = vmatmul.f32.gmra.mxu0 %v226
  %v746 = vpop.f32.mrf.mxu0
  %v747 = vadd.f32 0.0, %v746
  %748 = vmatmul.f32.gmra.mxu0 %v229
  %v749 = vpop.f32.mrf.mxu0
  %v750 = vadd.f32 0.0, %v749
  %751 = vmatmul.f32.gmra.mxu0 %v232
  %v752 = vpop.f32.mrf.mxu0
  %v753 = vadd.f32 0.0, %v752
  %754 = vmatmul.f32.gmra.mxu0 %v235
  %v755 = vpop.f32.mrf.mxu0
  %v756 = vadd.f32 0.0, %v755
  %757 = vmatmul.f32.gmra.mxu0 %v238
  %v758 = vpop.f32.mrf.mxu0
  %v759 = vadd.f32 0.0, %v758
  %760 = vmatmul.f32.gmra.mxu0 %v241
  %v761 = vpop.f32.mrf.mxu0
  %v762 = vadd.f32 0.0, %v761
  %763 = vmatmul.f32.gmra.mxu0 %v244
  %v764 = vpop.f32.mrf.mxu0
  %v765 = vadd.f32 0.0, %v764
  %766 = vmatmul.f32.gmra.mxu0 %v247
  %v767 = vpop.f32.mrf.mxu0
  %v768 = vadd.f32 0.0, %v767
  %769 = vmatmul.f32.gmra.mxu0 %v250
  %v770 = vpop.f32.mrf.mxu0
  %v771 = vadd.f32 0.0, %v770
  %772 = vmatmul.f32.gmra.mxu0 %v253
  %v773 = vpop.f32.mrf.mxu0
  %v774 = vadd.f32 0.0, %v773
  %775 = vmatmul.f32.gmra.mxu0 %v256
  %v776 = vpop.f32.mrf.mxu0
  %v777 = vadd.f32 0.0, %v776
  %778 = vmatmul.f32.gmra.mxu0 %v259
  %v779 = vpop.f32.mrf.mxu0
  %v780 = vadd.f32 0.0, %v779
  %781 = vmatmul.f32.gmra.mxu0 %v262
  %v782 = vpop.f32.mrf.mxu0
  %v783 = vadd.f32 0.0, %v782
  %784 = vmatmul.f32.gmra.mxu0 %v265
  %v785 = vpop.f32.mrf.mxu0
  %v786 = vadd.f32 0.0, %v785
  %787 = vmatmul.f32.gmra.mxu0 %v268
  %v788 = vpop.f32.mrf.mxu0
  %v789 = vadd.f32 0.0, %v788
  %790 = vmatmul.f32.gmra.mxu0 %v271
  %v791 = vpop.f32.mrf.mxu0
  %v792 = vadd.f32 0.0, %v791
  %793 = vmatmul.f32.gmra.mxu0 %v274
  %v794 = vpop.f32.mrf.mxu0
  %v795 = vadd.f32 0.0, %v794
  %796 = vmatmul.f32.gmra.mxu0 %v277
  %v797 = vpop.f32.mrf.mxu0
  %v798 = vadd.f32 0.0, %v797
  %799 = vmatmul.f32.gmra.mxu0 %v280
  %v800 = vpop.f32.mrf.mxu0
  %v801 = vadd.f32 0.0, %v800
  %802 = vmatmul.f32.gmra.mxu0 %v283
  %v803 = vpop.f32.mrf.mxu0
  %v804 = vadd.f32 0.0, %v803
  %805 = vmatmul.f32.gmra.mxu0 %v286
  %v806 = vpop.f32.mrf.mxu0
  %v807 = vadd.f32 0.0, %v806
  %808 = vmatmul.f32.gmra.mxu0 %v289
  %v809 = vpop.f32.mrf.mxu0
  %v810 = vadd.f32 0.0, %v809
  %811 = vmatmul.f32.gmra.mxu0 %v292
  %v812 = vpop.f32.mrf.mxu0
  %v813 = vadd.f32 0.0, %v812
  %814 = vmatmul.f32.gmra.mxu0 %v295
  %v815 = vpop.f32.mrf.mxu0
  %v816 = vadd.f32 0.0, %v815
  %817 = vmatmul.f32.gmra.mxu0 %v298
  %v818 = vpop.f32.mrf.mxu0
  %v819 = vadd.f32 0.0, %v818
  %820 = vmatmul.f32.gmra.mxu0 %v301
  %v821 = vpop.f32.mrf.mxu0
  %v822 = vadd.f32 0.0, %v821
  %823 = vmatmul.f32.gmra.mxu0 %v304
  %v824 = vpop.f32.mrf.mxu0
  %v825 = vadd.f32 0.0, %v824
  %826 = vmatmul.f32.gmra.mxu0 %v307
  %v827 = vpop.f32.mrf.mxu0
  %v828 = vadd.f32 0.0, %v827
  %829 = vmatmul.f32.gmra.mxu0 %v310
  %v830 = vpop.f32.mrf.mxu0
  %v831 = vadd.f32 0.0, %v830
  %832 = vmatmul.f32.gmra.mxu0 %v313
  %v833 = vpop.f32.mrf.mxu0
  %v834 = vadd.f32 0.0, %v833
  %835 = vmatmul.f32.gmra.mxu0 %v316
  %v836 = vpop.f32.mrf.mxu0
  %v837 = vadd.f32 0.0, %v836
  %838 = vmatmul.f32.gmra.mxu0 %v319
  %v839 = vpop.f32.mrf.mxu0
  %v840 = vadd.f32 0.0, %v839
  %841 = vmatmul.f32.gmra.mxu0 %v322
  %v842 = vpop.f32.mrf.mxu0
  %v843 = vadd.f32 0.0, %v842
  %844 = vmatmul.f32.gmra.mxu0 %v325
  %v845 = vpop.f32.mrf.mxu0
  %v846 = vadd.f32 0.0, %v845
  %847 = vmatmul.f32.gmra.mxu0 %v328
  %v848 = vpop.f32.mrf.mxu0
  %v849 = vadd.f32 0.0, %v848
  %850 = vmatmul.f32.gmra.mxu0 %v331
  %v851 = vpop.f32.mrf.mxu0
  %v852 = vadd.f32 0.0, %v851
  %853 = vmatmul.f32.gmra.mxu0 %v334
  %v854 = vpop.f32.mrf.mxu0
  %v855 = vadd.f32 0.0, %v854
  %856 = vmatmul.f32.gmra.mxu0 %v337
  %v857 = vpop.f32.mrf.mxu0
  %v858 = vadd.f32 0.0, %v857
  %859 = vmatmul.f32.gmra.mxu0 %v340
  %v860 = vpop.f32.mrf.mxu0
  %v861 = vadd.f32 0.0, %v860
  %862 = vmatmul.f32.gmra.mxu0 %v343
  %v863 = vpop.f32.mrf.mxu0
  %v864 = vadd.f32 0.0, %v863
  %865 = vmatmul.f32.gmra.mxu0 %v346
  %v866 = vpop.f32.mrf.mxu0
  %v867 = vadd.f32 0.0, %v866
  %868 = vmatmul.f32.gmra.mxu0 %v349
  %v869 = vpop.f32.mrf.mxu0
  %v870 = vadd.f32 0.0, %v869
  %871 = vdwg.mxu0
  %vm872 = vcmask 1045504
  %v873 = vrot.slane %v25, 2
  %v874 = vrot.slane %v26, 2
  %v875 = vsel %vm872, %v873, %v874
  %877 = vmatpush.msra.mxu0 0.0
  %878 = vmatpush.msra.mxu0 0.0
  %879 = vmatpush.msra.mxu0 0.0
  %880 = vmatpush.msra.mxu0 0.0
  %881 = vmatpush.msra.mxu0 0.0
  %882 = vmatpush.msra.mxu0 0.0
  %883 = vmatpush.msra.mxu0 0.0
  %884 = vmatpush.msra.mxu0 0.0
  %885 = vmatpush.msra.mxu0 0.0
  %886 = vmatpush.msra.mxu0 0.0
  %887 = vmatpush.msra.mxu0 0.0
  %888 = vmatpush.msra.mxu0 0.0
  %889 = vmatpush.msra.mxu0 0.0
  %890 = vmatpush.msra.mxu0 0.0
  %891 = vmatpush.msra.mxu0 0.0
  %892 = vmatpush.msra.mxu0 %v875
  %893 = vmatmul.f32.gmra.mxu0 %v112
  %v894 = vpop.f32.mrf.mxu0
  %v895 = vadd.f32 0.0, %v894
  %896 = vmatmul.f32.gmra.mxu0 %v115
  %v897 = vpop.f32.mrf.mxu0
  %v898 = vadd.f32 0.0, %v897
  %899 = vmatmul.f32.gmra.mxu0 %v118
  %v900 = vpop.f32.mrf.mxu0
  %v901 = vadd.f32 0.0, %v900
  %902 = vmatmul.f32.gmra.mxu0 %v121
  %v903 = vpop.f32.mrf.mxu0
  %v904 = vadd.f32 0.0, %v903
  %905 = vmatmul.f32.gmra.mxu0 %v124
  %v906 = vpop.f32.mrf.mxu0
  %v907 = vadd.f32 0.0, %v906
  %908 = vmatmul.f32.gmra.mxu0 %v127
  %v909 = vpop.f32.mrf.mxu0
  %v910 = vadd.f32 0.0, %v909
  %911 = vmatmul.f32.gmra.mxu0 %v130
  %v912 = vpop.f32.mrf.mxu0
  %v913 = vadd.f32 0.0, %v912
  %914 = vmatmul.f32.gmra.mxu0 %v133
  %v915 = vpop.f32.mrf.mxu0
  %v916 = vadd.f32 0.0, %v915
  %917 = vmatmul.f32.gmra.mxu0 %v136
  %v918 = vpop.f32.mrf.mxu0
  %v919 = vadd.f32 0.0, %v918
  %920 = vmatmul.f32.gmra.mxu0 %v139
  %v921 = vpop.f32.mrf.mxu0
  %v922 = vadd.f32 0.0, %v921
  %923 = vmatmul.f32.gmra.mxu0 %v142
  %v924 = vpop.f32.mrf.mxu0
  %v925 = vadd.f32 0.0, %v924
  %926 = vmatmul.f32.gmra.mxu0 %v145
  %v927 = vpop.f32.mrf.mxu0
  %v928 = vadd.f32 0.0, %v927
  %929 = vmatmul.f32.gmra.mxu0 %v148
  %v930 = vpop.f32.mrf.mxu0
  %v931 = vadd.f32 0.0, %v930
  %932 = vmatmul.f32.gmra.mxu0 %v151
  %v933 = vpop.f32.mrf.mxu0
  %v934 = vadd.f32 0.0, %v933
  %935 = vmatmul.f32.gmra.mxu0 %v154
  %v936 = vpop.f32.mrf.mxu0
  %v937 = vadd.f32 0.0, %v936
  %938 = vmatmul.f32.gmra.mxu0 %v157
  %v939 = vpop.f32.mrf.mxu0
  %v940 = vadd.f32 0.0, %v939
  %941 = vmatmul.f32.gmra.mxu0 %v160
  %v942 = vpop.f32.mrf.mxu0
  %v943 = vadd.f32 0.0, %v942
  %944 = vmatmul.f32.gmra.mxu0 %v163
  %v945 = vpop.f32.mrf.mxu0
  %v946 = vadd.f32 0.0, %v945
  %947 = vmatmul.f32.gmra.mxu0 %v166
  %v948 = vpop.f32.mrf.mxu0
  %v949 = vadd.f32 0.0, %v948
  %950 = vmatmul.f32.gmra.mxu0 %v169
  %v951 = vpop.f32.mrf.mxu0
  %v952 = vadd.f32 0.0, %v951
  %953 = vmatmul.f32.gmra.mxu0 %v172
  %v954 = vpop.f32.mrf.mxu0
  %v955 = vadd.f32 0.0, %v954
  %956 = vmatmul.f32.gmra.mxu0 %v175
  %v957 = vpop.f32.mrf.mxu0
  %v958 = vadd.f32 0.0, %v957
  %959 = vmatmul.f32.gmra.mxu0 %v178
  %v960 = vpop.f32.mrf.mxu0
  %v961 = vadd.f32 0.0, %v960
  %962 = vmatmul.f32.gmra.mxu0 %v181
  %v963 = vpop.f32.mrf.mxu0
  %v964 = vadd.f32 0.0, %v963
  %965 = vmatmul.f32.gmra.mxu0 %v184
  %v966 = vpop.f32.mrf.mxu0
  %v967 = vadd.f32 0.0, %v966
  %968 = vmatmul.f32.gmra.mxu0 %v187
  %v969 = vpop.f32.mrf.mxu0
  %v970 = vadd.f32 0.0, %v969
  %971 = vmatmul.f32.gmra.mxu0 %v190
  %v972 = vpop.f32.mrf.mxu0
  %v973 = vadd.f32 0.0, %v972
  %974 = vmatmul.f32.gmra.mxu0 %v193
  %v975 = vpop.f32.mrf.mxu0
  %v976 = vadd.f32 0.0, %v975
  %977 = vmatmul.f32.gmra.mxu0 %v196
  %v978 = vpop.f32.mrf.mxu0
  %v979 = vadd.f32 0.0, %v978
  %980 = vmatmul.f32.gmra.mxu0 %v199
  %v981 = vpop.f32.mrf.mxu0
  %v982 = vadd.f32 0.0, %v981
  %983 = vmatmul.f32.gmra.mxu0 %v202
  %v984 = vpop.f32.mrf.mxu0
  %v985 = vadd.f32 0.0, %v984
  %986 = vmatmul.f32.gmra.mxu0 %v205
  %v987 = vpop.f32.mrf.mxu0
  %v988 = vadd.f32 0.0, %v987
  %989 = vmatmul.f32.gmra.mxu0 %v208
  %v990 = vpop.f32.mrf.mxu0
  %v991 = vadd.f32 0.0, %v990
  %992 = vmatmul.f32.gmra.mxu0 %v211
  %v993 = vpop.f32.mrf.mxu0
  %v994 = vadd.f32 0.0, %v993
  %995 = vmatmul.f32.gmra.mxu0 %v214
  %v996 = vpop.f32.mrf.mxu0
  %v997 = vadd.f32 0.0, %v996
  %998 = vmatmul.f32.gmra.mxu0 %v217
  %v999 = vpop.f32.mrf.mxu0
  %v1000 = vadd.f32 0.0, %v999
  %1001 = vmatmul.f32.gmra.mxu0 %v220
  %v1002 = vpop.f32.mrf.mxu0
  %v1003 = vadd.f32 0.0, %v1002
  %1004 = vmatmul.f32.gmra.mxu0 %v223
  %v1005 = vpop.f32.mrf.mxu0
  %v1006 = vadd.f32 0.0, %v1005
  %1007 = vmatmul.f32.gmra.mxu0 %v226
  %v1008 = vpop.f32.mrf.mxu0
  %v1009 = vadd.f32 0.0, %v1008
  %1010 = vmatmul.f32.gmra.mxu0 %v229
  %v1011 = vpop.f32.mrf.mxu0
  %v1012 = vadd.f32 0.0, %v1011
  %1013 = vmatmul.f32.gmra.mxu0 %v232
  %v1014 = vpop.f32.mrf.mxu0
  %v1015 = vadd.f32 0.0, %v1014
  %1016 = vmatmul.f32.gmra.mxu0 %v235
  %v1017 = vpop.f32.mrf.mxu0
  %v1018 = vadd.f32 0.0, %v1017
  %1019 = vmatmul.f32.gmra.mxu0 %v238
  %v1020 = vpop.f32.mrf.mxu0
  %v1021 = vadd.f32 0.0, %v1020
  %1022 = vmatmul.f32.gmra.mxu0 %v241
  %v1023 = vpop.f32.mrf.mxu0
  %v1024 = vadd.f32 0.0, %v1023
  %1025 = vmatmul.f32.gmra.mxu0 %v244
  %v1026 = vpop.f32.mrf.mxu0
  %v1027 = vadd.f32 0.0, %v1026
  %1028 = vmatmul.f32.gmra.mxu0 %v247
  %v1029 = vpop.f32.mrf.mxu0
  %v1030 = vadd.f32 0.0, %v1029
  %1031 = vmatmul.f32.gmra.mxu0 %v250
  %v1032 = vpop.f32.mrf.mxu0
  %v1033 = vadd.f32 0.0, %v1032
  %1034 = vmatmul.f32.gmra.mxu0 %v253
  %v1035 = vpop.f32.mrf.mxu0
  %v1036 = vadd.f32 0.0, %v1035
  %1037 = vmatmul.f32.gmra.mxu0 %v256
  %v1038 = vpop.f32.mrf.mxu0
  %v1039 = vadd.f32 0.0, %v1038
  %1040 = vmatmul.f32.gmra.mxu0 %v259
  %v1041 = vpop.f32.mrf.mxu0
  %v1042 = vadd.f32 0.0, %v1041
  %1043 = vmatmul.f32.gmra.mxu0 %v262
  %v1044 = vpop.f32.mrf.mxu0
  %v1045 = vadd.f32 0.0, %v1044
  %1046 = vmatmul.f32.gmra.mxu0 %v265
  %v1047 = vpop.f32.mrf.mxu0
  %v1048 = vadd.f32 0.0, %v1047
  %1049 = vmatmul.f32.gmra.mxu0 %v268
  %v1050 = vpop.f32.mrf.mxu0
  %v1051 = vadd.f32 0.0, %v1050
  %1052 = vmatmul.f32.gmra.mxu0 %v271
  %v1053 = vpop.f32.mrf.mxu0
  %v1054 = vadd.f32 0.0, %v1053
  %1055 = vmatmul.f32.gmra.mxu0 %v274
  %v1056 = vpop.f32.mrf.mxu0
  %v1057 = vadd.f32 0.0, %v1056
  %1058 = vmatmul.f32.gmra.mxu0 %v277
  %v1059 = vpop.f32.mrf.mxu0
  %v1060 = vadd.f32 0.0, %v1059
  %1061 = vmatmul.f32.gmra.mxu0 %v280
  %v1062 = vpop.f32.mrf.mxu0
  %v1063 = vadd.f32 0.0, %v1062
  %1064 = vmatmul.f32.gmra.mxu0 %v283
  %v1065 = vpop.f32.mrf.mxu0
  %v1066 = vadd.f32 0.0, %v1065
  %1067 = vmatmul.f32.gmra.mxu0 %v286
  %v1068 = vpop.f32.mrf.mxu0
  %v1069 = vadd.f32 0.0, %v1068
  %1070 = vmatmul.f32.gmra.mxu0 %v289
  %v1071 = vpop.f32.mrf.mxu0
  %v1072 = vadd.f32 0.0, %v1071
  %1073 = vmatmul.f32.gmra.mxu0 %v292
  %v1074 = vpop.f32.mrf.mxu0
  %v1075 = vadd.f32 0.0, %v1074
  %1076 = vmatmul.f32.gmra.mxu0 %v295
  %v1077 = vpop.f32.mrf.mxu0
  %v1078 = vadd.f32 0.0, %v1077
  %1079 = vmatmul.f32.gmra.mxu0 %v298
  %v1080 = vpop.f32.mrf.mxu0
  %v1081 = vadd.f32 0.0, %v1080
  %1082 = vmatmul.f32.gmra.mxu0 %v301
  %v1083 = vpop.f32.mrf.mxu0
  %v1084 = vadd.f32 0.0, %v1083
  %1085 = vmatmul.f32.gmra.mxu0 %v304
  %v1086 = vpop.f32.mrf.mxu0
  %v1087 = vadd.f32 0.0, %v1086
  %1088 = vmatmul.f32.gmra.mxu0 %v307
  %v1089 = vpop.f32.mrf.mxu0
  %v1090 = vadd.f32 0.0, %v1089
  %1091 = vmatmul.f32.gmra.mxu0 %v310
  %v1092 = vpop.f32.mrf.mxu0
  %v1093 = vadd.f32 0.0, %v1092
  %1094 = vmatmul.f32.gmra.mxu0 %v313
  %v1095 = vpop.f32.mrf.mxu0
  %v1096 = vadd.f32 0.0, %v1095
  %1097 = vmatmul.f32.gmra.mxu0 %v316
  %v1098 = vpop.f32.mrf.mxu0
  %v1099 = vadd.f32 0.0, %v1098
  %1100 = vmatmul.f32.gmra.mxu0 %v319
  %v1101 = vpop.f32.mrf.mxu0
  %v1102 = vadd.f32 0.0, %v1101
  %1103 = vmatmul.f32.gmra.mxu0 %v322
  %v1104 = vpop.f32.mrf.mxu0
  %v1105 = vadd.f32 0.0, %v1104
  %1106 = vmatmul.f32.gmra.mxu0 %v325
  %v1107 = vpop.f32.mrf.mxu0
  %v1108 = vadd.f32 0.0, %v1107
  %1109 = vmatmul.f32.gmra.mxu0 %v328
  %v1110 = vpop.f32.mrf.mxu0
  %v1111 = vadd.f32 0.0, %v1110
  %1112 = vmatmul.f32.gmra.mxu0 %v331
  %v1113 = vpop.f32.mrf.mxu0
  %v1114 = vadd.f32 0.0, %v1113
  %1115 = vmatmul.f32.gmra.mxu0 %v334
  %v1116 = vpop.f32.mrf.mxu0
  %v1117 = vadd.f32 0.0, %v1116
  %1118 = vmatmul.f32.gmra.mxu0 %v337
  %v1119 = vpop.f32.mrf.mxu0
  %v1120 = vadd.f32 0.0, %v1119
  %1121 = vmatmul.f32.gmra.mxu0 %v340
  %v1122 = vpop.f32.mrf.mxu0
  %v1123 = vadd.f32 0.0, %v1122
  %1124 = vmatmul.f32.gmra.mxu0 %v343
  %v1125 = vpop.f32.mrf.mxu0
  %v1126 = vadd.f32 0.0, %v1125
  %1127 = vmatmul.f32.gmra.mxu0 %v346
  %v1128 = vpop.f32.mrf.mxu0
  %v1129 = vadd.f32 0.0, %v1128
  %1130 = vmatmul.f32.gmra.mxu0 %v349
  %v1131 = vpop.f32.mrf.mxu0
  %v1132 = vadd.f32 0.0, %v1131
  %1133 = vdwg.mxu0
  %vm1134 = vcmask 1044480
  %v1135 = vrot.slane %v25, 3
  %v1136 = vrot.slane %v26, 3
  %v1137 = vsel %vm1134, %v1135, %v1136
  %1139 = vmatpush.msra.mxu0 0.0
  %1140 = vmatpush.msra.mxu0 0.0
  %1141 = vmatpush.msra.mxu0 0.0
  %1142 = vmatpush.msra.mxu0 0.0
  %1143 = vmatpush.msra.mxu0 0.0
  %1144 = vmatpush.msra.mxu0 0.0
  %1145 = vmatpush.msra.mxu0 0.0
  %1146 = vmatpush.msra.mxu0 0.0
  %1147 = vmatpush.msra.mxu0 0.0
  %1148 = vmatpush.msra.mxu0 0.0
  %1149 = vmatpush.msra.mxu0 0.0
  %1150 = vmatpush.msra.mxu0 0.0
  %1151 = vmatpush.msra.mxu0 0.0
  %1152 = vmatpush.msra.mxu0 0.0
  %1153 = vmatpush.msra.mxu0 0.0
  %1154 = vmatpush.msra.mxu0 %v1137
  %1155 = vmatmul.f32.gmra.mxu0 %v112
  %v1156 = vpop.f32.mrf.mxu0
  %v1157 = vadd.f32 0.0, %v1156
  %1158 = vmatmul.f32.gmra.mxu0 %v115
  %v1159 = vpop.f32.mrf.mxu0
  %v1160 = vadd.f32 0.0, %v1159
  %1161 = vmatmul.f32.gmra.mxu0 %v118
  %v1162 = vpop.f32.mrf.mxu0
  %v1163 = vadd.f32 0.0, %v1162
  %1164 = vmatmul.f32.gmra.mxu0 %v121
  %v1165 = vpop.f32.mrf.mxu0
  %v1166 = vadd.f32 0.0, %v1165
  %1167 = vmatmul.f32.gmra.mxu0 %v124
  %v1168 = vpop.f32.mrf.mxu0
  %v1169 = vadd.f32 0.0, %v1168
  %1170 = vmatmul.f32.gmra.mxu0 %v127
  %v1171 = vpop.f32.mrf.mxu0
  %v1172 = vadd.f32 0.0, %v1171
  %1173 = vmatmul.f32.gmra.mxu0 %v130
  %v1174 = vpop.f32.mrf.mxu0
  %v1175 = vadd.f32 0.0, %v1174
  %1176 = vmatmul.f32.gmra.mxu0 %v133
  %v1177 = vpop.f32.mrf.mxu0
  %v1178 = vadd.f32 0.0, %v1177
  %1179 = vmatmul.f32.gmra.mxu0 %v136
  %v1180 = vpop.f32.mrf.mxu0
  %v1181 = vadd.f32 0.0, %v1180
  %1182 = vmatmul.f32.gmra.mxu0 %v139
  %v1183 = vpop.f32.mrf.mxu0
  %v1184 = vadd.f32 0.0, %v1183
  %1185 = vmatmul.f32.gmra.mxu0 %v142
  %v1186 = vpop.f32.mrf.mxu0
  %v1187 = vadd.f32 0.0, %v1186
  %1188 = vmatmul.f32.gmra.mxu0 %v145
  %v1189 = vpop.f32.mrf.mxu0
  %v1190 = vadd.f32 0.0, %v1189
  %1191 = vmatmul.f32.gmra.mxu0 %v148
  %v1192 = vpop.f32.mrf.mxu0
  %v1193 = vadd.f32 0.0, %v1192
  %1194 = vmatmul.f32.gmra.mxu0 %v151
  %v1195 = vpop.f32.mrf.mxu0
  %v1196 = vadd.f32 0.0, %v1195
  %1197 = vmatmul.f32.gmra.mxu0 %v154
  %v1198 = vpop.f32.mrf.mxu0
  %v1199 = vadd.f32 0.0, %v1198
  %1200 = vmatmul.f32.gmra.mxu0 %v157
  %v1201 = vpop.f32.mrf.mxu0
  %v1202 = vadd.f32 0.0, %v1201
  %1203 = vmatmul.f32.gmra.mxu0 %v160
  %v1204 = vpop.f32.mrf.mxu0
  %v1205 = vadd.f32 0.0, %v1204
  %1206 = vmatmul.f32.gmra.mxu0 %v163
  %v1207 = vpop.f32.mrf.mxu0
  %v1208 = vadd.f32 0.0, %v1207
  %1209 = vmatmul.f32.gmra.mxu0 %v166
  %v1210 = vpop.f32.mrf.mxu0
  %v1211 = vadd.f32 0.0, %v1210
  %1212 = vmatmul.f32.gmra.mxu0 %v169
  %v1213 = vpop.f32.mrf.mxu0
  %v1214 = vadd.f32 0.0, %v1213
  %1215 = vmatmul.f32.gmra.mxu0 %v172
  %v1216 = vpop.f32.mrf.mxu0
  %v1217 = vadd.f32 0.0, %v1216
  %1218 = vmatmul.f32.gmra.mxu0 %v175
  %v1219 = vpop.f32.mrf.mxu0
  %v1220 = vadd.f32 0.0, %v1219
  %1221 = vmatmul.f32.gmra.mxu0 %v178
  %v1222 = vpop.f32.mrf.mxu0
  %v1223 = vadd.f32 0.0, %v1222
  %1224 = vmatmul.f32.gmra.mxu0 %v181
  %v1225 = vpop.f32.mrf.mxu0
  %v1226 = vadd.f32 0.0, %v1225
  %1227 = vmatmul.f32.gmra.mxu0 %v184
  %v1228 = vpop.f32.mrf.mxu0
  %v1229 = vadd.f32 0.0, %v1228
  %1230 = vmatmul.f32.gmra.mxu0 %v187
  %v1231 = vpop.f32.mrf.mxu0
  %v1232 = vadd.f32 0.0, %v1231
  %1233 = vmatmul.f32.gmra.mxu0 %v190
  %v1234 = vpop.f32.mrf.mxu0
  %v1235 = vadd.f32 0.0, %v1234
  %1236 = vmatmul.f32.gmra.mxu0 %v193
  %v1237 = vpop.f32.mrf.mxu0
  %v1238 = vadd.f32 0.0, %v1237
  %1239 = vmatmul.f32.gmra.mxu0 %v196
  %v1240 = vpop.f32.mrf.mxu0
  %v1241 = vadd.f32 0.0, %v1240
  %1242 = vmatmul.f32.gmra.mxu0 %v199
  %v1243 = vpop.f32.mrf.mxu0
  %v1244 = vadd.f32 0.0, %v1243
  %1245 = vmatmul.f32.gmra.mxu0 %v202
  %v1246 = vpop.f32.mrf.mxu0
  %v1247 = vadd.f32 0.0, %v1246
  %1248 = vmatmul.f32.gmra.mxu0 %v205
  %v1249 = vpop.f32.mrf.mxu0
  %v1250 = vadd.f32 0.0, %v1249
  %1251 = vmatmul.f32.gmra.mxu0 %v208
  %v1252 = vpop.f32.mrf.mxu0
  %v1253 = vadd.f32 0.0, %v1252
  %1254 = vmatmul.f32.gmra.mxu0 %v211
  %v1255 = vpop.f32.mrf.mxu0
  %v1256 = vadd.f32 0.0, %v1255
  %1257 = vmatmul.f32.gmra.mxu0 %v214
  %v1258 = vpop.f32.mrf.mxu0
  %v1259 = vadd.f32 0.0, %v1258
  %1260 = vmatmul.f32.gmra.mxu0 %v217
  %v1261 = vpop.f32.mrf.mxu0
  %v1262 = vadd.f32 0.0, %v1261
  %1263 = vmatmul.f32.gmra.mxu0 %v220
  %v1264 = vpop.f32.mrf.mxu0
  %v1265 = vadd.f32 0.0, %v1264
  %1266 = vmatmul.f32.gmra.mxu0 %v223
  %v1267 = vpop.f32.mrf.mxu0
  %v1268 = vadd.f32 0.0, %v1267
  %1269 = vmatmul.f32.gmra.mxu0 %v226
  %v1270 = vpop.f32.mrf.mxu0
  %v1271 = vadd.f32 0.0, %v1270
  %1272 = vmatmul.f32.gmra.mxu0 %v229
  %v1273 = vpop.f32.mrf.mxu0
  %v1274 = vadd.f32 0.0, %v1273
  %1275 = vmatmul.f32.gmra.mxu0 %v232
  %v1276 = vpop.f32.mrf.mxu0
  %v1277 = vadd.f32 0.0, %v1276
  %1278 = vmatmul.f32.gmra.mxu0 %v235
  %v1279 = vpop.f32.mrf.mxu0
  %v1280 = vadd.f32 0.0, %v1279
  %1281 = vmatmul.f32.gmra.mxu0 %v238
  %v1282 = vpop.f32.mrf.mxu0
  %v1283 = vadd.f32 0.0, %v1282
  %1284 = vmatmul.f32.gmra.mxu0 %v241
  %v1285 = vpop.f32.mrf.mxu0
  %v1286 = vadd.f32 0.0, %v1285
  %1287 = vmatmul.f32.gmra.mxu0 %v244
  %v1288 = vpop.f32.mrf.mxu0
  %v1289 = vadd.f32 0.0, %v1288
  %1290 = vmatmul.f32.gmra.mxu0 %v247
  %v1291 = vpop.f32.mrf.mxu0
  %v1292 = vadd.f32 0.0, %v1291
  %1293 = vmatmul.f32.gmra.mxu0 %v250
  %v1294 = vpop.f32.mrf.mxu0
  %v1295 = vadd.f32 0.0, %v1294
  %1296 = vmatmul.f32.gmra.mxu0 %v253
  %v1297 = vpop.f32.mrf.mxu0
  %v1298 = vadd.f32 0.0, %v1297
  %1299 = vmatmul.f32.gmra.mxu0 %v256
  %v1300 = vpop.f32.mrf.mxu0
  %v1301 = vadd.f32 0.0, %v1300
  %1302 = vmatmul.f32.gmra.mxu0 %v259
  %v1303 = vpop.f32.mrf.mxu0
  %v1304 = vadd.f32 0.0, %v1303
  %1305 = vmatmul.f32.gmra.mxu0 %v262
  %v1306 = vpop.f32.mrf.mxu0
  %v1307 = vadd.f32 0.0, %v1306
  %1308 = vmatmul.f32.gmra.mxu0 %v265
  %v1309 = vpop.f32.mrf.mxu0
  %v1310 = vadd.f32 0.0, %v1309
  %1311 = vmatmul.f32.gmra.mxu0 %v268
  %v1312 = vpop.f32.mrf.mxu0
  %v1313 = vadd.f32 0.0, %v1312
  %1314 = vmatmul.f32.gmra.mxu0 %v271
  %v1315 = vpop.f32.mrf.mxu0
  %v1316 = vadd.f32 0.0, %v1315
  %1317 = vmatmul.f32.gmra.mxu0 %v274
  %v1318 = vpop.f32.mrf.mxu0
  %v1319 = vadd.f32 0.0, %v1318
  %1320 = vmatmul.f32.gmra.mxu0 %v277
  %v1321 = vpop.f32.mrf.mxu0
  %v1322 = vadd.f32 0.0, %v1321
  %1323 = vmatmul.f32.gmra.mxu0 %v280
  %v1324 = vpop.f32.mrf.mxu0
  %v1325 = vadd.f32 0.0, %v1324
  %1326 = vmatmul.f32.gmra.mxu0 %v283
  %v1327 = vpop.f32.mrf.mxu0
  %v1328 = vadd.f32 0.0, %v1327
  %1329 = vmatmul.f32.gmra.mxu0 %v286
  %v1330 = vpop.f32.mrf.mxu0
  %v1331 = vadd.f32 0.0, %v1330
  %1332 = vmatmul.f32.gmra.mxu0 %v289
  %v1333 = vpop.f32.mrf.mxu0
  %v1334 = vadd.f32 0.0, %v1333
  %1335 = vmatmul.f32.gmra.mxu0 %v292
  %v1336 = vpop.f32.mrf.mxu0
  %v1337 = vadd.f32 0.0, %v1336
  %1338 = vmatmul.f32.gmra.mxu0 %v295
  %v1339 = vpop.f32.mrf.mxu0
  %v1340 = vadd.f32 0.0, %v1339
  %1341 = vmatmul.f32.gmra.mxu0 %v298
  %v1342 = vpop.f32.mrf.mxu0
  %v1343 = vadd.f32 0.0, %v1342
  %1344 = vmatmul.f32.gmra.mxu0 %v301
  %v1345 = vpop.f32.mrf.mxu0
  %v1346 = vadd.f32 0.0, %v1345
  %1347 = vmatmul.f32.gmra.mxu0 %v304
  %v1348 = vpop.f32.mrf.mxu0
  %v1349 = vadd.f32 0.0, %v1348
  %1350 = vmatmul.f32.gmra.mxu0 %v307
  %v1351 = vpop.f32.mrf.mxu0
  %v1352 = vadd.f32 0.0, %v1351
  %1353 = vmatmul.f32.gmra.mxu0 %v310
  %v1354 = vpop.f32.mrf.mxu0
  %v1355 = vadd.f32 0.0, %v1354
  %1356 = vmatmul.f32.gmra.mxu0 %v313
  %v1357 = vpop.f32.mrf.mxu0
  %v1358 = vadd.f32 0.0, %v1357
  %1359 = vmatmul.f32.gmra.mxu0 %v316
  %v1360 = vpop.f32.mrf.mxu0
  %v1361 = vadd.f32 0.0, %v1360
  %1362 = vmatmul.f32.gmra.mxu0 %v319
  %v1363 = vpop.f32.mrf.mxu0
  %v1364 = vadd.f32 0.0, %v1363
  %1365 = vmatmul.f32.gmra.mxu0 %v322
  %v1366 = vpop.f32.mrf.mxu0
  %v1367 = vadd.f32 0.0, %v1366
  %1368 = vmatmul.f32.gmra.mxu0 %v325
  %v1369 = vpop.f32.mrf.mxu0
  %v1370 = vadd.f32 0.0, %v1369
  %1371 = vmatmul.f32.gmra.mxu0 %v328
  %v1372 = vpop.f32.mrf.mxu0
  %v1373 = vadd.f32 0.0, %v1372
  %1374 = vmatmul.f32.gmra.mxu0 %v331
  %v1375 = vpop.f32.mrf.mxu0
  %v1376 = vadd.f32 0.0, %v1375
  %1377 = vmatmul.f32.gmra.mxu0 %v334
  %v1378 = vpop.f32.mrf.mxu0
  %v1379 = vadd.f32 0.0, %v1378
  %1380 = vmatmul.f32.gmra.mxu0 %v337
  %v1381 = vpop.f32.mrf.mxu0
  %v1382 = vadd.f32 0.0, %v1381
  %1383 = vmatmul.f32.gmra.mxu0 %v340
  %v1384 = vpop.f32.mrf.mxu0
  %v1385 = vadd.f32 0.0, %v1384
  %1386 = vmatmul.f32.gmra.mxu0 %v343
  %v1387 = vpop.f32.mrf.mxu0
  %v1388 = vadd.f32 0.0, %v1387
  %1389 = vmatmul.f32.gmra.mxu0 %v346
  %v1390 = vpop.f32.mrf.mxu0
  %v1391 = vadd.f32 0.0, %v1390
  %1392 = vmatmul.f32.gmra.mxu0 %v349
  %v1393 = vpop.f32.mrf.mxu0
  %v1394 = vadd.f32 0.0, %v1393
  %1395 = vdwg.mxu0
  %vm1396 = vcmask 1043456
  %v1397 = vrot.slane %v25, 4
  %v1398 = vrot.slane %v26, 4
  %v1399 = vsel %vm1396, %v1397, %v1398
  %1401 = vmatpush.msra.mxu0 0.0
  %1402 = vmatpush.msra.mxu0 0.0
  %1403 = vmatpush.msra.mxu0 0.0
  %1404 = vmatpush.msra.mxu0 0.0
  %1405 = vmatpush.msra.mxu0 0.0
  %1406 = vmatpush.msra.mxu0 0.0
  %1407 = vmatpush.msra.mxu0 0.0
  %1408 = vmatpush.msra.mxu0 0.0
  %1409 = vmatpush.msra.mxu0 0.0
  %1410 = vmatpush.msra.mxu0 0.0
  %1411 = vmatpush.msra.mxu0 0.0
  %1412 = vmatpush.msra.mxu0 0.0
  %1413 = vmatpush.msra.mxu0 0.0
  %1414 = vmatpush.msra.mxu0 0.0
  %1415 = vmatpush.msra.mxu0 0.0
  %1416 = vmatpush.msra.mxu0 %v1399
  %1417 = vmatmul.f32.gmra.mxu0 %v112
  %v1418 = vpop.f32.mrf.mxu0
  %v1419 = vadd.f32 0.0, %v1418
  %1420 = vmatmul.f32.gmra.mxu0 %v115
  %v1421 = vpop.f32.mrf.mxu0
  %v1422 = vadd.f32 0.0, %v1421
  %1423 = vmatmul.f32.gmra.mxu0 %v118
  %v1424 = vpop.f32.mrf.mxu0
  %v1425 = vadd.f32 0.0, %v1424
  %1426 = vmatmul.f32.gmra.mxu0 %v121
  %v1427 = vpop.f32.mrf.mxu0
  %v1428 = vadd.f32 0.0, %v1427
  %1429 = vmatmul.f32.gmra.mxu0 %v124
  %v1430 = vpop.f32.mrf.mxu0
  %v1431 = vadd.f32 0.0, %v1430
  %1432 = vmatmul.f32.gmra.mxu0 %v127
  %v1433 = vpop.f32.mrf.mxu0
  %v1434 = vadd.f32 0.0, %v1433
  %1435 = vmatmul.f32.gmra.mxu0 %v130
  %v1436 = vpop.f32.mrf.mxu0
  %v1437 = vadd.f32 0.0, %v1436
  %1438 = vmatmul.f32.gmra.mxu0 %v133
  %v1439 = vpop.f32.mrf.mxu0
  %v1440 = vadd.f32 0.0, %v1439
  %1441 = vmatmul.f32.gmra.mxu0 %v136
  %v1442 = vpop.f32.mrf.mxu0
  %v1443 = vadd.f32 0.0, %v1442
  %1444 = vmatmul.f32.gmra.mxu0 %v139
  %v1445 = vpop.f32.mrf.mxu0
  %v1446 = vadd.f32 0.0, %v1445
  %1447 = vmatmul.f32.gmra.mxu0 %v142
  %v1448 = vpop.f32.mrf.mxu0
  %v1449 = vadd.f32 0.0, %v1448
  %1450 = vmatmul.f32.gmra.mxu0 %v145
  %v1451 = vpop.f32.mrf.mxu0
  %v1452 = vadd.f32 0.0, %v1451
  %1453 = vmatmul.f32.gmra.mxu0 %v148
  %v1454 = vpop.f32.mrf.mxu0
  %v1455 = vadd.f32 0.0, %v1454
  %1456 = vmatmul.f32.gmra.mxu0 %v151
  %v1457 = vpop.f32.mrf.mxu0
  %v1458 = vadd.f32 0.0, %v1457
  %1459 = vmatmul.f32.gmra.mxu0 %v154
  %v1460 = vpop.f32.mrf.mxu0
  %v1461 = vadd.f32 0.0, %v1460
  %1462 = vmatmul.f32.gmra.mxu0 %v157
  %v1463 = vpop.f32.mrf.mxu0
  %v1464 = vadd.f32 0.0, %v1463
  %1465 = vmatmul.f32.gmra.mxu0 %v160
  %v1466 = vpop.f32.mrf.mxu0
  %v1467 = vadd.f32 0.0, %v1466
  %1468 = vmatmul.f32.gmra.mxu0 %v163
  %v1469 = vpop.f32.mrf.mxu0
  %v1470 = vadd.f32 0.0, %v1469
  %1471 = vmatmul.f32.gmra.mxu0 %v166
  %v1472 = vpop.f32.mrf.mxu0
  %v1473 = vadd.f32 0.0, %v1472
  %1474 = vmatmul.f32.gmra.mxu0 %v169
  %v1475 = vpop.f32.mrf.mxu0
  %v1476 = vadd.f32 0.0, %v1475
  %1477 = vmatmul.f32.gmra.mxu0 %v172
  %v1478 = vpop.f32.mrf.mxu0
  %v1479 = vadd.f32 0.0, %v1478
  %1480 = vmatmul.f32.gmra.mxu0 %v175
  %v1481 = vpop.f32.mrf.mxu0
  %v1482 = vadd.f32 0.0, %v1481
  %1483 = vmatmul.f32.gmra.mxu0 %v178
  %v1484 = vpop.f32.mrf.mxu0
  %v1485 = vadd.f32 0.0, %v1484
  %1486 = vmatmul.f32.gmra.mxu0 %v181
  %v1487 = vpop.f32.mrf.mxu0
  %v1488 = vadd.f32 0.0, %v1487
  %1489 = vmatmul.f32.gmra.mxu0 %v184
  %v1490 = vpop.f32.mrf.mxu0
  %v1491 = vadd.f32 0.0, %v1490
  %1492 = vmatmul.f32.gmra.mxu0 %v187
  %v1493 = vpop.f32.mrf.mxu0
  %v1494 = vadd.f32 0.0, %v1493
  %1495 = vmatmul.f32.gmra.mxu0 %v190
  %v1496 = vpop.f32.mrf.mxu0
  %v1497 = vadd.f32 0.0, %v1496
  %1498 = vmatmul.f32.gmra.mxu0 %v193
  %v1499 = vpop.f32.mrf.mxu0
  %v1500 = vadd.f32 0.0, %v1499
  %1501 = vmatmul.f32.gmra.mxu0 %v196
  %v1502 = vpop.f32.mrf.mxu0
  %v1503 = vadd.f32 0.0, %v1502
  %1504 = vmatmul.f32.gmra.mxu0 %v199
  %v1505 = vpop.f32.mrf.mxu0
  %v1506 = vadd.f32 0.0, %v1505
  %1507 = vmatmul.f32.gmra.mxu0 %v202
  %v1508 = vpop.f32.mrf.mxu0
  %v1509 = vadd.f32 0.0, %v1508
  %1510 = vmatmul.f32.gmra.mxu0 %v205
  %v1511 = vpop.f32.mrf.mxu0
  %v1512 = vadd.f32 0.0, %v1511
  %1513 = vmatmul.f32.gmra.mxu0 %v208
  %v1514 = vpop.f32.mrf.mxu0
  %v1515 = vadd.f32 0.0, %v1514
  %1516 = vmatmul.f32.gmra.mxu0 %v211
  %v1517 = vpop.f32.mrf.mxu0
  %v1518 = vadd.f32 0.0, %v1517
  %1519 = vmatmul.f32.gmra.mxu0 %v214
  %v1520 = vpop.f32.mrf.mxu0
  %v1521 = vadd.f32 0.0, %v1520
  %1522 = vmatmul.f32.gmra.mxu0 %v217
  %v1523 = vpop.f32.mrf.mxu0
  %v1524 = vadd.f32 0.0, %v1523
  %1525 = vmatmul.f32.gmra.mxu0 %v220
  %v1526 = vpop.f32.mrf.mxu0
  %v1527 = vadd.f32 0.0, %v1526
  %1528 = vmatmul.f32.gmra.mxu0 %v223
  %v1529 = vpop.f32.mrf.mxu0
  %v1530 = vadd.f32 0.0, %v1529
  %1531 = vmatmul.f32.gmra.mxu0 %v226
  %v1532 = vpop.f32.mrf.mxu0
  %v1533 = vadd.f32 0.0, %v1532
  %1534 = vmatmul.f32.gmra.mxu0 %v229
  %v1535 = vpop.f32.mrf.mxu0
  %v1536 = vadd.f32 0.0, %v1535
  %1537 = vmatmul.f32.gmra.mxu0 %v232
  %v1538 = vpop.f32.mrf.mxu0
  %v1539 = vadd.f32 0.0, %v1538
  %1540 = vmatmul.f32.gmra.mxu0 %v235
  %v1541 = vpop.f32.mrf.mxu0
  %v1542 = vadd.f32 0.0, %v1541
  %1543 = vmatmul.f32.gmra.mxu0 %v238
  %v1544 = vpop.f32.mrf.mxu0
  %v1545 = vadd.f32 0.0, %v1544
  %1546 = vmatmul.f32.gmra.mxu0 %v241
  %v1547 = vpop.f32.mrf.mxu0
  %v1548 = vadd.f32 0.0, %v1547
  %1549 = vmatmul.f32.gmra.mxu0 %v244
  %v1550 = vpop.f32.mrf.mxu0
  %v1551 = vadd.f32 0.0, %v1550
  %1552 = vmatmul.f32.gmra.mxu0 %v247
  %v1553 = vpop.f32.mrf.mxu0
  %v1554 = vadd.f32 0.0, %v1553
  %1555 = vmatmul.f32.gmra.mxu0 %v250
  %v1556 = vpop.f32.mrf.mxu0
  %v1557 = vadd.f32 0.0, %v1556
  %1558 = vmatmul.f32.gmra.mxu0 %v253
  %v1559 = vpop.f32.mrf.mxu0
  %v1560 = vadd.f32 0.0, %v1559
  %1561 = vmatmul.f32.gmra.mxu0 %v256
  %v1562 = vpop.f32.mrf.mxu0
  %v1563 = vadd.f32 0.0, %v1562
  %1564 = vmatmul.f32.gmra.mxu0 %v259
  %v1565 = vpop.f32.mrf.mxu0
  %v1566 = vadd.f32 0.0, %v1565
  %1567 = vmatmul.f32.gmra.mxu0 %v262
  %v1568 = vpop.f32.mrf.mxu0
  %v1569 = vadd.f32 0.0, %v1568
  %1570 = vmatmul.f32.gmra.mxu0 %v265
  %v1571 = vpop.f32.mrf.mxu0
  %v1572 = vadd.f32 0.0, %v1571
  %1573 = vmatmul.f32.gmra.mxu0 %v268
  %v1574 = vpop.f32.mrf.mxu0
  %v1575 = vadd.f32 0.0, %v1574
  %1576 = vmatmul.f32.gmra.mxu0 %v271
  %v1577 = vpop.f32.mrf.mxu0
  %v1578 = vadd.f32 0.0, %v1577
  %1579 = vmatmul.f32.gmra.mxu0 %v274
  %v1580 = vpop.f32.mrf.mxu0
  %v1581 = vadd.f32 0.0, %v1580
  %1582 = vmatmul.f32.gmra.mxu0 %v277
  %v1583 = vpop.f32.mrf.mxu0
  %v1584 = vadd.f32 0.0, %v1583
  %1585 = vmatmul.f32.gmra.mxu0 %v280
  %v1586 = vpop.f32.mrf.mxu0
  %v1587 = vadd.f32 0.0, %v1586
  %1588 = vmatmul.f32.gmra.mxu0 %v283
  %v1589 = vpop.f32.mrf.mxu0
  %v1590 = vadd.f32 0.0, %v1589
  %1591 = vmatmul.f32.gmra.mxu0 %v286
  %v1592 = vpop.f32.mrf.mxu0
  %v1593 = vadd.f32 0.0, %v1592
  %1594 = vmatmul.f32.gmra.mxu0 %v289
  %v1595 = vpop.f32.mrf.mxu0
  %v1596 = vadd.f32 0.0, %v1595
  %1597 = vmatmul.f32.gmra.mxu0 %v292
  %v1598 = vpop.f32.mrf.mxu0
  %v1599 = vadd.f32 0.0, %v1598
  %1600 = vmatmul.f32.gmra.mxu0 %v295
  %v1601 = vpop.f32.mrf.mxu0
  %v1602 = vadd.f32 0.0, %v1601
  %1603 = vmatmul.f32.gmra.mxu0 %v298
  %v1604 = vpop.f32.mrf.mxu0
  %v1605 = vadd.f32 0.0, %v1604
  %1606 = vmatmul.f32.gmra.mxu0 %v301
  %v1607 = vpop.f32.mrf.mxu0
  %v1608 = vadd.f32 0.0, %v1607
  %1609 = vmatmul.f32.gmra.mxu0 %v304
  %v1610 = vpop.f32.mrf.mxu0
  %v1611 = vadd.f32 0.0, %v1610
  %1612 = vmatmul.f32.gmra.mxu0 %v307
  %v1613 = vpop.f32.mrf.mxu0
  %v1614 = vadd.f32 0.0, %v1613
  %1615 = vmatmul.f32.gmra.mxu0 %v310
  %v1616 = vpop.f32.mrf.mxu0
  %v1617 = vadd.f32 0.0, %v1616
  %1618 = vmatmul.f32.gmra.mxu0 %v313
  %v1619 = vpop.f32.mrf.mxu0
  %v1620 = vadd.f32 0.0, %v1619
  %1621 = vmatmul.f32.gmra.mxu0 %v316
  %v1622 = vpop.f32.mrf.mxu0
  %v1623 = vadd.f32 0.0, %v1622
  %1624 = vmatmul.f32.gmra.mxu0 %v319
  %v1625 = vpop.f32.mrf.mxu0
  %v1626 = vadd.f32 0.0, %v1625
  %1627 = vmatmul.f32.gmra.mxu0 %v322
  %v1628 = vpop.f32.mrf.mxu0
  %v1629 = vadd.f32 0.0, %v1628
  %1630 = vmatmul.f32.gmra.mxu0 %v325
  %v1631 = vpop.f32.mrf.mxu0
  %v1632 = vadd.f32 0.0, %v1631
  %1633 = vmatmul.f32.gmra.mxu0 %v328
  %v1634 = vpop.f32.mrf.mxu0
  %v1635 = vadd.f32 0.0, %v1634
  %1636 = vmatmul.f32.gmra.mxu0 %v331
  %v1637 = vpop.f32.mrf.mxu0
  %v1638 = vadd.f32 0.0, %v1637
  %1639 = vmatmul.f32.gmra.mxu0 %v334
  %v1640 = vpop.f32.mrf.mxu0
  %v1641 = vadd.f32 0.0, %v1640
  %1642 = vmatmul.f32.gmra.mxu0 %v337
  %v1643 = vpop.f32.mrf.mxu0
  %v1644 = vadd.f32 0.0, %v1643
  %1645 = vmatmul.f32.gmra.mxu0 %v340
  %v1646 = vpop.f32.mrf.mxu0
  %v1647 = vadd.f32 0.0, %v1646
  %1648 = vmatmul.f32.gmra.mxu0 %v343
  %v1649 = vpop.f32.mrf.mxu0
  %v1650 = vadd.f32 0.0, %v1649
  %1651 = vmatmul.f32.gmra.mxu0 %v346
  %v1652 = vpop.f32.mrf.mxu0
  %v1653 = vadd.f32 0.0, %v1652
  %1654 = vmatmul.f32.gmra.mxu0 %v349
  %v1655 = vpop.f32.mrf.mxu0
  %v1656 = vadd.f32 0.0, %v1655
  %1657 = vdwg.mxu0
  %vm1658 = vcmask 1042432
  %v1659 = vrot.slane %v25, 5
  %v1660 = vrot.slane %v26, 5
  %v1661 = vsel %vm1658, %v1659, %v1660
  %1663 = vmatpush.msra.mxu0 0.0
  %1664 = vmatpush.msra.mxu0 0.0
  %1665 = vmatpush.msra.mxu0 0.0
  %1666 = vmatpush.msra.mxu0 0.0
  %1667 = vmatpush.msra.mxu0 0.0
  %1668 = vmatpush.msra.mxu0 0.0
  %1669 = vmatpush.msra.mxu0 0.0
  %1670 = vmatpush.msra.mxu0 0.0
  %1671 = vmatpush.msra.mxu0 0.0
  %1672 = vmatpush.msra.mxu0 0.0
  %1673 = vmatpush.msra.mxu0 0.0
  %1674 = vmatpush.msra.mxu0 0.0
  %1675 = vmatpush.msra.mxu0 0.0
  %1676 = vmatpush.msra.mxu0 0.0
  %1677 = vmatpush.msra.mxu0 0.0
  %1678 = vmatpush.msra.mxu0 %v1661
  %1679 = vmatmul.f32.gmra.mxu0 %v112
  %v1680 = vpop.f32.mrf.mxu0
  %v1681 = vadd.f32 0.0, %v1680
  %1682 = vmatmul.f32.gmra.mxu0 %v115
  %v1683 = vpop.f32.mrf.mxu0
  %v1684 = vadd.f32 0.0, %v1683
  %1685 = vmatmul.f32.gmra.mxu0 %v118
  %v1686 = vpop.f32.mrf.mxu0
  %v1687 = vadd.f32 0.0, %v1686
  %1688 = vmatmul.f32.gmra.mxu0 %v121
  %v1689 = vpop.f32.mrf.mxu0
  %v1690 = vadd.f32 0.0, %v1689
  %1691 = vmatmul.f32.gmra.mxu0 %v124
  %v1692 = vpop.f32.mrf.mxu0
  %v1693 = vadd.f32 0.0, %v1692
  %1694 = vmatmul.f32.gmra.mxu0 %v127
  %v1695 = vpop.f32.mrf.mxu0
  %v1696 = vadd.f32 0.0, %v1695
  %1697 = vmatmul.f32.gmra.mxu0 %v130
  %v1698 = vpop.f32.mrf.mxu0
  %v1699 = vadd.f32 0.0, %v1698
  %1700 = vmatmul.f32.gmra.mxu0 %v133
  %v1701 = vpop.f32.mrf.mxu0
  %v1702 = vadd.f32 0.0, %v1701
  %1703 = vmatmul.f32.gmra.mxu0 %v136
  %v1704 = vpop.f32.mrf.mxu0
  %v1705 = vadd.f32 0.0, %v1704
  %1706 = vmatmul.f32.gmra.mxu0 %v139
  %v1707 = vpop.f32.mrf.mxu0
  %v1708 = vadd.f32 0.0, %v1707
  %1709 = vmatmul.f32.gmra.mxu0 %v142
  %v1710 = vpop.f32.mrf.mxu0
  %v1711 = vadd.f32 0.0, %v1710
  %1712 = vmatmul.f32.gmra.mxu0 %v145
  %v1713 = vpop.f32.mrf.mxu0
  %v1714 = vadd.f32 0.0, %v1713
  %1715 = vmatmul.f32.gmra.mxu0 %v148
  %v1716 = vpop.f32.mrf.mxu0
  %v1717 = vadd.f32 0.0, %v1716
  %1718 = vmatmul.f32.gmra.mxu0 %v151
  %v1719 = vpop.f32.mrf.mxu0
  %v1720 = vadd.f32 0.0, %v1719
  %1721 = vmatmul.f32.gmra.mxu0 %v154
  %v1722 = vpop.f32.mrf.mxu0
  %v1723 = vadd.f32 0.0, %v1722
  %1724 = vmatmul.f32.gmra.mxu0 %v157
  %v1725 = vpop.f32.mrf.mxu0
  %v1726 = vadd.f32 0.0, %v1725
  %1727 = vmatmul.f32.gmra.mxu0 %v160
  %v1728 = vpop.f32.mrf.mxu0
  %v1729 = vadd.f32 0.0, %v1728
  %1730 = vmatmul.f32.gmra.mxu0 %v163
  %v1731 = vpop.f32.mrf.mxu0
  %v1732 = vadd.f32 0.0, %v1731
  %1733 = vmatmul.f32.gmra.mxu0 %v166
  %v1734 = vpop.f32.mrf.mxu0
  %v1735 = vadd.f32 0.0, %v1734
  %1736 = vmatmul.f32.gmra.mxu0 %v169
  %v1737 = vpop.f32.mrf.mxu0
  %v1738 = vadd.f32 0.0, %v1737
  %1739 = vmatmul.f32.gmra.mxu0 %v172
  %v1740 = vpop.f32.mrf.mxu0
  %v1741 = vadd.f32 0.0, %v1740
  %1742 = vmatmul.f32.gmra.mxu0 %v175
  %v1743 = vpop.f32.mrf.mxu0
  %v1744 = vadd.f32 0.0, %v1743
  %1745 = vmatmul.f32.gmra.mxu0 %v178
  %v1746 = vpop.f32.mrf.mxu0
  %v1747 = vadd.f32 0.0, %v1746
  %1748 = vmatmul.f32.gmra.mxu0 %v181
  %v1749 = vpop.f32.mrf.mxu0
  %v1750 = vadd.f32 0.0, %v1749
  %1751 = vmatmul.f32.gmra.mxu0 %v184
  %v1752 = vpop.f32.mrf.mxu0
  %v1753 = vadd.f32 0.0, %v1752
  %1754 = vmatmul.f32.gmra.mxu0 %v187
  %v1755 = vpop.f32.mrf.mxu0
  %v1756 = vadd.f32 0.0, %v1755
  %1757 = vmatmul.f32.gmra.mxu0 %v190
  %v1758 = vpop.f32.mrf.mxu0
  %v1759 = vadd.f32 0.0, %v1758
  %1760 = vmatmul.f32.gmra.mxu0 %v193
  %v1761 = vpop.f32.mrf.mxu0
  %v1762 = vadd.f32 0.0, %v1761
  %1763 = vmatmul.f32.gmra.mxu0 %v196
  %v1764 = vpop.f32.mrf.mxu0
  %v1765 = vadd.f32 0.0, %v1764
  %1766 = vmatmul.f32.gmra.mxu0 %v199
  %v1767 = vpop.f32.mrf.mxu0
  %v1768 = vadd.f32 0.0, %v1767
  %1769 = vmatmul.f32.gmra.mxu0 %v202
  %v1770 = vpop.f32.mrf.mxu0
  %v1771 = vadd.f32 0.0, %v1770
  %1772 = vmatmul.f32.gmra.mxu0 %v205
  %v1773 = vpop.f32.mrf.mxu0
  %v1774 = vadd.f32 0.0, %v1773
  %1775 = vmatmul.f32.gmra.mxu0 %v208
  %v1776 = vpop.f32.mrf.mxu0
  %v1777 = vadd.f32 0.0, %v1776
  %1778 = vmatmul.f32.gmra.mxu0 %v211
  %v1779 = vpop.f32.mrf.mxu0
  %v1780 = vadd.f32 0.0, %v1779
  %1781 = vmatmul.f32.gmra.mxu0 %v214
  %v1782 = vpop.f32.mrf.mxu0
  %v1783 = vadd.f32 0.0, %v1782
  %1784 = vmatmul.f32.gmra.mxu0 %v217
  %v1785 = vpop.f32.mrf.mxu0
  %v1786 = vadd.f32 0.0, %v1785
  %1787 = vmatmul.f32.gmra.mxu0 %v220
  %v1788 = vpop.f32.mrf.mxu0
  %v1789 = vadd.f32 0.0, %v1788
  %1790 = vmatmul.f32.gmra.mxu0 %v223
  %v1791 = vpop.f32.mrf.mxu0
  %v1792 = vadd.f32 0.0, %v1791
  %1793 = vmatmul.f32.gmra.mxu0 %v226
  %v1794 = vpop.f32.mrf.mxu0
  %v1795 = vadd.f32 0.0, %v1794
  %1796 = vmatmul.f32.gmra.mxu0 %v229
  %v1797 = vpop.f32.mrf.mxu0
  %v1798 = vadd.f32 0.0, %v1797
  %1799 = vmatmul.f32.gmra.mxu0 %v232
  %v1800 = vpop.f32.mrf.mxu0
  %v1801 = vadd.f32 0.0, %v1800
  %1802 = vmatmul.f32.gmra.mxu0 %v235
  %v1803 = vpop.f32.mrf.mxu0
  %v1804 = vadd.f32 0.0, %v1803
  %1805 = vmatmul.f32.gmra.mxu0 %v238
  %v1806 = vpop.f32.mrf.mxu0
  %v1807 = vadd.f32 0.0, %v1806
  %1808 = vmatmul.f32.gmra.mxu0 %v241
  %v1809 = vpop.f32.mrf.mxu0
  %v1810 = vadd.f32 0.0, %v1809
  %1811 = vmatmul.f32.gmra.mxu0 %v244
  %v1812 = vpop.f32.mrf.mxu0
  %v1813 = vadd.f32 0.0, %v1812
  %1814 = vmatmul.f32.gmra.mxu0 %v247
  %v1815 = vpop.f32.mrf.mxu0
  %v1816 = vadd.f32 0.0, %v1815
  %1817 = vmatmul.f32.gmra.mxu0 %v250
  %v1818 = vpop.f32.mrf.mxu0
  %v1819 = vadd.f32 0.0, %v1818
  %1820 = vmatmul.f32.gmra.mxu0 %v253
  %v1821 = vpop.f32.mrf.mxu0
  %v1822 = vadd.f32 0.0, %v1821
  %1823 = vmatmul.f32.gmra.mxu0 %v256
  %v1824 = vpop.f32.mrf.mxu0
  %v1825 = vadd.f32 0.0, %v1824
  %1826 = vmatmul.f32.gmra.mxu0 %v259
  %v1827 = vpop.f32.mrf.mxu0
  %v1828 = vadd.f32 0.0, %v1827
  %1829 = vmatmul.f32.gmra.mxu0 %v262
  %v1830 = vpop.f32.mrf.mxu0
  %v1831 = vadd.f32 0.0, %v1830
  %1832 = vmatmul.f32.gmra.mxu0 %v265
  %v1833 = vpop.f32.mrf.mxu0
  %v1834 = vadd.f32 0.0, %v1833
  %1835 = vmatmul.f32.gmra.mxu0 %v268
  %v1836 = vpop.f32.mrf.mxu0
  %v1837 = vadd.f32 0.0, %v1836
  %1838 = vmatmul.f32.gmra.mxu0 %v271
  %v1839 = vpop.f32.mrf.mxu0
  %v1840 = vadd.f32 0.0, %v1839
  %1841 = vmatmul.f32.gmra.mxu0 %v274
  %v1842 = vpop.f32.mrf.mxu0
  %v1843 = vadd.f32 0.0, %v1842
  %1844 = vmatmul.f32.gmra.mxu0 %v277
  %v1845 = vpop.f32.mrf.mxu0
  %v1846 = vadd.f32 0.0, %v1845
  %1847 = vmatmul.f32.gmra.mxu0 %v280
  %v1848 = vpop.f32.mrf.mxu0
  %v1849 = vadd.f32 0.0, %v1848
  %1850 = vmatmul.f32.gmra.mxu0 %v283
  %v1851 = vpop.f32.mrf.mxu0
  %v1852 = vadd.f32 0.0, %v1851
  %1853 = vmatmul.f32.gmra.mxu0 %v286
  %v1854 = vpop.f32.mrf.mxu0
  %v1855 = vadd.f32 0.0, %v1854
  %1856 = vmatmul.f32.gmra.mxu0 %v289
  %v1857 = vpop.f32.mrf.mxu0
  %v1858 = vadd.f32 0.0, %v1857
  %1859 = vmatmul.f32.gmra.mxu0 %v292
  %v1860 = vpop.f32.mrf.mxu0
  %v1861 = vadd.f32 0.0, %v1860
  %1862 = vmatmul.f32.gmra.mxu0 %v295
  %v1863 = vpop.f32.mrf.mxu0
  %v1864 = vadd.f32 0.0, %v1863
  %1865 = vmatmul.f32.gmra.mxu0 %v298
  %v1866 = vpop.f32.mrf.mxu0
  %v1867 = vadd.f32 0.0, %v1866
  %1868 = vmatmul.f32.gmra.mxu0 %v301
  %v1869 = vpop.f32.mrf.mxu0
  %v1870 = vadd.f32 0.0, %v1869
  %1871 = vmatmul.f32.gmra.mxu0 %v304
  %v1872 = vpop.f32.mrf.mxu0
  %v1873 = vadd.f32 0.0, %v1872
  %1874 = vmatmul.f32.gmra.mxu0 %v307
  %v1875 = vpop.f32.mrf.mxu0
  %v1876 = vadd.f32 0.0, %v1875
  %1877 = vmatmul.f32.gmra.mxu0 %v310
  %v1878 = vpop.f32.mrf.mxu0
  %v1879 = vadd.f32 0.0, %v1878
  %1880 = vmatmul.f32.gmra.mxu0 %v313
  %v1881 = vpop.f32.mrf.mxu0
  %v1882 = vadd.f32 0.0, %v1881
  %1883 = vmatmul.f32.gmra.mxu0 %v316
  %v1884 = vpop.f32.mrf.mxu0
  %v1885 = vadd.f32 0.0, %v1884
  %1886 = vmatmul.f32.gmra.mxu0 %v319
  %v1887 = vpop.f32.mrf.mxu0
  %v1888 = vadd.f32 0.0, %v1887
  %1889 = vmatmul.f32.gmra.mxu0 %v322
  %v1890 = vpop.f32.mrf.mxu0
  %v1891 = vadd.f32 0.0, %v1890
  %1892 = vmatmul.f32.gmra.mxu0 %v325
  %v1893 = vpop.f32.mrf.mxu0
  %v1894 = vadd.f32 0.0, %v1893
  %1895 = vmatmul.f32.gmra.mxu0 %v328
  %v1896 = vpop.f32.mrf.mxu0
  %v1897 = vadd.f32 0.0, %v1896
  %1898 = vmatmul.f32.gmra.mxu0 %v331
  %v1899 = vpop.f32.mrf.mxu0
  %v1900 = vadd.f32 0.0, %v1899
  %1901 = vmatmul.f32.gmra.mxu0 %v334
  %v1902 = vpop.f32.mrf.mxu0
  %v1903 = vadd.f32 0.0, %v1902
  %1904 = vmatmul.f32.gmra.mxu0 %v337
  %v1905 = vpop.f32.mrf.mxu0
  %v1906 = vadd.f32 0.0, %v1905
  %1907 = vmatmul.f32.gmra.mxu0 %v340
  %v1908 = vpop.f32.mrf.mxu0
  %v1909 = vadd.f32 0.0, %v1908
  %1910 = vmatmul.f32.gmra.mxu0 %v343
  %v1911 = vpop.f32.mrf.mxu0
  %v1912 = vadd.f32 0.0, %v1911
  %1913 = vmatmul.f32.gmra.mxu0 %v346
  %v1914 = vpop.f32.mrf.mxu0
  %v1915 = vadd.f32 0.0, %v1914
  %1916 = vmatmul.f32.gmra.mxu0 %v349
  %v1917 = vpop.f32.mrf.mxu0
  %v1918 = vadd.f32 0.0, %v1917
  %1919 = vdwg.mxu0
  %vm1920 = vcmask 1041408
  %v1921 = vrot.slane %v25, 6
  %v1922 = vrot.slane %v26, 6
  %v1923 = vsel %vm1920, %v1921, %v1922
  %1925 = vmatpush.msra.mxu0 0.0
  %1926 = vmatpush.msra.mxu0 0.0
  %1927 = vmatpush.msra.mxu0 0.0
  %1928 = vmatpush.msra.mxu0 0.0
  %1929 = vmatpush.msra.mxu0 0.0
  %1930 = vmatpush.msra.mxu0 0.0
  %1931 = vmatpush.msra.mxu0 0.0
  %1932 = vmatpush.msra.mxu0 0.0
  %1933 = vmatpush.msra.mxu0 0.0
  %1934 = vmatpush.msra.mxu0 0.0
  %1935 = vmatpush.msra.mxu0 0.0
  %1936 = vmatpush.msra.mxu0 0.0
  %1937 = vmatpush.msra.mxu0 0.0
  %1938 = vmatpush.msra.mxu0 0.0
  %1939 = vmatpush.msra.mxu0 0.0
  %1940 = vmatpush.msra.mxu0 %v1923
  %1941 = vmatmul.f32.gmra.mxu0 %v112
  %v1942 = vpop.f32.mrf.mxu0
  %v1943 = vadd.f32 0.0, %v1942
  %1944 = vmatmul.f32.gmra.mxu0 %v115
  %v1945 = vpop.f32.mrf.mxu0
  %v1946 = vadd.f32 0.0, %v1945
  %1947 = vmatmul.f32.gmra.mxu0 %v118
  %v1948 = vpop.f32.mrf.mxu0
  %v1949 = vadd.f32 0.0, %v1948
  %1950 = vmatmul.f32.gmra.mxu0 %v121
  %v1951 = vpop.f32.mrf.mxu0
  %v1952 = vadd.f32 0.0, %v1951
  %1953 = vmatmul.f32.gmra.mxu0 %v124
  %v1954 = vpop.f32.mrf.mxu0
  %v1955 = vadd.f32 0.0, %v1954
  %1956 = vmatmul.f32.gmra.mxu0 %v127
  %v1957 = vpop.f32.mrf.mxu0
  %v1958 = vadd.f32 0.0, %v1957
  %1959 = vmatmul.f32.gmra.mxu0 %v130
  %v1960 = vpop.f32.mrf.mxu0
  %v1961 = vadd.f32 0.0, %v1960
  %1962 = vmatmul.f32.gmra.mxu0 %v133
  %v1963 = vpop.f32.mrf.mxu0
  %v1964 = vadd.f32 0.0, %v1963
  %1965 = vmatmul.f32.gmra.mxu0 %v136
  %v1966 = vpop.f32.mrf.mxu0
  %v1967 = vadd.f32 0.0, %v1966
  %1968 = vmatmul.f32.gmra.mxu0 %v139
  %v1969 = vpop.f32.mrf.mxu0
  %v1970 = vadd.f32 0.0, %v1969
  %1971 = vmatmul.f32.gmra.mxu0 %v142
  %v1972 = vpop.f32.mrf.mxu0
  %v1973 = vadd.f32 0.0, %v1972
  %1974 = vmatmul.f32.gmra.mxu0 %v145
  %v1975 = vpop.f32.mrf.mxu0
  %v1976 = vadd.f32 0.0, %v1975
  %1977 = vmatmul.f32.gmra.mxu0 %v148
  %v1978 = vpop.f32.mrf.mxu0
  %v1979 = vadd.f32 0.0, %v1978
  %1980 = vmatmul.f32.gmra.mxu0 %v151
  %v1981 = vpop.f32.mrf.mxu0
  %v1982 = vadd.f32 0.0, %v1981
  %1983 = vmatmul.f32.gmra.mxu0 %v154
  %v1984 = vpop.f32.mrf.mxu0
  %v1985 = vadd.f32 0.0, %v1984
  %1986 = vmatmul.f32.gmra.mxu0 %v157
  %v1987 = vpop.f32.mrf.mxu0
  %v1988 = vadd.f32 0.0, %v1987
  %1989 = vmatmul.f32.gmra.mxu0 %v160
  %v1990 = vpop.f32.mrf.mxu0
  %v1991 = vadd.f32 0.0, %v1990
  %1992 = vmatmul.f32.gmra.mxu0 %v163
  %v1993 = vpop.f32.mrf.mxu0
  %v1994 = vadd.f32 0.0, %v1993
  %1995 = vmatmul.f32.gmra.mxu0 %v166
  %v1996 = vpop.f32.mrf.mxu0
  %v1997 = vadd.f32 0.0, %v1996
  %1998 = vmatmul.f32.gmra.mxu0 %v169
  %v1999 = vpop.f32.mrf.mxu0
  %v2000 = vadd.f32 0.0, %v1999
  %2001 = vmatmul.f32.gmra.mxu0 %v172
  %v2002 = vpop.f32.mrf.mxu0
  %v2003 = vadd.f32 0.0, %v2002
  %2004 = vmatmul.f32.gmra.mxu0 %v175
  %v2005 = vpop.f32.mrf.mxu0
  %v2006 = vadd.f32 0.0, %v2005
  %2007 = vmatmul.f32.gmra.mxu0 %v178
  %v2008 = vpop.f32.mrf.mxu0
  %v2009 = vadd.f32 0.0, %v2008
  %2010 = vmatmul.f32.gmra.mxu0 %v181
  %v2011 = vpop.f32.mrf.mxu0
  %v2012 = vadd.f32 0.0, %v2011
  %2013 = vmatmul.f32.gmra.mxu0 %v184
  %v2014 = vpop.f32.mrf.mxu0
  %v2015 = vadd.f32 0.0, %v2014
  %2016 = vmatmul.f32.gmra.mxu0 %v187
  %v2017 = vpop.f32.mrf.mxu0
  %v2018 = vadd.f32 0.0, %v2017
  %2019 = vmatmul.f32.gmra.mxu0 %v190
  %v2020 = vpop.f32.mrf.mxu0
  %v2021 = vadd.f32 0.0, %v2020
  %2022 = vmatmul.f32.gmra.mxu0 %v193
  %v2023 = vpop.f32.mrf.mxu0
  %v2024 = vadd.f32 0.0, %v2023
  %2025 = vmatmul.f32.gmra.mxu0 %v196
  %v2026 = vpop.f32.mrf.mxu0
  %v2027 = vadd.f32 0.0, %v2026
  %2028 = vmatmul.f32.gmra.mxu0 %v199
  %v2029 = vpop.f32.mrf.mxu0
  %v2030 = vadd.f32 0.0, %v2029
  %2031 = vmatmul.f32.gmra.mxu0 %v202
  %v2032 = vpop.f32.mrf.mxu0
  %v2033 = vadd.f32 0.0, %v2032
  %2034 = vmatmul.f32.gmra.mxu0 %v205
  %v2035 = vpop.f32.mrf.mxu0
  %v2036 = vadd.f32 0.0, %v2035
  %2037 = vmatmul.f32.gmra.mxu0 %v208
  %v2038 = vpop.f32.mrf.mxu0
  %v2039 = vadd.f32 0.0, %v2038
  %2040 = vmatmul.f32.gmra.mxu0 %v211
  %v2041 = vpop.f32.mrf.mxu0
  %v2042 = vadd.f32 0.0, %v2041
  %2043 = vmatmul.f32.gmra.mxu0 %v214
  %v2044 = vpop.f32.mrf.mxu0
  %v2045 = vadd.f32 0.0, %v2044
  %2046 = vmatmul.f32.gmra.mxu0 %v217
  %v2047 = vpop.f32.mrf.mxu0
  %v2048 = vadd.f32 0.0, %v2047
  %2049 = vmatmul.f32.gmra.mxu0 %v220
  %v2050 = vpop.f32.mrf.mxu0
  %v2051 = vadd.f32 0.0, %v2050
  %2052 = vmatmul.f32.gmra.mxu0 %v223
  %v2053 = vpop.f32.mrf.mxu0
  %v2054 = vadd.f32 0.0, %v2053
  %2055 = vmatmul.f32.gmra.mxu0 %v226
  %v2056 = vpop.f32.mrf.mxu0
  %v2057 = vadd.f32 0.0, %v2056
  %2058 = vmatmul.f32.gmra.mxu0 %v229
  %v2059 = vpop.f32.mrf.mxu0
  %v2060 = vadd.f32 0.0, %v2059
  %2061 = vmatmul.f32.gmra.mxu0 %v232
  %v2062 = vpop.f32.mrf.mxu0
  %v2063 = vadd.f32 0.0, %v2062
  %2064 = vmatmul.f32.gmra.mxu0 %v235
  %v2065 = vpop.f32.mrf.mxu0
  %v2066 = vadd.f32 0.0, %v2065
  %2067 = vmatmul.f32.gmra.mxu0 %v238
  %v2068 = vpop.f32.mrf.mxu0
  %v2069 = vadd.f32 0.0, %v2068
  %2070 = vmatmul.f32.gmra.mxu0 %v241
  %v2071 = vpop.f32.mrf.mxu0
  %v2072 = vadd.f32 0.0, %v2071
  %2073 = vmatmul.f32.gmra.mxu0 %v244
  %v2074 = vpop.f32.mrf.mxu0
  %v2075 = vadd.f32 0.0, %v2074
  %2076 = vmatmul.f32.gmra.mxu0 %v247
  %v2077 = vpop.f32.mrf.mxu0
  %v2078 = vadd.f32 0.0, %v2077
  %2079 = vmatmul.f32.gmra.mxu0 %v250
  %v2080 = vpop.f32.mrf.mxu0
  %v2081 = vadd.f32 0.0, %v2080
  %2082 = vmatmul.f32.gmra.mxu0 %v253
  %v2083 = vpop.f32.mrf.mxu0
  %v2084 = vadd.f32 0.0, %v2083
  %2085 = vmatmul.f32.gmra.mxu0 %v256
  %v2086 = vpop.f32.mrf.mxu0
  %v2087 = vadd.f32 0.0, %v2086
  %2088 = vmatmul.f32.gmra.mxu0 %v259
  %v2089 = vpop.f32.mrf.mxu0
  %v2090 = vadd.f32 0.0, %v2089
  %2091 = vmatmul.f32.gmra.mxu0 %v262
  %v2092 = vpop.f32.mrf.mxu0
  %v2093 = vadd.f32 0.0, %v2092
  %2094 = vmatmul.f32.gmra.mxu0 %v265
  %v2095 = vpop.f32.mrf.mxu0
  %v2096 = vadd.f32 0.0, %v2095
  %2097 = vmatmul.f32.gmra.mxu0 %v268
  %v2098 = vpop.f32.mrf.mxu0
  %v2099 = vadd.f32 0.0, %v2098
  %2100 = vmatmul.f32.gmra.mxu0 %v271
  %v2101 = vpop.f32.mrf.mxu0
  %v2102 = vadd.f32 0.0, %v2101
  %2103 = vmatmul.f32.gmra.mxu0 %v274
  %v2104 = vpop.f32.mrf.mxu0
  %v2105 = vadd.f32 0.0, %v2104
  %2106 = vmatmul.f32.gmra.mxu0 %v277
  %v2107 = vpop.f32.mrf.mxu0
  %v2108 = vadd.f32 0.0, %v2107
  %2109 = vmatmul.f32.gmra.mxu0 %v280
  %v2110 = vpop.f32.mrf.mxu0
  %v2111 = vadd.f32 0.0, %v2110
  %2112 = vmatmul.f32.gmra.mxu0 %v283
  %v2113 = vpop.f32.mrf.mxu0
  %v2114 = vadd.f32 0.0, %v2113
  %2115 = vmatmul.f32.gmra.mxu0 %v286
  %v2116 = vpop.f32.mrf.mxu0
  %v2117 = vadd.f32 0.0, %v2116
  %2118 = vmatmul.f32.gmra.mxu0 %v289
  %v2119 = vpop.f32.mrf.mxu0
  %v2120 = vadd.f32 0.0, %v2119
  %2121 = vmatmul.f32.gmra.mxu0 %v292
  %v2122 = vpop.f32.mrf.mxu0
  %v2123 = vadd.f32 0.0, %v2122
  %2124 = vmatmul.f32.gmra.mxu0 %v295
  %v2125 = vpop.f32.mrf.mxu0
  %v2126 = vadd.f32 0.0, %v2125
  %2127 = vmatmul.f32.gmra.mxu0 %v298
  %v2128 = vpop.f32.mrf.mxu0
  %v2129 = vadd.f32 0.0, %v2128
  %2130 = vmatmul.f32.gmra.mxu0 %v301
  %v2131 = vpop.f32.mrf.mxu0
  %v2132 = vadd.f32 0.0, %v2131
  %2133 = vmatmul.f32.gmra.mxu0 %v304
  %v2134 = vpop.f32.mrf.mxu0
  %v2135 = vadd.f32 0.0, %v2134
  %2136 = vmatmul.f32.gmra.mxu0 %v307
  %v2137 = vpop.f32.mrf.mxu0
  %v2138 = vadd.f32 0.0, %v2137
  %2139 = vmatmul.f32.gmra.mxu0 %v310
  %v2140 = vpop.f32.mrf.mxu0
  %v2141 = vadd.f32 0.0, %v2140
  %2142 = vmatmul.f32.gmra.mxu0 %v313
  %v2143 = vpop.f32.mrf.mxu0
  %v2144 = vadd.f32 0.0, %v2143
  %2145 = vmatmul.f32.gmra.mxu0 %v316
  %v2146 = vpop.f32.mrf.mxu0
  %v2147 = vadd.f32 0.0, %v2146
  %2148 = vmatmul.f32.gmra.mxu0 %v319
  %v2149 = vpop.f32.mrf.mxu0
  %v2150 = vadd.f32 0.0, %v2149
  %2151 = vmatmul.f32.gmra.mxu0 %v322
  %v2152 = vpop.f32.mrf.mxu0
  %v2153 = vadd.f32 0.0, %v2152
  %2154 = vmatmul.f32.gmra.mxu0 %v325
  %v2155 = vpop.f32.mrf.mxu0
  %v2156 = vadd.f32 0.0, %v2155
  %2157 = vmatmul.f32.gmra.mxu0 %v328
  %v2158 = vpop.f32.mrf.mxu0
  %v2159 = vadd.f32 0.0, %v2158
  %2160 = vmatmul.f32.gmra.mxu0 %v331
  %v2161 = vpop.f32.mrf.mxu0
  %v2162 = vadd.f32 0.0, %v2161
  %2163 = vmatmul.f32.gmra.mxu0 %v334
  %v2164 = vpop.f32.mrf.mxu0
  %v2165 = vadd.f32 0.0, %v2164
  %2166 = vmatmul.f32.gmra.mxu0 %v337
  %v2167 = vpop.f32.mrf.mxu0
  %v2168 = vadd.f32 0.0, %v2167
  %2169 = vmatmul.f32.gmra.mxu0 %v340
  %v2170 = vpop.f32.mrf.mxu0
  %v2171 = vadd.f32 0.0, %v2170
  %2172 = vmatmul.f32.gmra.mxu0 %v343
  %v2173 = vpop.f32.mrf.mxu0
  %v2174 = vadd.f32 0.0, %v2173
  %2175 = vmatmul.f32.gmra.mxu0 %v346
  %v2176 = vpop.f32.mrf.mxu0
  %v2177 = vadd.f32 0.0, %v2176
  %2178 = vmatmul.f32.gmra.mxu0 %v349
  %v2179 = vpop.f32.mrf.mxu0
  %v2180 = vadd.f32 0.0, %v2179
  %2181 = vdwg.mxu0
  %vm2182 = vcmask 1040384
  %v2183 = vrot.slane %v25, 7
  %v2184 = vrot.slane %v26, 7
  %v2185 = vsel %vm2182, %v2183, %v2184
  %2187 = vmatpush.msra.mxu0 0.0
  %2188 = vmatpush.msra.mxu0 0.0
  %2189 = vmatpush.msra.mxu0 0.0
  %2190 = vmatpush.msra.mxu0 0.0
  %2191 = vmatpush.msra.mxu0 0.0
  %2192 = vmatpush.msra.mxu0 0.0
  %2193 = vmatpush.msra.mxu0 0.0
  %2194 = vmatpush.msra.mxu0 0.0
  %2195 = vmatpush.msra.mxu0 0.0
  %2196 = vmatpush.msra.mxu0 0.0
  %2197 = vmatpush.msra.mxu0 0.0
  %2198 = vmatpush.msra.mxu0 0.0
  %2199 = vmatpush.msra.mxu0 0.0
  %2200 = vmatpush.msra.mxu0 0.0
  %2201 = vmatpush.msra.mxu0 0.0
  %2202 = vmatpush.msra.mxu0 %v2185
  %2203 = vmatmul.f32.gmra.mxu0 %v112
  %v2204 = vpop.f32.mrf.mxu0
  %v2205 = vadd.f32 0.0, %v2204
  %2206 = vmatmul.f32.gmra.mxu0 %v115
  %v2207 = vpop.f32.mrf.mxu0
  %v2208 = vadd.f32 0.0, %v2207
  %2209 = vmatmul.f32.gmra.mxu0 %v118
  %v2210 = vpop.f32.mrf.mxu0
  %v2211 = vadd.f32 0.0, %v2210
  %2212 = vmatmul.f32.gmra.mxu0 %v121
  %v2213 = vpop.f32.mrf.mxu0
  %v2214 = vadd.f32 0.0, %v2213
  %2215 = vmatmul.f32.gmra.mxu0 %v124
  %v2216 = vpop.f32.mrf.mxu0
  %v2217 = vadd.f32 0.0, %v2216
  %2218 = vmatmul.f32.gmra.mxu0 %v127
  %v2219 = vpop.f32.mrf.mxu0
  %v2220 = vadd.f32 0.0, %v2219
  %2221 = vmatmul.f32.gmra.mxu0 %v130
  %v2222 = vpop.f32.mrf.mxu0
  %v2223 = vadd.f32 0.0, %v2222
  %2224 = vmatmul.f32.gmra.mxu0 %v133
  %v2225 = vpop.f32.mrf.mxu0
  %v2226 = vadd.f32 0.0, %v2225
  %2227 = vmatmul.f32.gmra.mxu0 %v136
  %v2228 = vpop.f32.mrf.mxu0
  %v2229 = vadd.f32 0.0, %v2228
  %2230 = vmatmul.f32.gmra.mxu0 %v139
  %v2231 = vpop.f32.mrf.mxu0
  %v2232 = vadd.f32 0.0, %v2231
  %2233 = vmatmul.f32.gmra.mxu0 %v142
  %v2234 = vpop.f32.mrf.mxu0
  %v2235 = vadd.f32 0.0, %v2234
  %2236 = vmatmul.f32.gmra.mxu0 %v145
  %v2237 = vpop.f32.mrf.mxu0
  %v2238 = vadd.f32 0.0, %v2237
  %2239 = vmatmul.f32.gmra.mxu0 %v148
  %v2240 = vpop.f32.mrf.mxu0
  %v2241 = vadd.f32 0.0, %v2240
  %2242 = vmatmul.f32.gmra.mxu0 %v151
  %v2243 = vpop.f32.mrf.mxu0
  %v2244 = vadd.f32 0.0, %v2243
  %2245 = vmatmul.f32.gmra.mxu0 %v154
  %v2246 = vpop.f32.mrf.mxu0
  %v2247 = vadd.f32 0.0, %v2246
  %2248 = vmatmul.f32.gmra.mxu0 %v157
  %v2249 = vpop.f32.mrf.mxu0
  %v2250 = vadd.f32 0.0, %v2249
  %2251 = vmatmul.f32.gmra.mxu0 %v160
  %v2252 = vpop.f32.mrf.mxu0
  %v2253 = vadd.f32 0.0, %v2252
  %2254 = vmatmul.f32.gmra.mxu0 %v163
  %v2255 = vpop.f32.mrf.mxu0
  %v2256 = vadd.f32 0.0, %v2255
  %2257 = vmatmul.f32.gmra.mxu0 %v166
  %v2258 = vpop.f32.mrf.mxu0
  %v2259 = vadd.f32 0.0, %v2258
  %2260 = vmatmul.f32.gmra.mxu0 %v169
  %v2261 = vpop.f32.mrf.mxu0
  %v2262 = vadd.f32 0.0, %v2261
  %2263 = vmatmul.f32.gmra.mxu0 %v172
  %v2264 = vpop.f32.mrf.mxu0
  %v2265 = vadd.f32 0.0, %v2264
  %2266 = vmatmul.f32.gmra.mxu0 %v175
  %v2267 = vpop.f32.mrf.mxu0
  %v2268 = vadd.f32 0.0, %v2267
  %2269 = vmatmul.f32.gmra.mxu0 %v178
  %v2270 = vpop.f32.mrf.mxu0
  %v2271 = vadd.f32 0.0, %v2270
  %2272 = vmatmul.f32.gmra.mxu0 %v181
  %v2273 = vpop.f32.mrf.mxu0
  %v2274 = vadd.f32 0.0, %v2273
  %2275 = vmatmul.f32.gmra.mxu0 %v184
  %v2276 = vpop.f32.mrf.mxu0
  %v2277 = vadd.f32 0.0, %v2276
  %2278 = vmatmul.f32.gmra.mxu0 %v187
  %v2279 = vpop.f32.mrf.mxu0
  %v2280 = vadd.f32 0.0, %v2279
  %2281 = vmatmul.f32.gmra.mxu0 %v190
  %v2282 = vpop.f32.mrf.mxu0
  %v2283 = vadd.f32 0.0, %v2282
  %2284 = vmatmul.f32.gmra.mxu0 %v193
  %v2285 = vpop.f32.mrf.mxu0
  %v2286 = vadd.f32 0.0, %v2285
  %2287 = vmatmul.f32.gmra.mxu0 %v196
  %v2288 = vpop.f32.mrf.mxu0
  %v2289 = vadd.f32 0.0, %v2288
  %2290 = vmatmul.f32.gmra.mxu0 %v199
  %v2291 = vpop.f32.mrf.mxu0
  %v2292 = vadd.f32 0.0, %v2291
  %2293 = vmatmul.f32.gmra.mxu0 %v202
  %v2294 = vpop.f32.mrf.mxu0
  %v2295 = vadd.f32 0.0, %v2294
  %2296 = vmatmul.f32.gmra.mxu0 %v205
  %v2297 = vpop.f32.mrf.mxu0
  %v2298 = vadd.f32 0.0, %v2297
  %2299 = vmatmul.f32.gmra.mxu0 %v208
  %v2300 = vpop.f32.mrf.mxu0
  %v2301 = vadd.f32 0.0, %v2300
  %2302 = vmatmul.f32.gmra.mxu0 %v211
  %v2303 = vpop.f32.mrf.mxu0
  %v2304 = vadd.f32 0.0, %v2303
  %2305 = vmatmul.f32.gmra.mxu0 %v214
  %v2306 = vpop.f32.mrf.mxu0
  %v2307 = vadd.f32 0.0, %v2306
  %2308 = vmatmul.f32.gmra.mxu0 %v217
  %v2309 = vpop.f32.mrf.mxu0
  %v2310 = vadd.f32 0.0, %v2309
  %2311 = vmatmul.f32.gmra.mxu0 %v220
  %v2312 = vpop.f32.mrf.mxu0
  %v2313 = vadd.f32 0.0, %v2312
  %2314 = vmatmul.f32.gmra.mxu0 %v223
  %v2315 = vpop.f32.mrf.mxu0
  %v2316 = vadd.f32 0.0, %v2315
  %2317 = vmatmul.f32.gmra.mxu0 %v226
  %v2318 = vpop.f32.mrf.mxu0
  %v2319 = vadd.f32 0.0, %v2318
  %2320 = vmatmul.f32.gmra.mxu0 %v229
  %v2321 = vpop.f32.mrf.mxu0
  %v2322 = vadd.f32 0.0, %v2321
  %2323 = vmatmul.f32.gmra.mxu0 %v232
  %v2324 = vpop.f32.mrf.mxu0
  %v2325 = vadd.f32 0.0, %v2324
  %2326 = vmatmul.f32.gmra.mxu0 %v235
  %v2327 = vpop.f32.mrf.mxu0
  %v2328 = vadd.f32 0.0, %v2327
  %2329 = vmatmul.f32.gmra.mxu0 %v238
  %v2330 = vpop.f32.mrf.mxu0
  %v2331 = vadd.f32 0.0, %v2330
  %2332 = vmatmul.f32.gmra.mxu0 %v241
  %v2333 = vpop.f32.mrf.mxu0
  %v2334 = vadd.f32 0.0, %v2333
  %2335 = vmatmul.f32.gmra.mxu0 %v244
  %v2336 = vpop.f32.mrf.mxu0
  %v2337 = vadd.f32 0.0, %v2336
  %2338 = vmatmul.f32.gmra.mxu0 %v247
  %v2339 = vpop.f32.mrf.mxu0
  %v2340 = vadd.f32 0.0, %v2339
  %2341 = vmatmul.f32.gmra.mxu0 %v250
  %v2342 = vpop.f32.mrf.mxu0
  %v2343 = vadd.f32 0.0, %v2342
  %2344 = vmatmul.f32.gmra.mxu0 %v253
  %v2345 = vpop.f32.mrf.mxu0
  %v2346 = vadd.f32 0.0, %v2345
  %2347 = vmatmul.f32.gmra.mxu0 %v256
  %v2348 = vpop.f32.mrf.mxu0
  %v2349 = vadd.f32 0.0, %v2348
  %2350 = vmatmul.f32.gmra.mxu0 %v259
  %v2351 = vpop.f32.mrf.mxu0
  %v2352 = vadd.f32 0.0, %v2351
  %2353 = vmatmul.f32.gmra.mxu0 %v262
  %v2354 = vpop.f32.mrf.mxu0
  %v2355 = vadd.f32 0.0, %v2354
  %2356 = vmatmul.f32.gmra.mxu0 %v265
  %v2357 = vpop.f32.mrf.mxu0
  %v2358 = vadd.f32 0.0, %v2357
  %2359 = vmatmul.f32.gmra.mxu0 %v268
  %v2360 = vpop.f32.mrf.mxu0
  %v2361 = vadd.f32 0.0, %v2360
  %2362 = vmatmul.f32.gmra.mxu0 %v271
  %v2363 = vpop.f32.mrf.mxu0
  %v2364 = vadd.f32 0.0, %v2363
  %2365 = vmatmul.f32.gmra.mxu0 %v274
  %v2366 = vpop.f32.mrf.mxu0
  %v2367 = vadd.f32 0.0, %v2366
  %2368 = vmatmul.f32.gmra.mxu0 %v277
  %v2369 = vpop.f32.mrf.mxu0
  %v2370 = vadd.f32 0.0, %v2369
  %2371 = vmatmul.f32.gmra.mxu0 %v280
  %v2372 = vpop.f32.mrf.mxu0
  %v2373 = vadd.f32 0.0, %v2372
  %2374 = vmatmul.f32.gmra.mxu0 %v283
  %v2375 = vpop.f32.mrf.mxu0
  %v2376 = vadd.f32 0.0, %v2375
  %2377 = vmatmul.f32.gmra.mxu0 %v286
  %v2378 = vpop.f32.mrf.mxu0
  %v2379 = vadd.f32 0.0, %v2378
  %2380 = vmatmul.f32.gmra.mxu0 %v289
  %v2381 = vpop.f32.mrf.mxu0
  %v2382 = vadd.f32 0.0, %v2381
  %2383 = vmatmul.f32.gmra.mxu0 %v292
  %v2384 = vpop.f32.mrf.mxu0
  %v2385 = vadd.f32 0.0, %v2384
  %2386 = vmatmul.f32.gmra.mxu0 %v295
  %v2387 = vpop.f32.mrf.mxu0
  %v2388 = vadd.f32 0.0, %v2387
  %2389 = vmatmul.f32.gmra.mxu0 %v298
  %v2390 = vpop.f32.mrf.mxu0
  %v2391 = vadd.f32 0.0, %v2390
  %2392 = vmatmul.f32.gmra.mxu0 %v301
  %v2393 = vpop.f32.mrf.mxu0
  %v2394 = vadd.f32 0.0, %v2393
  %2395 = vmatmul.f32.gmra.mxu0 %v304
  %v2396 = vpop.f32.mrf.mxu0
  %v2397 = vadd.f32 0.0, %v2396
  %2398 = vmatmul.f32.gmra.mxu0 %v307
  %v2399 = vpop.f32.mrf.mxu0
  %v2400 = vadd.f32 0.0, %v2399
  %2401 = vmatmul.f32.gmra.mxu0 %v310
  %v2402 = vpop.f32.mrf.mxu0
  %v2403 = vadd.f32 0.0, %v2402
  %2404 = vmatmul.f32.gmra.mxu0 %v313
  %v2405 = vpop.f32.mrf.mxu0
  %v2406 = vadd.f32 0.0, %v2405
  %2407 = vmatmul.f32.gmra.mxu0 %v316
  %v2408 = vpop.f32.mrf.mxu0
  %v2409 = vadd.f32 0.0, %v2408
  %2410 = vmatmul.f32.gmra.mxu0 %v319
  %v2411 = vpop.f32.mrf.mxu0
  %v2412 = vadd.f32 0.0, %v2411
  %2413 = vmatmul.f32.gmra.mxu0 %v322
  %v2414 = vpop.f32.mrf.mxu0
  %v2415 = vadd.f32 0.0, %v2414
  %2416 = vmatmul.f32.gmra.mxu0 %v325
  %v2417 = vpop.f32.mrf.mxu0
  %v2418 = vadd.f32 0.0, %v2417
  %2419 = vmatmul.f32.gmra.mxu0 %v328
  %v2420 = vpop.f32.mrf.mxu0
  %v2421 = vadd.f32 0.0, %v2420
  %2422 = vmatmul.f32.gmra.mxu0 %v331
  %v2423 = vpop.f32.mrf.mxu0
  %v2424 = vadd.f32 0.0, %v2423
  %2425 = vmatmul.f32.gmra.mxu0 %v334
  %v2426 = vpop.f32.mrf.mxu0
  %v2427 = vadd.f32 0.0, %v2426
  %2428 = vmatmul.f32.gmra.mxu0 %v337
  %v2429 = vpop.f32.mrf.mxu0
  %v2430 = vadd.f32 0.0, %v2429
  %2431 = vmatmul.f32.gmra.mxu0 %v340
  %v2432 = vpop.f32.mrf.mxu0
  %v2433 = vadd.f32 0.0, %v2432
  %2434 = vmatmul.f32.gmra.mxu0 %v343
  %v2435 = vpop.f32.mrf.mxu0
  %v2436 = vadd.f32 0.0, %v2435
  %2437 = vmatmul.f32.gmra.mxu0 %v346
  %v2438 = vpop.f32.mrf.mxu0
  %v2439 = vadd.f32 0.0, %v2438
  %2440 = vmatmul.f32.gmra.mxu0 %v349
  %v2441 = vpop.f32.mrf.mxu0
  %v2442 = vadd.f32 0.0, %v2441
  %2443 = vdwg.mxu0
  %v2444 = vmax.f32 %v369, %v633
  %v2445 = vmax.f32 %v372, %v636
  %v2446 = vmax.f32 %v375, %v639
  %v2447 = vmax.f32 %v378, %v642
  %v2448 = vmax.f32 %v381, %v645
  %v2449 = vmax.f32 %v384, %v648
  %v2450 = vmax.f32 %v387, %v651
  %v2451 = vmax.f32 %v390, %v654
  %v2452 = vmax.f32 %v393, %v657
  %v2453 = vmax.f32 %v396, %v660
  %v2454 = vmax.f32 %v399, %v663
  %v2455 = vmax.f32 %v402, %v666
  %v2456 = vmax.f32 %v405, %v669
  %v2457 = vmax.f32 %v408, %v672
  %v2458 = vmax.f32 %v411, %v675
  %v2459 = vmax.f32 %v414, %v678
  %v2460 = vmax.f32 %v417, %v681
  %v2461 = vmax.f32 %v420, %v684
  %v2462 = vmax.f32 %v423, %v687
  %v2463 = vmax.f32 %v426, %v690
  %v2464 = vmax.f32 %v429, %v693
  %v2465 = vmax.f32 %v432, %v696
  %v2466 = vmax.f32 %v435, %v699
  %v2467 = vmax.f32 %v438, %v702
  %v2468 = vmax.f32 %v441, %v705
  %v2469 = vmax.f32 %v444, %v708
  %v2470 = vmax.f32 %v447, %v711
  %v2471 = vmax.f32 %v450, %v714
  %v2472 = vmax.f32 %v453, %v717
  %v2473 = vmax.f32 %v456, %v720
  %v2474 = vmax.f32 %v459, %v723
  %v2475 = vmax.f32 %v462, %v726
  %v2476 = vmax.f32 %v465, %v729
  %v2477 = vmax.f32 %v468, %v732
  %v2478 = vmax.f32 %v471, %v735
  %v2479 = vmax.f32 %v474, %v738
  %v2480 = vmax.f32 %v477, %v741
  %v2481 = vmax.f32 %v480, %v744
  %v2482 = vmax.f32 %v483, %v747
  %v2483 = vmax.f32 %v486, %v750
  %v2484 = vmax.f32 %v489, %v753
  %v2485 = vmax.f32 %v492, %v756
  %v2486 = vmax.f32 %v495, %v759
  %v2487 = vmax.f32 %v498, %v762
  %v2488 = vmax.f32 %v501, %v765
  %v2489 = vmax.f32 %v504, %v768
  %v2490 = vmax.f32 %v507, %v771
  %v2491 = vmax.f32 %v510, %v774
  %v2492 = vmax.f32 %v513, %v777
  %v2493 = vmax.f32 %v516, %v780
  %v2494 = vmax.f32 %v519, %v783
  %v2495 = vmax.f32 %v522, %v786
  %v2496 = vmax.f32 %v525, %v789
  %v2497 = vmax.f32 %v528, %v792
  %v2498 = vmax.f32 %v531, %v795
  %v2499 = vmax.f32 %v534, %v798
  %v2500 = vmax.f32 %v537, %v801
  %v2501 = vmax.f32 %v540, %v804
  %v2502 = vmax.f32 %v543, %v807
  %v2503 = vmax.f32 %v546, %v810
  %v2504 = vmax.f32 %v549, %v813
  %v2505 = vmax.f32 %v552, %v816
  %v2506 = vmax.f32 %v555, %v819
  %v2507 = vmax.f32 %v558, %v822
  %v2508 = vmax.f32 %v561, %v825
  %v2509 = vmax.f32 %v564, %v828
  %v2510 = vmax.f32 %v567, %v831
  %v2511 = vmax.f32 %v570, %v834
  %v2512 = vmax.f32 %v573, %v837
  %v2513 = vmax.f32 %v576, %v840
  %v2514 = vmax.f32 %v579, %v843
  %v2515 = vmax.f32 %v582, %v846
  %v2516 = vmax.f32 %v585, %v849
  %v2517 = vmax.f32 %v588, %v852
  %v2518 = vmax.f32 %v591, %v855
  %v2519 = vmax.f32 %v594, %v858
  %v2520 = vmax.f32 %v597, %v861
  %v2521 = vmax.f32 %v600, %v864
  %v2522 = vmax.f32 %v603, %v867
  %v2523 = vmax.f32 %v606, %v870
  %v2524 = vmax.f32 %v895, %v1157
  %v2525 = vmax.f32 %v898, %v1160
  %v2526 = vmax.f32 %v901, %v1163
  %v2527 = vmax.f32 %v904, %v1166
  %v2528 = vmax.f32 %v907, %v1169
  %v2529 = vmax.f32 %v910, %v1172
  %v2530 = vmax.f32 %v913, %v1175
  %v2531 = vmax.f32 %v916, %v1178
  %v2532 = vmax.f32 %v919, %v1181
  %v2533 = vmax.f32 %v922, %v1184
  %v2534 = vmax.f32 %v925, %v1187
  %v2535 = vmax.f32 %v928, %v1190
  %v2536 = vmax.f32 %v931, %v1193
  %v2537 = vmax.f32 %v934, %v1196
  %v2538 = vmax.f32 %v937, %v1199
  %v2539 = vmax.f32 %v940, %v1202
  %v2540 = vmax.f32 %v943, %v1205
  %v2541 = vmax.f32 %v946, %v1208
  %v2542 = vmax.f32 %v949, %v1211
  %v2543 = vmax.f32 %v952, %v1214
  %v2544 = vmax.f32 %v955, %v1217
  %v2545 = vmax.f32 %v958, %v1220
  %v2546 = vmax.f32 %v961, %v1223
  %v2547 = vmax.f32 %v964, %v1226
  %v2548 = vmax.f32 %v967, %v1229
  %v2549 = vmax.f32 %v970, %v1232
  %v2550 = vmax.f32 %v973, %v1235
  %v2551 = vmax.f32 %v976, %v1238
  %v2552 = vmax.f32 %v979, %v1241
  %v2553 = vmax.f32 %v982, %v1244
  %v2554 = vmax.f32 %v985, %v1247
  %v2555 = vmax.f32 %v988, %v1250
  %v2556 = vmax.f32 %v991, %v1253
  %v2557 = vmax.f32 %v994, %v1256
  %v2558 = vmax.f32 %v997, %v1259
  %v2559 = vmax.f32 %v1000, %v1262
  %v2560 = vmax.f32 %v1003, %v1265
  %v2561 = vmax.f32 %v1006, %v1268
  %v2562 = vmax.f32 %v1009, %v1271
  %v2563 = vmax.f32 %v1012, %v1274
  %v2564 = vmax.f32 %v1015, %v1277
  %v2565 = vmax.f32 %v1018, %v1280
  %v2566 = vmax.f32 %v1021, %v1283
  %v2567 = vmax.f32 %v1024, %v1286
  %v2568 = vmax.f32 %v1027, %v1289
  %v2569 = vmax.f32 %v1030, %v1292
  %v2570 = vmax.f32 %v1033, %v1295
  %v2571 = vmax.f32 %v1036, %v1298
  %v2572 = vmax.f32 %v1039, %v1301
  %v2573 = vmax.f32 %v1042, %v1304
  %v2574 = vmax.f32 %v1045, %v1307
  %v2575 = vmax.f32 %v1048, %v1310
  %v2576 = vmax.f32 %v1051, %v1313
  %v2577 = vmax.f32 %v1054, %v1316
  %v2578 = vmax.f32 %v1057, %v1319
  %v2579 = vmax.f32 %v1060, %v1322
  %v2580 = vmax.f32 %v1063, %v1325
  %v2581 = vmax.f32 %v1066, %v1328
  %v2582 = vmax.f32 %v1069, %v1331
  %v2583 = vmax.f32 %v1072, %v1334
  %v2584 = vmax.f32 %v1075, %v1337
  %v2585 = vmax.f32 %v1078, %v1340
  %v2586 = vmax.f32 %v1081, %v1343
  %v2587 = vmax.f32 %v1084, %v1346
  %v2588 = vmax.f32 %v1087, %v1349
  %v2589 = vmax.f32 %v1090, %v1352
  %v2590 = vmax.f32 %v1093, %v1355
  %v2591 = vmax.f32 %v1096, %v1358
  %v2592 = vmax.f32 %v1099, %v1361
  %v2593 = vmax.f32 %v1102, %v1364
  %v2594 = vmax.f32 %v1105, %v1367
  %v2595 = vmax.f32 %v1108, %v1370
  %v2596 = vmax.f32 %v1111, %v1373
  %v2597 = vmax.f32 %v1114, %v1376
  %v2598 = vmax.f32 %v1117, %v1379
  %v2599 = vmax.f32 %v1120, %v1382
  %v2600 = vmax.f32 %v1123, %v1385
  %v2601 = vmax.f32 %v1126, %v1388
  %v2602 = vmax.f32 %v1129, %v1391
  %v2603 = vmax.f32 %v1132, %v1394
  %v2604 = vmax.f32 %v1419, %v1681
  %v2605 = vmax.f32 %v1422, %v1684
  %v2606 = vmax.f32 %v1425, %v1687
  %v2607 = vmax.f32 %v1428, %v1690
  %v2608 = vmax.f32 %v1431, %v1693
  %v2609 = vmax.f32 %v1434, %v1696
  %v2610 = vmax.f32 %v1437, %v1699
  %v2611 = vmax.f32 %v1440, %v1702
  %v2612 = vmax.f32 %v1443, %v1705
  %v2613 = vmax.f32 %v1446, %v1708
  %v2614 = vmax.f32 %v1449, %v1711
  %v2615 = vmax.f32 %v1452, %v1714
  %v2616 = vmax.f32 %v1455, %v1717
  %v2617 = vmax.f32 %v1458, %v1720
  %v2618 = vmax.f32 %v1461, %v1723
  %v2619 = vmax.f32 %v1464, %v1726
  %v2620 = vmax.f32 %v1467, %v1729
  %v2621 = vmax.f32 %v1470, %v1732
  %v2622 = vmax.f32 %v1473, %v1735
  %v2623 = vmax.f32 %v1476, %v1738
  %v2624 = vmax.f32 %v1479, %v1741
  %v2625 = vmax.f32 %v1482, %v1744
  %v2626 = vmax.f32 %v1485, %v1747
  %v2627 = vmax.f32 %v1488, %v1750
  %v2628 = vmax.f32 %v1491, %v1753
  %v2629 = vmax.f32 %v1494, %v1756
  %v2630 = vmax.f32 %v1497, %v1759
  %v2631 = vmax.f32 %v1500, %v1762
  %v2632 = vmax.f32 %v1503, %v1765
  %v2633 = vmax.f32 %v1506, %v1768
  %v2634 = vmax.f32 %v1509, %v1771
  %v2635 = vmax.f32 %v1512, %v1774
  %v2636 = vmax.f32 %v1515, %v1777
  %v2637 = vmax.f32 %v1518, %v1780
  %v2638 = vmax.f32 %v1521, %v1783
  %v2639 = vmax.f32 %v1524, %v1786
  %v2640 = vmax.f32 %v1527, %v1789
  %v2641 = vmax.f32 %v1530, %v1792
  %v2642 = vmax.f32 %v1533, %v1795
  %v2643 = vmax.f32 %v1536, %v1798
  %v2644 = vmax.f32 %v1539, %v1801
  %v2645 = vmax.f32 %v1542, %v1804
  %v2646 = vmax.f32 %v1545, %v1807
  %v2647 = vmax.f32 %v1548, %v1810
  %v2648 = vmax.f32 %v1551, %v1813
  %v2649 = vmax.f32 %v1554, %v1816
  %v2650 = vmax.f32 %v1557, %v1819
  %v2651 = vmax.f32 %v1560, %v1822
  %v2652 = vmax.f32 %v1563, %v1825
  %v2653 = vmax.f32 %v1566, %v1828
  %v2654 = vmax.f32 %v1569, %v1831
  %v2655 = vmax.f32 %v1572, %v1834
  %v2656 = vmax.f32 %v1575, %v1837
  %v2657 = vmax.f32 %v1578, %v1840
  %v2658 = vmax.f32 %v1581, %v1843
  %v2659 = vmax.f32 %v1584, %v1846
  %v2660 = vmax.f32 %v1587, %v1849
  %v2661 = vmax.f32 %v1590, %v1852
  %v2662 = vmax.f32 %v1593, %v1855
  %v2663 = vmax.f32 %v1596, %v1858
  %v2664 = vmax.f32 %v1599, %v1861
  %v2665 = vmax.f32 %v1602, %v1864
  %v2666 = vmax.f32 %v1605, %v1867
  %v2667 = vmax.f32 %v1608, %v1870
  %v2668 = vmax.f32 %v1611, %v1873
  %v2669 = vmax.f32 %v1614, %v1876
  %v2670 = vmax.f32 %v1617, %v1879
  %v2671 = vmax.f32 %v1620, %v1882
  %v2672 = vmax.f32 %v1623, %v1885
  %v2673 = vmax.f32 %v1626, %v1888
  %v2674 = vmax.f32 %v1629, %v1891
  %v2675 = vmax.f32 %v1632, %v1894
  %v2676 = vmax.f32 %v1635, %v1897
  %v2677 = vmax.f32 %v1638, %v1900
  %v2678 = vmax.f32 %v1641, %v1903
  %v2679 = vmax.f32 %v1644, %v1906
  %v2680 = vmax.f32 %v1647, %v1909
  %v2681 = vmax.f32 %v1650, %v1912
  %v2682 = vmax.f32 %v1653, %v1915
  %v2683 = vmax.f32 %v1656, %v1918
  %v2684 = vmax.f32 %v1943, %v2205
  %v2685 = vmax.f32 %v1946, %v2208
  %v2686 = vmax.f32 %v1949, %v2211
  %v2687 = vmax.f32 %v1952, %v2214
  %v2688 = vmax.f32 %v1955, %v2217
  %v2689 = vmax.f32 %v1958, %v2220
  %v2690 = vmax.f32 %v1961, %v2223
  %v2691 = vmax.f32 %v1964, %v2226
  %v2692 = vmax.f32 %v1967, %v2229
  %v2693 = vmax.f32 %v1970, %v2232
  %v2694 = vmax.f32 %v1973, %v2235
  %v2695 = vmax.f32 %v1976, %v2238
  %v2696 = vmax.f32 %v1979, %v2241
  %v2697 = vmax.f32 %v1982, %v2244
  %v2698 = vmax.f32 %v1985, %v2247
  %v2699 = vmax.f32 %v1988, %v2250
  %v2700 = vmax.f32 %v1991, %v2253
  %v2701 = vmax.f32 %v1994, %v2256
  %v2702 = vmax.f32 %v1997, %v2259
  %v2703 = vmax.f32 %v2000, %v2262
  %v2704 = vmax.f32 %v2003, %v2265
  %v2705 = vmax.f32 %v2006, %v2268
  %v2706 = vmax.f32 %v2009, %v2271
  %v2707 = vmax.f32 %v2012, %v2274
  %v2708 = vmax.f32 %v2015, %v2277
  %v2709 = vmax.f32 %v2018, %v2280
  %v2710 = vmax.f32 %v2021, %v2283
  %v2711 = vmax.f32 %v2024, %v2286
  %v2712 = vmax.f32 %v2027, %v2289
  %v2713 = vmax.f32 %v2030, %v2292
  %v2714 = vmax.f32 %v2033, %v2295
  %v2715 = vmax.f32 %v2036, %v2298
  %v2716 = vmax.f32 %v2039, %v2301
  %v2717 = vmax.f32 %v2042, %v2304
  %v2718 = vmax.f32 %v2045, %v2307
  %v2719 = vmax.f32 %v2048, %v2310
  %v2720 = vmax.f32 %v2051, %v2313
  %v2721 = vmax.f32 %v2054, %v2316
  %v2722 = vmax.f32 %v2057, %v2319
  %v2723 = vmax.f32 %v2060, %v2322
  %v2724 = vmax.f32 %v2063, %v2325
  %v2725 = vmax.f32 %v2066, %v2328
  %v2726 = vmax.f32 %v2069, %v2331
  %v2727 = vmax.f32 %v2072, %v2334
  %v2728 = vmax.f32 %v2075, %v2337
  %v2729 = vmax.f32 %v2078, %v2340
  %v2730 = vmax.f32 %v2081, %v2343
  %v2731 = vmax.f32 %v2084, %v2346
  %v2732 = vmax.f32 %v2087, %v2349
  %v2733 = vmax.f32 %v2090, %v2352
  %v2734 = vmax.f32 %v2093, %v2355
  %v2735 = vmax.f32 %v2096, %v2358
  %v2736 = vmax.f32 %v2099, %v2361
  %v2737 = vmax.f32 %v2102, %v2364
  %v2738 = vmax.f32 %v2105, %v2367
  %v2739 = vmax.f32 %v2108, %v2370
  %v2740 = vmax.f32 %v2111, %v2373
  %v2741 = vmax.f32 %v2114, %v2376
  %v2742 = vmax.f32 %v2117, %v2379
  %v2743 = vmax.f32 %v2120, %v2382
  %v2744 = vmax.f32 %v2123, %v2385
  %v2745 = vmax.f32 %v2126, %v2388
  %v2746 = vmax.f32 %v2129, %v2391
  %v2747 = vmax.f32 %v2132, %v2394
  %v2748 = vmax.f32 %v2135, %v2397
  %v2749 = vmax.f32 %v2138, %v2400
  %v2750 = vmax.f32 %v2141, %v2403
  %v2751 = vmax.f32 %v2144, %v2406
  %v2752 = vmax.f32 %v2147, %v2409
  %v2753 = vmax.f32 %v2150, %v2412
  %v2754 = vmax.f32 %v2153, %v2415
  %v2755 = vmax.f32 %v2156, %v2418
  %v2756 = vmax.f32 %v2159, %v2421
  %v2757 = vmax.f32 %v2162, %v2424
  %v2758 = vmax.f32 %v2165, %v2427
  %v2759 = vmax.f32 %v2168, %v2430
  %v2760 = vmax.f32 %v2171, %v2433
  %v2761 = vmax.f32 %v2174, %v2436
  %v2762 = vmax.f32 %v2177, %v2439
  %v2763 = vmax.f32 %v2180, %v2442
  %v2764 = vmax.f32 %v2444, %v2524
  %v2765 = vmax.f32 %v2445, %v2525
  %v2766 = vmax.f32 %v2446, %v2526
  %v2767 = vmax.f32 %v2447, %v2527
  %v2768 = vmax.f32 %v2448, %v2528
  %v2769 = vmax.f32 %v2449, %v2529
  %v2770 = vmax.f32 %v2450, %v2530
  %v2771 = vmax.f32 %v2451, %v2531
  %v2772 = vmax.f32 %v2452, %v2532
  %v2773 = vmax.f32 %v2453, %v2533
  %v2774 = vmax.f32 %v2454, %v2534
  %v2775 = vmax.f32 %v2455, %v2535
  %v2776 = vmax.f32 %v2456, %v2536
  %v2777 = vmax.f32 %v2457, %v2537
  %v2778 = vmax.f32 %v2458, %v2538
  %v2779 = vmax.f32 %v2459, %v2539
  %v2780 = vmax.f32 %v2460, %v2540
  %v2781 = vmax.f32 %v2461, %v2541
  %v2782 = vmax.f32 %v2462, %v2542
  %v2783 = vmax.f32 %v2463, %v2543
  %v2784 = vmax.f32 %v2464, %v2544
  %v2785 = vmax.f32 %v2465, %v2545
  %v2786 = vmax.f32 %v2466, %v2546
  %v2787 = vmax.f32 %v2467, %v2547
  %v2788 = vmax.f32 %v2468, %v2548
  %v2789 = vmax.f32 %v2469, %v2549
  %v2790 = vmax.f32 %v2470, %v2550
  %v2791 = vmax.f32 %v2471, %v2551
  %v2792 = vmax.f32 %v2472, %v2552
  %v2793 = vmax.f32 %v2473, %v2553
  %v2794 = vmax.f32 %v2474, %v2554
  %v2795 = vmax.f32 %v2475, %v2555
  %v2796 = vmax.f32 %v2476, %v2556
  %v2797 = vmax.f32 %v2477, %v2557
  %v2798 = vmax.f32 %v2478, %v2558
  %v2799 = vmax.f32 %v2479, %v2559
  %v2800 = vmax.f32 %v2480, %v2560
  %v2801 = vmax.f32 %v2481, %v2561
  %v2802 = vmax.f32 %v2482, %v2562
  %v2803 = vmax.f32 %v2483, %v2563
  %v2804 = vmax.f32 %v2484, %v2564
  %v2805 = vmax.f32 %v2485, %v2565
  %v2806 = vmax.f32 %v2486, %v2566
  %v2807 = vmax.f32 %v2487, %v2567
  %v2808 = vmax.f32 %v2488, %v2568
  %v2809 = vmax.f32 %v2489, %v2569
  %v2810 = vmax.f32 %v2490, %v2570
  %v2811 = vmax.f32 %v2491, %v2571
  %v2812 = vmax.f32 %v2492, %v2572
  %v2813 = vmax.f32 %v2493, %v2573
  %v2814 = vmax.f32 %v2494, %v2574
  %v2815 = vmax.f32 %v2495, %v2575
  %v2816 = vmax.f32 %v2496, %v2576
  %v2817 = vmax.f32 %v2497, %v2577
  %v2818 = vmax.f32 %v2498, %v2578
  %v2819 = vmax.f32 %v2499, %v2579
  %v2820 = vmax.f32 %v2500, %v2580
  %v2821 = vmax.f32 %v2501, %v2581
  %v2822 = vmax.f32 %v2502, %v2582
  %v2823 = vmax.f32 %v2503, %v2583
  %v2824 = vmax.f32 %v2504, %v2584
  %v2825 = vmax.f32 %v2505, %v2585
  %v2826 = vmax.f32 %v2506, %v2586
  %v2827 = vmax.f32 %v2507, %v2587
  %v2828 = vmax.f32 %v2508, %v2588
  %v2829 = vmax.f32 %v2509, %v2589
  %v2830 = vmax.f32 %v2510, %v2590
  %v2831 = vmax.f32 %v2511, %v2591
  %v2832 = vmax.f32 %v2512, %v2592
  %v2833 = vmax.f32 %v2513, %v2593
  %v2834 = vmax.f32 %v2514, %v2594
  %v2835 = vmax.f32 %v2515, %v2595
  %v2836 = vmax.f32 %v2516, %v2596
  %v2837 = vmax.f32 %v2517, %v2597
  %v2838 = vmax.f32 %v2518, %v2598
  %v2839 = vmax.f32 %v2519, %v2599
  %v2840 = vmax.f32 %v2520, %v2600
  %v2841 = vmax.f32 %v2521, %v2601
  %v2842 = vmax.f32 %v2522, %v2602
  %v2843 = vmax.f32 %v2523, %v2603
  %v2844 = vmax.f32 %v2604, %v2684
  %v2845 = vmax.f32 %v2605, %v2685
  %v2846 = vmax.f32 %v2606, %v2686
  %v2847 = vmax.f32 %v2607, %v2687
  %v2848 = vmax.f32 %v2608, %v2688
  %v2849 = vmax.f32 %v2609, %v2689
  %v2850 = vmax.f32 %v2610, %v2690
  %v2851 = vmax.f32 %v2611, %v2691
  %v2852 = vmax.f32 %v2612, %v2692
  %v2853 = vmax.f32 %v2613, %v2693
  %v2854 = vmax.f32 %v2614, %v2694
  %v2855 = vmax.f32 %v2615, %v2695
  %v2856 = vmax.f32 %v2616, %v2696
  %v2857 = vmax.f32 %v2617, %v2697
  %v2858 = vmax.f32 %v2618, %v2698
  %v2859 = vmax.f32 %v2619, %v2699
  %v2860 = vmax.f32 %v2620, %v2700
  %v2861 = vmax.f32 %v2621, %v2701
  %v2862 = vmax.f32 %v2622, %v2702
  %v2863 = vmax.f32 %v2623, %v2703
  %v2864 = vmax.f32 %v2624, %v2704
  %v2865 = vmax.f32 %v2625, %v2705
  %v2866 = vmax.f32 %v2626, %v2706
  %v2867 = vmax.f32 %v2627, %v2707
  %v2868 = vmax.f32 %v2628, %v2708
  %v2869 = vmax.f32 %v2629, %v2709
  %v2870 = vmax.f32 %v2630, %v2710
  %v2871 = vmax.f32 %v2631, %v2711
  %v2872 = vmax.f32 %v2632, %v2712
  %v2873 = vmax.f32 %v2633, %v2713
  %v2874 = vmax.f32 %v2634, %v2714
  %v2875 = vmax.f32 %v2635, %v2715
  %v2876 = vmax.f32 %v2636, %v2716
  %v2877 = vmax.f32 %v2637, %v2717
  %v2878 = vmax.f32 %v2638, %v2718
  %v2879 = vmax.f32 %v2639, %v2719
  %v2880 = vmax.f32 %v2640, %v2720
  %v2881 = vmax.f32 %v2641, %v2721
  %v2882 = vmax.f32 %v2642, %v2722
  %v2883 = vmax.f32 %v2643, %v2723
  %v2884 = vmax.f32 %v2644, %v2724
  %v2885 = vmax.f32 %v2645, %v2725
  %v2886 = vmax.f32 %v2646, %v2726
  %v2887 = vmax.f32 %v2647, %v2727
  %v2888 = vmax.f32 %v2648, %v2728
  %v2889 = vmax.f32 %v2649, %v2729
  %v2890 = vmax.f32 %v2650, %v2730
  %v2891 = vmax.f32 %v2651, %v2731
  %v2892 = vmax.f32 %v2652, %v2732
  %v2893 = vmax.f32 %v2653, %v2733
  %v2894 = vmax.f32 %v2654, %v2734
  %v2895 = vmax.f32 %v2655, %v2735
  %v2896 = vmax.f32 %v2656, %v2736
  %v2897 = vmax.f32 %v2657, %v2737
  %v2898 = vmax.f32 %v2658, %v2738
  %v2899 = vmax.f32 %v2659, %v2739
  %v2900 = vmax.f32 %v2660, %v2740
  %v2901 = vmax.f32 %v2661, %v2741
  %v2902 = vmax.f32 %v2662, %v2742
  %v2903 = vmax.f32 %v2663, %v2743
  %v2904 = vmax.f32 %v2664, %v2744
  %v2905 = vmax.f32 %v2665, %v2745
  %v2906 = vmax.f32 %v2666, %v2746
  %v2907 = vmax.f32 %v2667, %v2747
  %v2908 = vmax.f32 %v2668, %v2748
  %v2909 = vmax.f32 %v2669, %v2749
  %v2910 = vmax.f32 %v2670, %v2750
  %v2911 = vmax.f32 %v2671, %v2751
  %v2912 = vmax.f32 %v2672, %v2752
  %v2913 = vmax.f32 %v2673, %v2753
  %v2914 = vmax.f32 %v2674, %v2754
  %v2915 = vmax.f32 %v2675, %v2755
  %v2916 = vmax.f32 %v2676, %v2756
  %v2917 = vmax.f32 %v2677, %v2757
  %v2918 = vmax.f32 %v2678, %v2758
  %v2919 = vmax.f32 %v2679, %v2759
  %v2920 = vmax.f32 %v2680, %v2760
  %v2921 = vmax.f32 %v2681, %v2761
  %v2922 = vmax.f32 %v2682, %v2762
  %v2923 = vmax.f32 %v2683, %v2763
  %v2924 = vmax.f32 %v2764, %v2844
  %v2925 = vmax.f32 %v2765, %v2845
  %v2926 = vmax.f32 %v2766, %v2846
  %v2927 = vmax.f32 %v2767, %v2847
  %v2928 = vmax.f32 %v2768, %v2848
  %v2929 = vmax.f32 %v2769, %v2849
  %v2930 = vmax.f32 %v2770, %v2850
  %v2931 = vmax.f32 %v2771, %v2851
  %v2932 = vmax.f32 %v2772, %v2852
  %v2933 = vmax.f32 %v2773, %v2853
  %v2934 = vmax.f32 %v2774, %v2854
  %v2935 = vmax.f32 %v2775, %v2855
  %v2936 = vmax.f32 %v2776, %v2856
  %v2937 = vmax.f32 %v2777, %v2857
  %v2938 = vmax.f32 %v2778, %v2858
  %v2939 = vmax.f32 %v2779, %v2859
  %v2940 = vmax.f32 %v2780, %v2860
  %v2941 = vmax.f32 %v2781, %v2861
  %v2942 = vmax.f32 %v2782, %v2862
  %v2943 = vmax.f32 %v2783, %v2863
  %v2944 = vmax.f32 %v2784, %v2864
  %v2945 = vmax.f32 %v2785, %v2865
  %v2946 = vmax.f32 %v2786, %v2866
  %v2947 = vmax.f32 %v2787, %v2867
  %v2948 = vmax.f32 %v2788, %v2868
  %v2949 = vmax.f32 %v2789, %v2869
  %v2950 = vmax.f32 %v2790, %v2870
  %v2951 = vmax.f32 %v2791, %v2871
  %v2952 = vmax.f32 %v2792, %v2872
  %v2953 = vmax.f32 %v2793, %v2873
  %v2954 = vmax.f32 %v2794, %v2874
  %v2955 = vmax.f32 %v2795, %v2875
  %v2956 = vmax.f32 %v2796, %v2876
  %v2957 = vmax.f32 %v2797, %v2877
  %v2958 = vmax.f32 %v2798, %v2878
  %v2959 = vmax.f32 %v2799, %v2879
  %v2960 = vmax.f32 %v2800, %v2880
  %v2961 = vmax.f32 %v2801, %v2881
  %v2962 = vmax.f32 %v2802, %v2882
  %v2963 = vmax.f32 %v2803, %v2883
  %v2964 = vmax.f32 %v2804, %v2884
  %v2965 = vmax.f32 %v2805, %v2885
  %v2966 = vmax.f32 %v2806, %v2886
  %v2967 = vmax.f32 %v2807, %v2887
  %v2968 = vmax.f32 %v2808, %v2888
  %v2969 = vmax.f32 %v2809, %v2889
  %v2970 = vmax.f32 %v2810, %v2890
  %v2971 = vmax.f32 %v2811, %v2891
  %v2972 = vmax.f32 %v2812, %v2892
  %v2973 = vmax.f32 %v2813, %v2893
  %v2974 = vmax.f32 %v2814, %v2894
  %v2975 = vmax.f32 %v2815, %v2895
  %v2976 = vmax.f32 %v2816, %v2896
  %v2977 = vmax.f32 %v2817, %v2897
  %v2978 = vmax.f32 %v2818, %v2898
  %v2979 = vmax.f32 %v2819, %v2899
  %v2980 = vmax.f32 %v2820, %v2900
  %v2981 = vmax.f32 %v2821, %v2901
  %v2982 = vmax.f32 %v2822, %v2902
  %v2983 = vmax.f32 %v2823, %v2903
  %v2984 = vmax.f32 %v2824, %v2904
  %v2985 = vmax.f32 %v2825, %v2905
  %v2986 = vmax.f32 %v2826, %v2906
  %v2987 = vmax.f32 %v2827, %v2907
  %v2988 = vmax.f32 %v2828, %v2908
  %v2989 = vmax.f32 %v2829, %v2909
  %v2990 = vmax.f32 %v2830, %v2910
  %v2991 = vmax.f32 %v2831, %v2911
  %v2992 = vmax.f32 %v2832, %v2912
  %v2993 = vmax.f32 %v2833, %v2913
  %v2994 = vmax.f32 %v2834, %v2914
  %v2995 = vmax.f32 %v2835, %v2915
  %v2996 = vmax.f32 %v2836, %v2916
  %v2997 = vmax.f32 %v2837, %v2917
  %v2998 = vmax.f32 %v2838, %v2918
  %v2999 = vmax.f32 %v2839, %v2919
  %v3000 = vmax.f32 %v2840, %v2920
  %v3001 = vmax.f32 %v2841, %v2921
  %v3002 = vmax.f32 %v2842, %v2922
  %v3003 = vmax.f32 %v2843, %v2923
  %3004 = vmatpush.msra.mxu0 0.0
  %3005 = vmatpush.msra.mxu0 0.0
  %3006 = vmatpush.msra.mxu0 0.0
  %3007 = vmatpush.msra.mxu0 0.0
  %3008 = vmatpush.msra.mxu0 0.0
  %3009 = vmatpush.msra.mxu0 0.0
  %3010 = vmatpush.msra.mxu0 0.0
  %3011 = vmatpush.msra.mxu0 0.0
  %3012 = vmatpush.msra.mxu0 0.0
  %3013 = vmatpush.msra.mxu0 0.0
  %3014 = vmatpush.msra.mxu0 0.0
  %3015 = vmatpush.msra.mxu0 0.0
  %3016 = vmatpush.msra.mxu0 0.0
  %3017 = vmatpush.msra.mxu0 0.0
  %3018 = vmatpush.msra.mxu0 0.0
  %3019 = vmatpush.msra.mxu0 %v26
  %3020 = vmatmul.f32.gmra.mxu0 %v112
  %v3021 = vpop.f32.mrf.mxu0
  %v3022 = vadd.f32 0.0, %v3021
  %3023 = vmatmul.f32.gmra.mxu0 %v115
  %v3024 = vpop.f32.mrf.mxu0
  %v3025 = vadd.f32 0.0, %v3024
  %3026 = vmatmul.f32.gmra.mxu0 %v118
  %v3027 = vpop.f32.mrf.mxu0
  %v3028 = vadd.f32 0.0, %v3027
  %3029 = vmatmul.f32.gmra.mxu0 %v121
  %v3030 = vpop.f32.mrf.mxu0
  %v3031 = vadd.f32 0.0, %v3030
  %3032 = vmatmul.f32.gmra.mxu0 %v124
  %v3033 = vpop.f32.mrf.mxu0
  %v3034 = vadd.f32 0.0, %v3033
  %3035 = vmatmul.f32.gmra.mxu0 %v127
  %v3036 = vpop.f32.mrf.mxu0
  %v3037 = vadd.f32 0.0, %v3036
  %3038 = vmatmul.f32.gmra.mxu0 %v130
  %v3039 = vpop.f32.mrf.mxu0
  %v3040 = vadd.f32 0.0, %v3039
  %3041 = vmatmul.f32.gmra.mxu0 %v133
  %v3042 = vpop.f32.mrf.mxu0
  %v3043 = vadd.f32 0.0, %v3042
  %3044 = vmatmul.f32.gmra.mxu0 %v136
  %v3045 = vpop.f32.mrf.mxu0
  %v3046 = vadd.f32 0.0, %v3045
  %3047 = vmatmul.f32.gmra.mxu0 %v139
  %v3048 = vpop.f32.mrf.mxu0
  %v3049 = vadd.f32 0.0, %v3048
  %3050 = vmatmul.f32.gmra.mxu0 %v142
  %v3051 = vpop.f32.mrf.mxu0
  %v3052 = vadd.f32 0.0, %v3051
  %3053 = vmatmul.f32.gmra.mxu0 %v145
  %v3054 = vpop.f32.mrf.mxu0
  %v3055 = vadd.f32 0.0, %v3054
  %3056 = vmatmul.f32.gmra.mxu0 %v148
  %v3057 = vpop.f32.mrf.mxu0
  %v3058 = vadd.f32 0.0, %v3057
  %3059 = vmatmul.f32.gmra.mxu0 %v151
  %v3060 = vpop.f32.mrf.mxu0
  %v3061 = vadd.f32 0.0, %v3060
  %3062 = vmatmul.f32.gmra.mxu0 %v154
  %v3063 = vpop.f32.mrf.mxu0
  %v3064 = vadd.f32 0.0, %v3063
  %3065 = vmatmul.f32.gmra.mxu0 %v157
  %v3066 = vpop.f32.mrf.mxu0
  %v3067 = vadd.f32 0.0, %v3066
  %3068 = vmatmul.f32.gmra.mxu0 %v160
  %v3069 = vpop.f32.mrf.mxu0
  %v3070 = vadd.f32 0.0, %v3069
  %3071 = vmatmul.f32.gmra.mxu0 %v163
  %v3072 = vpop.f32.mrf.mxu0
  %v3073 = vadd.f32 0.0, %v3072
  %3074 = vmatmul.f32.gmra.mxu0 %v166
  %v3075 = vpop.f32.mrf.mxu0
  %v3076 = vadd.f32 0.0, %v3075
  %3077 = vmatmul.f32.gmra.mxu0 %v169
  %v3078 = vpop.f32.mrf.mxu0
  %v3079 = vadd.f32 0.0, %v3078
  %3080 = vmatmul.f32.gmra.mxu0 %v172
  %v3081 = vpop.f32.mrf.mxu0
  %v3082 = vadd.f32 0.0, %v3081
  %3083 = vmatmul.f32.gmra.mxu0 %v175
  %v3084 = vpop.f32.mrf.mxu0
  %v3085 = vadd.f32 0.0, %v3084
  %3086 = vmatmul.f32.gmra.mxu0 %v178
  %v3087 = vpop.f32.mrf.mxu0
  %v3088 = vadd.f32 0.0, %v3087
  %3089 = vmatmul.f32.gmra.mxu0 %v181
  %v3090 = vpop.f32.mrf.mxu0
  %v3091 = vadd.f32 0.0, %v3090
  %3092 = vmatmul.f32.gmra.mxu0 %v184
  %v3093 = vpop.f32.mrf.mxu0
  %v3094 = vadd.f32 0.0, %v3093
  %3095 = vmatmul.f32.gmra.mxu0 %v187
  %v3096 = vpop.f32.mrf.mxu0
  %v3097 = vadd.f32 0.0, %v3096
  %3098 = vmatmul.f32.gmra.mxu0 %v190
  %v3099 = vpop.f32.mrf.mxu0
  %v3100 = vadd.f32 0.0, %v3099
  %3101 = vmatmul.f32.gmra.mxu0 %v193
  %v3102 = vpop.f32.mrf.mxu0
  %v3103 = vadd.f32 0.0, %v3102
  %3104 = vmatmul.f32.gmra.mxu0 %v196
  %v3105 = vpop.f32.mrf.mxu0
  %v3106 = vadd.f32 0.0, %v3105
  %3107 = vmatmul.f32.gmra.mxu0 %v199
  %v3108 = vpop.f32.mrf.mxu0
  %v3109 = vadd.f32 0.0, %v3108
  %3110 = vmatmul.f32.gmra.mxu0 %v202
  %v3111 = vpop.f32.mrf.mxu0
  %v3112 = vadd.f32 0.0, %v3111
  %3113 = vmatmul.f32.gmra.mxu0 %v205
  %v3114 = vpop.f32.mrf.mxu0
  %v3115 = vadd.f32 0.0, %v3114
  %3116 = vmatmul.f32.gmra.mxu0 %v208
  %v3117 = vpop.f32.mrf.mxu0
  %v3118 = vadd.f32 0.0, %v3117
  %3119 = vmatmul.f32.gmra.mxu0 %v211
  %v3120 = vpop.f32.mrf.mxu0
  %v3121 = vadd.f32 0.0, %v3120
  %3122 = vmatmul.f32.gmra.mxu0 %v214
  %v3123 = vpop.f32.mrf.mxu0
  %v3124 = vadd.f32 0.0, %v3123
  %3125 = vmatmul.f32.gmra.mxu0 %v217
  %v3126 = vpop.f32.mrf.mxu0
  %v3127 = vadd.f32 0.0, %v3126
  %3128 = vmatmul.f32.gmra.mxu0 %v220
  %v3129 = vpop.f32.mrf.mxu0
  %v3130 = vadd.f32 0.0, %v3129
  %3131 = vmatmul.f32.gmra.mxu0 %v223
  %v3132 = vpop.f32.mrf.mxu0
  %v3133 = vadd.f32 0.0, %v3132
  %3134 = vmatmul.f32.gmra.mxu0 %v226
  %v3135 = vpop.f32.mrf.mxu0
  %v3136 = vadd.f32 0.0, %v3135
  %3137 = vmatmul.f32.gmra.mxu0 %v229
  %v3138 = vpop.f32.mrf.mxu0
  %v3139 = vadd.f32 0.0, %v3138
  %3140 = vmatmul.f32.gmra.mxu0 %v232
  %v3141 = vpop.f32.mrf.mxu0
  %v3142 = vadd.f32 0.0, %v3141
  %3143 = vmatmul.f32.gmra.mxu0 %v235
  %v3144 = vpop.f32.mrf.mxu0
  %v3145 = vadd.f32 0.0, %v3144
  %3146 = vmatmul.f32.gmra.mxu0 %v238
  %v3147 = vpop.f32.mrf.mxu0
  %v3148 = vadd.f32 0.0, %v3147
  %3149 = vmatmul.f32.gmra.mxu0 %v241
  %v3150 = vpop.f32.mrf.mxu0
  %v3151 = vadd.f32 0.0, %v3150
  %3152 = vmatmul.f32.gmra.mxu0 %v244
  %v3153 = vpop.f32.mrf.mxu0
  %v3154 = vadd.f32 0.0, %v3153
  %3155 = vmatmul.f32.gmra.mxu0 %v247
  %v3156 = vpop.f32.mrf.mxu0
  %v3157 = vadd.f32 0.0, %v3156
  %3158 = vmatmul.f32.gmra.mxu0 %v250
  %v3159 = vpop.f32.mrf.mxu0
  %v3160 = vadd.f32 0.0, %v3159
  %3161 = vmatmul.f32.gmra.mxu0 %v253
  %v3162 = vpop.f32.mrf.mxu0
  %v3163 = vadd.f32 0.0, %v3162
  %3164 = vmatmul.f32.gmra.mxu0 %v256
  %v3165 = vpop.f32.mrf.mxu0
  %v3166 = vadd.f32 0.0, %v3165
  %3167 = vmatmul.f32.gmra.mxu0 %v259
  %v3168 = vpop.f32.mrf.mxu0
  %v3169 = vadd.f32 0.0, %v3168
  %3170 = vmatmul.f32.gmra.mxu0 %v262
  %v3171 = vpop.f32.mrf.mxu0
  %v3172 = vadd.f32 0.0, %v3171
  %3173 = vmatmul.f32.gmra.mxu0 %v265
  %v3174 = vpop.f32.mrf.mxu0
  %v3175 = vadd.f32 0.0, %v3174
  %3176 = vmatmul.f32.gmra.mxu0 %v268
  %v3177 = vpop.f32.mrf.mxu0
  %v3178 = vadd.f32 0.0, %v3177
  %3179 = vmatmul.f32.gmra.mxu0 %v271
  %v3180 = vpop.f32.mrf.mxu0
  %v3181 = vadd.f32 0.0, %v3180
  %3182 = vmatmul.f32.gmra.mxu0 %v274
  %v3183 = vpop.f32.mrf.mxu0
  %v3184 = vadd.f32 0.0, %v3183
  %3185 = vmatmul.f32.gmra.mxu0 %v277
  %v3186 = vpop.f32.mrf.mxu0
  %v3187 = vadd.f32 0.0, %v3186
  %3188 = vmatmul.f32.gmra.mxu0 %v280
  %v3189 = vpop.f32.mrf.mxu0
  %v3190 = vadd.f32 0.0, %v3189
  %3191 = vmatmul.f32.gmra.mxu0 %v283
  %v3192 = vpop.f32.mrf.mxu0
  %v3193 = vadd.f32 0.0, %v3192
  %3194 = vmatmul.f32.gmra.mxu0 %v286
  %v3195 = vpop.f32.mrf.mxu0
  %v3196 = vadd.f32 0.0, %v3195
  %3197 = vmatmul.f32.gmra.mxu0 %v289
  %v3198 = vpop.f32.mrf.mxu0
  %v3199 = vadd.f32 0.0, %v3198
  %3200 = vmatmul.f32.gmra.mxu0 %v292
  %v3201 = vpop.f32.mrf.mxu0
  %v3202 = vadd.f32 0.0, %v3201
  %3203 = vmatmul.f32.gmra.mxu0 %v295
  %v3204 = vpop.f32.mrf.mxu0
  %v3205 = vadd.f32 0.0, %v3204
  %3206 = vmatmul.f32.gmra.mxu0 %v298
  %v3207 = vpop.f32.mrf.mxu0
  %v3208 = vadd.f32 0.0, %v3207
  %3209 = vmatmul.f32.gmra.mxu0 %v301
  %v3210 = vpop.f32.mrf.mxu0
  %v3211 = vadd.f32 0.0, %v3210
  %3212 = vmatmul.f32.gmra.mxu0 %v304
  %v3213 = vpop.f32.mrf.mxu0
  %v3214 = vadd.f32 0.0, %v3213
  %3215 = vmatmul.f32.gmra.mxu0 %v307
  %v3216 = vpop.f32.mrf.mxu0
  %v3217 = vadd.f32 0.0, %v3216
  %3218 = vmatmul.f32.gmra.mxu0 %v310
  %v3219 = vpop.f32.mrf.mxu0
  %v3220 = vadd.f32 0.0, %v3219
  %3221 = vmatmul.f32.gmra.mxu0 %v313
  %v3222 = vpop.f32.mrf.mxu0
  %v3223 = vadd.f32 0.0, %v3222
  %3224 = vmatmul.f32.gmra.mxu0 %v316
  %v3225 = vpop.f32.mrf.mxu0
  %v3226 = vadd.f32 0.0, %v3225
  %3227 = vmatmul.f32.gmra.mxu0 %v319
  %v3228 = vpop.f32.mrf.mxu0
  %v3229 = vadd.f32 0.0, %v3228
  %3230 = vmatmul.f32.gmra.mxu0 %v322
  %v3231 = vpop.f32.mrf.mxu0
  %v3232 = vadd.f32 0.0, %v3231
  %3233 = vmatmul.f32.gmra.mxu0 %v325
  %v3234 = vpop.f32.mrf.mxu0
  %v3235 = vadd.f32 0.0, %v3234
  %3236 = vmatmul.f32.gmra.mxu0 %v328
  %v3237 = vpop.f32.mrf.mxu0
  %v3238 = vadd.f32 0.0, %v3237
  %3239 = vmatmul.f32.gmra.mxu0 %v331
  %v3240 = vpop.f32.mrf.mxu0
  %v3241 = vadd.f32 0.0, %v3240
  %3242 = vmatmul.f32.gmra.mxu0 %v334
  %v3243 = vpop.f32.mrf.mxu0
  %v3244 = vadd.f32 0.0, %v3243
  %3245 = vmatmul.f32.gmra.mxu0 %v337
  %v3246 = vpop.f32.mrf.mxu0
  %v3247 = vadd.f32 0.0, %v3246
  %3248 = vmatmul.f32.gmra.mxu0 %v340
  %v3249 = vpop.f32.mrf.mxu0
  %v3250 = vadd.f32 0.0, %v3249
  %3251 = vmatmul.f32.gmra.mxu0 %v343
  %v3252 = vpop.f32.mrf.mxu0
  %v3253 = vadd.f32 0.0, %v3252
  %3254 = vmatmul.f32.gmra.mxu0 %v346
  %v3255 = vpop.f32.mrf.mxu0
  %v3256 = vadd.f32 0.0, %v3255
  %3257 = vmatmul.f32.gmra.mxu0 %v349
  %v3258 = vpop.f32.mrf.mxu0
  %v3259 = vadd.f32 0.0, %v3258
  %3260 = vdwg.mxu0
  %v3262 = vrot.slane %v27, 1
  %v3263 = vsel %vm610, %v612, %v3262
  %3265 = vmatpush.msra.mxu0 0.0
  %3266 = vmatpush.msra.mxu0 0.0
  %3267 = vmatpush.msra.mxu0 0.0
  %3268 = vmatpush.msra.mxu0 0.0
  %3269 = vmatpush.msra.mxu0 0.0
  %3270 = vmatpush.msra.mxu0 0.0
  %3271 = vmatpush.msra.mxu0 0.0
  %3272 = vmatpush.msra.mxu0 0.0
  %3273 = vmatpush.msra.mxu0 0.0
  %3274 = vmatpush.msra.mxu0 0.0
  %3275 = vmatpush.msra.mxu0 0.0
  %3276 = vmatpush.msra.mxu0 0.0
  %3277 = vmatpush.msra.mxu0 0.0
  %3278 = vmatpush.msra.mxu0 0.0
  %3279 = vmatpush.msra.mxu0 0.0
  %3280 = vmatpush.msra.mxu0 %v3263
  %3281 = vmatmul.f32.gmra.mxu0 %v112
  %v3282 = vpop.f32.mrf.mxu0
  %v3283 = vadd.f32 0.0, %v3282
  %3284 = vmatmul.f32.gmra.mxu0 %v115
  %v3285 = vpop.f32.mrf.mxu0
  %v3286 = vadd.f32 0.0, %v3285
  %3287 = vmatmul.f32.gmra.mxu0 %v118
  %v3288 = vpop.f32.mrf.mxu0
  %v3289 = vadd.f32 0.0, %v3288
  %3290 = vmatmul.f32.gmra.mxu0 %v121
  %v3291 = vpop.f32.mrf.mxu0
  %v3292 = vadd.f32 0.0, %v3291
  %3293 = vmatmul.f32.gmra.mxu0 %v124
  %v3294 = vpop.f32.mrf.mxu0
  %v3295 = vadd.f32 0.0, %v3294
  %3296 = vmatmul.f32.gmra.mxu0 %v127
  %v3297 = vpop.f32.mrf.mxu0
  %v3298 = vadd.f32 0.0, %v3297
  %3299 = vmatmul.f32.gmra.mxu0 %v130
  %v3300 = vpop.f32.mrf.mxu0
  %v3301 = vadd.f32 0.0, %v3300
  %3302 = vmatmul.f32.gmra.mxu0 %v133
  %v3303 = vpop.f32.mrf.mxu0
  %v3304 = vadd.f32 0.0, %v3303
  %3305 = vmatmul.f32.gmra.mxu0 %v136
  %v3306 = vpop.f32.mrf.mxu0
  %v3307 = vadd.f32 0.0, %v3306
  %3308 = vmatmul.f32.gmra.mxu0 %v139
  %v3309 = vpop.f32.mrf.mxu0
  %v3310 = vadd.f32 0.0, %v3309
  %3311 = vmatmul.f32.gmra.mxu0 %v142
  %v3312 = vpop.f32.mrf.mxu0
  %v3313 = vadd.f32 0.0, %v3312
  %3314 = vmatmul.f32.gmra.mxu0 %v145
  %v3315 = vpop.f32.mrf.mxu0
  %v3316 = vadd.f32 0.0, %v3315
  %3317 = vmatmul.f32.gmra.mxu0 %v148
  %v3318 = vpop.f32.mrf.mxu0
  %v3319 = vadd.f32 0.0, %v3318
  %3320 = vmatmul.f32.gmra.mxu0 %v151
  %v3321 = vpop.f32.mrf.mxu0
  %v3322 = vadd.f32 0.0, %v3321
  %3323 = vmatmul.f32.gmra.mxu0 %v154
  %v3324 = vpop.f32.mrf.mxu0
  %v3325 = vadd.f32 0.0, %v3324
  %3326 = vmatmul.f32.gmra.mxu0 %v157
  %v3327 = vpop.f32.mrf.mxu0
  %v3328 = vadd.f32 0.0, %v3327
  %3329 = vmatmul.f32.gmra.mxu0 %v160
  %v3330 = vpop.f32.mrf.mxu0
  %v3331 = vadd.f32 0.0, %v3330
  %3332 = vmatmul.f32.gmra.mxu0 %v163
  %v3333 = vpop.f32.mrf.mxu0
  %v3334 = vadd.f32 0.0, %v3333
  %3335 = vmatmul.f32.gmra.mxu0 %v166
  %v3336 = vpop.f32.mrf.mxu0
  %v3337 = vadd.f32 0.0, %v3336
  %3338 = vmatmul.f32.gmra.mxu0 %v169
  %v3339 = vpop.f32.mrf.mxu0
  %v3340 = vadd.f32 0.0, %v3339
  %3341 = vmatmul.f32.gmra.mxu0 %v172
  %v3342 = vpop.f32.mrf.mxu0
  %v3343 = vadd.f32 0.0, %v3342
  %3344 = vmatmul.f32.gmra.mxu0 %v175
  %v3345 = vpop.f32.mrf.mxu0
  %v3346 = vadd.f32 0.0, %v3345
  %3347 = vmatmul.f32.gmra.mxu0 %v178
  %v3348 = vpop.f32.mrf.mxu0
  %v3349 = vadd.f32 0.0, %v3348
  %3350 = vmatmul.f32.gmra.mxu0 %v181
  %v3351 = vpop.f32.mrf.mxu0
  %v3352 = vadd.f32 0.0, %v3351
  %3353 = vmatmul.f32.gmra.mxu0 %v184
  %v3354 = vpop.f32.mrf.mxu0
  %v3355 = vadd.f32 0.0, %v3354
  %3356 = vmatmul.f32.gmra.mxu0 %v187
  %v3357 = vpop.f32.mrf.mxu0
  %v3358 = vadd.f32 0.0, %v3357
  %3359 = vmatmul.f32.gmra.mxu0 %v190
  %v3360 = vpop.f32.mrf.mxu0
  %v3361 = vadd.f32 0.0, %v3360
  %3362 = vmatmul.f32.gmra.mxu0 %v193
  %v3363 = vpop.f32.mrf.mxu0
  %v3364 = vadd.f32 0.0, %v3363
  %3365 = vmatmul.f32.gmra.mxu0 %v196
  %v3366 = vpop.f32.mrf.mxu0
  %v3367 = vadd.f32 0.0, %v3366
  %3368 = vmatmul.f32.gmra.mxu0 %v199
  %v3369 = vpop.f32.mrf.mxu0
  %v3370 = vadd.f32 0.0, %v3369
  %3371 = vmatmul.f32.gmra.mxu0 %v202
  %v3372 = vpop.f32.mrf.mxu0
  %v3373 = vadd.f32 0.0, %v3372
  %3374 = vmatmul.f32.gmra.mxu0 %v205
  %v3375 = vpop.f32.mrf.mxu0
  %v3376 = vadd.f32 0.0, %v3375
  %3377 = vmatmul.f32.gmra.mxu0 %v208
  %v3378 = vpop.f32.mrf.mxu0
  %v3379 = vadd.f32 0.0, %v3378
  %3380 = vmatmul.f32.gmra.mxu0 %v211
  %v3381 = vpop.f32.mrf.mxu0
  %v3382 = vadd.f32 0.0, %v3381
  %3383 = vmatmul.f32.gmra.mxu0 %v214
  %v3384 = vpop.f32.mrf.mxu0
  %v3385 = vadd.f32 0.0, %v3384
  %3386 = vmatmul.f32.gmra.mxu0 %v217
  %v3387 = vpop.f32.mrf.mxu0
  %v3388 = vadd.f32 0.0, %v3387
  %3389 = vmatmul.f32.gmra.mxu0 %v220
  %v3390 = vpop.f32.mrf.mxu0
  %v3391 = vadd.f32 0.0, %v3390
  %3392 = vmatmul.f32.gmra.mxu0 %v223
  %v3393 = vpop.f32.mrf.mxu0
  %v3394 = vadd.f32 0.0, %v3393
  %3395 = vmatmul.f32.gmra.mxu0 %v226
  %v3396 = vpop.f32.mrf.mxu0
  %v3397 = vadd.f32 0.0, %v3396
  %3398 = vmatmul.f32.gmra.mxu0 %v229
  %v3399 = vpop.f32.mrf.mxu0
  %v3400 = vadd.f32 0.0, %v3399
  %3401 = vmatmul.f32.gmra.mxu0 %v232
  %v3402 = vpop.f32.mrf.mxu0
  %v3403 = vadd.f32 0.0, %v3402
  %3404 = vmatmul.f32.gmra.mxu0 %v235
  %v3405 = vpop.f32.mrf.mxu0
  %v3406 = vadd.f32 0.0, %v3405
  %3407 = vmatmul.f32.gmra.mxu0 %v238
  %v3408 = vpop.f32.mrf.mxu0
  %v3409 = vadd.f32 0.0, %v3408
  %3410 = vmatmul.f32.gmra.mxu0 %v241
  %v3411 = vpop.f32.mrf.mxu0
  %v3412 = vadd.f32 0.0, %v3411
  %3413 = vmatmul.f32.gmra.mxu0 %v244
  %v3414 = vpop.f32.mrf.mxu0
  %v3415 = vadd.f32 0.0, %v3414
  %3416 = vmatmul.f32.gmra.mxu0 %v247
  %v3417 = vpop.f32.mrf.mxu0
  %v3418 = vadd.f32 0.0, %v3417
  %3419 = vmatmul.f32.gmra.mxu0 %v250
  %v3420 = vpop.f32.mrf.mxu0
  %v3421 = vadd.f32 0.0, %v3420
  %3422 = vmatmul.f32.gmra.mxu0 %v253
  %v3423 = vpop.f32.mrf.mxu0
  %v3424 = vadd.f32 0.0, %v3423
  %3425 = vmatmul.f32.gmra.mxu0 %v256
  %v3426 = vpop.f32.mrf.mxu0
  %v3427 = vadd.f32 0.0, %v3426
  %3428 = vmatmul.f32.gmra.mxu0 %v259
  %v3429 = vpop.f32.mrf.mxu0
  %v3430 = vadd.f32 0.0, %v3429
  %3431 = vmatmul.f32.gmra.mxu0 %v262
  %v3432 = vpop.f32.mrf.mxu0
  %v3433 = vadd.f32 0.0, %v3432
  %3434 = vmatmul.f32.gmra.mxu0 %v265
  %v3435 = vpop.f32.mrf.mxu0
  %v3436 = vadd.f32 0.0, %v3435
  %3437 = vmatmul.f32.gmra.mxu0 %v268
  %v3438 = vpop.f32.mrf.mxu0
  %v3439 = vadd.f32 0.0, %v3438
  %3440 = vmatmul.f32.gmra.mxu0 %v271
  %v3441 = vpop.f32.mrf.mxu0
  %v3442 = vadd.f32 0.0, %v3441
  %3443 = vmatmul.f32.gmra.mxu0 %v274
  %v3444 = vpop.f32.mrf.mxu0
  %v3445 = vadd.f32 0.0, %v3444
  %3446 = vmatmul.f32.gmra.mxu0 %v277
  %v3447 = vpop.f32.mrf.mxu0
  %v3448 = vadd.f32 0.0, %v3447
  %3449 = vmatmul.f32.gmra.mxu0 %v280
  %v3450 = vpop.f32.mrf.mxu0
  %v3451 = vadd.f32 0.0, %v3450
  %3452 = vmatmul.f32.gmra.mxu0 %v283
  %v3453 = vpop.f32.mrf.mxu0
  %v3454 = vadd.f32 0.0, %v3453
  %3455 = vmatmul.f32.gmra.mxu0 %v286
  %v3456 = vpop.f32.mrf.mxu0
  %v3457 = vadd.f32 0.0, %v3456
  %3458 = vmatmul.f32.gmra.mxu0 %v289
  %v3459 = vpop.f32.mrf.mxu0
  %v3460 = vadd.f32 0.0, %v3459
  %3461 = vmatmul.f32.gmra.mxu0 %v292
  %v3462 = vpop.f32.mrf.mxu0
  %v3463 = vadd.f32 0.0, %v3462
  %3464 = vmatmul.f32.gmra.mxu0 %v295
  %v3465 = vpop.f32.mrf.mxu0
  %v3466 = vadd.f32 0.0, %v3465
  %3467 = vmatmul.f32.gmra.mxu0 %v298
  %v3468 = vpop.f32.mrf.mxu0
  %v3469 = vadd.f32 0.0, %v3468
  %3470 = vmatmul.f32.gmra.mxu0 %v301
  %v3471 = vpop.f32.mrf.mxu0
  %v3472 = vadd.f32 0.0, %v3471
  %3473 = vmatmul.f32.gmra.mxu0 %v304
  %v3474 = vpop.f32.mrf.mxu0
  %v3475 = vadd.f32 0.0, %v3474
  %3476 = vmatmul.f32.gmra.mxu0 %v307
  %v3477 = vpop.f32.mrf.mxu0
  %v3478 = vadd.f32 0.0, %v3477
  %3479 = vmatmul.f32.gmra.mxu0 %v310
  %v3480 = vpop.f32.mrf.mxu0
  %v3481 = vadd.f32 0.0, %v3480
  %3482 = vmatmul.f32.gmra.mxu0 %v313
  %v3483 = vpop.f32.mrf.mxu0
  %v3484 = vadd.f32 0.0, %v3483
  %3485 = vmatmul.f32.gmra.mxu0 %v316
  %v3486 = vpop.f32.mrf.mxu0
  %v3487 = vadd.f32 0.0, %v3486
  %3488 = vmatmul.f32.gmra.mxu0 %v319
  %v3489 = vpop.f32.mrf.mxu0
  %v3490 = vadd.f32 0.0, %v3489
  %3491 = vmatmul.f32.gmra.mxu0 %v322
  %v3492 = vpop.f32.mrf.mxu0
  %v3493 = vadd.f32 0.0, %v3492
  %3494 = vmatmul.f32.gmra.mxu0 %v325
  %v3495 = vpop.f32.mrf.mxu0
  %v3496 = vadd.f32 0.0, %v3495
  %3497 = vmatmul.f32.gmra.mxu0 %v328
  %v3498 = vpop.f32.mrf.mxu0
  %v3499 = vadd.f32 0.0, %v3498
  %3500 = vmatmul.f32.gmra.mxu0 %v331
  %v3501 = vpop.f32.mrf.mxu0
  %v3502 = vadd.f32 0.0, %v3501
  %3503 = vmatmul.f32.gmra.mxu0 %v334
  %v3504 = vpop.f32.mrf.mxu0
  %v3505 = vadd.f32 0.0, %v3504
  %3506 = vmatmul.f32.gmra.mxu0 %v337
  %v3507 = vpop.f32.mrf.mxu0
  %v3508 = vadd.f32 0.0, %v3507
  %3509 = vmatmul.f32.gmra.mxu0 %v340
  %v3510 = vpop.f32.mrf.mxu0
  %v3511 = vadd.f32 0.0, %v3510
  %3512 = vmatmul.f32.gmra.mxu0 %v343
  %v3513 = vpop.f32.mrf.mxu0
  %v3514 = vadd.f32 0.0, %v3513
  %3515 = vmatmul.f32.gmra.mxu0 %v346
  %v3516 = vpop.f32.mrf.mxu0
  %v3517 = vadd.f32 0.0, %v3516
  %3518 = vmatmul.f32.gmra.mxu0 %v349
  %v3519 = vpop.f32.mrf.mxu0
  %v3520 = vadd.f32 0.0, %v3519
  %3521 = vdwg.mxu0
  %v3522 = vrot.slane %v27, 2
  %v3523 = vsel %vm872, %v874, %v3522
  %3525 = vmatpush.msra.mxu0 0.0
  %3526 = vmatpush.msra.mxu0 0.0
  %3527 = vmatpush.msra.mxu0 0.0
  %3528 = vmatpush.msra.mxu0 0.0
  %3529 = vmatpush.msra.mxu0 0.0
  %3530 = vmatpush.msra.mxu0 0.0
  %3531 = vmatpush.msra.mxu0 0.0
  %3532 = vmatpush.msra.mxu0 0.0
  %3533 = vmatpush.msra.mxu0 0.0
  %3534 = vmatpush.msra.mxu0 0.0
  %3535 = vmatpush.msra.mxu0 0.0
  %3536 = vmatpush.msra.mxu0 0.0
  %3537 = vmatpush.msra.mxu0 0.0
  %3538 = vmatpush.msra.mxu0 0.0
  %3539 = vmatpush.msra.mxu0 0.0
  %3540 = vmatpush.msra.mxu0 %v3523
  %3541 = vmatmul.f32.gmra.mxu0 %v112
  %v3542 = vpop.f32.mrf.mxu0
  %v3543 = vadd.f32 0.0, %v3542
  %3544 = vmatmul.f32.gmra.mxu0 %v115
  %v3545 = vpop.f32.mrf.mxu0
  %v3546 = vadd.f32 0.0, %v3545
  %3547 = vmatmul.f32.gmra.mxu0 %v118
  %v3548 = vpop.f32.mrf.mxu0
  %v3549 = vadd.f32 0.0, %v3548
  %3550 = vmatmul.f32.gmra.mxu0 %v121
  %v3551 = vpop.f32.mrf.mxu0
  %v3552 = vadd.f32 0.0, %v3551
  %3553 = vmatmul.f32.gmra.mxu0 %v124
  %v3554 = vpop.f32.mrf.mxu0
  %v3555 = vadd.f32 0.0, %v3554
  %3556 = vmatmul.f32.gmra.mxu0 %v127
  %v3557 = vpop.f32.mrf.mxu0
  %v3558 = vadd.f32 0.0, %v3557
  %3559 = vmatmul.f32.gmra.mxu0 %v130
  %v3560 = vpop.f32.mrf.mxu0
  %v3561 = vadd.f32 0.0, %v3560
  %3562 = vmatmul.f32.gmra.mxu0 %v133
  %v3563 = vpop.f32.mrf.mxu0
  %v3564 = vadd.f32 0.0, %v3563
  %3565 = vmatmul.f32.gmra.mxu0 %v136
  %v3566 = vpop.f32.mrf.mxu0
  %v3567 = vadd.f32 0.0, %v3566
  %3568 = vmatmul.f32.gmra.mxu0 %v139
  %v3569 = vpop.f32.mrf.mxu0
  %v3570 = vadd.f32 0.0, %v3569
  %3571 = vmatmul.f32.gmra.mxu0 %v142
  %v3572 = vpop.f32.mrf.mxu0
  %v3573 = vadd.f32 0.0, %v3572
  %3574 = vmatmul.f32.gmra.mxu0 %v145
  %v3575 = vpop.f32.mrf.mxu0
  %v3576 = vadd.f32 0.0, %v3575
  %3577 = vmatmul.f32.gmra.mxu0 %v148
  %v3578 = vpop.f32.mrf.mxu0
  %v3579 = vadd.f32 0.0, %v3578
  %3580 = vmatmul.f32.gmra.mxu0 %v151
  %v3581 = vpop.f32.mrf.mxu0
  %v3582 = vadd.f32 0.0, %v3581
  %3583 = vmatmul.f32.gmra.mxu0 %v154
  %v3584 = vpop.f32.mrf.mxu0
  %v3585 = vadd.f32 0.0, %v3584
  %3586 = vmatmul.f32.gmra.mxu0 %v157
  %v3587 = vpop.f32.mrf.mxu0
  %v3588 = vadd.f32 0.0, %v3587
  %3589 = vmatmul.f32.gmra.mxu0 %v160
  %v3590 = vpop.f32.mrf.mxu0
  %v3591 = vadd.f32 0.0, %v3590
  %3592 = vmatmul.f32.gmra.mxu0 %v163
  %v3593 = vpop.f32.mrf.mxu0
  %v3594 = vadd.f32 0.0, %v3593
  %3595 = vmatmul.f32.gmra.mxu0 %v166
  %v3596 = vpop.f32.mrf.mxu0
  %v3597 = vadd.f32 0.0, %v3596
  %3598 = vmatmul.f32.gmra.mxu0 %v169
  %v3599 = vpop.f32.mrf.mxu0
  %v3600 = vadd.f32 0.0, %v3599
  %3601 = vmatmul.f32.gmra.mxu0 %v172
  %v3602 = vpop.f32.mrf.mxu0
  %v3603 = vadd.f32 0.0, %v3602
  %3604 = vmatmul.f32.gmra.mxu0 %v175
  %v3605 = vpop.f32.mrf.mxu0
  %v3606 = vadd.f32 0.0, %v3605
  %3607 = vmatmul.f32.gmra.mxu0 %v178
  %v3608 = vpop.f32.mrf.mxu0
  %v3609 = vadd.f32 0.0, %v3608
  %3610 = vmatmul.f32.gmra.mxu0 %v181
  %v3611 = vpop.f32.mrf.mxu0
  %v3612 = vadd.f32 0.0, %v3611
  %3613 = vmatmul.f32.gmra.mxu0 %v184
  %v3614 = vpop.f32.mrf.mxu0
  %v3615 = vadd.f32 0.0, %v3614
  %3616 = vmatmul.f32.gmra.mxu0 %v187
  %v3617 = vpop.f32.mrf.mxu0
  %v3618 = vadd.f32 0.0, %v3617
  %3619 = vmatmul.f32.gmra.mxu0 %v190
  %v3620 = vpop.f32.mrf.mxu0
  %v3621 = vadd.f32 0.0, %v3620
  %3622 = vmatmul.f32.gmra.mxu0 %v193
  %v3623 = vpop.f32.mrf.mxu0
  %v3624 = vadd.f32 0.0, %v3623
  %3625 = vmatmul.f32.gmra.mxu0 %v196
  %v3626 = vpop.f32.mrf.mxu0
  %v3627 = vadd.f32 0.0, %v3626
  %3628 = vmatmul.f32.gmra.mxu0 %v199
  %v3629 = vpop.f32.mrf.mxu0
  %v3630 = vadd.f32 0.0, %v3629
  %3631 = vmatmul.f32.gmra.mxu0 %v202
  %v3632 = vpop.f32.mrf.mxu0
  %v3633 = vadd.f32 0.0, %v3632
  %3634 = vmatmul.f32.gmra.mxu0 %v205
  %v3635 = vpop.f32.mrf.mxu0
  %v3636 = vadd.f32 0.0, %v3635
  %3637 = vmatmul.f32.gmra.mxu0 %v208
  %v3638 = vpop.f32.mrf.mxu0
  %v3639 = vadd.f32 0.0, %v3638
  %3640 = vmatmul.f32.gmra.mxu0 %v211
  %v3641 = vpop.f32.mrf.mxu0
  %v3642 = vadd.f32 0.0, %v3641
  %3643 = vmatmul.f32.gmra.mxu0 %v214
  %v3644 = vpop.f32.mrf.mxu0
  %v3645 = vadd.f32 0.0, %v3644
  %3646 = vmatmul.f32.gmra.mxu0 %v217
  %v3647 = vpop.f32.mrf.mxu0
  %v3648 = vadd.f32 0.0, %v3647
  %3649 = vmatmul.f32.gmra.mxu0 %v220
  %v3650 = vpop.f32.mrf.mxu0
  %v3651 = vadd.f32 0.0, %v3650
  %3652 = vmatmul.f32.gmra.mxu0 %v223
  %v3653 = vpop.f32.mrf.mxu0
  %v3654 = vadd.f32 0.0, %v3653
  %3655 = vmatmul.f32.gmra.mxu0 %v226
  %v3656 = vpop.f32.mrf.mxu0
  %v3657 = vadd.f32 0.0, %v3656
  %3658 = vmatmul.f32.gmra.mxu0 %v229
  %v3659 = vpop.f32.mrf.mxu0
  %v3660 = vadd.f32 0.0, %v3659
  %3661 = vmatmul.f32.gmra.mxu0 %v232
  %v3662 = vpop.f32.mrf.mxu0
  %v3663 = vadd.f32 0.0, %v3662
  %3664 = vmatmul.f32.gmra.mxu0 %v235
  %v3665 = vpop.f32.mrf.mxu0
  %v3666 = vadd.f32 0.0, %v3665
  %3667 = vmatmul.f32.gmra.mxu0 %v238
  %v3668 = vpop.f32.mrf.mxu0
  %v3669 = vadd.f32 0.0, %v3668
  %3670 = vmatmul.f32.gmra.mxu0 %v241
  %v3671 = vpop.f32.mrf.mxu0
  %v3672 = vadd.f32 0.0, %v3671
  %3673 = vmatmul.f32.gmra.mxu0 %v244
  %v3674 = vpop.f32.mrf.mxu0
  %v3675 = vadd.f32 0.0, %v3674
  %3676 = vmatmul.f32.gmra.mxu0 %v247
  %v3677 = vpop.f32.mrf.mxu0
  %v3678 = vadd.f32 0.0, %v3677
  %3679 = vmatmul.f32.gmra.mxu0 %v250
  %v3680 = vpop.f32.mrf.mxu0
  %v3681 = vadd.f32 0.0, %v3680
  %3682 = vmatmul.f32.gmra.mxu0 %v253
  %v3683 = vpop.f32.mrf.mxu0
  %v3684 = vadd.f32 0.0, %v3683
  %3685 = vmatmul.f32.gmra.mxu0 %v256
  %v3686 = vpop.f32.mrf.mxu0
  %v3687 = vadd.f32 0.0, %v3686
  %3688 = vmatmul.f32.gmra.mxu0 %v259
  %v3689 = vpop.f32.mrf.mxu0
  %v3690 = vadd.f32 0.0, %v3689
  %3691 = vmatmul.f32.gmra.mxu0 %v262
  %v3692 = vpop.f32.mrf.mxu0
  %v3693 = vadd.f32 0.0, %v3692
  %3694 = vmatmul.f32.gmra.mxu0 %v265
  %v3695 = vpop.f32.mrf.mxu0
  %v3696 = vadd.f32 0.0, %v3695
  %3697 = vmatmul.f32.gmra.mxu0 %v268
  %v3698 = vpop.f32.mrf.mxu0
  %v3699 = vadd.f32 0.0, %v3698
  %3700 = vmatmul.f32.gmra.mxu0 %v271
  %v3701 = vpop.f32.mrf.mxu0
  %v3702 = vadd.f32 0.0, %v3701
  %3703 = vmatmul.f32.gmra.mxu0 %v274
  %v3704 = vpop.f32.mrf.mxu0
  %v3705 = vadd.f32 0.0, %v3704
  %3706 = vmatmul.f32.gmra.mxu0 %v277
  %v3707 = vpop.f32.mrf.mxu0
  %v3708 = vadd.f32 0.0, %v3707
  %3709 = vmatmul.f32.gmra.mxu0 %v280
  %v3710 = vpop.f32.mrf.mxu0
  %v3711 = vadd.f32 0.0, %v3710
  %3712 = vmatmul.f32.gmra.mxu0 %v283
  %v3713 = vpop.f32.mrf.mxu0
  %v3714 = vadd.f32 0.0, %v3713
  %3715 = vmatmul.f32.gmra.mxu0 %v286
  %v3716 = vpop.f32.mrf.mxu0
  %v3717 = vadd.f32 0.0, %v3716
  %3718 = vmatmul.f32.gmra.mxu0 %v289
  %v3719 = vpop.f32.mrf.mxu0
  %v3720 = vadd.f32 0.0, %v3719
  %3721 = vmatmul.f32.gmra.mxu0 %v292
  %v3722 = vpop.f32.mrf.mxu0
  %v3723 = vadd.f32 0.0, %v3722
  %3724 = vmatmul.f32.gmra.mxu0 %v295
  %v3725 = vpop.f32.mrf.mxu0
  %v3726 = vadd.f32 0.0, %v3725
  %3727 = vmatmul.f32.gmra.mxu0 %v298
  %v3728 = vpop.f32.mrf.mxu0
  %v3729 = vadd.f32 0.0, %v3728
  %3730 = vmatmul.f32.gmra.mxu0 %v301
  %v3731 = vpop.f32.mrf.mxu0
  %v3732 = vadd.f32 0.0, %v3731
  %3733 = vmatmul.f32.gmra.mxu0 %v304
  %v3734 = vpop.f32.mrf.mxu0
  %v3735 = vadd.f32 0.0, %v3734
  %3736 = vmatmul.f32.gmra.mxu0 %v307
  %v3737 = vpop.f32.mrf.mxu0
  %v3738 = vadd.f32 0.0, %v3737
  %3739 = vmatmul.f32.gmra.mxu0 %v310
  %v3740 = vpop.f32.mrf.mxu0
  %v3741 = vadd.f32 0.0, %v3740
  %3742 = vmatmul.f32.gmra.mxu0 %v313
  %v3743 = vpop.f32.mrf.mxu0
  %v3744 = vadd.f32 0.0, %v3743
  %3745 = vmatmul.f32.gmra.mxu0 %v316
  %v3746 = vpop.f32.mrf.mxu0
  %v3747 = vadd.f32 0.0, %v3746
  %3748 = vmatmul.f32.gmra.mxu0 %v319
  %v3749 = vpop.f32.mrf.mxu0
  %v3750 = vadd.f32 0.0, %v3749
  %3751 = vmatmul.f32.gmra.mxu0 %v322
  %v3752 = vpop.f32.mrf.mxu0
  %v3753 = vadd.f32 0.0, %v3752
  %3754 = vmatmul.f32.gmra.mxu0 %v325
  %v3755 = vpop.f32.mrf.mxu0
  %v3756 = vadd.f32 0.0, %v3755
  %3757 = vmatmul.f32.gmra.mxu0 %v328
  %v3758 = vpop.f32.mrf.mxu0
  %v3759 = vadd.f32 0.0, %v3758
  %3760 = vmatmul.f32.gmra.mxu0 %v331
  %v3761 = vpop.f32.mrf.mxu0
  %v3762 = vadd.f32 0.0, %v3761
  %3763 = vmatmul.f32.gmra.mxu0 %v334
  %v3764 = vpop.f32.mrf.mxu0
  %v3765 = vadd.f32 0.0, %v3764
  %3766 = vmatmul.f32.gmra.mxu0 %v337
  %v3767 = vpop.f32.mrf.mxu0
  %v3768 = vadd.f32 0.0, %v3767
  %3769 = vmatmul.f32.gmra.mxu0 %v340
  %v3770 = vpop.f32.mrf.mxu0
  %v3771 = vadd.f32 0.0, %v3770
  %3772 = vmatmul.f32.gmra.mxu0 %v343
  %v3773 = vpop.f32.mrf.mxu0
  %v3774 = vadd.f32 0.0, %v3773
  %3775 = vmatmul.f32.gmra.mxu0 %v346
  %v3776 = vpop.f32.mrf.mxu0
  %v3777 = vadd.f32 0.0, %v3776
  %3778 = vmatmul.f32.gmra.mxu0 %v349
  %v3779 = vpop.f32.mrf.mxu0
  %v3780 = vadd.f32 0.0, %v3779
  %3781 = vdwg.mxu0
  %v3782 = vrot.slane %v27, 3
  %v3783 = vsel %vm1134, %v1136, %v3782
  %3785 = vmatpush.msra.mxu0 0.0
  %3786 = vmatpush.msra.mxu0 0.0
  %3787 = vmatpush.msra.mxu0 0.0
  %3788 = vmatpush.msra.mxu0 0.0
  %3789 = vmatpush.msra.mxu0 0.0
  %3790 = vmatpush.msra.mxu0 0.0
  %3791 = vmatpush.msra.mxu0 0.0
  %3792 = vmatpush.msra.mxu0 0.0
  %3793 = vmatpush.msra.mxu0 0.0
  %3794 = vmatpush.msra.mxu0 0.0
  %3795 = vmatpush.msra.mxu0 0.0
  %3796 = vmatpush.msra.mxu0 0.0
  %3797 = vmatpush.msra.mxu0 0.0
  %3798 = vmatpush.msra.mxu0 0.0
  %3799 = vmatpush.msra.mxu0 0.0
  %3800 = vmatpush.msra.mxu0 %v3783
  %3801 = vmatmul.f32.gmra.mxu0 %v112
  %v3802 = vpop.f32.mrf.mxu0
  %v3803 = vadd.f32 0.0, %v3802
  %3804 = vmatmul.f32.gmra.mxu0 %v115
  %v3805 = vpop.f32.mrf.mxu0
  %v3806 = vadd.f32 0.0, %v3805
  %3807 = vmatmul.f32.gmra.mxu0 %v118
  %v3808 = vpop.f32.mrf.mxu0
  %v3809 = vadd.f32 0.0, %v3808
  %3810 = vmatmul.f32.gmra.mxu0 %v121
  %v3811 = vpop.f32.mrf.mxu0
  %v3812 = vadd.f32 0.0, %v3811
  %3813 = vmatmul.f32.gmra.mxu0 %v124
  %v3814 = vpop.f32.mrf.mxu0
  %v3815 = vadd.f32 0.0, %v3814
  %3816 = vmatmul.f32.gmra.mxu0 %v127
  %v3817 = vpop.f32.mrf.mxu0
  %v3818 = vadd.f32 0.0, %v3817
  %3819 = vmatmul.f32.gmra.mxu0 %v130
  %v3820 = vpop.f32.mrf.mxu0
  %v3821 = vadd.f32 0.0, %v3820
  %3822 = vmatmul.f32.gmra.mxu0 %v133
  %v3823 = vpop.f32.mrf.mxu0
  %v3824 = vadd.f32 0.0, %v3823
  %3825 = vmatmul.f32.gmra.mxu0 %v136
  %v3826 = vpop.f32.mrf.mxu0
  %v3827 = vadd.f32 0.0, %v3826
  %3828 = vmatmul.f32.gmra.mxu0 %v139
  %v3829 = vpop.f32.mrf.mxu0
  %v3830 = vadd.f32 0.0, %v3829
  %3831 = vmatmul.f32.gmra.mxu0 %v142
  %v3832 = vpop.f32.mrf.mxu0
  %v3833 = vadd.f32 0.0, %v3832
  %3834 = vmatmul.f32.gmra.mxu0 %v145
  %v3835 = vpop.f32.mrf.mxu0
  %v3836 = vadd.f32 0.0, %v3835
  %3837 = vmatmul.f32.gmra.mxu0 %v148
  %v3838 = vpop.f32.mrf.mxu0
  %v3839 = vadd.f32 0.0, %v3838
  %3840 = vmatmul.f32.gmra.mxu0 %v151
  %v3841 = vpop.f32.mrf.mxu0
  %v3842 = vadd.f32 0.0, %v3841
  %3843 = vmatmul.f32.gmra.mxu0 %v154
  %v3844 = vpop.f32.mrf.mxu0
  %v3845 = vadd.f32 0.0, %v3844
  %3846 = vmatmul.f32.gmra.mxu0 %v157
  %v3847 = vpop.f32.mrf.mxu0
  %v3848 = vadd.f32 0.0, %v3847
  %3849 = vmatmul.f32.gmra.mxu0 %v160
  %v3850 = vpop.f32.mrf.mxu0
  %v3851 = vadd.f32 0.0, %v3850
  %3852 = vmatmul.f32.gmra.mxu0 %v163
  %v3853 = vpop.f32.mrf.mxu0
  %v3854 = vadd.f32 0.0, %v3853
  %3855 = vmatmul.f32.gmra.mxu0 %v166
  %v3856 = vpop.f32.mrf.mxu0
  %v3857 = vadd.f32 0.0, %v3856
  %3858 = vmatmul.f32.gmra.mxu0 %v169
  %v3859 = vpop.f32.mrf.mxu0
  %v3860 = vadd.f32 0.0, %v3859
  %3861 = vmatmul.f32.gmra.mxu0 %v172
  %v3862 = vpop.f32.mrf.mxu0
  %v3863 = vadd.f32 0.0, %v3862
  %3864 = vmatmul.f32.gmra.mxu0 %v175
  %v3865 = vpop.f32.mrf.mxu0
  %v3866 = vadd.f32 0.0, %v3865
  %3867 = vmatmul.f32.gmra.mxu0 %v178
  %v3868 = vpop.f32.mrf.mxu0
  %v3869 = vadd.f32 0.0, %v3868
  %3870 = vmatmul.f32.gmra.mxu0 %v181
  %v3871 = vpop.f32.mrf.mxu0
  %v3872 = vadd.f32 0.0, %v3871
  %3873 = vmatmul.f32.gmra.mxu0 %v184
  %v3874 = vpop.f32.mrf.mxu0
  %v3875 = vadd.f32 0.0, %v3874
  %3876 = vmatmul.f32.gmra.mxu0 %v187
  %v3877 = vpop.f32.mrf.mxu0
  %v3878 = vadd.f32 0.0, %v3877
  %3879 = vmatmul.f32.gmra.mxu0 %v190
  %v3880 = vpop.f32.mrf.mxu0
  %v3881 = vadd.f32 0.0, %v3880
  %3882 = vmatmul.f32.gmra.mxu0 %v193
  %v3883 = vpop.f32.mrf.mxu0
  %v3884 = vadd.f32 0.0, %v3883
  %3885 = vmatmul.f32.gmra.mxu0 %v196
  %v3886 = vpop.f32.mrf.mxu0
  %v3887 = vadd.f32 0.0, %v3886
  %3888 = vmatmul.f32.gmra.mxu0 %v199
  %v3889 = vpop.f32.mrf.mxu0
  %v3890 = vadd.f32 0.0, %v3889
  %3891 = vmatmul.f32.gmra.mxu0 %v202
  %v3892 = vpop.f32.mrf.mxu0
  %v3893 = vadd.f32 0.0, %v3892
  %3894 = vmatmul.f32.gmra.mxu0 %v205
  %v3895 = vpop.f32.mrf.mxu0
  %v3896 = vadd.f32 0.0, %v3895
  %3897 = vmatmul.f32.gmra.mxu0 %v208
  %v3898 = vpop.f32.mrf.mxu0
  %v3899 = vadd.f32 0.0, %v3898
  %3900 = vmatmul.f32.gmra.mxu0 %v211
  %v3901 = vpop.f32.mrf.mxu0
  %v3902 = vadd.f32 0.0, %v3901
  %3903 = vmatmul.f32.gmra.mxu0 %v214
  %v3904 = vpop.f32.mrf.mxu0
  %v3905 = vadd.f32 0.0, %v3904
  %3906 = vmatmul.f32.gmra.mxu0 %v217
  %v3907 = vpop.f32.mrf.mxu0
  %v3908 = vadd.f32 0.0, %v3907
  %3909 = vmatmul.f32.gmra.mxu0 %v220
  %v3910 = vpop.f32.mrf.mxu0
  %v3911 = vadd.f32 0.0, %v3910
  %3912 = vmatmul.f32.gmra.mxu0 %v223
  %v3913 = vpop.f32.mrf.mxu0
  %v3914 = vadd.f32 0.0, %v3913
  %3915 = vmatmul.f32.gmra.mxu0 %v226
  %v3916 = vpop.f32.mrf.mxu0
  %v3917 = vadd.f32 0.0, %v3916
  %3918 = vmatmul.f32.gmra.mxu0 %v229
  %v3919 = vpop.f32.mrf.mxu0
  %v3920 = vadd.f32 0.0, %v3919
  %3921 = vmatmul.f32.gmra.mxu0 %v232
  %v3922 = vpop.f32.mrf.mxu0
  %v3923 = vadd.f32 0.0, %v3922
  %3924 = vmatmul.f32.gmra.mxu0 %v235
  %v3925 = vpop.f32.mrf.mxu0
  %v3926 = vadd.f32 0.0, %v3925
  %3927 = vmatmul.f32.gmra.mxu0 %v238
  %v3928 = vpop.f32.mrf.mxu0
  %v3929 = vadd.f32 0.0, %v3928
  %3930 = vmatmul.f32.gmra.mxu0 %v241
  %v3931 = vpop.f32.mrf.mxu0
  %v3932 = vadd.f32 0.0, %v3931
  %3933 = vmatmul.f32.gmra.mxu0 %v244
  %v3934 = vpop.f32.mrf.mxu0
  %v3935 = vadd.f32 0.0, %v3934
  %3936 = vmatmul.f32.gmra.mxu0 %v247
  %v3937 = vpop.f32.mrf.mxu0
  %v3938 = vadd.f32 0.0, %v3937
  %3939 = vmatmul.f32.gmra.mxu0 %v250
  %v3940 = vpop.f32.mrf.mxu0
  %v3941 = vadd.f32 0.0, %v3940
  %3942 = vmatmul.f32.gmra.mxu0 %v253
  %v3943 = vpop.f32.mrf.mxu0
  %v3944 = vadd.f32 0.0, %v3943
  %3945 = vmatmul.f32.gmra.mxu0 %v256
  %v3946 = vpop.f32.mrf.mxu0
  %v3947 = vadd.f32 0.0, %v3946
  %3948 = vmatmul.f32.gmra.mxu0 %v259
  %v3949 = vpop.f32.mrf.mxu0
  %v3950 = vadd.f32 0.0, %v3949
  %3951 = vmatmul.f32.gmra.mxu0 %v262
  %v3952 = vpop.f32.mrf.mxu0
  %v3953 = vadd.f32 0.0, %v3952
  %3954 = vmatmul.f32.gmra.mxu0 %v265
  %v3955 = vpop.f32.mrf.mxu0
  %v3956 = vadd.f32 0.0, %v3955
  %3957 = vmatmul.f32.gmra.mxu0 %v268
  %v3958 = vpop.f32.mrf.mxu0
  %v3959 = vadd.f32 0.0, %v3958
  %3960 = vmatmul.f32.gmra.mxu0 %v271
  %v3961 = vpop.f32.mrf.mxu0
  %v3962 = vadd.f32 0.0, %v3961
  %3963 = vmatmul.f32.gmra.mxu0 %v274
  %v3964 = vpop.f32.mrf.mxu0
  %v3965 = vadd.f32 0.0, %v3964
  %3966 = vmatmul.f32.gmra.mxu0 %v277
  %v3967 = vpop.f32.mrf.mxu0
  %v3968 = vadd.f32 0.0, %v3967
  %3969 = vmatmul.f32.gmra.mxu0 %v280
  %v3970 = vpop.f32.mrf.mxu0
  %v3971 = vadd.f32 0.0, %v3970
  %3972 = vmatmul.f32.gmra.mxu0 %v283
  %v3973 = vpop.f32.mrf.mxu0
  %v3974 = vadd.f32 0.0, %v3973
  %3975 = vmatmul.f32.gmra.mxu0 %v286
  %v3976 = vpop.f32.mrf.mxu0
  %v3977 = vadd.f32 0.0, %v3976
  %3978 = vmatmul.f32.gmra.mxu0 %v289
  %v3979 = vpop.f32.mrf.mxu0
  %v3980 = vadd.f32 0.0, %v3979
  %3981 = vmatmul.f32.gmra.mxu0 %v292
  %v3982 = vpop.f32.mrf.mxu0
  %v3983 = vadd.f32 0.0, %v3982
  %3984 = vmatmul.f32.gmra.mxu0 %v295
  %v3985 = vpop.f32.mrf.mxu0
  %v3986 = vadd.f32 0.0, %v3985
  %3987 = vmatmul.f32.gmra.mxu0 %v298
  %v3988 = vpop.f32.mrf.mxu0
  %v3989 = vadd.f32 0.0, %v3988
  %3990 = vmatmul.f32.gmra.mxu0 %v301
  %v3991 = vpop.f32.mrf.mxu0
  %v3992 = vadd.f32 0.0, %v3991
  %3993 = vmatmul.f32.gmra.mxu0 %v304
  %v3994 = vpop.f32.mrf.mxu0
  %v3995 = vadd.f32 0.0, %v3994
  %3996 = vmatmul.f32.gmra.mxu0 %v307
  %v3997 = vpop.f32.mrf.mxu0
  %v3998 = vadd.f32 0.0, %v3997
  %3999 = vmatmul.f32.gmra.mxu0 %v310
  %v4000 = vpop.f32.mrf.mxu0
  %v4001 = vadd.f32 0.0, %v4000
  %4002 = vmatmul.f32.gmra.mxu0 %v313
  %v4003 = vpop.f32.mrf.mxu0
  %v4004 = vadd.f32 0.0, %v4003
  %4005 = vmatmul.f32.gmra.mxu0 %v316
  %v4006 = vpop.f32.mrf.mxu0
  %v4007 = vadd.f32 0.0, %v4006
  %4008 = vmatmul.f32.gmra.mxu0 %v319
  %v4009 = vpop.f32.mrf.mxu0
  %v4010 = vadd.f32 0.0, %v4009
  %4011 = vmatmul.f32.gmra.mxu0 %v322
  %v4012 = vpop.f32.mrf.mxu0
  %v4013 = vadd.f32 0.0, %v4012
  %4014 = vmatmul.f32.gmra.mxu0 %v325
  %v4015 = vpop.f32.mrf.mxu0
  %v4016 = vadd.f32 0.0, %v4015
  %4017 = vmatmul.f32.gmra.mxu0 %v328
  %v4018 = vpop.f32.mrf.mxu0
  %v4019 = vadd.f32 0.0, %v4018
  %4020 = vmatmul.f32.gmra.mxu0 %v331
  %v4021 = vpop.f32.mrf.mxu0
  %v4022 = vadd.f32 0.0, %v4021
  %4023 = vmatmul.f32.gmra.mxu0 %v334
  %v4024 = vpop.f32.mrf.mxu0
  %v4025 = vadd.f32 0.0, %v4024
  %4026 = vmatmul.f32.gmra.mxu0 %v337
  %v4027 = vpop.f32.mrf.mxu0
  %v4028 = vadd.f32 0.0, %v4027
  %4029 = vmatmul.f32.gmra.mxu0 %v340
  %v4030 = vpop.f32.mrf.mxu0
  %v4031 = vadd.f32 0.0, %v4030
  %4032 = vmatmul.f32.gmra.mxu0 %v343
  %v4033 = vpop.f32.mrf.mxu0
  %v4034 = vadd.f32 0.0, %v4033
  %4035 = vmatmul.f32.gmra.mxu0 %v346
  %v4036 = vpop.f32.mrf.mxu0
  %v4037 = vadd.f32 0.0, %v4036
  %4038 = vmatmul.f32.gmra.mxu0 %v349
  %v4039 = vpop.f32.mrf.mxu0
  %v4040 = vadd.f32 0.0, %v4039
  %4041 = vdwg.mxu0
  %v4042 = vrot.slane %v27, 4
  %v4043 = vsel %vm1396, %v1398, %v4042
  %4045 = vmatpush.msra.mxu0 0.0
  %4046 = vmatpush.msra.mxu0 0.0
  %4047 = vmatpush.msra.mxu0 0.0
  %4048 = vmatpush.msra.mxu0 0.0
  %4049 = vmatpush.msra.mxu0 0.0
  %4050 = vmatpush.msra.mxu0 0.0
  %4051 = vmatpush.msra.mxu0 0.0
  %4052 = vmatpush.msra.mxu0 0.0
  %4053 = vmatpush.msra.mxu0 0.0
  %4054 = vmatpush.msra.mxu0 0.0
  %4055 = vmatpush.msra.mxu0 0.0
  %4056 = vmatpush.msra.mxu0 0.0
  %4057 = vmatpush.msra.mxu0 0.0
  %4058 = vmatpush.msra.mxu0 0.0
  %4059 = vmatpush.msra.mxu0 0.0
  %4060 = vmatpush.msra.mxu0 %v4043
  %4061 = vmatmul.f32.gmra.mxu0 %v112
  %v4062 = vpop.f32.mrf.mxu0
  %v4063 = vadd.f32 0.0, %v4062
  %4064 = vmatmul.f32.gmra.mxu0 %v115
  %v4065 = vpop.f32.mrf.mxu0
  %v4066 = vadd.f32 0.0, %v4065
  %4067 = vmatmul.f32.gmra.mxu0 %v118
  %v4068 = vpop.f32.mrf.mxu0
  %v4069 = vadd.f32 0.0, %v4068
  %4070 = vmatmul.f32.gmra.mxu0 %v121
  %v4071 = vpop.f32.mrf.mxu0
  %v4072 = vadd.f32 0.0, %v4071
  %4073 = vmatmul.f32.gmra.mxu0 %v124
  %v4074 = vpop.f32.mrf.mxu0
  %v4075 = vadd.f32 0.0, %v4074
  %4076 = vmatmul.f32.gmra.mxu0 %v127
  %v4077 = vpop.f32.mrf.mxu0
  %v4078 = vadd.f32 0.0, %v4077
  %4079 = vmatmul.f32.gmra.mxu0 %v130
  %v4080 = vpop.f32.mrf.mxu0
  %v4081 = vadd.f32 0.0, %v4080
  %4082 = vmatmul.f32.gmra.mxu0 %v133
  %v4083 = vpop.f32.mrf.mxu0
  %v4084 = vadd.f32 0.0, %v4083
  %4085 = vmatmul.f32.gmra.mxu0 %v136
  %v4086 = vpop.f32.mrf.mxu0
  %v4087 = vadd.f32 0.0, %v4086
  %4088 = vmatmul.f32.gmra.mxu0 %v139
  %v4089 = vpop.f32.mrf.mxu0
  %v4090 = vadd.f32 0.0, %v4089
  %4091 = vmatmul.f32.gmra.mxu0 %v142
  %v4092 = vpop.f32.mrf.mxu0
  %v4093 = vadd.f32 0.0, %v4092
  %4094 = vmatmul.f32.gmra.mxu0 %v145
  %v4095 = vpop.f32.mrf.mxu0
  %v4096 = vadd.f32 0.0, %v4095
  %4097 = vmatmul.f32.gmra.mxu0 %v148
  %v4098 = vpop.f32.mrf.mxu0
  %v4099 = vadd.f32 0.0, %v4098
  %4100 = vmatmul.f32.gmra.mxu0 %v151
  %v4101 = vpop.f32.mrf.mxu0
  %v4102 = vadd.f32 0.0, %v4101
  %4103 = vmatmul.f32.gmra.mxu0 %v154
  %v4104 = vpop.f32.mrf.mxu0
  %v4105 = vadd.f32 0.0, %v4104
  %4106 = vmatmul.f32.gmra.mxu0 %v157
  %v4107 = vpop.f32.mrf.mxu0
  %v4108 = vadd.f32 0.0, %v4107
  %4109 = vmatmul.f32.gmra.mxu0 %v160
  %v4110 = vpop.f32.mrf.mxu0
  %v4111 = vadd.f32 0.0, %v4110
  %4112 = vmatmul.f32.gmra.mxu0 %v163
  %v4113 = vpop.f32.mrf.mxu0
  %v4114 = vadd.f32 0.0, %v4113
  %4115 = vmatmul.f32.gmra.mxu0 %v166
  %v4116 = vpop.f32.mrf.mxu0
  %v4117 = vadd.f32 0.0, %v4116
  %4118 = vmatmul.f32.gmra.mxu0 %v169
  %v4119 = vpop.f32.mrf.mxu0
  %v4120 = vadd.f32 0.0, %v4119
  %4121 = vmatmul.f32.gmra.mxu0 %v172
  %v4122 = vpop.f32.mrf.mxu0
  %v4123 = vadd.f32 0.0, %v4122
  %4124 = vmatmul.f32.gmra.mxu0 %v175
  %v4125 = vpop.f32.mrf.mxu0
  %v4126 = vadd.f32 0.0, %v4125
  %4127 = vmatmul.f32.gmra.mxu0 %v178
  %v4128 = vpop.f32.mrf.mxu0
  %v4129 = vadd.f32 0.0, %v4128
  %4130 = vmatmul.f32.gmra.mxu0 %v181
  %v4131 = vpop.f32.mrf.mxu0
  %v4132 = vadd.f32 0.0, %v4131
  %4133 = vmatmul.f32.gmra.mxu0 %v184
  %v4134 = vpop.f32.mrf.mxu0
  %v4135 = vadd.f32 0.0, %v4134
  %4136 = vmatmul.f32.gmra.mxu0 %v187
  %v4137 = vpop.f32.mrf.mxu0
  %v4138 = vadd.f32 0.0, %v4137
  %4139 = vmatmul.f32.gmra.mxu0 %v190
  %v4140 = vpop.f32.mrf.mxu0
  %v4141 = vadd.f32 0.0, %v4140
  %4142 = vmatmul.f32.gmra.mxu0 %v193
  %v4143 = vpop.f32.mrf.mxu0
  %v4144 = vadd.f32 0.0, %v4143
  %4145 = vmatmul.f32.gmra.mxu0 %v196
  %v4146 = vpop.f32.mrf.mxu0
  %v4147 = vadd.f32 0.0, %v4146
  %4148 = vmatmul.f32.gmra.mxu0 %v199
  %v4149 = vpop.f32.mrf.mxu0
  %v4150 = vadd.f32 0.0, %v4149
  %4151 = vmatmul.f32.gmra.mxu0 %v202
  %v4152 = vpop.f32.mrf.mxu0
  %v4153 = vadd.f32 0.0, %v4152
  %4154 = vmatmul.f32.gmra.mxu0 %v205
  %v4155 = vpop.f32.mrf.mxu0
  %v4156 = vadd.f32 0.0, %v4155
  %4157 = vmatmul.f32.gmra.mxu0 %v208
  %v4158 = vpop.f32.mrf.mxu0
  %v4159 = vadd.f32 0.0, %v4158
  %4160 = vmatmul.f32.gmra.mxu0 %v211
  %v4161 = vpop.f32.mrf.mxu0
  %v4162 = vadd.f32 0.0, %v4161
  %4163 = vmatmul.f32.gmra.mxu0 %v214
  %v4164 = vpop.f32.mrf.mxu0
  %v4165 = vadd.f32 0.0, %v4164
  %4166 = vmatmul.f32.gmra.mxu0 %v217
  %v4167 = vpop.f32.mrf.mxu0
  %v4168 = vadd.f32 0.0, %v4167
  %4169 = vmatmul.f32.gmra.mxu0 %v220
  %v4170 = vpop.f32.mrf.mxu0
  %v4171 = vadd.f32 0.0, %v4170
  %4172 = vmatmul.f32.gmra.mxu0 %v223
  %v4173 = vpop.f32.mrf.mxu0
  %v4174 = vadd.f32 0.0, %v4173
  %4175 = vmatmul.f32.gmra.mxu0 %v226
  %v4176 = vpop.f32.mrf.mxu0
  %v4177 = vadd.f32 0.0, %v4176
  %4178 = vmatmul.f32.gmra.mxu0 %v229
  %v4179 = vpop.f32.mrf.mxu0
  %v4180 = vadd.f32 0.0, %v4179
  %4181 = vmatmul.f32.gmra.mxu0 %v232
  %v4182 = vpop.f32.mrf.mxu0
  %v4183 = vadd.f32 0.0, %v4182
  %4184 = vmatmul.f32.gmra.mxu0 %v235
  %v4185 = vpop.f32.mrf.mxu0
  %v4186 = vadd.f32 0.0, %v4185
  %4187 = vmatmul.f32.gmra.mxu0 %v238
  %v4188 = vpop.f32.mrf.mxu0
  %v4189 = vadd.f32 0.0, %v4188
  %4190 = vmatmul.f32.gmra.mxu0 %v241
  %v4191 = vpop.f32.mrf.mxu0
  %v4192 = vadd.f32 0.0, %v4191
  %4193 = vmatmul.f32.gmra.mxu0 %v244
  %v4194 = vpop.f32.mrf.mxu0
  %v4195 = vadd.f32 0.0, %v4194
  %4196 = vmatmul.f32.gmra.mxu0 %v247
  %v4197 = vpop.f32.mrf.mxu0
  %v4198 = vadd.f32 0.0, %v4197
  %4199 = vmatmul.f32.gmra.mxu0 %v250
  %v4200 = vpop.f32.mrf.mxu0
  %v4201 = vadd.f32 0.0, %v4200
  %4202 = vmatmul.f32.gmra.mxu0 %v253
  %v4203 = vpop.f32.mrf.mxu0
  %v4204 = vadd.f32 0.0, %v4203
  %4205 = vmatmul.f32.gmra.mxu0 %v256
  %v4206 = vpop.f32.mrf.mxu0
  %v4207 = vadd.f32 0.0, %v4206
  %4208 = vmatmul.f32.gmra.mxu0 %v259
  %v4209 = vpop.f32.mrf.mxu0
  %v4210 = vadd.f32 0.0, %v4209
  %4211 = vmatmul.f32.gmra.mxu0 %v262
  %v4212 = vpop.f32.mrf.mxu0
  %v4213 = vadd.f32 0.0, %v4212
  %4214 = vmatmul.f32.gmra.mxu0 %v265
  %v4215 = vpop.f32.mrf.mxu0
  %v4216 = vadd.f32 0.0, %v4215
  %4217 = vmatmul.f32.gmra.mxu0 %v268
  %v4218 = vpop.f32.mrf.mxu0
  %v4219 = vadd.f32 0.0, %v4218
  %4220 = vmatmul.f32.gmra.mxu0 %v271
  %v4221 = vpop.f32.mrf.mxu0
  %v4222 = vadd.f32 0.0, %v4221
  %4223 = vmatmul.f32.gmra.mxu0 %v274
  %v4224 = vpop.f32.mrf.mxu0
  %v4225 = vadd.f32 0.0, %v4224
  %4226 = vmatmul.f32.gmra.mxu0 %v277
  %v4227 = vpop.f32.mrf.mxu0
  %v4228 = vadd.f32 0.0, %v4227
  %4229 = vmatmul.f32.gmra.mxu0 %v280
  %v4230 = vpop.f32.mrf.mxu0
  %v4231 = vadd.f32 0.0, %v4230
  %4232 = vmatmul.f32.gmra.mxu0 %v283
  %v4233 = vpop.f32.mrf.mxu0
  %v4234 = vadd.f32 0.0, %v4233
  %4235 = vmatmul.f32.gmra.mxu0 %v286
  %v4236 = vpop.f32.mrf.mxu0
  %v4237 = vadd.f32 0.0, %v4236
  %4238 = vmatmul.f32.gmra.mxu0 %v289
  %v4239 = vpop.f32.mrf.mxu0
  %v4240 = vadd.f32 0.0, %v4239
  %4241 = vmatmul.f32.gmra.mxu0 %v292
  %v4242 = vpop.f32.mrf.mxu0
  %v4243 = vadd.f32 0.0, %v4242
  %4244 = vmatmul.f32.gmra.mxu0 %v295
  %v4245 = vpop.f32.mrf.mxu0
  %v4246 = vadd.f32 0.0, %v4245
  %4247 = vmatmul.f32.gmra.mxu0 %v298
  %v4248 = vpop.f32.mrf.mxu0
  %v4249 = vadd.f32 0.0, %v4248
  %4250 = vmatmul.f32.gmra.mxu0 %v301
  %v4251 = vpop.f32.mrf.mxu0
  %v4252 = vadd.f32 0.0, %v4251
  %4253 = vmatmul.f32.gmra.mxu0 %v304
  %v4254 = vpop.f32.mrf.mxu0
  %v4255 = vadd.f32 0.0, %v4254
  %4256 = vmatmul.f32.gmra.mxu0 %v307
  %v4257 = vpop.f32.mrf.mxu0
  %v4258 = vadd.f32 0.0, %v4257
  %4259 = vmatmul.f32.gmra.mxu0 %v310
  %v4260 = vpop.f32.mrf.mxu0
  %v4261 = vadd.f32 0.0, %v4260
  %4262 = vmatmul.f32.gmra.mxu0 %v313
  %v4263 = vpop.f32.mrf.mxu0
  %v4264 = vadd.f32 0.0, %v4263
  %4265 = vmatmul.f32.gmra.mxu0 %v316
  %v4266 = vpop.f32.mrf.mxu0
  %v4267 = vadd.f32 0.0, %v4266
  %4268 = vmatmul.f32.gmra.mxu0 %v319
  %v4269 = vpop.f32.mrf.mxu0
  %v4270 = vadd.f32 0.0, %v4269
  %4271 = vmatmul.f32.gmra.mxu0 %v322
  %v4272 = vpop.f32.mrf.mxu0
  %v4273 = vadd.f32 0.0, %v4272
  %4274 = vmatmul.f32.gmra.mxu0 %v325
  %v4275 = vpop.f32.mrf.mxu0
  %v4276 = vadd.f32 0.0, %v4275
  %4277 = vmatmul.f32.gmra.mxu0 %v328
  %v4278 = vpop.f32.mrf.mxu0
  %v4279 = vadd.f32 0.0, %v4278
  %4280 = vmatmul.f32.gmra.mxu0 %v331
  %v4281 = vpop.f32.mrf.mxu0
  %v4282 = vadd.f32 0.0, %v4281
  %4283 = vmatmul.f32.gmra.mxu0 %v334
  %v4284 = vpop.f32.mrf.mxu0
  %v4285 = vadd.f32 0.0, %v4284
  %4286 = vmatmul.f32.gmra.mxu0 %v337
  %v4287 = vpop.f32.mrf.mxu0
  %v4288 = vadd.f32 0.0, %v4287
  %4289 = vmatmul.f32.gmra.mxu0 %v340
  %v4290 = vpop.f32.mrf.mxu0
  %v4291 = vadd.f32 0.0, %v4290
  %4292 = vmatmul.f32.gmra.mxu0 %v343
  %v4293 = vpop.f32.mrf.mxu0
  %v4294 = vadd.f32 0.0, %v4293
  %4295 = vmatmul.f32.gmra.mxu0 %v346
  %v4296 = vpop.f32.mrf.mxu0
  %v4297 = vadd.f32 0.0, %v4296
  %4298 = vmatmul.f32.gmra.mxu0 %v349
  %v4299 = vpop.f32.mrf.mxu0
  %v4300 = vadd.f32 0.0, %v4299
  %4301 = vdwg.mxu0
  %v4302 = vrot.slane %v27, 5
  %v4303 = vsel %vm1658, %v1660, %v4302
  %4305 = vmatpush.msra.mxu0 0.0
  %4306 = vmatpush.msra.mxu0 0.0
  %4307 = vmatpush.msra.mxu0 0.0
  %4308 = vmatpush.msra.mxu0 0.0
  %4309 = vmatpush.msra.mxu0 0.0
  %4310 = vmatpush.msra.mxu0 0.0
  %4311 = vmatpush.msra.mxu0 0.0
  %4312 = vmatpush.msra.mxu0 0.0
  %4313 = vmatpush.msra.mxu0 0.0
  %4314 = vmatpush.msra.mxu0 0.0
  %4315 = vmatpush.msra.mxu0 0.0
  %4316 = vmatpush.msra.mxu0 0.0
  %4317 = vmatpush.msra.mxu0 0.0
  %4318 = vmatpush.msra.mxu0 0.0
  %4319 = vmatpush.msra.mxu0 0.0
  %4320 = vmatpush.msra.mxu0 %v4303
  %4321 = vmatmul.f32.gmra.mxu0 %v112
  %v4322 = vpop.f32.mrf.mxu0
  %v4323 = vadd.f32 0.0, %v4322
  %4324 = vmatmul.f32.gmra.mxu0 %v115
  %v4325 = vpop.f32.mrf.mxu0
  %v4326 = vadd.f32 0.0, %v4325
  %4327 = vmatmul.f32.gmra.mxu0 %v118
  %v4328 = vpop.f32.mrf.mxu0
  %v4329 = vadd.f32 0.0, %v4328
  %4330 = vmatmul.f32.gmra.mxu0 %v121
  %v4331 = vpop.f32.mrf.mxu0
  %v4332 = vadd.f32 0.0, %v4331
  %4333 = vmatmul.f32.gmra.mxu0 %v124
  %v4334 = vpop.f32.mrf.mxu0
  %v4335 = vadd.f32 0.0, %v4334
  %4336 = vmatmul.f32.gmra.mxu0 %v127
  %v4337 = vpop.f32.mrf.mxu0
  %v4338 = vadd.f32 0.0, %v4337
  %4339 = vmatmul.f32.gmra.mxu0 %v130
  %v4340 = vpop.f32.mrf.mxu0
  %v4341 = vadd.f32 0.0, %v4340
  %4342 = vmatmul.f32.gmra.mxu0 %v133
  %v4343 = vpop.f32.mrf.mxu0
  %v4344 = vadd.f32 0.0, %v4343
  %4345 = vmatmul.f32.gmra.mxu0 %v136
  %v4346 = vpop.f32.mrf.mxu0
  %v4347 = vadd.f32 0.0, %v4346
  %4348 = vmatmul.f32.gmra.mxu0 %v139
  %v4349 = vpop.f32.mrf.mxu0
  %v4350 = vadd.f32 0.0, %v4349
  %4351 = vmatmul.f32.gmra.mxu0 %v142
  %v4352 = vpop.f32.mrf.mxu0
  %v4353 = vadd.f32 0.0, %v4352
  %4354 = vmatmul.f32.gmra.mxu0 %v145
  %v4355 = vpop.f32.mrf.mxu0
  %v4356 = vadd.f32 0.0, %v4355
  %4357 = vmatmul.f32.gmra.mxu0 %v148
  %v4358 = vpop.f32.mrf.mxu0
  %v4359 = vadd.f32 0.0, %v4358
  %4360 = vmatmul.f32.gmra.mxu0 %v151
  %v4361 = vpop.f32.mrf.mxu0
  %v4362 = vadd.f32 0.0, %v4361
  %4363 = vmatmul.f32.gmra.mxu0 %v154
  %v4364 = vpop.f32.mrf.mxu0
  %v4365 = vadd.f32 0.0, %v4364
  %4366 = vmatmul.f32.gmra.mxu0 %v157
  %v4367 = vpop.f32.mrf.mxu0
  %v4368 = vadd.f32 0.0, %v4367
  %4369 = vmatmul.f32.gmra.mxu0 %v160
  %v4370 = vpop.f32.mrf.mxu0
  %v4371 = vadd.f32 0.0, %v4370
  %4372 = vmatmul.f32.gmra.mxu0 %v163
  %v4373 = vpop.f32.mrf.mxu0
  %v4374 = vadd.f32 0.0, %v4373
  %4375 = vmatmul.f32.gmra.mxu0 %v166
  %v4376 = vpop.f32.mrf.mxu0
  %v4377 = vadd.f32 0.0, %v4376
  %4378 = vmatmul.f32.gmra.mxu0 %v169
  %v4379 = vpop.f32.mrf.mxu0
  %v4380 = vadd.f32 0.0, %v4379
  %4381 = vmatmul.f32.gmra.mxu0 %v172
  %v4382 = vpop.f32.mrf.mxu0
  %v4383 = vadd.f32 0.0, %v4382
  %4384 = vmatmul.f32.gmra.mxu0 %v175
  %v4385 = vpop.f32.mrf.mxu0
  %v4386 = vadd.f32 0.0, %v4385
  %4387 = vmatmul.f32.gmra.mxu0 %v178
  %v4388 = vpop.f32.mrf.mxu0
  %v4389 = vadd.f32 0.0, %v4388
  %4390 = vmatmul.f32.gmra.mxu0 %v181
  %v4391 = vpop.f32.mrf.mxu0
  %v4392 = vadd.f32 0.0, %v4391
  %4393 = vmatmul.f32.gmra.mxu0 %v184
  %v4394 = vpop.f32.mrf.mxu0
  %v4395 = vadd.f32 0.0, %v4394
  %4396 = vmatmul.f32.gmra.mxu0 %v187
  %v4397 = vpop.f32.mrf.mxu0
  %v4398 = vadd.f32 0.0, %v4397
  %4399 = vmatmul.f32.gmra.mxu0 %v190
  %v4400 = vpop.f32.mrf.mxu0
  %v4401 = vadd.f32 0.0, %v4400
  %4402 = vmatmul.f32.gmra.mxu0 %v193
  %v4403 = vpop.f32.mrf.mxu0
  %v4404 = vadd.f32 0.0, %v4403
  %4405 = vmatmul.f32.gmra.mxu0 %v196
  %v4406 = vpop.f32.mrf.mxu0
  %v4407 = vadd.f32 0.0, %v4406
  %4408 = vmatmul.f32.gmra.mxu0 %v199
  %v4409 = vpop.f32.mrf.mxu0
  %v4410 = vadd.f32 0.0, %v4409
  %4411 = vmatmul.f32.gmra.mxu0 %v202
  %v4412 = vpop.f32.mrf.mxu0
  %v4413 = vadd.f32 0.0, %v4412
  %4414 = vmatmul.f32.gmra.mxu0 %v205
  %v4415 = vpop.f32.mrf.mxu0
  %v4416 = vadd.f32 0.0, %v4415
  %4417 = vmatmul.f32.gmra.mxu0 %v208
  %v4418 = vpop.f32.mrf.mxu0
  %v4419 = vadd.f32 0.0, %v4418
  %4420 = vmatmul.f32.gmra.mxu0 %v211
  %v4421 = vpop.f32.mrf.mxu0
  %v4422 = vadd.f32 0.0, %v4421
  %4423 = vmatmul.f32.gmra.mxu0 %v214
  %v4424 = vpop.f32.mrf.mxu0
  %v4425 = vadd.f32 0.0, %v4424
  %4426 = vmatmul.f32.gmra.mxu0 %v217
  %v4427 = vpop.f32.mrf.mxu0
  %v4428 = vadd.f32 0.0, %v4427
  %4429 = vmatmul.f32.gmra.mxu0 %v220
  %v4430 = vpop.f32.mrf.mxu0
  %v4431 = vadd.f32 0.0, %v4430
  %4432 = vmatmul.f32.gmra.mxu0 %v223
  %v4433 = vpop.f32.mrf.mxu0
  %v4434 = vadd.f32 0.0, %v4433
  %4435 = vmatmul.f32.gmra.mxu0 %v226
  %v4436 = vpop.f32.mrf.mxu0
  %v4437 = vadd.f32 0.0, %v4436
  %4438 = vmatmul.f32.gmra.mxu0 %v229
  %v4439 = vpop.f32.mrf.mxu0
  %v4440 = vadd.f32 0.0, %v4439
  %4441 = vmatmul.f32.gmra.mxu0 %v232
  %v4442 = vpop.f32.mrf.mxu0
  %v4443 = vadd.f32 0.0, %v4442
  %4444 = vmatmul.f32.gmra.mxu0 %v235
  %v4445 = vpop.f32.mrf.mxu0
  %v4446 = vadd.f32 0.0, %v4445
  %4447 = vmatmul.f32.gmra.mxu0 %v238
  %v4448 = vpop.f32.mrf.mxu0
  %v4449 = vadd.f32 0.0, %v4448
  %4450 = vmatmul.f32.gmra.mxu0 %v241
  %v4451 = vpop.f32.mrf.mxu0
  %v4452 = vadd.f32 0.0, %v4451
  %4453 = vmatmul.f32.gmra.mxu0 %v244
  %v4454 = vpop.f32.mrf.mxu0
  %v4455 = vadd.f32 0.0, %v4454
  %4456 = vmatmul.f32.gmra.mxu0 %v247
  %v4457 = vpop.f32.mrf.mxu0
  %v4458 = vadd.f32 0.0, %v4457
  %4459 = vmatmul.f32.gmra.mxu0 %v250
  %v4460 = vpop.f32.mrf.mxu0
  %v4461 = vadd.f32 0.0, %v4460
  %4462 = vmatmul.f32.gmra.mxu0 %v253
  %v4463 = vpop.f32.mrf.mxu0
  %v4464 = vadd.f32 0.0, %v4463
  %4465 = vmatmul.f32.gmra.mxu0 %v256
  %v4466 = vpop.f32.mrf.mxu0
  %v4467 = vadd.f32 0.0, %v4466
  %4468 = vmatmul.f32.gmra.mxu0 %v259
  %v4469 = vpop.f32.mrf.mxu0
  %v4470 = vadd.f32 0.0, %v4469
  %4471 = vmatmul.f32.gmra.mxu0 %v262
  %v4472 = vpop.f32.mrf.mxu0
  %v4473 = vadd.f32 0.0, %v4472
  %4474 = vmatmul.f32.gmra.mxu0 %v265
  %v4475 = vpop.f32.mrf.mxu0
  %v4476 = vadd.f32 0.0, %v4475
  %4477 = vmatmul.f32.gmra.mxu0 %v268
  %v4478 = vpop.f32.mrf.mxu0
  %v4479 = vadd.f32 0.0, %v4478
  %4480 = vmatmul.f32.gmra.mxu0 %v271
  %v4481 = vpop.f32.mrf.mxu0
  %v4482 = vadd.f32 0.0, %v4481
  %4483 = vmatmul.f32.gmra.mxu0 %v274
  %v4484 = vpop.f32.mrf.mxu0
  %v4485 = vadd.f32 0.0, %v4484
  %4486 = vmatmul.f32.gmra.mxu0 %v277
  %v4487 = vpop.f32.mrf.mxu0
  %v4488 = vadd.f32 0.0, %v4487
  %4489 = vmatmul.f32.gmra.mxu0 %v280
  %v4490 = vpop.f32.mrf.mxu0
  %v4491 = vadd.f32 0.0, %v4490
  %4492 = vmatmul.f32.gmra.mxu0 %v283
  %v4493 = vpop.f32.mrf.mxu0
  %v4494 = vadd.f32 0.0, %v4493
  %4495 = vmatmul.f32.gmra.mxu0 %v286
  %v4496 = vpop.f32.mrf.mxu0
  %v4497 = vadd.f32 0.0, %v4496
  %4498 = vmatmul.f32.gmra.mxu0 %v289
  %v4499 = vpop.f32.mrf.mxu0
  %v4500 = vadd.f32 0.0, %v4499
  %4501 = vmatmul.f32.gmra.mxu0 %v292
  %v4502 = vpop.f32.mrf.mxu0
  %v4503 = vadd.f32 0.0, %v4502
  %4504 = vmatmul.f32.gmra.mxu0 %v295
  %v4505 = vpop.f32.mrf.mxu0
  %v4506 = vadd.f32 0.0, %v4505
  %4507 = vmatmul.f32.gmra.mxu0 %v298
  %v4508 = vpop.f32.mrf.mxu0
  %v4509 = vadd.f32 0.0, %v4508
  %4510 = vmatmul.f32.gmra.mxu0 %v301
  %v4511 = vpop.f32.mrf.mxu0
  %v4512 = vadd.f32 0.0, %v4511
  %4513 = vmatmul.f32.gmra.mxu0 %v304
  %v4514 = vpop.f32.mrf.mxu0
  %v4515 = vadd.f32 0.0, %v4514
  %4516 = vmatmul.f32.gmra.mxu0 %v307
  %v4517 = vpop.f32.mrf.mxu0
  %v4518 = vadd.f32 0.0, %v4517
  %4519 = vmatmul.f32.gmra.mxu0 %v310
  %v4520 = vpop.f32.mrf.mxu0
  %v4521 = vadd.f32 0.0, %v4520
  %4522 = vmatmul.f32.gmra.mxu0 %v313
  %v4523 = vpop.f32.mrf.mxu0
  %v4524 = vadd.f32 0.0, %v4523
  %4525 = vmatmul.f32.gmra.mxu0 %v316
  %v4526 = vpop.f32.mrf.mxu0
  %v4527 = vadd.f32 0.0, %v4526
  %4528 = vmatmul.f32.gmra.mxu0 %v319
  %v4529 = vpop.f32.mrf.mxu0
  %v4530 = vadd.f32 0.0, %v4529
  %4531 = vmatmul.f32.gmra.mxu0 %v322
  %v4532 = vpop.f32.mrf.mxu0
  %v4533 = vadd.f32 0.0, %v4532
  %4534 = vmatmul.f32.gmra.mxu0 %v325
  %v4535 = vpop.f32.mrf.mxu0
  %v4536 = vadd.f32 0.0, %v4535
  %4537 = vmatmul.f32.gmra.mxu0 %v328
  %v4538 = vpop.f32.mrf.mxu0
  %v4539 = vadd.f32 0.0, %v4538
  %4540 = vmatmul.f32.gmra.mxu0 %v331
  %v4541 = vpop.f32.mrf.mxu0
  %v4542 = vadd.f32 0.0, %v4541
  %4543 = vmatmul.f32.gmra.mxu0 %v334
  %v4544 = vpop.f32.mrf.mxu0
  %v4545 = vadd.f32 0.0, %v4544
  %4546 = vmatmul.f32.gmra.mxu0 %v337
  %v4547 = vpop.f32.mrf.mxu0
  %v4548 = vadd.f32 0.0, %v4547
  %4549 = vmatmul.f32.gmra.mxu0 %v340
  %v4550 = vpop.f32.mrf.mxu0
  %v4551 = vadd.f32 0.0, %v4550
  %4552 = vmatmul.f32.gmra.mxu0 %v343
  %v4553 = vpop.f32.mrf.mxu0
  %v4554 = vadd.f32 0.0, %v4553
  %4555 = vmatmul.f32.gmra.mxu0 %v346
  %v4556 = vpop.f32.mrf.mxu0
  %v4557 = vadd.f32 0.0, %v4556
  %4558 = vmatmul.f32.gmra.mxu0 %v349
  %v4559 = vpop.f32.mrf.mxu0
  %v4560 = vadd.f32 0.0, %v4559
  %4561 = vdwg.mxu0
  %v4562 = vrot.slane %v27, 6
  %v4563 = vsel %vm1920, %v1922, %v4562
  %4565 = vmatpush.msra.mxu0 0.0
  %4566 = vmatpush.msra.mxu0 0.0
  %4567 = vmatpush.msra.mxu0 0.0
  %4568 = vmatpush.msra.mxu0 0.0
  %4569 = vmatpush.msra.mxu0 0.0
  %4570 = vmatpush.msra.mxu0 0.0
  %4571 = vmatpush.msra.mxu0 0.0
  %4572 = vmatpush.msra.mxu0 0.0
  %4573 = vmatpush.msra.mxu0 0.0
  %4574 = vmatpush.msra.mxu0 0.0
  %4575 = vmatpush.msra.mxu0 0.0
  %4576 = vmatpush.msra.mxu0 0.0
  %4577 = vmatpush.msra.mxu0 0.0
  %4578 = vmatpush.msra.mxu0 0.0
  %4579 = vmatpush.msra.mxu0 0.0
  %4580 = vmatpush.msra.mxu0 %v4563
  %4581 = vmatmul.f32.gmra.mxu0 %v112
  %v4582 = vpop.f32.mrf.mxu0
  %v4583 = vadd.f32 0.0, %v4582
  %4584 = vmatmul.f32.gmra.mxu0 %v115
  %v4585 = vpop.f32.mrf.mxu0
  %v4586 = vadd.f32 0.0, %v4585
  %4587 = vmatmul.f32.gmra.mxu0 %v118
  %v4588 = vpop.f32.mrf.mxu0
  %v4589 = vadd.f32 0.0, %v4588
  %4590 = vmatmul.f32.gmra.mxu0 %v121
  %v4591 = vpop.f32.mrf.mxu0
  %v4592 = vadd.f32 0.0, %v4591
  %4593 = vmatmul.f32.gmra.mxu0 %v124
  %v4594 = vpop.f32.mrf.mxu0
  %v4595 = vadd.f32 0.0, %v4594
  %4596 = vmatmul.f32.gmra.mxu0 %v127
  %v4597 = vpop.f32.mrf.mxu0
  %v4598 = vadd.f32 0.0, %v4597
  %4599 = vmatmul.f32.gmra.mxu0 %v130
  %v4600 = vpop.f32.mrf.mxu0
  %v4601 = vadd.f32 0.0, %v4600
  %4602 = vmatmul.f32.gmra.mxu0 %v133
  %v4603 = vpop.f32.mrf.mxu0
  %v4604 = vadd.f32 0.0, %v4603
  %4605 = vmatmul.f32.gmra.mxu0 %v136
  %v4606 = vpop.f32.mrf.mxu0
  %v4607 = vadd.f32 0.0, %v4606
  %4608 = vmatmul.f32.gmra.mxu0 %v139
  %v4609 = vpop.f32.mrf.mxu0
  %v4610 = vadd.f32 0.0, %v4609
  %4611 = vmatmul.f32.gmra.mxu0 %v142
  %v4612 = vpop.f32.mrf.mxu0
  %v4613 = vadd.f32 0.0, %v4612
  %4614 = vmatmul.f32.gmra.mxu0 %v145
  %v4615 = vpop.f32.mrf.mxu0
  %v4616 = vadd.f32 0.0, %v4615
  %4617 = vmatmul.f32.gmra.mxu0 %v148
  %v4618 = vpop.f32.mrf.mxu0
  %v4619 = vadd.f32 0.0, %v4618
  %4620 = vmatmul.f32.gmra.mxu0 %v151
  %v4621 = vpop.f32.mrf.mxu0
  %v4622 = vadd.f32 0.0, %v4621
  %4623 = vmatmul.f32.gmra.mxu0 %v154
  %v4624 = vpop.f32.mrf.mxu0
  %v4625 = vadd.f32 0.0, %v4624
  %4626 = vmatmul.f32.gmra.mxu0 %v157
  %v4627 = vpop.f32.mrf.mxu0
  %v4628 = vadd.f32 0.0, %v4627
  %4629 = vmatmul.f32.gmra.mxu0 %v160
  %v4630 = vpop.f32.mrf.mxu0
  %v4631 = vadd.f32 0.0, %v4630
  %4632 = vmatmul.f32.gmra.mxu0 %v163
  %v4633 = vpop.f32.mrf.mxu0
  %v4634 = vadd.f32 0.0, %v4633
  %4635 = vmatmul.f32.gmra.mxu0 %v166
  %v4636 = vpop.f32.mrf.mxu0
  %v4637 = vadd.f32 0.0, %v4636
  %4638 = vmatmul.f32.gmra.mxu0 %v169
  %v4639 = vpop.f32.mrf.mxu0
  %v4640 = vadd.f32 0.0, %v4639
  %4641 = vmatmul.f32.gmra.mxu0 %v172
  %v4642 = vpop.f32.mrf.mxu0
  %v4643 = vadd.f32 0.0, %v4642
  %4644 = vmatmul.f32.gmra.mxu0 %v175
  %v4645 = vpop.f32.mrf.mxu0
  %v4646 = vadd.f32 0.0, %v4645
  %4647 = vmatmul.f32.gmra.mxu0 %v178
  %v4648 = vpop.f32.mrf.mxu0
  %v4649 = vadd.f32 0.0, %v4648
  %4650 = vmatmul.f32.gmra.mxu0 %v181
  %v4651 = vpop.f32.mrf.mxu0
  %v4652 = vadd.f32 0.0, %v4651
  %4653 = vmatmul.f32.gmra.mxu0 %v184
  %v4654 = vpop.f32.mrf.mxu0
  %v4655 = vadd.f32 0.0, %v4654
  %4656 = vmatmul.f32.gmra.mxu0 %v187
  %v4657 = vpop.f32.mrf.mxu0
  %v4658 = vadd.f32 0.0, %v4657
  %4659 = vmatmul.f32.gmra.mxu0 %v190
  %v4660 = vpop.f32.mrf.mxu0
  %v4661 = vadd.f32 0.0, %v4660
  %4662 = vmatmul.f32.gmra.mxu0 %v193
  %v4663 = vpop.f32.mrf.mxu0
  %v4664 = vadd.f32 0.0, %v4663
  %4665 = vmatmul.f32.gmra.mxu0 %v196
  %v4666 = vpop.f32.mrf.mxu0
  %v4667 = vadd.f32 0.0, %v4666
  %4668 = vmatmul.f32.gmra.mxu0 %v199
  %v4669 = vpop.f32.mrf.mxu0
  %v4670 = vadd.f32 0.0, %v4669
  %4671 = vmatmul.f32.gmra.mxu0 %v202
  %v4672 = vpop.f32.mrf.mxu0
  %v4673 = vadd.f32 0.0, %v4672
  %4674 = vmatmul.f32.gmra.mxu0 %v205
  %v4675 = vpop.f32.mrf.mxu0
  %v4676 = vadd.f32 0.0, %v4675
  %4677 = vmatmul.f32.gmra.mxu0 %v208
  %v4678 = vpop.f32.mrf.mxu0
  %v4679 = vadd.f32 0.0, %v4678
  %4680 = vmatmul.f32.gmra.mxu0 %v211
  %v4681 = vpop.f32.mrf.mxu0
  %v4682 = vadd.f32 0.0, %v4681
  %4683 = vmatmul.f32.gmra.mxu0 %v214
  %v4684 = vpop.f32.mrf.mxu0
  %v4685 = vadd.f32 0.0, %v4684
  %4686 = vmatmul.f32.gmra.mxu0 %v217
  %v4687 = vpop.f32.mrf.mxu0
  %v4688 = vadd.f32 0.0, %v4687
  %4689 = vmatmul.f32.gmra.mxu0 %v220
  %v4690 = vpop.f32.mrf.mxu0
  %v4691 = vadd.f32 0.0, %v4690
  %4692 = vmatmul.f32.gmra.mxu0 %v223
  %v4693 = vpop.f32.mrf.mxu0
  %v4694 = vadd.f32 0.0, %v4693
  %4695 = vmatmul.f32.gmra.mxu0 %v226
  %v4696 = vpop.f32.mrf.mxu0
  %v4697 = vadd.f32 0.0, %v4696
  %4698 = vmatmul.f32.gmra.mxu0 %v229
  %v4699 = vpop.f32.mrf.mxu0
  %v4700 = vadd.f32 0.0, %v4699
  %4701 = vmatmul.f32.gmra.mxu0 %v232
  %v4702 = vpop.f32.mrf.mxu0
  %v4703 = vadd.f32 0.0, %v4702
  %4704 = vmatmul.f32.gmra.mxu0 %v235
  %v4705 = vpop.f32.mrf.mxu0
  %v4706 = vadd.f32 0.0, %v4705
  %4707 = vmatmul.f32.gmra.mxu0 %v238
  %v4708 = vpop.f32.mrf.mxu0
  %v4709 = vadd.f32 0.0, %v4708
  %4710 = vmatmul.f32.gmra.mxu0 %v241
  %v4711 = vpop.f32.mrf.mxu0
  %v4712 = vadd.f32 0.0, %v4711
  %4713 = vmatmul.f32.gmra.mxu0 %v244
  %v4714 = vpop.f32.mrf.mxu0
  %v4715 = vadd.f32 0.0, %v4714
  %4716 = vmatmul.f32.gmra.mxu0 %v247
  %v4717 = vpop.f32.mrf.mxu0
  %v4718 = vadd.f32 0.0, %v4717
  %4719 = vmatmul.f32.gmra.mxu0 %v250
  %v4720 = vpop.f32.mrf.mxu0
  %v4721 = vadd.f32 0.0, %v4720
  %4722 = vmatmul.f32.gmra.mxu0 %v253
  %v4723 = vpop.f32.mrf.mxu0
  %v4724 = vadd.f32 0.0, %v4723
  %4725 = vmatmul.f32.gmra.mxu0 %v256
  %v4726 = vpop.f32.mrf.mxu0
  %v4727 = vadd.f32 0.0, %v4726
  %4728 = vmatmul.f32.gmra.mxu0 %v259
  %v4729 = vpop.f32.mrf.mxu0
  %v4730 = vadd.f32 0.0, %v4729
  %4731 = vmatmul.f32.gmra.mxu0 %v262
  %v4732 = vpop.f32.mrf.mxu0
  %v4733 = vadd.f32 0.0, %v4732
  %4734 = vmatmul.f32.gmra.mxu0 %v265
  %v4735 = vpop.f32.mrf.mxu0
  %v4736 = vadd.f32 0.0, %v4735
  %4737 = vmatmul.f32.gmra.mxu0 %v268
  %v4738 = vpop.f32.mrf.mxu0
  %v4739 = vadd.f32 0.0, %v4738
  %4740 = vmatmul.f32.gmra.mxu0 %v271
  %v4741 = vpop.f32.mrf.mxu0
  %v4742 = vadd.f32 0.0, %v4741
  %4743 = vmatmul.f32.gmra.mxu0 %v274
  %v4744 = vpop.f32.mrf.mxu0
  %v4745 = vadd.f32 0.0, %v4744
  %4746 = vmatmul.f32.gmra.mxu0 %v277
  %v4747 = vpop.f32.mrf.mxu0
  %v4748 = vadd.f32 0.0, %v4747
  %4749 = vmatmul.f32.gmra.mxu0 %v280
  %v4750 = vpop.f32.mrf.mxu0
  %v4751 = vadd.f32 0.0, %v4750
  %4752 = vmatmul.f32.gmra.mxu0 %v283
  %v4753 = vpop.f32.mrf.mxu0
  %v4754 = vadd.f32 0.0, %v4753
  %4755 = vmatmul.f32.gmra.mxu0 %v286
  %v4756 = vpop.f32.mrf.mxu0
  %v4757 = vadd.f32 0.0, %v4756
  %4758 = vmatmul.f32.gmra.mxu0 %v289
  %v4759 = vpop.f32.mrf.mxu0
  %v4760 = vadd.f32 0.0, %v4759
  %4761 = vmatmul.f32.gmra.mxu0 %v292
  %v4762 = vpop.f32.mrf.mxu0
  %v4763 = vadd.f32 0.0, %v4762
  %4764 = vmatmul.f32.gmra.mxu0 %v295
  %v4765 = vpop.f32.mrf.mxu0
  %v4766 = vadd.f32 0.0, %v4765
  %4767 = vmatmul.f32.gmra.mxu0 %v298
  %v4768 = vpop.f32.mrf.mxu0
  %v4769 = vadd.f32 0.0, %v4768
  %4770 = vmatmul.f32.gmra.mxu0 %v301
  %v4771 = vpop.f32.mrf.mxu0
  %v4772 = vadd.f32 0.0, %v4771
  %4773 = vmatmul.f32.gmra.mxu0 %v304
  %v4774 = vpop.f32.mrf.mxu0
  %v4775 = vadd.f32 0.0, %v4774
  %4776 = vmatmul.f32.gmra.mxu0 %v307
  %v4777 = vpop.f32.mrf.mxu0
  %v4778 = vadd.f32 0.0, %v4777
  %4779 = vmatmul.f32.gmra.mxu0 %v310
  %v4780 = vpop.f32.mrf.mxu0
  %v4781 = vadd.f32 0.0, %v4780
  %4782 = vmatmul.f32.gmra.mxu0 %v313
  %v4783 = vpop.f32.mrf.mxu0
  %v4784 = vadd.f32 0.0, %v4783
  %4785 = vmatmul.f32.gmra.mxu0 %v316
  %v4786 = vpop.f32.mrf.mxu0
  %v4787 = vadd.f32 0.0, %v4786
  %4788 = vmatmul.f32.gmra.mxu0 %v319
  %v4789 = vpop.f32.mrf.mxu0
  %v4790 = vadd.f32 0.0, %v4789
  %4791 = vmatmul.f32.gmra.mxu0 %v322
  %v4792 = vpop.f32.mrf.mxu0
  %v4793 = vadd.f32 0.0, %v4792
  %4794 = vmatmul.f32.gmra.mxu0 %v325
  %v4795 = vpop.f32.mrf.mxu0
  %v4796 = vadd.f32 0.0, %v4795
  %4797 = vmatmul.f32.gmra.mxu0 %v328
  %v4798 = vpop.f32.mrf.mxu0
  %v4799 = vadd.f32 0.0, %v4798
  %4800 = vmatmul.f32.gmra.mxu0 %v331
  %v4801 = vpop.f32.mrf.mxu0
  %v4802 = vadd.f32 0.0, %v4801
  %4803 = vmatmul.f32.gmra.mxu0 %v334
  %v4804 = vpop.f32.mrf.mxu0
  %v4805 = vadd.f32 0.0, %v4804
  %4806 = vmatmul.f32.gmra.mxu0 %v337
  %v4807 = vpop.f32.mrf.mxu0
  %v4808 = vadd.f32 0.0, %v4807
  %4809 = vmatmul.f32.gmra.mxu0 %v340
  %v4810 = vpop.f32.mrf.mxu0
  %v4811 = vadd.f32 0.0, %v4810
  %4812 = vmatmul.f32.gmra.mxu0 %v343
  %v4813 = vpop.f32.mrf.mxu0
  %v4814 = vadd.f32 0.0, %v4813
  %4815 = vmatmul.f32.gmra.mxu0 %v346
  %v4816 = vpop.f32.mrf.mxu0
  %v4817 = vadd.f32 0.0, %v4816
  %4818 = vmatmul.f32.gmra.mxu0 %v349
  %v4819 = vpop.f32.mrf.mxu0
  %v4820 = vadd.f32 0.0, %v4819
  %4821 = vdwg.mxu0
  %v4822 = vrot.slane %v27, 7
  %v4823 = vsel %vm2182, %v2184, %v4822
  %4825 = vmatpush.msra.mxu0 0.0
  %4826 = vmatpush.msra.mxu0 0.0
  %4827 = vmatpush.msra.mxu0 0.0
  %4828 = vmatpush.msra.mxu0 0.0
  %4829 = vmatpush.msra.mxu0 0.0
  %4830 = vmatpush.msra.mxu0 0.0
  %4831 = vmatpush.msra.mxu0 0.0
  %4832 = vmatpush.msra.mxu0 0.0
  %4833 = vmatpush.msra.mxu0 0.0
  %4834 = vmatpush.msra.mxu0 0.0
  %4835 = vmatpush.msra.mxu0 0.0
  %4836 = vmatpush.msra.mxu0 0.0
  %4837 = vmatpush.msra.mxu0 0.0
  %4838 = vmatpush.msra.mxu0 0.0
  %4839 = vmatpush.msra.mxu0 0.0
  %4840 = vmatpush.msra.mxu0 %v4823
  %4841 = vmatmul.f32.gmra.mxu0 %v112
  %v4842 = vpop.f32.mrf.mxu0
  %v4843 = vadd.f32 0.0, %v4842
  %4844 = vmatmul.f32.gmra.mxu0 %v115
  %v4845 = vpop.f32.mrf.mxu0
  %v4846 = vadd.f32 0.0, %v4845
  %4847 = vmatmul.f32.gmra.mxu0 %v118
  %v4848 = vpop.f32.mrf.mxu0
  %v4849 = vadd.f32 0.0, %v4848
  %4850 = vmatmul.f32.gmra.mxu0 %v121
  %v4851 = vpop.f32.mrf.mxu0
  %v4852 = vadd.f32 0.0, %v4851
  %4853 = vmatmul.f32.gmra.mxu0 %v124
  %v4854 = vpop.f32.mrf.mxu0
  %v4855 = vadd.f32 0.0, %v4854
  %4856 = vmatmul.f32.gmra.mxu0 %v127
  %v4857 = vpop.f32.mrf.mxu0
  %v4858 = vadd.f32 0.0, %v4857
  %4859 = vmatmul.f32.gmra.mxu0 %v130
  %v4860 = vpop.f32.mrf.mxu0
  %v4861 = vadd.f32 0.0, %v4860
  %4862 = vmatmul.f32.gmra.mxu0 %v133
  %v4863 = vpop.f32.mrf.mxu0
  %v4864 = vadd.f32 0.0, %v4863
  %4865 = vmatmul.f32.gmra.mxu0 %v136
  %v4866 = vpop.f32.mrf.mxu0
  %v4867 = vadd.f32 0.0, %v4866
  %4868 = vmatmul.f32.gmra.mxu0 %v139
  %v4869 = vpop.f32.mrf.mxu0
  %v4870 = vadd.f32 0.0, %v4869
  %4871 = vmatmul.f32.gmra.mxu0 %v142
  %v4872 = vpop.f32.mrf.mxu0
  %v4873 = vadd.f32 0.0, %v4872
  %4874 = vmatmul.f32.gmra.mxu0 %v145
  %v4875 = vpop.f32.mrf.mxu0
  %v4876 = vadd.f32 0.0, %v4875
  %4877 = vmatmul.f32.gmra.mxu0 %v148
  %v4878 = vpop.f32.mrf.mxu0
  %v4879 = vadd.f32 0.0, %v4878
  %4880 = vmatmul.f32.gmra.mxu0 %v151
  %v4881 = vpop.f32.mrf.mxu0
  %v4882 = vadd.f32 0.0, %v4881
  %4883 = vmatmul.f32.gmra.mxu0 %v154
  %v4884 = vpop.f32.mrf.mxu0
  %v4885 = vadd.f32 0.0, %v4884
  %4886 = vmatmul.f32.gmra.mxu0 %v157
  %v4887 = vpop.f32.mrf.mxu0
  %v4888 = vadd.f32 0.0, %v4887
  %4889 = vmatmul.f32.gmra.mxu0 %v160
  %v4890 = vpop.f32.mrf.mxu0
  %v4891 = vadd.f32 0.0, %v4890
  %4892 = vmatmul.f32.gmra.mxu0 %v163
  %v4893 = vpop.f32.mrf.mxu0
  %v4894 = vadd.f32 0.0, %v4893
  %4895 = vmatmul.f32.gmra.mxu0 %v166
  %v4896 = vpop.f32.mrf.mxu0
  %v4897 = vadd.f32 0.0, %v4896
  %4898 = vmatmul.f32.gmra.mxu0 %v169
  %v4899 = vpop.f32.mrf.mxu0
  %v4900 = vadd.f32 0.0, %v4899
  %4901 = vmatmul.f32.gmra.mxu0 %v172
  %v4902 = vpop.f32.mrf.mxu0
  %v4903 = vadd.f32 0.0, %v4902
  %4904 = vmatmul.f32.gmra.mxu0 %v175
  %v4905 = vpop.f32.mrf.mxu0
  %v4906 = vadd.f32 0.0, %v4905
  %4907 = vmatmul.f32.gmra.mxu0 %v178
  %v4908 = vpop.f32.mrf.mxu0
  %v4909 = vadd.f32 0.0, %v4908
  %4910 = vmatmul.f32.gmra.mxu0 %v181
  %v4911 = vpop.f32.mrf.mxu0
  %v4912 = vadd.f32 0.0, %v4911
  %4913 = vmatmul.f32.gmra.mxu0 %v184
  %v4914 = vpop.f32.mrf.mxu0
  %v4915 = vadd.f32 0.0, %v4914
  %4916 = vmatmul.f32.gmra.mxu0 %v187
  %v4917 = vpop.f32.mrf.mxu0
  %v4918 = vadd.f32 0.0, %v4917
  %4919 = vmatmul.f32.gmra.mxu0 %v190
  %v4920 = vpop.f32.mrf.mxu0
  %v4921 = vadd.f32 0.0, %v4920
  %4922 = vmatmul.f32.gmra.mxu0 %v193
  %v4923 = vpop.f32.mrf.mxu0
  %v4924 = vadd.f32 0.0, %v4923
  %4925 = vmatmul.f32.gmra.mxu0 %v196
  %v4926 = vpop.f32.mrf.mxu0
  %v4927 = vadd.f32 0.0, %v4926
  %4928 = vmatmul.f32.gmra.mxu0 %v199
  %v4929 = vpop.f32.mrf.mxu0
  %v4930 = vadd.f32 0.0, %v4929
  %4931 = vmatmul.f32.gmra.mxu0 %v202
  %v4932 = vpop.f32.mrf.mxu0
  %v4933 = vadd.f32 0.0, %v4932
  %4934 = vmatmul.f32.gmra.mxu0 %v205
  %v4935 = vpop.f32.mrf.mxu0
  %v4936 = vadd.f32 0.0, %v4935
  %4937 = vmatmul.f32.gmra.mxu0 %v208
  %v4938 = vpop.f32.mrf.mxu0
  %v4939 = vadd.f32 0.0, %v4938
  %4940 = vmatmul.f32.gmra.mxu0 %v211
  %v4941 = vpop.f32.mrf.mxu0
  %v4942 = vadd.f32 0.0, %v4941
  %4943 = vmatmul.f32.gmra.mxu0 %v214
  %v4944 = vpop.f32.mrf.mxu0
  %v4945 = vadd.f32 0.0, %v4944
  %4946 = vmatmul.f32.gmra.mxu0 %v217
  %v4947 = vpop.f32.mrf.mxu0
  %v4948 = vadd.f32 0.0, %v4947
  %4949 = vmatmul.f32.gmra.mxu0 %v220
  %v4950 = vpop.f32.mrf.mxu0
  %v4951 = vadd.f32 0.0, %v4950
  %4952 = vmatmul.f32.gmra.mxu0 %v223
  %v4953 = vpop.f32.mrf.mxu0
  %v4954 = vadd.f32 0.0, %v4953
  %4955 = vmatmul.f32.gmra.mxu0 %v226
  %v4956 = vpop.f32.mrf.mxu0
  %v4957 = vadd.f32 0.0, %v4956
  %4958 = vmatmul.f32.gmra.mxu0 %v229
  %v4959 = vpop.f32.mrf.mxu0
  %v4960 = vadd.f32 0.0, %v4959
  %4961 = vmatmul.f32.gmra.mxu0 %v232
  %v4962 = vpop.f32.mrf.mxu0
  %v4963 = vadd.f32 0.0, %v4962
  %4964 = vmatmul.f32.gmra.mxu0 %v235
  %v4965 = vpop.f32.mrf.mxu0
  %v4966 = vadd.f32 0.0, %v4965
  %4967 = vmatmul.f32.gmra.mxu0 %v238
  %v4968 = vpop.f32.mrf.mxu0
  %v4969 = vadd.f32 0.0, %v4968
  %4970 = vmatmul.f32.gmra.mxu0 %v241
  %v4971 = vpop.f32.mrf.mxu0
  %v4972 = vadd.f32 0.0, %v4971
  %4973 = vmatmul.f32.gmra.mxu0 %v244
  %v4974 = vpop.f32.mrf.mxu0
  %v4975 = vadd.f32 0.0, %v4974
  %4976 = vmatmul.f32.gmra.mxu0 %v247
  %v4977 = vpop.f32.mrf.mxu0
  %v4978 = vadd.f32 0.0, %v4977
  %4979 = vmatmul.f32.gmra.mxu0 %v250
  %v4980 = vpop.f32.mrf.mxu0
  %v4981 = vadd.f32 0.0, %v4980
  %4982 = vmatmul.f32.gmra.mxu0 %v253
  %v4983 = vpop.f32.mrf.mxu0
  %v4984 = vadd.f32 0.0, %v4983
  %4985 = vmatmul.f32.gmra.mxu0 %v256
  %v4986 = vpop.f32.mrf.mxu0
  %v4987 = vadd.f32 0.0, %v4986
  %4988 = vmatmul.f32.gmra.mxu0 %v259
  %v4989 = vpop.f32.mrf.mxu0
  %v4990 = vadd.f32 0.0, %v4989
  %4991 = vmatmul.f32.gmra.mxu0 %v262
  %v4992 = vpop.f32.mrf.mxu0
  %v4993 = vadd.f32 0.0, %v4992
  %4994 = vmatmul.f32.gmra.mxu0 %v265
  %v4995 = vpop.f32.mrf.mxu0
  %v4996 = vadd.f32 0.0, %v4995
  %4997 = vmatmul.f32.gmra.mxu0 %v268
  %v4998 = vpop.f32.mrf.mxu0
  %v4999 = vadd.f32 0.0, %v4998
  %5000 = vmatmul.f32.gmra.mxu0 %v271
  %v5001 = vpop.f32.mrf.mxu0
  %v5002 = vadd.f32 0.0, %v5001
  %5003 = vmatmul.f32.gmra.mxu0 %v274
  %v5004 = vpop.f32.mrf.mxu0
  %v5005 = vadd.f32 0.0, %v5004
  %5006 = vmatmul.f32.gmra.mxu0 %v277
  %v5007 = vpop.f32.mrf.mxu0
  %v5008 = vadd.f32 0.0, %v5007
  %5009 = vmatmul.f32.gmra.mxu0 %v280
  %v5010 = vpop.f32.mrf.mxu0
  %v5011 = vadd.f32 0.0, %v5010
  %5012 = vmatmul.f32.gmra.mxu0 %v283
  %v5013 = vpop.f32.mrf.mxu0
  %v5014 = vadd.f32 0.0, %v5013
  %5015 = vmatmul.f32.gmra.mxu0 %v286
  %v5016 = vpop.f32.mrf.mxu0
  %v5017 = vadd.f32 0.0, %v5016
  %5018 = vmatmul.f32.gmra.mxu0 %v289
  %v5019 = vpop.f32.mrf.mxu0
  %v5020 = vadd.f32 0.0, %v5019
  %5021 = vmatmul.f32.gmra.mxu0 %v292
  %v5022 = vpop.f32.mrf.mxu0
  %v5023 = vadd.f32 0.0, %v5022
  %5024 = vmatmul.f32.gmra.mxu0 %v295
  %v5025 = vpop.f32.mrf.mxu0
  %v5026 = vadd.f32 0.0, %v5025
  %5027 = vmatmul.f32.gmra.mxu0 %v298
  %v5028 = vpop.f32.mrf.mxu0
  %v5029 = vadd.f32 0.0, %v5028
  %5030 = vmatmul.f32.gmra.mxu0 %v301
  %v5031 = vpop.f32.mrf.mxu0
  %v5032 = vadd.f32 0.0, %v5031
  %5033 = vmatmul.f32.gmra.mxu0 %v304
  %v5034 = vpop.f32.mrf.mxu0
  %v5035 = vadd.f32 0.0, %v5034
  %5036 = vmatmul.f32.gmra.mxu0 %v307
  %v5037 = vpop.f32.mrf.mxu0
  %v5038 = vadd.f32 0.0, %v5037
  %5039 = vmatmul.f32.gmra.mxu0 %v310
  %v5040 = vpop.f32.mrf.mxu0
  %v5041 = vadd.f32 0.0, %v5040
  %5042 = vmatmul.f32.gmra.mxu0 %v313
  %v5043 = vpop.f32.mrf.mxu0
  %v5044 = vadd.f32 0.0, %v5043
  %5045 = vmatmul.f32.gmra.mxu0 %v316
  %v5046 = vpop.f32.mrf.mxu0
  %v5047 = vadd.f32 0.0, %v5046
  %5048 = vmatmul.f32.gmra.mxu0 %v319
  %v5049 = vpop.f32.mrf.mxu0
  %v5050 = vadd.f32 0.0, %v5049
  %5051 = vmatmul.f32.gmra.mxu0 %v322
  %v5052 = vpop.f32.mrf.mxu0
  %v5053 = vadd.f32 0.0, %v5052
  %5054 = vmatmul.f32.gmra.mxu0 %v325
  %v5055 = vpop.f32.mrf.mxu0
  %v5056 = vadd.f32 0.0, %v5055
  %5057 = vmatmul.f32.gmra.mxu0 %v328
  %v5058 = vpop.f32.mrf.mxu0
  %v5059 = vadd.f32 0.0, %v5058
  %5060 = vmatmul.f32.gmra.mxu0 %v331
  %v5061 = vpop.f32.mrf.mxu0
  %v5062 = vadd.f32 0.0, %v5061
  %5063 = vmatmul.f32.gmra.mxu0 %v334
  %v5064 = vpop.f32.mrf.mxu0
  %v5065 = vadd.f32 0.0, %v5064
  %5066 = vmatmul.f32.gmra.mxu0 %v337
  %v5067 = vpop.f32.mrf.mxu0
  %v5068 = vadd.f32 0.0, %v5067
  %5069 = vmatmul.f32.gmra.mxu0 %v340
  %v5070 = vpop.f32.mrf.mxu0
  %v5071 = vadd.f32 0.0, %v5070
  %5072 = vmatmul.f32.gmra.mxu0 %v343
  %v5073 = vpop.f32.mrf.mxu0
  %v5074 = vadd.f32 0.0, %v5073
  %5075 = vmatmul.f32.gmra.mxu0 %v346
  %v5076 = vpop.f32.mrf.mxu0
  %v5077 = vadd.f32 0.0, %v5076
  %5078 = vmatmul.f32.gmra.mxu0 %v349
  %v5079 = vpop.f32.mrf.mxu0
  %v5080 = vadd.f32 0.0, %v5079
  %5081 = vdwg.mxu0
  %v5082 = vmax.f32 %v3022, %v3283
  %v5083 = vmax.f32 %v3025, %v3286
  %v5084 = vmax.f32 %v3028, %v3289
  %v5085 = vmax.f32 %v3031, %v3292
  %v5086 = vmax.f32 %v3034, %v3295
  %v5087 = vmax.f32 %v3037, %v3298
  %v5088 = vmax.f32 %v3040, %v3301
  %v5089 = vmax.f32 %v3043, %v3304
  %v5090 = vmax.f32 %v3046, %v3307
  %v5091 = vmax.f32 %v3049, %v3310
  %v5092 = vmax.f32 %v3052, %v3313
  %v5093 = vmax.f32 %v3055, %v3316
  %v5094 = vmax.f32 %v3058, %v3319
  %v5095 = vmax.f32 %v3061, %v3322
  %v5096 = vmax.f32 %v3064, %v3325
  %v5097 = vmax.f32 %v3067, %v3328
  %v5098 = vmax.f32 %v3070, %v3331
  %v5099 = vmax.f32 %v3073, %v3334
  %v5100 = vmax.f32 %v3076, %v3337
  %v5101 = vmax.f32 %v3079, %v3340
  %v5102 = vmax.f32 %v3082, %v3343
  %v5103 = vmax.f32 %v3085, %v3346
  %v5104 = vmax.f32 %v3088, %v3349
  %v5105 = vmax.f32 %v3091, %v3352
  %v5106 = vmax.f32 %v3094, %v3355
  %v5107 = vmax.f32 %v3097, %v3358
  %v5108 = vmax.f32 %v3100, %v3361
  %v5109 = vmax.f32 %v3103, %v3364
  %v5110 = vmax.f32 %v3106, %v3367
  %v5111 = vmax.f32 %v3109, %v3370
  %v5112 = vmax.f32 %v3112, %v3373
  %v5113 = vmax.f32 %v3115, %v3376
  %v5114 = vmax.f32 %v3118, %v3379
  %v5115 = vmax.f32 %v3121, %v3382
  %v5116 = vmax.f32 %v3124, %v3385
  %v5117 = vmax.f32 %v3127, %v3388
  %v5118 = vmax.f32 %v3130, %v3391
  %v5119 = vmax.f32 %v3133, %v3394
  %v5120 = vmax.f32 %v3136, %v3397
  %v5121 = vmax.f32 %v3139, %v3400
  %v5122 = vmax.f32 %v3142, %v3403
  %v5123 = vmax.f32 %v3145, %v3406
  %v5124 = vmax.f32 %v3148, %v3409
  %v5125 = vmax.f32 %v3151, %v3412
  %v5126 = vmax.f32 %v3154, %v3415
  %v5127 = vmax.f32 %v3157, %v3418
  %v5128 = vmax.f32 %v3160, %v3421
  %v5129 = vmax.f32 %v3163, %v3424
  %v5130 = vmax.f32 %v3166, %v3427
  %v5131 = vmax.f32 %v3169, %v3430
  %v5132 = vmax.f32 %v3172, %v3433
  %v5133 = vmax.f32 %v3175, %v3436
  %v5134 = vmax.f32 %v3178, %v3439
  %v5135 = vmax.f32 %v3181, %v3442
  %v5136 = vmax.f32 %v3184, %v3445
  %v5137 = vmax.f32 %v3187, %v3448
  %v5138 = vmax.f32 %v3190, %v3451
  %v5139 = vmax.f32 %v3193, %v3454
  %v5140 = vmax.f32 %v3196, %v3457
  %v5141 = vmax.f32 %v3199, %v3460
  %v5142 = vmax.f32 %v3202, %v3463
  %v5143 = vmax.f32 %v3205, %v3466
  %v5144 = vmax.f32 %v3208, %v3469
  %v5145 = vmax.f32 %v3211, %v3472
  %v5146 = vmax.f32 %v3214, %v3475
  %v5147 = vmax.f32 %v3217, %v3478
  %v5148 = vmax.f32 %v3220, %v3481
  %v5149 = vmax.f32 %v3223, %v3484
  %v5150 = vmax.f32 %v3226, %v3487
  %v5151 = vmax.f32 %v3229, %v3490
  %v5152 = vmax.f32 %v3232, %v3493
  %v5153 = vmax.f32 %v3235, %v3496
  %v5154 = vmax.f32 %v3238, %v3499
  %v5155 = vmax.f32 %v3241, %v3502
  %v5156 = vmax.f32 %v3244, %v3505
  %v5157 = vmax.f32 %v3247, %v3508
  %v5158 = vmax.f32 %v3250, %v3511
  %v5159 = vmax.f32 %v3253, %v3514
  %v5160 = vmax.f32 %v3256, %v3517
  %v5161 = vmax.f32 %v3259, %v3520
  %v5162 = vmax.f32 %v3543, %v3803
  %v5163 = vmax.f32 %v3546, %v3806
  %v5164 = vmax.f32 %v3549, %v3809
  %v5165 = vmax.f32 %v3552, %v3812
  %v5166 = vmax.f32 %v3555, %v3815
  %v5167 = vmax.f32 %v3558, %v3818
  %v5168 = vmax.f32 %v3561, %v3821
  %v5169 = vmax.f32 %v3564, %v3824
  %v5170 = vmax.f32 %v3567, %v3827
  %v5171 = vmax.f32 %v3570, %v3830
  %v5172 = vmax.f32 %v3573, %v3833
  %v5173 = vmax.f32 %v3576, %v3836
  %v5174 = vmax.f32 %v3579, %v3839
  %v5175 = vmax.f32 %v3582, %v3842
  %v5176 = vmax.f32 %v3585, %v3845
  %v5177 = vmax.f32 %v3588, %v3848
  %v5178 = vmax.f32 %v3591, %v3851
  %v5179 = vmax.f32 %v3594, %v3854
  %v5180 = vmax.f32 %v3597, %v3857
  %v5181 = vmax.f32 %v3600, %v3860
  %v5182 = vmax.f32 %v3603, %v3863
  %v5183 = vmax.f32 %v3606, %v3866
  %v5184 = vmax.f32 %v3609, %v3869
  %v5185 = vmax.f32 %v3612, %v3872
  %v5186 = vmax.f32 %v3615, %v3875
  %v5187 = vmax.f32 %v3618, %v3878
  %v5188 = vmax.f32 %v3621, %v3881
  %v5189 = vmax.f32 %v3624, %v3884
  %v5190 = vmax.f32 %v3627, %v3887
  %v5191 = vmax.f32 %v3630, %v3890
  %v5192 = vmax.f32 %v3633, %v3893
  %v5193 = vmax.f32 %v3636, %v3896
  %v5194 = vmax.f32 %v3639, %v3899
  %v5195 = vmax.f32 %v3642, %v3902
  %v5196 = vmax.f32 %v3645, %v3905
  %v5197 = vmax.f32 %v3648, %v3908
  %v5198 = vmax.f32 %v3651, %v3911
  %v5199 = vmax.f32 %v3654, %v3914
  %v5200 = vmax.f32 %v3657, %v3917
  %v5201 = vmax.f32 %v3660, %v3920
  %v5202 = vmax.f32 %v3663, %v3923
  %v5203 = vmax.f32 %v3666, %v3926
  %v5204 = vmax.f32 %v3669, %v3929
  %v5205 = vmax.f32 %v3672, %v3932
  %v5206 = vmax.f32 %v3675, %v3935
  %v5207 = vmax.f32 %v3678, %v3938
  %v5208 = vmax.f32 %v3681, %v3941
  %v5209 = vmax.f32 %v3684, %v3944
  %v5210 = vmax.f32 %v3687, %v3947
  %v5211 = vmax.f32 %v3690, %v3950
  %v5212 = vmax.f32 %v3693, %v3953
  %v5213 = vmax.f32 %v3696, %v3956
  %v5214 = vmax.f32 %v3699, %v3959
  %v5215 = vmax.f32 %v3702, %v3962
  %v5216 = vmax.f32 %v3705, %v3965
  %v5217 = vmax.f32 %v3708, %v3968
  %v5218 = vmax.f32 %v3711, %v3971
  %v5219 = vmax.f32 %v3714, %v3974
  %v5220 = vmax.f32 %v3717, %v3977
  %v5221 = vmax.f32 %v3720, %v3980
  %v5222 = vmax.f32 %v3723, %v3983
  %v5223 = vmax.f32 %v3726, %v3986
  %v5224 = vmax.f32 %v3729, %v3989
  %v5225 = vmax.f32 %v3732, %v3992
  %v5226 = vmax.f32 %v3735, %v3995
  %v5227 = vmax.f32 %v3738, %v3998
  %v5228 = vmax.f32 %v3741, %v4001
  %v5229 = vmax.f32 %v3744, %v4004
  %v5230 = vmax.f32 %v3747, %v4007
  %v5231 = vmax.f32 %v3750, %v4010
  %v5232 = vmax.f32 %v3753, %v4013
  %v5233 = vmax.f32 %v3756, %v4016
  %v5234 = vmax.f32 %v3759, %v4019
  %v5235 = vmax.f32 %v3762, %v4022
  %v5236 = vmax.f32 %v3765, %v4025
  %v5237 = vmax.f32 %v3768, %v4028
  %v5238 = vmax.f32 %v3771, %v4031
  %v5239 = vmax.f32 %v3774, %v4034
  %v5240 = vmax.f32 %v3777, %v4037
  %v5241 = vmax.f32 %v3780, %v4040
  %v5242 = vmax.f32 %v4063, %v4323
  %v5243 = vmax.f32 %v4066, %v4326
  %v5244 = vmax.f32 %v4069, %v4329
  %v5245 = vmax.f32 %v4072, %v4332
  %v5246 = vmax.f32 %v4075, %v4335
  %v5247 = vmax.f32 %v4078, %v4338
  %v5248 = vmax.f32 %v4081, %v4341
  %v5249 = vmax.f32 %v4084, %v4344
  %v5250 = vmax.f32 %v4087, %v4347
  %v5251 = vmax.f32 %v4090, %v4350
  %v5252 = vmax.f32 %v4093, %v4353
  %v5253 = vmax.f32 %v4096, %v4356
  %v5254 = vmax.f32 %v4099, %v4359
  %v5255 = vmax.f32 %v4102, %v4362
  %v5256 = vmax.f32 %v4105, %v4365
  %v5257 = vmax.f32 %v4108, %v4368
  %v5258 = vmax.f32 %v4111, %v4371
  %v5259 = vmax.f32 %v4114, %v4374
  %v5260 = vmax.f32 %v4117, %v4377
  %v5261 = vmax.f32 %v4120, %v4380
  %v5262 = vmax.f32 %v4123, %v4383
  %v5263 = vmax.f32 %v4126, %v4386
  %v5264 = vmax.f32 %v4129, %v4389
  %v5265 = vmax.f32 %v4132, %v4392
  %v5266 = vmax.f32 %v4135, %v4395
  %v5267 = vmax.f32 %v4138, %v4398
  %v5268 = vmax.f32 %v4141, %v4401
  %v5269 = vmax.f32 %v4144, %v4404
  %v5270 = vmax.f32 %v4147, %v4407
  %v5271 = vmax.f32 %v4150, %v4410
  %v5272 = vmax.f32 %v4153, %v4413
  %v5273 = vmax.f32 %v4156, %v4416
  %v5274 = vmax.f32 %v4159, %v4419
  %v5275 = vmax.f32 %v4162, %v4422
  %v5276 = vmax.f32 %v4165, %v4425
  %v5277 = vmax.f32 %v4168, %v4428
  %v5278 = vmax.f32 %v4171, %v4431
  %v5279 = vmax.f32 %v4174, %v4434
  %v5280 = vmax.f32 %v4177, %v4437
  %v5281 = vmax.f32 %v4180, %v4440
  %v5282 = vmax.f32 %v4183, %v4443
  %v5283 = vmax.f32 %v4186, %v4446
  %v5284 = vmax.f32 %v4189, %v4449
  %v5285 = vmax.f32 %v4192, %v4452
  %v5286 = vmax.f32 %v4195, %v4455
  %v5287 = vmax.f32 %v4198, %v4458
  %v5288 = vmax.f32 %v4201, %v4461
  %v5289 = vmax.f32 %v4204, %v4464
  %v5290 = vmax.f32 %v4207, %v4467
  %v5291 = vmax.f32 %v4210, %v4470
  %v5292 = vmax.f32 %v4213, %v4473
  %v5293 = vmax.f32 %v4216, %v4476
  %v5294 = vmax.f32 %v4219, %v4479
  %v5295 = vmax.f32 %v4222, %v4482
  %v5296 = vmax.f32 %v4225, %v4485
  %v5297 = vmax.f32 %v4228, %v4488
  %v5298 = vmax.f32 %v4231, %v4491
  %v5299 = vmax.f32 %v4234, %v4494
  %v5300 = vmax.f32 %v4237, %v4497
  %v5301 = vmax.f32 %v4240, %v4500
  %v5302 = vmax.f32 %v4243, %v4503
  %v5303 = vmax.f32 %v4246, %v4506
  %v5304 = vmax.f32 %v4249, %v4509
  %v5305 = vmax.f32 %v4252, %v4512
  %v5306 = vmax.f32 %v4255, %v4515
  %v5307 = vmax.f32 %v4258, %v4518
  %v5308 = vmax.f32 %v4261, %v4521
  %v5309 = vmax.f32 %v4264, %v4524
  %v5310 = vmax.f32 %v4267, %v4527
  %v5311 = vmax.f32 %v4270, %v4530
  %v5312 = vmax.f32 %v4273, %v4533
  %v5313 = vmax.f32 %v4276, %v4536
  %v5314 = vmax.f32 %v4279, %v4539
  %v5315 = vmax.f32 %v4282, %v4542
  %v5316 = vmax.f32 %v4285, %v4545
  %v5317 = vmax.f32 %v4288, %v4548
  %v5318 = vmax.f32 %v4291, %v4551
  %v5319 = vmax.f32 %v4294, %v4554
  %v5320 = vmax.f32 %v4297, %v4557
  %v5321 = vmax.f32 %v4300, %v4560
  %v5322 = vmax.f32 %v4583, %v4843
  %v5323 = vmax.f32 %v4586, %v4846
  %v5324 = vmax.f32 %v4589, %v4849
  %v5325 = vmax.f32 %v4592, %v4852
  %v5326 = vmax.f32 %v4595, %v4855
  %v5327 = vmax.f32 %v4598, %v4858
  %v5328 = vmax.f32 %v4601, %v4861
  %v5329 = vmax.f32 %v4604, %v4864
  %v5330 = vmax.f32 %v4607, %v4867
  %v5331 = vmax.f32 %v4610, %v4870
  %v5332 = vmax.f32 %v4613, %v4873
  %v5333 = vmax.f32 %v4616, %v4876
  %v5334 = vmax.f32 %v4619, %v4879
  %v5335 = vmax.f32 %v4622, %v4882
  %v5336 = vmax.f32 %v4625, %v4885
  %v5337 = vmax.f32 %v4628, %v4888
  %v5338 = vmax.f32 %v4631, %v4891
  %v5339 = vmax.f32 %v4634, %v4894
  %v5340 = vmax.f32 %v4637, %v4897
  %v5341 = vmax.f32 %v4640, %v4900
  %v5342 = vmax.f32 %v4643, %v4903
  %v5343 = vmax.f32 %v4646, %v4906
  %v5344 = vmax.f32 %v4649, %v4909
  %v5345 = vmax.f32 %v4652, %v4912
  %v5346 = vmax.f32 %v4655, %v4915
  %v5347 = vmax.f32 %v4658, %v4918
  %v5348 = vmax.f32 %v4661, %v4921
  %v5349 = vmax.f32 %v4664, %v4924
  %v5350 = vmax.f32 %v4667, %v4927
  %v5351 = vmax.f32 %v4670, %v4930
  %v5352 = vmax.f32 %v4673, %v4933
  %v5353 = vmax.f32 %v4676, %v4936
  %v5354 = vmax.f32 %v4679, %v4939
  %v5355 = vmax.f32 %v4682, %v4942
  %v5356 = vmax.f32 %v4685, %v4945
  %v5357 = vmax.f32 %v4688, %v4948
  %v5358 = vmax.f32 %v4691, %v4951
  %v5359 = vmax.f32 %v4694, %v4954
  %v5360 = vmax.f32 %v4697, %v4957
  %v5361 = vmax.f32 %v4700, %v4960
  %v5362 = vmax.f32 %v4703, %v4963
  %v5363 = vmax.f32 %v4706, %v4966
  %v5364 = vmax.f32 %v4709, %v4969
  %v5365 = vmax.f32 %v4712, %v4972
  %v5366 = vmax.f32 %v4715, %v4975
  %v5367 = vmax.f32 %v4718, %v4978
  %v5368 = vmax.f32 %v4721, %v4981
  %v5369 = vmax.f32 %v4724, %v4984
  %v5370 = vmax.f32 %v4727, %v4987
  %v5371 = vmax.f32 %v4730, %v4990
  %v5372 = vmax.f32 %v4733, %v4993
  %v5373 = vmax.f32 %v4736, %v4996
  %v5374 = vmax.f32 %v4739, %v4999
  %v5375 = vmax.f32 %v4742, %v5002
  %v5376 = vmax.f32 %v4745, %v5005
  %v5377 = vmax.f32 %v4748, %v5008
  %v5378 = vmax.f32 %v4751, %v5011
  %v5379 = vmax.f32 %v4754, %v5014
  %v5380 = vmax.f32 %v4757, %v5017
  %v5381 = vmax.f32 %v4760, %v5020
  %v5382 = vmax.f32 %v4763, %v5023
  %v5383 = vmax.f32 %v4766, %v5026
  %v5384 = vmax.f32 %v4769, %v5029
  %v5385 = vmax.f32 %v4772, %v5032
  %v5386 = vmax.f32 %v4775, %v5035
  %v5387 = vmax.f32 %v4778, %v5038
  %v5388 = vmax.f32 %v4781, %v5041
  %v5389 = vmax.f32 %v4784, %v5044
  %v5390 = vmax.f32 %v4787, %v5047
  %v5391 = vmax.f32 %v4790, %v5050
  %v5392 = vmax.f32 %v4793, %v5053
  %v5393 = vmax.f32 %v4796, %v5056
  %v5394 = vmax.f32 %v4799, %v5059
  %v5395 = vmax.f32 %v4802, %v5062
  %v5396 = vmax.f32 %v4805, %v5065
  %v5397 = vmax.f32 %v4808, %v5068
  %v5398 = vmax.f32 %v4811, %v5071
  %v5399 = vmax.f32 %v4814, %v5074
  %v5400 = vmax.f32 %v4817, %v5077
  %v5401 = vmax.f32 %v4820, %v5080
  %v5402 = vmax.f32 %v5082, %v5162
  %v5403 = vmax.f32 %v5083, %v5163
  %v5404 = vmax.f32 %v5084, %v5164
  %v5405 = vmax.f32 %v5085, %v5165
  %v5406 = vmax.f32 %v5086, %v5166
  %v5407 = vmax.f32 %v5087, %v5167
  %v5408 = vmax.f32 %v5088, %v5168
  %v5409 = vmax.f32 %v5089, %v5169
  %v5410 = vmax.f32 %v5090, %v5170
  %v5411 = vmax.f32 %v5091, %v5171
  %v5412 = vmax.f32 %v5092, %v5172
  %v5413 = vmax.f32 %v5093, %v5173
  %v5414 = vmax.f32 %v5094, %v5174
  %v5415 = vmax.f32 %v5095, %v5175
  %v5416 = vmax.f32 %v5096, %v5176
  %v5417 = vmax.f32 %v5097, %v5177
  %v5418 = vmax.f32 %v5098, %v5178
  %v5419 = vmax.f32 %v5099, %v5179
  %v5420 = vmax.f32 %v5100, %v5180
  %v5421 = vmax.f32 %v5101, %v5181
  %v5422 = vmax.f32 %v5102, %v5182
  %v5423 = vmax.f32 %v5103, %v5183
  %v5424 = vmax.f32 %v5104, %v5184
  %v5425 = vmax.f32 %v5105, %v5185
  %v5426 = vmax.f32 %v5106, %v5186
  %v5427 = vmax.f32 %v5107, %v5187
  %v5428 = vmax.f32 %v5108, %v5188
  %v5429 = vmax.f32 %v5109, %v5189
  %v5430 = vmax.f32 %v5110, %v5190
  %v5431 = vmax.f32 %v5111, %v5191
  %v5432 = vmax.f32 %v5112, %v5192
  %v5433 = vmax.f32 %v5113, %v5193
  %v5434 = vmax.f32 %v5114, %v5194
  %v5435 = vmax.f32 %v5115, %v5195
  %v5436 = vmax.f32 %v5116, %v5196
  %v5437 = vmax.f32 %v5117, %v5197
  %v5438 = vmax.f32 %v5118, %v5198
  %v5439 = vmax.f32 %v5119, %v5199
  %v5440 = vmax.f32 %v5120, %v5200
  %v5441 = vmax.f32 %v5121, %v5201
  %v5442 = vmax.f32 %v5122, %v5202
  %v5443 = vmax.f32 %v5123, %v5203
  %v5444 = vmax.f32 %v5124, %v5204
  %v5445 = vmax.f32 %v5125, %v5205
  %v5446 = vmax.f32 %v5126, %v5206
  %v5447 = vmax.f32 %v5127, %v5207
  %v5448 = vmax.f32 %v5128, %v5208
  %v5449 = vmax.f32 %v5129, %v5209
  %v5450 = vmax.f32 %v5130, %v5210
  %v5451 = vmax.f32 %v5131, %v5211
  %v5452 = vmax.f32 %v5132, %v5212
  %v5453 = vmax.f32 %v5133, %v5213
  %v5454 = vmax.f32 %v5134, %v5214
  %v5455 = vmax.f32 %v5135, %v5215
  %v5456 = vmax.f32 %v5136, %v5216
  %v5457 = vmax.f32 %v5137, %v5217
  %v5458 = vmax.f32 %v5138, %v5218
  %v5459 = vmax.f32 %v5139, %v5219
  %v5460 = vmax.f32 %v5140, %v5220
  %v5461 = vmax.f32 %v5141, %v5221
  %v5462 = vmax.f32 %v5142, %v5222
  %v5463 = vmax.f32 %v5143, %v5223
  %v5464 = vmax.f32 %v5144, %v5224
  %v5465 = vmax.f32 %v5145, %v5225
  %v5466 = vmax.f32 %v5146, %v5226
  %v5467 = vmax.f32 %v5147, %v5227
  %v5468 = vmax.f32 %v5148, %v5228
  %v5469 = vmax.f32 %v5149, %v5229
  %v5470 = vmax.f32 %v5150, %v5230
  %v5471 = vmax.f32 %v5151, %v5231
  %v5472 = vmax.f32 %v5152, %v5232
  %v5473 = vmax.f32 %v5153, %v5233
  %v5474 = vmax.f32 %v5154, %v5234
  %v5475 = vmax.f32 %v5155, %v5235
  %v5476 = vmax.f32 %v5156, %v5236
  %v5477 = vmax.f32 %v5157, %v5237
  %v5478 = vmax.f32 %v5158, %v5238
  %v5479 = vmax.f32 %v5159, %v5239
  %v5480 = vmax.f32 %v5160, %v5240
  %v5481 = vmax.f32 %v5161, %v5241
  %v5482 = vmax.f32 %v5242, %v5322
  %v5483 = vmax.f32 %v5243, %v5323
  %v5484 = vmax.f32 %v5244, %v5324
  %v5485 = vmax.f32 %v5245, %v5325
  %v5486 = vmax.f32 %v5246, %v5326
  %v5487 = vmax.f32 %v5247, %v5327
  %v5488 = vmax.f32 %v5248, %v5328
  %v5489 = vmax.f32 %v5249, %v5329
  %v5490 = vmax.f32 %v5250, %v5330
  %v5491 = vmax.f32 %v5251, %v5331
  %v5492 = vmax.f32 %v5252, %v5332
  %v5493 = vmax.f32 %v5253, %v5333
  %v5494 = vmax.f32 %v5254, %v5334
  %v5495 = vmax.f32 %v5255, %v5335
  %v5496 = vmax.f32 %v5256, %v5336
  %v5497 = vmax.f32 %v5257, %v5337
  %v5498 = vmax.f32 %v5258, %v5338
  %v5499 = vmax.f32 %v5259, %v5339
  %v5500 = vmax.f32 %v5260, %v5340
  %v5501 = vmax.f32 %v5261, %v5341
  %v5502 = vmax.f32 %v5262, %v5342
  %v5503 = vmax.f32 %v5263, %v5343
  %v5504 = vmax.f32 %v5264, %v5344
  %v5505 = vmax.f32 %v5265, %v5345
  %v5506 = vmax.f32 %v5266, %v5346
  %v5507 = vmax.f32 %v5267, %v5347
  %v5508 = vmax.f32 %v5268, %v5348
  %v5509 = vmax.f32 %v5269, %v5349
  %v5510 = vmax.f32 %v5270, %v5350
  %v5511 = vmax.f32 %v5271, %v5351
  %v5512 = vmax.f32 %v5272, %v5352
  %v5513 = vmax.f32 %v5273, %v5353
  %v5514 = vmax.f32 %v5274, %v5354
  %v5515 = vmax.f32 %v5275, %v5355
  %v5516 = vmax.f32 %v5276, %v5356
  %v5517 = vmax.f32 %v5277, %v5357
  %v5518 = vmax.f32 %v5278, %v5358
  %v5519 = vmax.f32 %v5279, %v5359
  %v5520 = vmax.f32 %v5280, %v5360
  %v5521 = vmax.f32 %v5281, %v5361
  %v5522 = vmax.f32 %v5282, %v5362
  %v5523 = vmax.f32 %v5283, %v5363
  %v5524 = vmax.f32 %v5284, %v5364
  %v5525 = vmax.f32 %v5285, %v5365
  %v5526 = vmax.f32 %v5286, %v5366
  %v5527 = vmax.f32 %v5287, %v5367
  %v5528 = vmax.f32 %v5288, %v5368
  %v5529 = vmax.f32 %v5289, %v5369
  %v5530 = vmax.f32 %v5290, %v5370
  %v5531 = vmax.f32 %v5291, %v5371
  %v5532 = vmax.f32 %v5292, %v5372
  %v5533 = vmax.f32 %v5293, %v5373
  %v5534 = vmax.f32 %v5294, %v5374
  %v5535 = vmax.f32 %v5295, %v5375
  %v5536 = vmax.f32 %v5296, %v5376
  %v5537 = vmax.f32 %v5297, %v5377
  %v5538 = vmax.f32 %v5298, %v5378
  %v5539 = vmax.f32 %v5299, %v5379
  %v5540 = vmax.f32 %v5300, %v5380
  %v5541 = vmax.f32 %v5301, %v5381
  %v5542 = vmax.f32 %v5302, %v5382
  %v5543 = vmax.f32 %v5303, %v5383
  %v5544 = vmax.f32 %v5304, %v5384
  %v5545 = vmax.f32 %v5305, %v5385
  %v5546 = vmax.f32 %v5306, %v5386
  %v5547 = vmax.f32 %v5307, %v5387
  %v5548 = vmax.f32 %v5308, %v5388
  %v5549 = vmax.f32 %v5309, %v5389
  %v5550 = vmax.f32 %v5310, %v5390
  %v5551 = vmax.f32 %v5311, %v5391
  %v5552 = vmax.f32 %v5312, %v5392
  %v5553 = vmax.f32 %v5313, %v5393
  %v5554 = vmax.f32 %v5314, %v5394
  %v5555 = vmax.f32 %v5315, %v5395
  %v5556 = vmax.f32 %v5316, %v5396
  %v5557 = vmax.f32 %v5317, %v5397
  %v5558 = vmax.f32 %v5318, %v5398
  %v5559 = vmax.f32 %v5319, %v5399
  %v5560 = vmax.f32 %v5320, %v5400
  %v5561 = vmax.f32 %v5321, %v5401
  %v5562 = vmax.f32 %v5402, %v5482
  %v5563 = vmax.f32 %v5403, %v5483
  %v5564 = vmax.f32 %v5404, %v5484
  %v5565 = vmax.f32 %v5405, %v5485
  %v5566 = vmax.f32 %v5406, %v5486
  %v5567 = vmax.f32 %v5407, %v5487
  %v5568 = vmax.f32 %v5408, %v5488
  %v5569 = vmax.f32 %v5409, %v5489
  %v5570 = vmax.f32 %v5410, %v5490
  %v5571 = vmax.f32 %v5411, %v5491
  %v5572 = vmax.f32 %v5412, %v5492
  %v5573 = vmax.f32 %v5413, %v5493
  %v5574 = vmax.f32 %v5414, %v5494
  %v5575 = vmax.f32 %v5415, %v5495
  %v5576 = vmax.f32 %v5416, %v5496
  %v5577 = vmax.f32 %v5417, %v5497
  %v5578 = vmax.f32 %v5418, %v5498
  %v5579 = vmax.f32 %v5419, %v5499
  %v5580 = vmax.f32 %v5420, %v5500
  %v5581 = vmax.f32 %v5421, %v5501
  %v5582 = vmax.f32 %v5422, %v5502
  %v5583 = vmax.f32 %v5423, %v5503
  %v5584 = vmax.f32 %v5424, %v5504
  %v5585 = vmax.f32 %v5425, %v5505
  %v5586 = vmax.f32 %v5426, %v5506
  %v5587 = vmax.f32 %v5427, %v5507
  %v5588 = vmax.f32 %v5428, %v5508
  %v5589 = vmax.f32 %v5429, %v5509
  %v5590 = vmax.f32 %v5430, %v5510
  %v5591 = vmax.f32 %v5431, %v5511
  %v5592 = vmax.f32 %v5432, %v5512
  %v5593 = vmax.f32 %v5433, %v5513
  %v5594 = vmax.f32 %v5434, %v5514
  %v5595 = vmax.f32 %v5435, %v5515
  %v5596 = vmax.f32 %v5436, %v5516
  %v5597 = vmax.f32 %v5437, %v5517
  %v5598 = vmax.f32 %v5438, %v5518
  %v5599 = vmax.f32 %v5439, %v5519
  %v5600 = vmax.f32 %v5440, %v5520
  %v5601 = vmax.f32 %v5441, %v5521
  %v5602 = vmax.f32 %v5442, %v5522
  %v5603 = vmax.f32 %v5443, %v5523
  %v5604 = vmax.f32 %v5444, %v5524
  %v5605 = vmax.f32 %v5445, %v5525
  %v5606 = vmax.f32 %v5446, %v5526
  %v5607 = vmax.f32 %v5447, %v5527
  %v5608 = vmax.f32 %v5448, %v5528
  %v5609 = vmax.f32 %v5449, %v5529
  %v5610 = vmax.f32 %v5450, %v5530
  %v5611 = vmax.f32 %v5451, %v5531
  %v5612 = vmax.f32 %v5452, %v5532
  %v5613 = vmax.f32 %v5453, %v5533
  %v5614 = vmax.f32 %v5454, %v5534
  %v5615 = vmax.f32 %v5455, %v5535
  %v5616 = vmax.f32 %v5456, %v5536
  %v5617 = vmax.f32 %v5457, %v5537
  %v5618 = vmax.f32 %v5458, %v5538
  %v5619 = vmax.f32 %v5459, %v5539
  %v5620 = vmax.f32 %v5460, %v5540
  %v5621 = vmax.f32 %v5461, %v5541
  %v5622 = vmax.f32 %v5462, %v5542
  %v5623 = vmax.f32 %v5463, %v5543
  %v5624 = vmax.f32 %v5464, %v5544
  %v5625 = vmax.f32 %v5465, %v5545
  %v5626 = vmax.f32 %v5466, %v5546
  %v5627 = vmax.f32 %v5467, %v5547
  %v5628 = vmax.f32 %v5468, %v5548
  %v5629 = vmax.f32 %v5469, %v5549
  %v5630 = vmax.f32 %v5470, %v5550
  %v5631 = vmax.f32 %v5471, %v5551
  %v5632 = vmax.f32 %v5472, %v5552
  %v5633 = vmax.f32 %v5473, %v5553
  %v5634 = vmax.f32 %v5474, %v5554
  %v5635 = vmax.f32 %v5475, %v5555
  %v5636 = vmax.f32 %v5476, %v5556
  %v5637 = vmax.f32 %v5477, %v5557
  %v5638 = vmax.f32 %v5478, %v5558
  %v5639 = vmax.f32 %v5479, %v5559
  %v5640 = vmax.f32 %v5480, %v5560
  %v5641 = vmax.f32 %v5481, %v5561
  %v5642 = vmax.f32 %v2924, %v5562
  %v5643 = vmax.f32 %v2925, %v5563
  %v5644 = vmax.f32 %v2926, %v5564
  %v5645 = vmax.f32 %v2927, %v5565
  %v5646 = vmax.f32 %v2928, %v5566
  %v5647 = vmax.f32 %v2929, %v5567
  %v5648 = vmax.f32 %v2930, %v5568
  %v5649 = vmax.f32 %v2931, %v5569
  %v5650 = vmax.f32 %v2932, %v5570
  %v5651 = vmax.f32 %v2933, %v5571
  %v5652 = vmax.f32 %v2934, %v5572
  %v5653 = vmax.f32 %v2935, %v5573
  %v5654 = vmax.f32 %v2936, %v5574
  %v5655 = vmax.f32 %v2937, %v5575
  %v5656 = vmax.f32 %v2938, %v5576
  %v5657 = vmax.f32 %v2939, %v5577
  %v5658 = vmax.f32 %v2940, %v5578
  %v5659 = vmax.f32 %v2941, %v5579
  %v5660 = vmax.f32 %v2942, %v5580
  %v5661 = vmax.f32 %v2943, %v5581
  %v5662 = vmax.f32 %v2944, %v5582
  %v5663 = vmax.f32 %v2945, %v5583
  %v5664 = vmax.f32 %v2946, %v5584
  %v5665 = vmax.f32 %v2947, %v5585
  %v5666 = vmax.f32 %v2948, %v5586
  %v5667 = vmax.f32 %v2949, %v5587
  %v5668 = vmax.f32 %v2950, %v5588
  %v5669 = vmax.f32 %v2951, %v5589
  %v5670 = vmax.f32 %v2952, %v5590
  %v5671 = vmax.f32 %v2953, %v5591
  %v5672 = vmax.f32 %v2954, %v5592
  %v5673 = vmax.f32 %v2955, %v5593
  %v5674 = vmax.f32 %v2956, %v5594
  %v5675 = vmax.f32 %v2957, %v5595
  %v5676 = vmax.f32 %v2958, %v5596
  %v5677 = vmax.f32 %v2959, %v5597
  %v5678 = vmax.f32 %v2960, %v5598
  %v5679 = vmax.f32 %v2961, %v5599
  %v5680 = vmax.f32 %v2962, %v5600
  %v5681 = vmax.f32 %v2963, %v5601
  %v5682 = vmax.f32 %v2964, %v5602
  %v5683 = vmax.f32 %v2965, %v5603
  %v5684 = vmax.f32 %v2966, %v5604
  %v5685 = vmax.f32 %v2967, %v5605
  %v5686 = vmax.f32 %v2968, %v5606
  %v5687 = vmax.f32 %v2969, %v5607
  %v5688 = vmax.f32 %v2970, %v5608
  %v5689 = vmax.f32 %v2971, %v5609
  %v5690 = vmax.f32 %v2972, %v5610
  %v5691 = vmax.f32 %v2973, %v5611
  %v5692 = vmax.f32 %v2974, %v5612
  %v5693 = vmax.f32 %v2975, %v5613
  %v5694 = vmax.f32 %v2976, %v5614
  %v5695 = vmax.f32 %v2977, %v5615
  %v5696 = vmax.f32 %v2978, %v5616
  %v5697 = vmax.f32 %v2979, %v5617
  %v5698 = vmax.f32 %v2980, %v5618
  %v5699 = vmax.f32 %v2981, %v5619
  %v5700 = vmax.f32 %v2982, %v5620
  %v5701 = vmax.f32 %v2983, %v5621
  %v5702 = vmax.f32 %v2984, %v5622
  %v5703 = vmax.f32 %v2985, %v5623
  %v5704 = vmax.f32 %v2986, %v5624
  %v5705 = vmax.f32 %v2987, %v5625
  %v5706 = vmax.f32 %v2988, %v5626
  %v5707 = vmax.f32 %v2989, %v5627
  %v5708 = vmax.f32 %v2990, %v5628
  %v5709 = vmax.f32 %v2991, %v5629
  %v5710 = vmax.f32 %v2992, %v5630
  %v5711 = vmax.f32 %v2993, %v5631
  %v5712 = vmax.f32 %v2994, %v5632
  %v5713 = vmax.f32 %v2995, %v5633
  %v5714 = vmax.f32 %v2996, %v5634
  %v5715 = vmax.f32 %v2997, %v5635
  %v5716 = vmax.f32 %v2998, %v5636
  %v5717 = vmax.f32 %v2999, %v5637
  %v5718 = vmax.f32 %v3000, %v5638
  %v5719 = vmax.f32 %v3001, %v5639
  %v5720 = vmax.f32 %v3002, %v5640
  %v5721 = vmax.f32 %v3003, %v5641
  %5722 = vmatpush.msra.mxu0 0.0
  %5723 = vmatpush.msra.mxu0 0.0
  %5724 = vmatpush.msra.mxu0 0.0
  %5725 = vmatpush.msra.mxu0 0.0
  %5726 = vmatpush.msra.mxu0 0.0
  %5727 = vmatpush.msra.mxu0 0.0
  %5728 = vmatpush.msra.mxu0 0.0
  %5729 = vmatpush.msra.mxu0 0.0
  %5730 = vmatpush.msra.mxu0 0.0
  %5731 = vmatpush.msra.mxu0 0.0
  %5732 = vmatpush.msra.mxu0 0.0
  %5733 = vmatpush.msra.mxu0 0.0
  %5734 = vmatpush.msra.mxu0 0.0
  %5735 = vmatpush.msra.mxu0 0.0
  %5736 = vmatpush.msra.mxu0 0.0
  %5737 = vmatpush.msra.mxu0 %v27
  %5738 = vmatmul.f32.gmra.mxu0 %v112
  %v5739 = vpop.f32.mrf.mxu0
  %v5740 = vadd.f32 0.0, %v5739
  %5741 = vmatmul.f32.gmra.mxu0 %v115
  %v5742 = vpop.f32.mrf.mxu0
  %v5743 = vadd.f32 0.0, %v5742
  %5744 = vmatmul.f32.gmra.mxu0 %v118
  %v5745 = vpop.f32.mrf.mxu0
  %v5746 = vadd.f32 0.0, %v5745
  %5747 = vmatmul.f32.gmra.mxu0 %v121
  %v5748 = vpop.f32.mrf.mxu0
  %v5749 = vadd.f32 0.0, %v5748
  %5750 = vmatmul.f32.gmra.mxu0 %v124
  %v5751 = vpop.f32.mrf.mxu0
  %v5752 = vadd.f32 0.0, %v5751
  %5753 = vmatmul.f32.gmra.mxu0 %v127
  %v5754 = vpop.f32.mrf.mxu0
  %v5755 = vadd.f32 0.0, %v5754
  %5756 = vmatmul.f32.gmra.mxu0 %v130
  %v5757 = vpop.f32.mrf.mxu0
  %v5758 = vadd.f32 0.0, %v5757
  %5759 = vmatmul.f32.gmra.mxu0 %v133
  %v5760 = vpop.f32.mrf.mxu0
  %v5761 = vadd.f32 0.0, %v5760
  %5762 = vmatmul.f32.gmra.mxu0 %v136
  %v5763 = vpop.f32.mrf.mxu0
  %v5764 = vadd.f32 0.0, %v5763
  %5765 = vmatmul.f32.gmra.mxu0 %v139
  %v5766 = vpop.f32.mrf.mxu0
  %v5767 = vadd.f32 0.0, %v5766
  %5768 = vmatmul.f32.gmra.mxu0 %v142
  %v5769 = vpop.f32.mrf.mxu0
  %v5770 = vadd.f32 0.0, %v5769
  %5771 = vmatmul.f32.gmra.mxu0 %v145
  %v5772 = vpop.f32.mrf.mxu0
  %v5773 = vadd.f32 0.0, %v5772
  %5774 = vmatmul.f32.gmra.mxu0 %v148
  %v5775 = vpop.f32.mrf.mxu0
  %v5776 = vadd.f32 0.0, %v5775
  %5777 = vmatmul.f32.gmra.mxu0 %v151
  %v5778 = vpop.f32.mrf.mxu0
  %v5779 = vadd.f32 0.0, %v5778
  %5780 = vmatmul.f32.gmra.mxu0 %v154
  %v5781 = vpop.f32.mrf.mxu0
  %v5782 = vadd.f32 0.0, %v5781
  %5783 = vmatmul.f32.gmra.mxu0 %v157
  %v5784 = vpop.f32.mrf.mxu0
  %v5785 = vadd.f32 0.0, %v5784
  %5786 = vmatmul.f32.gmra.mxu0 %v160
  %v5787 = vpop.f32.mrf.mxu0
  %v5788 = vadd.f32 0.0, %v5787
  %5789 = vmatmul.f32.gmra.mxu0 %v163
  %v5790 = vpop.f32.mrf.mxu0
  %v5791 = vadd.f32 0.0, %v5790
  %5792 = vmatmul.f32.gmra.mxu0 %v166
  %v5793 = vpop.f32.mrf.mxu0
  %v5794 = vadd.f32 0.0, %v5793
  %5795 = vmatmul.f32.gmra.mxu0 %v169
  %v5796 = vpop.f32.mrf.mxu0
  %v5797 = vadd.f32 0.0, %v5796
  %5798 = vmatmul.f32.gmra.mxu0 %v172
  %v5799 = vpop.f32.mrf.mxu0
  %v5800 = vadd.f32 0.0, %v5799
  %5801 = vmatmul.f32.gmra.mxu0 %v175
  %v5802 = vpop.f32.mrf.mxu0
  %v5803 = vadd.f32 0.0, %v5802
  %5804 = vmatmul.f32.gmra.mxu0 %v178
  %v5805 = vpop.f32.mrf.mxu0
  %v5806 = vadd.f32 0.0, %v5805
  %5807 = vmatmul.f32.gmra.mxu0 %v181
  %v5808 = vpop.f32.mrf.mxu0
  %v5809 = vadd.f32 0.0, %v5808
  %5810 = vmatmul.f32.gmra.mxu0 %v184
  %v5811 = vpop.f32.mrf.mxu0
  %v5812 = vadd.f32 0.0, %v5811
  %5813 = vmatmul.f32.gmra.mxu0 %v187
  %v5814 = vpop.f32.mrf.mxu0
  %v5815 = vadd.f32 0.0, %v5814
  %5816 = vmatmul.f32.gmra.mxu0 %v190
  %v5817 = vpop.f32.mrf.mxu0
  %v5818 = vadd.f32 0.0, %v5817
  %5819 = vmatmul.f32.gmra.mxu0 %v193
  %v5820 = vpop.f32.mrf.mxu0
  %v5821 = vadd.f32 0.0, %v5820
  %5822 = vmatmul.f32.gmra.mxu0 %v196
  %v5823 = vpop.f32.mrf.mxu0
  %v5824 = vadd.f32 0.0, %v5823
  %5825 = vmatmul.f32.gmra.mxu0 %v199
  %v5826 = vpop.f32.mrf.mxu0
  %v5827 = vadd.f32 0.0, %v5826
  %5828 = vmatmul.f32.gmra.mxu0 %v202
  %v5829 = vpop.f32.mrf.mxu0
  %v5830 = vadd.f32 0.0, %v5829
  %5831 = vmatmul.f32.gmra.mxu0 %v205
  %v5832 = vpop.f32.mrf.mxu0
  %v5833 = vadd.f32 0.0, %v5832
  %5834 = vmatmul.f32.gmra.mxu0 %v208
  %v5835 = vpop.f32.mrf.mxu0
  %v5836 = vadd.f32 0.0, %v5835
  %5837 = vmatmul.f32.gmra.mxu0 %v211
  %v5838 = vpop.f32.mrf.mxu0
  %v5839 = vadd.f32 0.0, %v5838
  %5840 = vmatmul.f32.gmra.mxu0 %v214
  %v5841 = vpop.f32.mrf.mxu0
  %v5842 = vadd.f32 0.0, %v5841
  %5843 = vmatmul.f32.gmra.mxu0 %v217
  %v5844 = vpop.f32.mrf.mxu0
  %v5845 = vadd.f32 0.0, %v5844
  %5846 = vmatmul.f32.gmra.mxu0 %v220
  %v5847 = vpop.f32.mrf.mxu0
  %v5848 = vadd.f32 0.0, %v5847
  %5849 = vmatmul.f32.gmra.mxu0 %v223
  %v5850 = vpop.f32.mrf.mxu0
  %v5851 = vadd.f32 0.0, %v5850
  %5852 = vmatmul.f32.gmra.mxu0 %v226
  %v5853 = vpop.f32.mrf.mxu0
  %v5854 = vadd.f32 0.0, %v5853
  %5855 = vmatmul.f32.gmra.mxu0 %v229
  %v5856 = vpop.f32.mrf.mxu0
  %v5857 = vadd.f32 0.0, %v5856
  %5858 = vmatmul.f32.gmra.mxu0 %v232
  %v5859 = vpop.f32.mrf.mxu0
  %v5860 = vadd.f32 0.0, %v5859
  %5861 = vmatmul.f32.gmra.mxu0 %v235
  %v5862 = vpop.f32.mrf.mxu0
  %v5863 = vadd.f32 0.0, %v5862
  %5864 = vmatmul.f32.gmra.mxu0 %v238
  %v5865 = vpop.f32.mrf.mxu0
  %v5866 = vadd.f32 0.0, %v5865
  %5867 = vmatmul.f32.gmra.mxu0 %v241
  %v5868 = vpop.f32.mrf.mxu0
  %v5869 = vadd.f32 0.0, %v5868
  %5870 = vmatmul.f32.gmra.mxu0 %v244
  %v5871 = vpop.f32.mrf.mxu0
  %v5872 = vadd.f32 0.0, %v5871
  %5873 = vmatmul.f32.gmra.mxu0 %v247
  %v5874 = vpop.f32.mrf.mxu0
  %v5875 = vadd.f32 0.0, %v5874
  %5876 = vmatmul.f32.gmra.mxu0 %v250
  %v5877 = vpop.f32.mrf.mxu0
  %v5878 = vadd.f32 0.0, %v5877
  %5879 = vmatmul.f32.gmra.mxu0 %v253
  %v5880 = vpop.f32.mrf.mxu0
  %v5881 = vadd.f32 0.0, %v5880
  %5882 = vmatmul.f32.gmra.mxu0 %v256
  %v5883 = vpop.f32.mrf.mxu0
  %v5884 = vadd.f32 0.0, %v5883
  %5885 = vmatmul.f32.gmra.mxu0 %v259
  %v5886 = vpop.f32.mrf.mxu0
  %v5887 = vadd.f32 0.0, %v5886
  %5888 = vmatmul.f32.gmra.mxu0 %v262
  %v5889 = vpop.f32.mrf.mxu0
  %v5890 = vadd.f32 0.0, %v5889
  %5891 = vmatmul.f32.gmra.mxu0 %v265
  %v5892 = vpop.f32.mrf.mxu0
  %v5893 = vadd.f32 0.0, %v5892
  %5894 = vmatmul.f32.gmra.mxu0 %v268
  %v5895 = vpop.f32.mrf.mxu0
  %v5896 = vadd.f32 0.0, %v5895
  %5897 = vmatmul.f32.gmra.mxu0 %v271
  %v5898 = vpop.f32.mrf.mxu0
  %v5899 = vadd.f32 0.0, %v5898
  %5900 = vmatmul.f32.gmra.mxu0 %v274
  %v5901 = vpop.f32.mrf.mxu0
  %v5902 = vadd.f32 0.0, %v5901
  %5903 = vmatmul.f32.gmra.mxu0 %v277
  %v5904 = vpop.f32.mrf.mxu0
  %v5905 = vadd.f32 0.0, %v5904
  %5906 = vmatmul.f32.gmra.mxu0 %v280
  %v5907 = vpop.f32.mrf.mxu0
  %v5908 = vadd.f32 0.0, %v5907
  %5909 = vmatmul.f32.gmra.mxu0 %v283
  %v5910 = vpop.f32.mrf.mxu0
  %v5911 = vadd.f32 0.0, %v5910
  %5912 = vmatmul.f32.gmra.mxu0 %v286
  %v5913 = vpop.f32.mrf.mxu0
  %v5914 = vadd.f32 0.0, %v5913
  %5915 = vmatmul.f32.gmra.mxu0 %v289
  %v5916 = vpop.f32.mrf.mxu0
  %v5917 = vadd.f32 0.0, %v5916
  %5918 = vmatmul.f32.gmra.mxu0 %v292
  %v5919 = vpop.f32.mrf.mxu0
  %v5920 = vadd.f32 0.0, %v5919
  %5921 = vmatmul.f32.gmra.mxu0 %v295
  %v5922 = vpop.f32.mrf.mxu0
  %v5923 = vadd.f32 0.0, %v5922
  %5924 = vmatmul.f32.gmra.mxu0 %v298
  %v5925 = vpop.f32.mrf.mxu0
  %v5926 = vadd.f32 0.0, %v5925
  %5927 = vmatmul.f32.gmra.mxu0 %v301
  %v5928 = vpop.f32.mrf.mxu0
  %v5929 = vadd.f32 0.0, %v5928
  %5930 = vmatmul.f32.gmra.mxu0 %v304
  %v5931 = vpop.f32.mrf.mxu0
  %v5932 = vadd.f32 0.0, %v5931
  %5933 = vmatmul.f32.gmra.mxu0 %v307
  %v5934 = vpop.f32.mrf.mxu0
  %v5935 = vadd.f32 0.0, %v5934
  %5936 = vmatmul.f32.gmra.mxu0 %v310
  %v5937 = vpop.f32.mrf.mxu0
  %v5938 = vadd.f32 0.0, %v5937
  %5939 = vmatmul.f32.gmra.mxu0 %v313
  %v5940 = vpop.f32.mrf.mxu0
  %v5941 = vadd.f32 0.0, %v5940
  %5942 = vmatmul.f32.gmra.mxu0 %v316
  %v5943 = vpop.f32.mrf.mxu0
  %v5944 = vadd.f32 0.0, %v5943
  %5945 = vmatmul.f32.gmra.mxu0 %v319
  %v5946 = vpop.f32.mrf.mxu0
  %v5947 = vadd.f32 0.0, %v5946
  %5948 = vmatmul.f32.gmra.mxu0 %v322
  %v5949 = vpop.f32.mrf.mxu0
  %v5950 = vadd.f32 0.0, %v5949
  %5951 = vmatmul.f32.gmra.mxu0 %v325
  %v5952 = vpop.f32.mrf.mxu0
  %v5953 = vadd.f32 0.0, %v5952
  %5954 = vmatmul.f32.gmra.mxu0 %v328
  %v5955 = vpop.f32.mrf.mxu0
  %v5956 = vadd.f32 0.0, %v5955
  %5957 = vmatmul.f32.gmra.mxu0 %v331
  %v5958 = vpop.f32.mrf.mxu0
  %v5959 = vadd.f32 0.0, %v5958
  %5960 = vmatmul.f32.gmra.mxu0 %v334
  %v5961 = vpop.f32.mrf.mxu0
  %v5962 = vadd.f32 0.0, %v5961
  %5963 = vmatmul.f32.gmra.mxu0 %v337
  %v5964 = vpop.f32.mrf.mxu0
  %v5965 = vadd.f32 0.0, %v5964
  %5966 = vmatmul.f32.gmra.mxu0 %v340
  %v5967 = vpop.f32.mrf.mxu0
  %v5968 = vadd.f32 0.0, %v5967
  %5969 = vmatmul.f32.gmra.mxu0 %v343
  %v5970 = vpop.f32.mrf.mxu0
  %v5971 = vadd.f32 0.0, %v5970
  %5972 = vmatmul.f32.gmra.mxu0 %v346
  %v5973 = vpop.f32.mrf.mxu0
  %v5974 = vadd.f32 0.0, %v5973
  %5975 = vmatmul.f32.gmra.mxu0 %v349
  %v5976 = vpop.f32.mrf.mxu0
  %v5977 = vadd.f32 0.0, %v5976
  %5978 = vdwg.mxu0
  %v5980 = vrot.slane %v28, 1
  %v5981 = vsel %vm610, %v3262, %v5980
  %5983 = vmatpush.msra.mxu0 0.0
  %5984 = vmatpush.msra.mxu0 0.0
  %5985 = vmatpush.msra.mxu0 0.0
  %5986 = vmatpush.msra.mxu0 0.0
  %5987 = vmatpush.msra.mxu0 0.0
  %5988 = vmatpush.msra.mxu0 0.0
  %5989 = vmatpush.msra.mxu0 0.0
  %5990 = vmatpush.msra.mxu0 0.0
  %5991 = vmatpush.msra.mxu0 0.0
  %5992 = vmatpush.msra.mxu0 0.0
  %5993 = vmatpush.msra.mxu0 0.0
  %5994 = vmatpush.msra.mxu0 0.0
  %5995 = vmatpush.msra.mxu0 0.0
  %5996 = vmatpush.msra.mxu0 0.0
  %5997 = vmatpush.msra.mxu0 0.0
  %5998 = vmatpush.msra.mxu0 %v5981
  %5999 = vmatmul.f32.gmra.mxu0 %v112
  %v6000 = vpop.f32.mrf.mxu0
  %v6001 = vadd.f32 0.0, %v6000
  %6002 = vmatmul.f32.gmra.mxu0 %v115
  %v6003 = vpop.f32.mrf.mxu0
  %v6004 = vadd.f32 0.0, %v6003
  %6005 = vmatmul.f32.gmra.mxu0 %v118
  %v6006 = vpop.f32.mrf.mxu0
  %v6007 = vadd.f32 0.0, %v6006
  %6008 = vmatmul.f32.gmra.mxu0 %v121
  %v6009 = vpop.f32.mrf.mxu0
  %v6010 = vadd.f32 0.0, %v6009
  %6011 = vmatmul.f32.gmra.mxu0 %v124
  %v6012 = vpop.f32.mrf.mxu0
  %v6013 = vadd.f32 0.0, %v6012
  %6014 = vmatmul.f32.gmra.mxu0 %v127
  %v6015 = vpop.f32.mrf.mxu0
  %v6016 = vadd.f32 0.0, %v6015
  %6017 = vmatmul.f32.gmra.mxu0 %v130
  %v6018 = vpop.f32.mrf.mxu0
  %v6019 = vadd.f32 0.0, %v6018
  %6020 = vmatmul.f32.gmra.mxu0 %v133
  %v6021 = vpop.f32.mrf.mxu0
  %v6022 = vadd.f32 0.0, %v6021
  %6023 = vmatmul.f32.gmra.mxu0 %v136
  %v6024 = vpop.f32.mrf.mxu0
  %v6025 = vadd.f32 0.0, %v6024
  %6026 = vmatmul.f32.gmra.mxu0 %v139
  %v6027 = vpop.f32.mrf.mxu0
  %v6028 = vadd.f32 0.0, %v6027
  %6029 = vmatmul.f32.gmra.mxu0 %v142
  %v6030 = vpop.f32.mrf.mxu0
  %v6031 = vadd.f32 0.0, %v6030
  %6032 = vmatmul.f32.gmra.mxu0 %v145
  %v6033 = vpop.f32.mrf.mxu0
  %v6034 = vadd.f32 0.0, %v6033
  %6035 = vmatmul.f32.gmra.mxu0 %v148
  %v6036 = vpop.f32.mrf.mxu0
  %v6037 = vadd.f32 0.0, %v6036
  %6038 = vmatmul.f32.gmra.mxu0 %v151
  %v6039 = vpop.f32.mrf.mxu0
  %v6040 = vadd.f32 0.0, %v6039
  %6041 = vmatmul.f32.gmra.mxu0 %v154
  %v6042 = vpop.f32.mrf.mxu0
  %v6043 = vadd.f32 0.0, %v6042
  %6044 = vmatmul.f32.gmra.mxu0 %v157
  %v6045 = vpop.f32.mrf.mxu0
  %v6046 = vadd.f32 0.0, %v6045
  %6047 = vmatmul.f32.gmra.mxu0 %v160
  %v6048 = vpop.f32.mrf.mxu0
  %v6049 = vadd.f32 0.0, %v6048
  %6050 = vmatmul.f32.gmra.mxu0 %v163
  %v6051 = vpop.f32.mrf.mxu0
  %v6052 = vadd.f32 0.0, %v6051
  %6053 = vmatmul.f32.gmra.mxu0 %v166
  %v6054 = vpop.f32.mrf.mxu0
  %v6055 = vadd.f32 0.0, %v6054
  %6056 = vmatmul.f32.gmra.mxu0 %v169
  %v6057 = vpop.f32.mrf.mxu0
  %v6058 = vadd.f32 0.0, %v6057
  %6059 = vmatmul.f32.gmra.mxu0 %v172
  %v6060 = vpop.f32.mrf.mxu0
  %v6061 = vadd.f32 0.0, %v6060
  %6062 = vmatmul.f32.gmra.mxu0 %v175
  %v6063 = vpop.f32.mrf.mxu0
  %v6064 = vadd.f32 0.0, %v6063
  %6065 = vmatmul.f32.gmra.mxu0 %v178
  %v6066 = vpop.f32.mrf.mxu0
  %v6067 = vadd.f32 0.0, %v6066
  %6068 = vmatmul.f32.gmra.mxu0 %v181
  %v6069 = vpop.f32.mrf.mxu0
  %v6070 = vadd.f32 0.0, %v6069
  %6071 = vmatmul.f32.gmra.mxu0 %v184
  %v6072 = vpop.f32.mrf.mxu0
  %v6073 = vadd.f32 0.0, %v6072
  %6074 = vmatmul.f32.gmra.mxu0 %v187
  %v6075 = vpop.f32.mrf.mxu0
  %v6076 = vadd.f32 0.0, %v6075
  %6077 = vmatmul.f32.gmra.mxu0 %v190
  %v6078 = vpop.f32.mrf.mxu0
  %v6079 = vadd.f32 0.0, %v6078
  %6080 = vmatmul.f32.gmra.mxu0 %v193
  %v6081 = vpop.f32.mrf.mxu0
  %v6082 = vadd.f32 0.0, %v6081
  %6083 = vmatmul.f32.gmra.mxu0 %v196
  %v6084 = vpop.f32.mrf.mxu0
  %v6085 = vadd.f32 0.0, %v6084
  %6086 = vmatmul.f32.gmra.mxu0 %v199
  %v6087 = vpop.f32.mrf.mxu0
  %v6088 = vadd.f32 0.0, %v6087
  %6089 = vmatmul.f32.gmra.mxu0 %v202
  %v6090 = vpop.f32.mrf.mxu0
  %v6091 = vadd.f32 0.0, %v6090
  %6092 = vmatmul.f32.gmra.mxu0 %v205
  %v6093 = vpop.f32.mrf.mxu0
  %v6094 = vadd.f32 0.0, %v6093
  %6095 = vmatmul.f32.gmra.mxu0 %v208
  %v6096 = vpop.f32.mrf.mxu0
  %v6097 = vadd.f32 0.0, %v6096
  %6098 = vmatmul.f32.gmra.mxu0 %v211
  %v6099 = vpop.f32.mrf.mxu0
  %v6100 = vadd.f32 0.0, %v6099
  %6101 = vmatmul.f32.gmra.mxu0 %v214
  %v6102 = vpop.f32.mrf.mxu0
  %v6103 = vadd.f32 0.0, %v6102
  %6104 = vmatmul.f32.gmra.mxu0 %v217
  %v6105 = vpop.f32.mrf.mxu0
  %v6106 = vadd.f32 0.0, %v6105
  %6107 = vmatmul.f32.gmra.mxu0 %v220
  %v6108 = vpop.f32.mrf.mxu0
  %v6109 = vadd.f32 0.0, %v6108
  %6110 = vmatmul.f32.gmra.mxu0 %v223
  %v6111 = vpop.f32.mrf.mxu0
  %v6112 = vadd.f32 0.0, %v6111
  %6113 = vmatmul.f32.gmra.mxu0 %v226
  %v6114 = vpop.f32.mrf.mxu0
  %v6115 = vadd.f32 0.0, %v6114
  %6116 = vmatmul.f32.gmra.mxu0 %v229
  %v6117 = vpop.f32.mrf.mxu0
  %v6118 = vadd.f32 0.0, %v6117
  %6119 = vmatmul.f32.gmra.mxu0 %v232
  %v6120 = vpop.f32.mrf.mxu0
  %v6121 = vadd.f32 0.0, %v6120
  %6122 = vmatmul.f32.gmra.mxu0 %v235
  %v6123 = vpop.f32.mrf.mxu0
  %v6124 = vadd.f32 0.0, %v6123
  %6125 = vmatmul.f32.gmra.mxu0 %v238
  %v6126 = vpop.f32.mrf.mxu0
  %v6127 = vadd.f32 0.0, %v6126
  %6128 = vmatmul.f32.gmra.mxu0 %v241
  %v6129 = vpop.f32.mrf.mxu0
  %v6130 = vadd.f32 0.0, %v6129
  %6131 = vmatmul.f32.gmra.mxu0 %v244
  %v6132 = vpop.f32.mrf.mxu0
  %v6133 = vadd.f32 0.0, %v6132
  %6134 = vmatmul.f32.gmra.mxu0 %v247
  %v6135 = vpop.f32.mrf.mxu0
  %v6136 = vadd.f32 0.0, %v6135
  %6137 = vmatmul.f32.gmra.mxu0 %v250
  %v6138 = vpop.f32.mrf.mxu0
  %v6139 = vadd.f32 0.0, %v6138
  %6140 = vmatmul.f32.gmra.mxu0 %v253
  %v6141 = vpop.f32.mrf.mxu0
  %v6142 = vadd.f32 0.0, %v6141
  %6143 = vmatmul.f32.gmra.mxu0 %v256
  %v6144 = vpop.f32.mrf.mxu0
  %v6145 = vadd.f32 0.0, %v6144
  %6146 = vmatmul.f32.gmra.mxu0 %v259
  %v6147 = vpop.f32.mrf.mxu0
  %v6148 = vadd.f32 0.0, %v6147
  %6149 = vmatmul.f32.gmra.mxu0 %v262
  %v6150 = vpop.f32.mrf.mxu0
  %v6151 = vadd.f32 0.0, %v6150
  %6152 = vmatmul.f32.gmra.mxu0 %v265
  %v6153 = vpop.f32.mrf.mxu0
  %v6154 = vadd.f32 0.0, %v6153
  %6155 = vmatmul.f32.gmra.mxu0 %v268
  %v6156 = vpop.f32.mrf.mxu0
  %v6157 = vadd.f32 0.0, %v6156
  %6158 = vmatmul.f32.gmra.mxu0 %v271
  %v6159 = vpop.f32.mrf.mxu0
  %v6160 = vadd.f32 0.0, %v6159
  %6161 = vmatmul.f32.gmra.mxu0 %v274
  %v6162 = vpop.f32.mrf.mxu0
  %v6163 = vadd.f32 0.0, %v6162
  %6164 = vmatmul.f32.gmra.mxu0 %v277
  %v6165 = vpop.f32.mrf.mxu0
  %v6166 = vadd.f32 0.0, %v6165
  %6167 = vmatmul.f32.gmra.mxu0 %v280
  %v6168 = vpop.f32.mrf.mxu0
  %v6169 = vadd.f32 0.0, %v6168
  %6170 = vmatmul.f32.gmra.mxu0 %v283
  %v6171 = vpop.f32.mrf.mxu0
  %v6172 = vadd.f32 0.0, %v6171
  %6173 = vmatmul.f32.gmra.mxu0 %v286
  %v6174 = vpop.f32.mrf.mxu0
  %v6175 = vadd.f32 0.0, %v6174
  %6176 = vmatmul.f32.gmra.mxu0 %v289
  %v6177 = vpop.f32.mrf.mxu0
  %v6178 = vadd.f32 0.0, %v6177
  %6179 = vmatmul.f32.gmra.mxu0 %v292
  %v6180 = vpop.f32.mrf.mxu0
  %v6181 = vadd.f32 0.0, %v6180
  %6182 = vmatmul.f32.gmra.mxu0 %v295
  %v6183 = vpop.f32.mrf.mxu0
  %v6184 = vadd.f32 0.0, %v6183
  %6185 = vmatmul.f32.gmra.mxu0 %v298
  %v6186 = vpop.f32.mrf.mxu0
  %v6187 = vadd.f32 0.0, %v6186
  %6188 = vmatmul.f32.gmra.mxu0 %v301
  %v6189 = vpop.f32.mrf.mxu0
  %v6190 = vadd.f32 0.0, %v6189
  %6191 = vmatmul.f32.gmra.mxu0 %v304
  %v6192 = vpop.f32.mrf.mxu0
  %v6193 = vadd.f32 0.0, %v6192
  %6194 = vmatmul.f32.gmra.mxu0 %v307
  %v6195 = vpop.f32.mrf.mxu0
  %v6196 = vadd.f32 0.0, %v6195
  %6197 = vmatmul.f32.gmra.mxu0 %v310
  %v6198 = vpop.f32.mrf.mxu0
  %v6199 = vadd.f32 0.0, %v6198
  %6200 = vmatmul.f32.gmra.mxu0 %v313
  %v6201 = vpop.f32.mrf.mxu0
  %v6202 = vadd.f32 0.0, %v6201
  %6203 = vmatmul.f32.gmra.mxu0 %v316
  %v6204 = vpop.f32.mrf.mxu0
  %v6205 = vadd.f32 0.0, %v6204
  %6206 = vmatmul.f32.gmra.mxu0 %v319
  %v6207 = vpop.f32.mrf.mxu0
  %v6208 = vadd.f32 0.0, %v6207
  %6209 = vmatmul.f32.gmra.mxu0 %v322
  %v6210 = vpop.f32.mrf.mxu0
  %v6211 = vadd.f32 0.0, %v6210
  %6212 = vmatmul.f32.gmra.mxu0 %v325
  %v6213 = vpop.f32.mrf.mxu0
  %v6214 = vadd.f32 0.0, %v6213
  %6215 = vmatmul.f32.gmra.mxu0 %v328
  %v6216 = vpop.f32.mrf.mxu0
  %v6217 = vadd.f32 0.0, %v6216
  %6218 = vmatmul.f32.gmra.mxu0 %v331
  %v6219 = vpop.f32.mrf.mxu0
  %v6220 = vadd.f32 0.0, %v6219
  %6221 = vmatmul.f32.gmra.mxu0 %v334
  %v6222 = vpop.f32.mrf.mxu0
  %v6223 = vadd.f32 0.0, %v6222
  %6224 = vmatmul.f32.gmra.mxu0 %v337
  %v6225 = vpop.f32.mrf.mxu0
  %v6226 = vadd.f32 0.0, %v6225
  %6227 = vmatmul.f32.gmra.mxu0 %v340
  %v6228 = vpop.f32.mrf.mxu0
  %v6229 = vadd.f32 0.0, %v6228
  %6230 = vmatmul.f32.gmra.mxu0 %v343
  %v6231 = vpop.f32.mrf.mxu0
  %v6232 = vadd.f32 0.0, %v6231
  %6233 = vmatmul.f32.gmra.mxu0 %v346
  %v6234 = vpop.f32.mrf.mxu0
  %v6235 = vadd.f32 0.0, %v6234
  %6236 = vmatmul.f32.gmra.mxu0 %v349
  %v6237 = vpop.f32.mrf.mxu0
  %v6238 = vadd.f32 0.0, %v6237
  %6239 = vdwg.mxu0
  %v6240 = vrot.slane %v28, 2
  %v6241 = vsel %vm872, %v3522, %v6240
  %6243 = vmatpush.msra.mxu0 0.0
  %6244 = vmatpush.msra.mxu0 0.0
  %6245 = vmatpush.msra.mxu0 0.0
  %6246 = vmatpush.msra.mxu0 0.0
  %6247 = vmatpush.msra.mxu0 0.0
  %6248 = vmatpush.msra.mxu0 0.0
  %6249 = vmatpush.msra.mxu0 0.0
  %6250 = vmatpush.msra.mxu0 0.0
  %6251 = vmatpush.msra.mxu0 0.0
  %6252 = vmatpush.msra.mxu0 0.0
  %6253 = vmatpush.msra.mxu0 0.0
  %6254 = vmatpush.msra.mxu0 0.0
  %6255 = vmatpush.msra.mxu0 0.0
  %6256 = vmatpush.msra.mxu0 0.0
  %6257 = vmatpush.msra.mxu0 0.0
  %6258 = vmatpush.msra.mxu0 %v6241
  %6259 = vmatmul.f32.gmra.mxu0 %v112
  %v6260 = vpop.f32.mrf.mxu0
  %v6261 = vadd.f32 0.0, %v6260
  %6262 = vmatmul.f32.gmra.mxu0 %v115
  %v6263 = vpop.f32.mrf.mxu0
  %v6264 = vadd.f32 0.0, %v6263
  %6265 = vmatmul.f32.gmra.mxu0 %v118
  %v6266 = vpop.f32.mrf.mxu0
  %v6267 = vadd.f32 0.0, %v6266
  %6268 = vmatmul.f32.gmra.mxu0 %v121
  %v6269 = vpop.f32.mrf.mxu0
  %v6270 = vadd.f32 0.0, %v6269
  %6271 = vmatmul.f32.gmra.mxu0 %v124
  %v6272 = vpop.f32.mrf.mxu0
  %v6273 = vadd.f32 0.0, %v6272
  %6274 = vmatmul.f32.gmra.mxu0 %v127
  %v6275 = vpop.f32.mrf.mxu0
  %v6276 = vadd.f32 0.0, %v6275
  %6277 = vmatmul.f32.gmra.mxu0 %v130
  %v6278 = vpop.f32.mrf.mxu0
  %v6279 = vadd.f32 0.0, %v6278
  %6280 = vmatmul.f32.gmra.mxu0 %v133
  %v6281 = vpop.f32.mrf.mxu0
  %v6282 = vadd.f32 0.0, %v6281
  %6283 = vmatmul.f32.gmra.mxu0 %v136
  %v6284 = vpop.f32.mrf.mxu0
  %v6285 = vadd.f32 0.0, %v6284
  %6286 = vmatmul.f32.gmra.mxu0 %v139
  %v6287 = vpop.f32.mrf.mxu0
  %v6288 = vadd.f32 0.0, %v6287
  %6289 = vmatmul.f32.gmra.mxu0 %v142
  %v6290 = vpop.f32.mrf.mxu0
  %v6291 = vadd.f32 0.0, %v6290
  %6292 = vmatmul.f32.gmra.mxu0 %v145
  %v6293 = vpop.f32.mrf.mxu0
  %v6294 = vadd.f32 0.0, %v6293
  %6295 = vmatmul.f32.gmra.mxu0 %v148
  %v6296 = vpop.f32.mrf.mxu0
  %v6297 = vadd.f32 0.0, %v6296
  %6298 = vmatmul.f32.gmra.mxu0 %v151
  %v6299 = vpop.f32.mrf.mxu0
  %v6300 = vadd.f32 0.0, %v6299
  %6301 = vmatmul.f32.gmra.mxu0 %v154
  %v6302 = vpop.f32.mrf.mxu0
  %v6303 = vadd.f32 0.0, %v6302
  %6304 = vmatmul.f32.gmra.mxu0 %v157
  %v6305 = vpop.f32.mrf.mxu0
  %v6306 = vadd.f32 0.0, %v6305
  %6307 = vmatmul.f32.gmra.mxu0 %v160
  %v6308 = vpop.f32.mrf.mxu0
  %v6309 = vadd.f32 0.0, %v6308
  %6310 = vmatmul.f32.gmra.mxu0 %v163
  %v6311 = vpop.f32.mrf.mxu0
  %v6312 = vadd.f32 0.0, %v6311
  %6313 = vmatmul.f32.gmra.mxu0 %v166
  %v6314 = vpop.f32.mrf.mxu0
  %v6315 = vadd.f32 0.0, %v6314
  %6316 = vmatmul.f32.gmra.mxu0 %v169
  %v6317 = vpop.f32.mrf.mxu0
  %v6318 = vadd.f32 0.0, %v6317
  %6319 = vmatmul.f32.gmra.mxu0 %v172
  %v6320 = vpop.f32.mrf.mxu0
  %v6321 = vadd.f32 0.0, %v6320
  %6322 = vmatmul.f32.gmra.mxu0 %v175
  %v6323 = vpop.f32.mrf.mxu0
  %v6324 = vadd.f32 0.0, %v6323
  %6325 = vmatmul.f32.gmra.mxu0 %v178
  %v6326 = vpop.f32.mrf.mxu0
  %v6327 = vadd.f32 0.0, %v6326
  %6328 = vmatmul.f32.gmra.mxu0 %v181
  %v6329 = vpop.f32.mrf.mxu0
  %v6330 = vadd.f32 0.0, %v6329
  %6331 = vmatmul.f32.gmra.mxu0 %v184
  %v6332 = vpop.f32.mrf.mxu0
  %v6333 = vadd.f32 0.0, %v6332
  %6334 = vmatmul.f32.gmra.mxu0 %v187
  %v6335 = vpop.f32.mrf.mxu0
  %v6336 = vadd.f32 0.0, %v6335
  %6337 = vmatmul.f32.gmra.mxu0 %v190
  %v6338 = vpop.f32.mrf.mxu0
  %v6339 = vadd.f32 0.0, %v6338
  %6340 = vmatmul.f32.gmra.mxu0 %v193
  %v6341 = vpop.f32.mrf.mxu0
  %v6342 = vadd.f32 0.0, %v6341
  %6343 = vmatmul.f32.gmra.mxu0 %v196
  %v6344 = vpop.f32.mrf.mxu0
  %v6345 = vadd.f32 0.0, %v6344
  %6346 = vmatmul.f32.gmra.mxu0 %v199
  %v6347 = vpop.f32.mrf.mxu0
  %v6348 = vadd.f32 0.0, %v6347
  %6349 = vmatmul.f32.gmra.mxu0 %v202
  %v6350 = vpop.f32.mrf.mxu0
  %v6351 = vadd.f32 0.0, %v6350
  %6352 = vmatmul.f32.gmra.mxu0 %v205
  %v6353 = vpop.f32.mrf.mxu0
  %v6354 = vadd.f32 0.0, %v6353
  %6355 = vmatmul.f32.gmra.mxu0 %v208
  %v6356 = vpop.f32.mrf.mxu0
  %v6357 = vadd.f32 0.0, %v6356
  %6358 = vmatmul.f32.gmra.mxu0 %v211
  %v6359 = vpop.f32.mrf.mxu0
  %v6360 = vadd.f32 0.0, %v6359
  %6361 = vmatmul.f32.gmra.mxu0 %v214
  %v6362 = vpop.f32.mrf.mxu0
  %v6363 = vadd.f32 0.0, %v6362
  %6364 = vmatmul.f32.gmra.mxu0 %v217
  %v6365 = vpop.f32.mrf.mxu0
  %v6366 = vadd.f32 0.0, %v6365
  %6367 = vmatmul.f32.gmra.mxu0 %v220
  %v6368 = vpop.f32.mrf.mxu0
  %v6369 = vadd.f32 0.0, %v6368
  %6370 = vmatmul.f32.gmra.mxu0 %v223
  %v6371 = vpop.f32.mrf.mxu0
  %v6372 = vadd.f32 0.0, %v6371
  %6373 = vmatmul.f32.gmra.mxu0 %v226
  %v6374 = vpop.f32.mrf.mxu0
  %v6375 = vadd.f32 0.0, %v6374
  %6376 = vmatmul.f32.gmra.mxu0 %v229
  %v6377 = vpop.f32.mrf.mxu0
  %v6378 = vadd.f32 0.0, %v6377
  %6379 = vmatmul.f32.gmra.mxu0 %v232
  %v6380 = vpop.f32.mrf.mxu0
  %v6381 = vadd.f32 0.0, %v6380
  %6382 = vmatmul.f32.gmra.mxu0 %v235
  %v6383 = vpop.f32.mrf.mxu0
  %v6384 = vadd.f32 0.0, %v6383
  %6385 = vmatmul.f32.gmra.mxu0 %v238
  %v6386 = vpop.f32.mrf.mxu0
  %v6387 = vadd.f32 0.0, %v6386
  %6388 = vmatmul.f32.gmra.mxu0 %v241
  %v6389 = vpop.f32.mrf.mxu0
  %v6390 = vadd.f32 0.0, %v6389
  %6391 = vmatmul.f32.gmra.mxu0 %v244
  %v6392 = vpop.f32.mrf.mxu0
  %v6393 = vadd.f32 0.0, %v6392
  %6394 = vmatmul.f32.gmra.mxu0 %v247
  %v6395 = vpop.f32.mrf.mxu0
  %v6396 = vadd.f32 0.0, %v6395
  %6397 = vmatmul.f32.gmra.mxu0 %v250
  %v6398 = vpop.f32.mrf.mxu0
  %v6399 = vadd.f32 0.0, %v6398
  %6400 = vmatmul.f32.gmra.mxu0 %v253
  %v6401 = vpop.f32.mrf.mxu0
  %v6402 = vadd.f32 0.0, %v6401
  %6403 = vmatmul.f32.gmra.mxu0 %v256
  %v6404 = vpop.f32.mrf.mxu0
  %v6405 = vadd.f32 0.0, %v6404
  %6406 = vmatmul.f32.gmra.mxu0 %v259
  %v6407 = vpop.f32.mrf.mxu0
  %v6408 = vadd.f32 0.0, %v6407
  %6409 = vmatmul.f32.gmra.mxu0 %v262
  %v6410 = vpop.f32.mrf.mxu0
  %v6411 = vadd.f32 0.0, %v6410
  %6412 = vmatmul.f32.gmra.mxu0 %v265
  %v6413 = vpop.f32.mrf.mxu0
  %v6414 = vadd.f32 0.0, %v6413
  %6415 = vmatmul.f32.gmra.mxu0 %v268
  %v6416 = vpop.f32.mrf.mxu0
  %v6417 = vadd.f32 0.0, %v6416
  %6418 = vmatmul.f32.gmra.mxu0 %v271
  %v6419 = vpop.f32.mrf.mxu0
  %v6420 = vadd.f32 0.0, %v6419
  %6421 = vmatmul.f32.gmra.mxu0 %v274
  %v6422 = vpop.f32.mrf.mxu0
  %v6423 = vadd.f32 0.0, %v6422
  %6424 = vmatmul.f32.gmra.mxu0 %v277
  %v6425 = vpop.f32.mrf.mxu0
  %v6426 = vadd.f32 0.0, %v6425
  %6427 = vmatmul.f32.gmra.mxu0 %v280
  %v6428 = vpop.f32.mrf.mxu0
  %v6429 = vadd.f32 0.0, %v6428
  %6430 = vmatmul.f32.gmra.mxu0 %v283
  %v6431 = vpop.f32.mrf.mxu0
  %v6432 = vadd.f32 0.0, %v6431
  %6433 = vmatmul.f32.gmra.mxu0 %v286
  %v6434 = vpop.f32.mrf.mxu0
  %v6435 = vadd.f32 0.0, %v6434
  %6436 = vmatmul.f32.gmra.mxu0 %v289
  %v6437 = vpop.f32.mrf.mxu0
  %v6438 = vadd.f32 0.0, %v6437
  %6439 = vmatmul.f32.gmra.mxu0 %v292
  %v6440 = vpop.f32.mrf.mxu0
  %v6441 = vadd.f32 0.0, %v6440
  %6442 = vmatmul.f32.gmra.mxu0 %v295
  %v6443 = vpop.f32.mrf.mxu0
  %v6444 = vadd.f32 0.0, %v6443
  %6445 = vmatmul.f32.gmra.mxu0 %v298
  %v6446 = vpop.f32.mrf.mxu0
  %v6447 = vadd.f32 0.0, %v6446
  %6448 = vmatmul.f32.gmra.mxu0 %v301
  %v6449 = vpop.f32.mrf.mxu0
  %v6450 = vadd.f32 0.0, %v6449
  %6451 = vmatmul.f32.gmra.mxu0 %v304
  %v6452 = vpop.f32.mrf.mxu0
  %v6453 = vadd.f32 0.0, %v6452
  %6454 = vmatmul.f32.gmra.mxu0 %v307
  %v6455 = vpop.f32.mrf.mxu0
  %v6456 = vadd.f32 0.0, %v6455
  %6457 = vmatmul.f32.gmra.mxu0 %v310
  %v6458 = vpop.f32.mrf.mxu0
  %v6459 = vadd.f32 0.0, %v6458
  %6460 = vmatmul.f32.gmra.mxu0 %v313
  %v6461 = vpop.f32.mrf.mxu0
  %v6462 = vadd.f32 0.0, %v6461
  %6463 = vmatmul.f32.gmra.mxu0 %v316
  %v6464 = vpop.f32.mrf.mxu0
  %v6465 = vadd.f32 0.0, %v6464
  %6466 = vmatmul.f32.gmra.mxu0 %v319
  %v6467 = vpop.f32.mrf.mxu0
  %v6468 = vadd.f32 0.0, %v6467
  %6469 = vmatmul.f32.gmra.mxu0 %v322
  %v6470 = vpop.f32.mrf.mxu0
  %v6471 = vadd.f32 0.0, %v6470
  %6472 = vmatmul.f32.gmra.mxu0 %v325
  %v6473 = vpop.f32.mrf.mxu0
  %v6474 = vadd.f32 0.0, %v6473
  %6475 = vmatmul.f32.gmra.mxu0 %v328
  %v6476 = vpop.f32.mrf.mxu0
  %v6477 = vadd.f32 0.0, %v6476
  %6478 = vmatmul.f32.gmra.mxu0 %v331
  %v6479 = vpop.f32.mrf.mxu0
  %v6480 = vadd.f32 0.0, %v6479
  %6481 = vmatmul.f32.gmra.mxu0 %v334
  %v6482 = vpop.f32.mrf.mxu0
  %v6483 = vadd.f32 0.0, %v6482
  %6484 = vmatmul.f32.gmra.mxu0 %v337
  %v6485 = vpop.f32.mrf.mxu0
  %v6486 = vadd.f32 0.0, %v6485
  %6487 = vmatmul.f32.gmra.mxu0 %v340
  %v6488 = vpop.f32.mrf.mxu0
  %v6489 = vadd.f32 0.0, %v6488
  %6490 = vmatmul.f32.gmra.mxu0 %v343
  %v6491 = vpop.f32.mrf.mxu0
  %v6492 = vadd.f32 0.0, %v6491
  %6493 = vmatmul.f32.gmra.mxu0 %v346
  %v6494 = vpop.f32.mrf.mxu0
  %v6495 = vadd.f32 0.0, %v6494
  %6496 = vmatmul.f32.gmra.mxu0 %v349
  %v6497 = vpop.f32.mrf.mxu0
  %v6498 = vadd.f32 0.0, %v6497
  %6499 = vdwg.mxu0
  %v6500 = vrot.slane %v28, 3
  %v6501 = vsel %vm1134, %v3782, %v6500
  %6503 = vmatpush.msra.mxu0 0.0
  %6504 = vmatpush.msra.mxu0 0.0
  %6505 = vmatpush.msra.mxu0 0.0
  %6506 = vmatpush.msra.mxu0 0.0
  %6507 = vmatpush.msra.mxu0 0.0
  %6508 = vmatpush.msra.mxu0 0.0
  %6509 = vmatpush.msra.mxu0 0.0
  %6510 = vmatpush.msra.mxu0 0.0
  %6511 = vmatpush.msra.mxu0 0.0
  %6512 = vmatpush.msra.mxu0 0.0
  %6513 = vmatpush.msra.mxu0 0.0
  %6514 = vmatpush.msra.mxu0 0.0
  %6515 = vmatpush.msra.mxu0 0.0
  %6516 = vmatpush.msra.mxu0 0.0
  %6517 = vmatpush.msra.mxu0 0.0
  %6518 = vmatpush.msra.mxu0 %v6501
  %6519 = vmatmul.f32.gmra.mxu0 %v112
  %v6520 = vpop.f32.mrf.mxu0
  %v6521 = vadd.f32 0.0, %v6520
  %6522 = vmatmul.f32.gmra.mxu0 %v115
  %v6523 = vpop.f32.mrf.mxu0
  %v6524 = vadd.f32 0.0, %v6523
  %6525 = vmatmul.f32.gmra.mxu0 %v118
  %v6526 = vpop.f32.mrf.mxu0
  %v6527 = vadd.f32 0.0, %v6526
  %6528 = vmatmul.f32.gmra.mxu0 %v121
  %v6529 = vpop.f32.mrf.mxu0
  %v6530 = vadd.f32 0.0, %v6529
  %6531 = vmatmul.f32.gmra.mxu0 %v124
  %v6532 = vpop.f32.mrf.mxu0
  %v6533 = vadd.f32 0.0, %v6532
  %6534 = vmatmul.f32.gmra.mxu0 %v127
  %v6535 = vpop.f32.mrf.mxu0
  %v6536 = vadd.f32 0.0, %v6535
  %6537 = vmatmul.f32.gmra.mxu0 %v130
  %v6538 = vpop.f32.mrf.mxu0
  %v6539 = vadd.f32 0.0, %v6538
  %6540 = vmatmul.f32.gmra.mxu0 %v133
  %v6541 = vpop.f32.mrf.mxu0
  %v6542 = vadd.f32 0.0, %v6541
  %6543 = vmatmul.f32.gmra.mxu0 %v136
  %v6544 = vpop.f32.mrf.mxu0
  %v6545 = vadd.f32 0.0, %v6544
  %6546 = vmatmul.f32.gmra.mxu0 %v139
  %v6547 = vpop.f32.mrf.mxu0
  %v6548 = vadd.f32 0.0, %v6547
  %6549 = vmatmul.f32.gmra.mxu0 %v142
  %v6550 = vpop.f32.mrf.mxu0
  %v6551 = vadd.f32 0.0, %v6550
  %6552 = vmatmul.f32.gmra.mxu0 %v145
  %v6553 = vpop.f32.mrf.mxu0
  %v6554 = vadd.f32 0.0, %v6553
  %6555 = vmatmul.f32.gmra.mxu0 %v148
  %v6556 = vpop.f32.mrf.mxu0
  %v6557 = vadd.f32 0.0, %v6556
  %6558 = vmatmul.f32.gmra.mxu0 %v151
  %v6559 = vpop.f32.mrf.mxu0
  %v6560 = vadd.f32 0.0, %v6559
  %6561 = vmatmul.f32.gmra.mxu0 %v154
  %v6562 = vpop.f32.mrf.mxu0
  %v6563 = vadd.f32 0.0, %v6562
  %6564 = vmatmul.f32.gmra.mxu0 %v157
  %v6565 = vpop.f32.mrf.mxu0
  %v6566 = vadd.f32 0.0, %v6565
  %6567 = vmatmul.f32.gmra.mxu0 %v160
  %v6568 = vpop.f32.mrf.mxu0
  %v6569 = vadd.f32 0.0, %v6568
  %6570 = vmatmul.f32.gmra.mxu0 %v163
  %v6571 = vpop.f32.mrf.mxu0
  %v6572 = vadd.f32 0.0, %v6571
  %6573 = vmatmul.f32.gmra.mxu0 %v166
  %v6574 = vpop.f32.mrf.mxu0
  %v6575 = vadd.f32 0.0, %v6574
  %6576 = vmatmul.f32.gmra.mxu0 %v169
  %v6577 = vpop.f32.mrf.mxu0
  %v6578 = vadd.f32 0.0, %v6577
  %6579 = vmatmul.f32.gmra.mxu0 %v172
  %v6580 = vpop.f32.mrf.mxu0
  %v6581 = vadd.f32 0.0, %v6580
  %6582 = vmatmul.f32.gmra.mxu0 %v175
  %v6583 = vpop.f32.mrf.mxu0
  %v6584 = vadd.f32 0.0, %v6583
  %6585 = vmatmul.f32.gmra.mxu0 %v178
  %v6586 = vpop.f32.mrf.mxu0
  %v6587 = vadd.f32 0.0, %v6586
  %6588 = vmatmul.f32.gmra.mxu0 %v181
  %v6589 = vpop.f32.mrf.mxu0
  %v6590 = vadd.f32 0.0, %v6589
  %6591 = vmatmul.f32.gmra.mxu0 %v184
  %v6592 = vpop.f32.mrf.mxu0
  %v6593 = vadd.f32 0.0, %v6592
  %6594 = vmatmul.f32.gmra.mxu0 %v187
  %v6595 = vpop.f32.mrf.mxu0
  %v6596 = vadd.f32 0.0, %v6595
  %6597 = vmatmul.f32.gmra.mxu0 %v190
  %v6598 = vpop.f32.mrf.mxu0
  %v6599 = vadd.f32 0.0, %v6598
  %6600 = vmatmul.f32.gmra.mxu0 %v193
  %v6601 = vpop.f32.mrf.mxu0
  %v6602 = vadd.f32 0.0, %v6601
  %6603 = vmatmul.f32.gmra.mxu0 %v196
  %v6604 = vpop.f32.mrf.mxu0
  %v6605 = vadd.f32 0.0, %v6604
  %6606 = vmatmul.f32.gmra.mxu0 %v199
  %v6607 = vpop.f32.mrf.mxu0
  %v6608 = vadd.f32 0.0, %v6607
  %6609 = vmatmul.f32.gmra.mxu0 %v202
  %v6610 = vpop.f32.mrf.mxu0
  %v6611 = vadd.f32 0.0, %v6610
  %6612 = vmatmul.f32.gmra.mxu0 %v205
  %v6613 = vpop.f32.mrf.mxu0
  %v6614 = vadd.f32 0.0, %v6613
  %6615 = vmatmul.f32.gmra.mxu0 %v208
  %v6616 = vpop.f32.mrf.mxu0
  %v6617 = vadd.f32 0.0, %v6616
  %6618 = vmatmul.f32.gmra.mxu0 %v211
  %v6619 = vpop.f32.mrf.mxu0
  %v6620 = vadd.f32 0.0, %v6619
  %6621 = vmatmul.f32.gmra.mxu0 %v214
  %v6622 = vpop.f32.mrf.mxu0
  %v6623 = vadd.f32 0.0, %v6622
  %6624 = vmatmul.f32.gmra.mxu0 %v217
  %v6625 = vpop.f32.mrf.mxu0
  %v6626 = vadd.f32 0.0, %v6625
  %6627 = vmatmul.f32.gmra.mxu0 %v220
  %v6628 = vpop.f32.mrf.mxu0
  %v6629 = vadd.f32 0.0, %v6628
  %6630 = vmatmul.f32.gmra.mxu0 %v223
  %v6631 = vpop.f32.mrf.mxu0
  %v6632 = vadd.f32 0.0, %v6631
  %6633 = vmatmul.f32.gmra.mxu0 %v226
  %v6634 = vpop.f32.mrf.mxu0
  %v6635 = vadd.f32 0.0, %v6634
  %6636 = vmatmul.f32.gmra.mxu0 %v229
  %v6637 = vpop.f32.mrf.mxu0
  %v6638 = vadd.f32 0.0, %v6637
  %6639 = vmatmul.f32.gmra.mxu0 %v232
  %v6640 = vpop.f32.mrf.mxu0
  %v6641 = vadd.f32 0.0, %v6640
  %6642 = vmatmul.f32.gmra.mxu0 %v235
  %v6643 = vpop.f32.mrf.mxu0
  %v6644 = vadd.f32 0.0, %v6643
  %6645 = vmatmul.f32.gmra.mxu0 %v238
  %v6646 = vpop.f32.mrf.mxu0
  %v6647 = vadd.f32 0.0, %v6646
  %6648 = vmatmul.f32.gmra.mxu0 %v241
  %v6649 = vpop.f32.mrf.mxu0
  %v6650 = vadd.f32 0.0, %v6649
  %6651 = vmatmul.f32.gmra.mxu0 %v244
  %v6652 = vpop.f32.mrf.mxu0
  %v6653 = vadd.f32 0.0, %v6652
  %6654 = vmatmul.f32.gmra.mxu0 %v247
  %v6655 = vpop.f32.mrf.mxu0
  %v6656 = vadd.f32 0.0, %v6655
  %6657 = vmatmul.f32.gmra.mxu0 %v250
  %v6658 = vpop.f32.mrf.mxu0
  %v6659 = vadd.f32 0.0, %v6658
  %6660 = vmatmul.f32.gmra.mxu0 %v253
  %v6661 = vpop.f32.mrf.mxu0
  %v6662 = vadd.f32 0.0, %v6661
  %6663 = vmatmul.f32.gmra.mxu0 %v256
  %v6664 = vpop.f32.mrf.mxu0
  %v6665 = vadd.f32 0.0, %v6664
  %6666 = vmatmul.f32.gmra.mxu0 %v259
  %v6667 = vpop.f32.mrf.mxu0
  %v6668 = vadd.f32 0.0, %v6667
  %6669 = vmatmul.f32.gmra.mxu0 %v262
  %v6670 = vpop.f32.mrf.mxu0
  %v6671 = vadd.f32 0.0, %v6670
  %6672 = vmatmul.f32.gmra.mxu0 %v265
  %v6673 = vpop.f32.mrf.mxu0
  %v6674 = vadd.f32 0.0, %v6673
  %6675 = vmatmul.f32.gmra.mxu0 %v268
  %v6676 = vpop.f32.mrf.mxu0
  %v6677 = vadd.f32 0.0, %v6676
  %6678 = vmatmul.f32.gmra.mxu0 %v271
  %v6679 = vpop.f32.mrf.mxu0
  %v6680 = vadd.f32 0.0, %v6679
  %6681 = vmatmul.f32.gmra.mxu0 %v274
  %v6682 = vpop.f32.mrf.mxu0
  %v6683 = vadd.f32 0.0, %v6682
  %6684 = vmatmul.f32.gmra.mxu0 %v277
  %v6685 = vpop.f32.mrf.mxu0
  %v6686 = vadd.f32 0.0, %v6685
  %6687 = vmatmul.f32.gmra.mxu0 %v280
  %v6688 = vpop.f32.mrf.mxu0
  %v6689 = vadd.f32 0.0, %v6688
  %6690 = vmatmul.f32.gmra.mxu0 %v283
  %v6691 = vpop.f32.mrf.mxu0
  %v6692 = vadd.f32 0.0, %v6691
  %6693 = vmatmul.f32.gmra.mxu0 %v286
  %v6694 = vpop.f32.mrf.mxu0
  %v6695 = vadd.f32 0.0, %v6694
  %6696 = vmatmul.f32.gmra.mxu0 %v289
  %v6697 = vpop.f32.mrf.mxu0
  %v6698 = vadd.f32 0.0, %v6697
  %6699 = vmatmul.f32.gmra.mxu0 %v292
  %v6700 = vpop.f32.mrf.mxu0
  %v6701 = vadd.f32 0.0, %v6700
  %6702 = vmatmul.f32.gmra.mxu0 %v295
  %v6703 = vpop.f32.mrf.mxu0
  %v6704 = vadd.f32 0.0, %v6703
  %6705 = vmatmul.f32.gmra.mxu0 %v298
  %v6706 = vpop.f32.mrf.mxu0
  %v6707 = vadd.f32 0.0, %v6706
  %6708 = vmatmul.f32.gmra.mxu0 %v301
  %v6709 = vpop.f32.mrf.mxu0
  %v6710 = vadd.f32 0.0, %v6709
  %6711 = vmatmul.f32.gmra.mxu0 %v304
  %v6712 = vpop.f32.mrf.mxu0
  %v6713 = vadd.f32 0.0, %v6712
  %6714 = vmatmul.f32.gmra.mxu0 %v307
  %v6715 = vpop.f32.mrf.mxu0
  %v6716 = vadd.f32 0.0, %v6715
  %6717 = vmatmul.f32.gmra.mxu0 %v310
  %v6718 = vpop.f32.mrf.mxu0
  %v6719 = vadd.f32 0.0, %v6718
  %6720 = vmatmul.f32.gmra.mxu0 %v313
  %v6721 = vpop.f32.mrf.mxu0
  %v6722 = vadd.f32 0.0, %v6721
  %6723 = vmatmul.f32.gmra.mxu0 %v316
  %v6724 = vpop.f32.mrf.mxu0
  %v6725 = vadd.f32 0.0, %v6724
  %6726 = vmatmul.f32.gmra.mxu0 %v319
  %v6727 = vpop.f32.mrf.mxu0
  %v6728 = vadd.f32 0.0, %v6727
  %6729 = vmatmul.f32.gmra.mxu0 %v322
  %v6730 = vpop.f32.mrf.mxu0
  %v6731 = vadd.f32 0.0, %v6730
  %6732 = vmatmul.f32.gmra.mxu0 %v325
  %v6733 = vpop.f32.mrf.mxu0
  %v6734 = vadd.f32 0.0, %v6733
  %6735 = vmatmul.f32.gmra.mxu0 %v328
  %v6736 = vpop.f32.mrf.mxu0
  %v6737 = vadd.f32 0.0, %v6736
  %6738 = vmatmul.f32.gmra.mxu0 %v331
  %v6739 = vpop.f32.mrf.mxu0
  %v6740 = vadd.f32 0.0, %v6739
  %6741 = vmatmul.f32.gmra.mxu0 %v334
  %v6742 = vpop.f32.mrf.mxu0
  %v6743 = vadd.f32 0.0, %v6742
  %6744 = vmatmul.f32.gmra.mxu0 %v337
  %v6745 = vpop.f32.mrf.mxu0
  %v6746 = vadd.f32 0.0, %v6745
  %6747 = vmatmul.f32.gmra.mxu0 %v340
  %v6748 = vpop.f32.mrf.mxu0
  %v6749 = vadd.f32 0.0, %v6748
  %6750 = vmatmul.f32.gmra.mxu0 %v343
  %v6751 = vpop.f32.mrf.mxu0
  %v6752 = vadd.f32 0.0, %v6751
  %6753 = vmatmul.f32.gmra.mxu0 %v346
  %v6754 = vpop.f32.mrf.mxu0
  %v6755 = vadd.f32 0.0, %v6754
  %6756 = vmatmul.f32.gmra.mxu0 %v349
  %v6757 = vpop.f32.mrf.mxu0
  %v6758 = vadd.f32 0.0, %v6757
  %6759 = vdwg.mxu0
  %v6760 = vrot.slane %v28, 4
  %v6761 = vsel %vm1396, %v4042, %v6760
  %6763 = vmatpush.msra.mxu0 0.0
  %6764 = vmatpush.msra.mxu0 0.0
  %6765 = vmatpush.msra.mxu0 0.0
  %6766 = vmatpush.msra.mxu0 0.0
  %6767 = vmatpush.msra.mxu0 0.0
  %6768 = vmatpush.msra.mxu0 0.0
  %6769 = vmatpush.msra.mxu0 0.0
  %6770 = vmatpush.msra.mxu0 0.0
  %6771 = vmatpush.msra.mxu0 0.0
  %6772 = vmatpush.msra.mxu0 0.0
  %6773 = vmatpush.msra.mxu0 0.0
  %6774 = vmatpush.msra.mxu0 0.0
  %6775 = vmatpush.msra.mxu0 0.0
  %6776 = vmatpush.msra.mxu0 0.0
  %6777 = vmatpush.msra.mxu0 0.0
  %6778 = vmatpush.msra.mxu0 %v6761
  %6779 = vmatmul.f32.gmra.mxu0 %v112
  %v6780 = vpop.f32.mrf.mxu0
  %v6781 = vadd.f32 0.0, %v6780
  %6782 = vmatmul.f32.gmra.mxu0 %v115
  %v6783 = vpop.f32.mrf.mxu0
  %v6784 = vadd.f32 0.0, %v6783
  %6785 = vmatmul.f32.gmra.mxu0 %v118
  %v6786 = vpop.f32.mrf.mxu0
  %v6787 = vadd.f32 0.0, %v6786
  %6788 = vmatmul.f32.gmra.mxu0 %v121
  %v6789 = vpop.f32.mrf.mxu0
  %v6790 = vadd.f32 0.0, %v6789
  %6791 = vmatmul.f32.gmra.mxu0 %v124
  %v6792 = vpop.f32.mrf.mxu0
  %v6793 = vadd.f32 0.0, %v6792
  %6794 = vmatmul.f32.gmra.mxu0 %v127
  %v6795 = vpop.f32.mrf.mxu0
  %v6796 = vadd.f32 0.0, %v6795
  %6797 = vmatmul.f32.gmra.mxu0 %v130
  %v6798 = vpop.f32.mrf.mxu0
  %v6799 = vadd.f32 0.0, %v6798
  %6800 = vmatmul.f32.gmra.mxu0 %v133
  %v6801 = vpop.f32.mrf.mxu0
  %v6802 = vadd.f32 0.0, %v6801
  %6803 = vmatmul.f32.gmra.mxu0 %v136
  %v6804 = vpop.f32.mrf.mxu0
  %v6805 = vadd.f32 0.0, %v6804
  %6806 = vmatmul.f32.gmra.mxu0 %v139
  %v6807 = vpop.f32.mrf.mxu0
  %v6808 = vadd.f32 0.0, %v6807
  %6809 = vmatmul.f32.gmra.mxu0 %v142
  %v6810 = vpop.f32.mrf.mxu0
  %v6811 = vadd.f32 0.0, %v6810
  %6812 = vmatmul.f32.gmra.mxu0 %v145
  %v6813 = vpop.f32.mrf.mxu0
  %v6814 = vadd.f32 0.0, %v6813
  %6815 = vmatmul.f32.gmra.mxu0 %v148
  %v6816 = vpop.f32.mrf.mxu0
  %v6817 = vadd.f32 0.0, %v6816
  %6818 = vmatmul.f32.gmra.mxu0 %v151
  %v6819 = vpop.f32.mrf.mxu0
  %v6820 = vadd.f32 0.0, %v6819
  %6821 = vmatmul.f32.gmra.mxu0 %v154
  %v6822 = vpop.f32.mrf.mxu0
  %v6823 = vadd.f32 0.0, %v6822
  %6824 = vmatmul.f32.gmra.mxu0 %v157
  %v6825 = vpop.f32.mrf.mxu0
  %v6826 = vadd.f32 0.0, %v6825
  %6827 = vmatmul.f32.gmra.mxu0 %v160
  %v6828 = vpop.f32.mrf.mxu0
  %v6829 = vadd.f32 0.0, %v6828
  %6830 = vmatmul.f32.gmra.mxu0 %v163
  %v6831 = vpop.f32.mrf.mxu0
  %v6832 = vadd.f32 0.0, %v6831
  %6833 = vmatmul.f32.gmra.mxu0 %v166
  %v6834 = vpop.f32.mrf.mxu0
  %v6835 = vadd.f32 0.0, %v6834
  %6836 = vmatmul.f32.gmra.mxu0 %v169
  %v6837 = vpop.f32.mrf.mxu0
  %v6838 = vadd.f32 0.0, %v6837
  %6839 = vmatmul.f32.gmra.mxu0 %v172
  %v6840 = vpop.f32.mrf.mxu0
  %v6841 = vadd.f32 0.0, %v6840
  %6842 = vmatmul.f32.gmra.mxu0 %v175
  %v6843 = vpop.f32.mrf.mxu0
  %v6844 = vadd.f32 0.0, %v6843
  %6845 = vmatmul.f32.gmra.mxu0 %v178
  %v6846 = vpop.f32.mrf.mxu0
  %v6847 = vadd.f32 0.0, %v6846
  %6848 = vmatmul.f32.gmra.mxu0 %v181
  %v6849 = vpop.f32.mrf.mxu0
  %v6850 = vadd.f32 0.0, %v6849
  %6851 = vmatmul.f32.gmra.mxu0 %v184
  %v6852 = vpop.f32.mrf.mxu0
  %v6853 = vadd.f32 0.0, %v6852
  %6854 = vmatmul.f32.gmra.mxu0 %v187
  %v6855 = vpop.f32.mrf.mxu0
  %v6856 = vadd.f32 0.0, %v6855
  %6857 = vmatmul.f32.gmra.mxu0 %v190
  %v6858 = vpop.f32.mrf.mxu0
  %v6859 = vadd.f32 0.0, %v6858
  %6860 = vmatmul.f32.gmra.mxu0 %v193
  %v6861 = vpop.f32.mrf.mxu0
  %v6862 = vadd.f32 0.0, %v6861
  %6863 = vmatmul.f32.gmra.mxu0 %v196
  %v6864 = vpop.f32.mrf.mxu0
  %v6865 = vadd.f32 0.0, %v6864
  %6866 = vmatmul.f32.gmra.mxu0 %v199
  %v6867 = vpop.f32.mrf.mxu0
  %v6868 = vadd.f32 0.0, %v6867
  %6869 = vmatmul.f32.gmra.mxu0 %v202
  %v6870 = vpop.f32.mrf.mxu0
  %v6871 = vadd.f32 0.0, %v6870
  %6872 = vmatmul.f32.gmra.mxu0 %v205
  %v6873 = vpop.f32.mrf.mxu0
  %v6874 = vadd.f32 0.0, %v6873
  %6875 = vmatmul.f32.gmra.mxu0 %v208
  %v6876 = vpop.f32.mrf.mxu0
  %v6877 = vadd.f32 0.0, %v6876
  %6878 = vmatmul.f32.gmra.mxu0 %v211
  %v6879 = vpop.f32.mrf.mxu0
  %v6880 = vadd.f32 0.0, %v6879
  %6881 = vmatmul.f32.gmra.mxu0 %v214
  %v6882 = vpop.f32.mrf.mxu0
  %v6883 = vadd.f32 0.0, %v6882
  %6884 = vmatmul.f32.gmra.mxu0 %v217
  %v6885 = vpop.f32.mrf.mxu0
  %v6886 = vadd.f32 0.0, %v6885
  %6887 = vmatmul.f32.gmra.mxu0 %v220
  %v6888 = vpop.f32.mrf.mxu0
  %v6889 = vadd.f32 0.0, %v6888
  %6890 = vmatmul.f32.gmra.mxu0 %v223
  %v6891 = vpop.f32.mrf.mxu0
  %v6892 = vadd.f32 0.0, %v6891
  %6893 = vmatmul.f32.gmra.mxu0 %v226
  %v6894 = vpop.f32.mrf.mxu0
  %v6895 = vadd.f32 0.0, %v6894
  %6896 = vmatmul.f32.gmra.mxu0 %v229
  %v6897 = vpop.f32.mrf.mxu0
  %v6898 = vadd.f32 0.0, %v6897
  %6899 = vmatmul.f32.gmra.mxu0 %v232
  %v6900 = vpop.f32.mrf.mxu0
  %v6901 = vadd.f32 0.0, %v6900
  %6902 = vmatmul.f32.gmra.mxu0 %v235
  %v6903 = vpop.f32.mrf.mxu0
  %v6904 = vadd.f32 0.0, %v6903
  %6905 = vmatmul.f32.gmra.mxu0 %v238
  %v6906 = vpop.f32.mrf.mxu0
  %v6907 = vadd.f32 0.0, %v6906
  %6908 = vmatmul.f32.gmra.mxu0 %v241
  %v6909 = vpop.f32.mrf.mxu0
  %v6910 = vadd.f32 0.0, %v6909
  %6911 = vmatmul.f32.gmra.mxu0 %v244
  %v6912 = vpop.f32.mrf.mxu0
  %v6913 = vadd.f32 0.0, %v6912
  %6914 = vmatmul.f32.gmra.mxu0 %v247
  %v6915 = vpop.f32.mrf.mxu0
  %v6916 = vadd.f32 0.0, %v6915
  %6917 = vmatmul.f32.gmra.mxu0 %v250
  %v6918 = vpop.f32.mrf.mxu0
  %v6919 = vadd.f32 0.0, %v6918
  %6920 = vmatmul.f32.gmra.mxu0 %v253
  %v6921 = vpop.f32.mrf.mxu0
  %v6922 = vadd.f32 0.0, %v6921
  %6923 = vmatmul.f32.gmra.mxu0 %v256
  %v6924 = vpop.f32.mrf.mxu0
  %v6925 = vadd.f32 0.0, %v6924
  %6926 = vmatmul.f32.gmra.mxu0 %v259
  %v6927 = vpop.f32.mrf.mxu0
  %v6928 = vadd.f32 0.0, %v6927
  %6929 = vmatmul.f32.gmra.mxu0 %v262
  %v6930 = vpop.f32.mrf.mxu0
  %v6931 = vadd.f32 0.0, %v6930
  %6932 = vmatmul.f32.gmra.mxu0 %v265
  %v6933 = vpop.f32.mrf.mxu0
  %v6934 = vadd.f32 0.0, %v6933
  %6935 = vmatmul.f32.gmra.mxu0 %v268
  %v6936 = vpop.f32.mrf.mxu0
  %v6937 = vadd.f32 0.0, %v6936
  %6938 = vmatmul.f32.gmra.mxu0 %v271
  %v6939 = vpop.f32.mrf.mxu0
  %v6940 = vadd.f32 0.0, %v6939
  %6941 = vmatmul.f32.gmra.mxu0 %v274
  %v6942 = vpop.f32.mrf.mxu0
  %v6943 = vadd.f32 0.0, %v6942
  %6944 = vmatmul.f32.gmra.mxu0 %v277
  %v6945 = vpop.f32.mrf.mxu0
  %v6946 = vadd.f32 0.0, %v6945
  %6947 = vmatmul.f32.gmra.mxu0 %v280
  %v6948 = vpop.f32.mrf.mxu0
  %v6949 = vadd.f32 0.0, %v6948
  %6950 = vmatmul.f32.gmra.mxu0 %v283
  %v6951 = vpop.f32.mrf.mxu0
  %v6952 = vadd.f32 0.0, %v6951
  %6953 = vmatmul.f32.gmra.mxu0 %v286
  %v6954 = vpop.f32.mrf.mxu0
  %v6955 = vadd.f32 0.0, %v6954
  %6956 = vmatmul.f32.gmra.mxu0 %v289
  %v6957 = vpop.f32.mrf.mxu0
  %v6958 = vadd.f32 0.0, %v6957
  %6959 = vmatmul.f32.gmra.mxu0 %v292
  %v6960 = vpop.f32.mrf.mxu0
  %v6961 = vadd.f32 0.0, %v6960
  %6962 = vmatmul.f32.gmra.mxu0 %v295
  %v6963 = vpop.f32.mrf.mxu0
  %v6964 = vadd.f32 0.0, %v6963
  %6965 = vmatmul.f32.gmra.mxu0 %v298
  %v6966 = vpop.f32.mrf.mxu0
  %v6967 = vadd.f32 0.0, %v6966
  %6968 = vmatmul.f32.gmra.mxu0 %v301
  %v6969 = vpop.f32.mrf.mxu0
  %v6970 = vadd.f32 0.0, %v6969
  %6971 = vmatmul.f32.gmra.mxu0 %v304
  %v6972 = vpop.f32.mrf.mxu0
  %v6973 = vadd.f32 0.0, %v6972
  %6974 = vmatmul.f32.gmra.mxu0 %v307
  %v6975 = vpop.f32.mrf.mxu0
  %v6976 = vadd.f32 0.0, %v6975
  %6977 = vmatmul.f32.gmra.mxu0 %v310
  %v6978 = vpop.f32.mrf.mxu0
  %v6979 = vadd.f32 0.0, %v6978
  %6980 = vmatmul.f32.gmra.mxu0 %v313
  %v6981 = vpop.f32.mrf.mxu0
  %v6982 = vadd.f32 0.0, %v6981
  %6983 = vmatmul.f32.gmra.mxu0 %v316
  %v6984 = vpop.f32.mrf.mxu0
  %v6985 = vadd.f32 0.0, %v6984
  %6986 = vmatmul.f32.gmra.mxu0 %v319
  %v6987 = vpop.f32.mrf.mxu0
  %v6988 = vadd.f32 0.0, %v6987
  %6989 = vmatmul.f32.gmra.mxu0 %v322
  %v6990 = vpop.f32.mrf.mxu0
  %v6991 = vadd.f32 0.0, %v6990
  %6992 = vmatmul.f32.gmra.mxu0 %v325
  %v6993 = vpop.f32.mrf.mxu0
  %v6994 = vadd.f32 0.0, %v6993
  %6995 = vmatmul.f32.gmra.mxu0 %v328
  %v6996 = vpop.f32.mrf.mxu0
  %v6997 = vadd.f32 0.0, %v6996
  %6998 = vmatmul.f32.gmra.mxu0 %v331
  %v6999 = vpop.f32.mrf.mxu0
  %v7000 = vadd.f32 0.0, %v6999
  %7001 = vmatmul.f32.gmra.mxu0 %v334
  %v7002 = vpop.f32.mrf.mxu0
  %v7003 = vadd.f32 0.0, %v7002
  %7004 = vmatmul.f32.gmra.mxu0 %v337
  %v7005 = vpop.f32.mrf.mxu0
  %v7006 = vadd.f32 0.0, %v7005
  %7007 = vmatmul.f32.gmra.mxu0 %v340
  %v7008 = vpop.f32.mrf.mxu0
  %v7009 = vadd.f32 0.0, %v7008
  %7010 = vmatmul.f32.gmra.mxu0 %v343
  %v7011 = vpop.f32.mrf.mxu0
  %v7012 = vadd.f32 0.0, %v7011
  %7013 = vmatmul.f32.gmra.mxu0 %v346
  %v7014 = vpop.f32.mrf.mxu0
  %v7015 = vadd.f32 0.0, %v7014
  %7016 = vmatmul.f32.gmra.mxu0 %v349
  %v7017 = vpop.f32.mrf.mxu0
  %v7018 = vadd.f32 0.0, %v7017
  %7019 = vdwg.mxu0
  %v7020 = vrot.slane %v28, 5
  %v7021 = vsel %vm1658, %v4302, %v7020
  %7023 = vmatpush.msra.mxu0 0.0
  %7024 = vmatpush.msra.mxu0 0.0
  %7025 = vmatpush.msra.mxu0 0.0
  %7026 = vmatpush.msra.mxu0 0.0
  %7027 = vmatpush.msra.mxu0 0.0
  %7028 = vmatpush.msra.mxu0 0.0
  %7029 = vmatpush.msra.mxu0 0.0
  %7030 = vmatpush.msra.mxu0 0.0
  %7031 = vmatpush.msra.mxu0 0.0
  %7032 = vmatpush.msra.mxu0 0.0
  %7033 = vmatpush.msra.mxu0 0.0
  %7034 = vmatpush.msra.mxu0 0.0
  %7035 = vmatpush.msra.mxu0 0.0
  %7036 = vmatpush.msra.mxu0 0.0
  %7037 = vmatpush.msra.mxu0 0.0
  %7038 = vmatpush.msra.mxu0 %v7021
  %7039 = vmatmul.f32.gmra.mxu0 %v112
  %v7040 = vpop.f32.mrf.mxu0
  %v7041 = vadd.f32 0.0, %v7040
  %7042 = vmatmul.f32.gmra.mxu0 %v115
  %v7043 = vpop.f32.mrf.mxu0
  %v7044 = vadd.f32 0.0, %v7043
  %7045 = vmatmul.f32.gmra.mxu0 %v118
  %v7046 = vpop.f32.mrf.mxu0
  %v7047 = vadd.f32 0.0, %v7046
  %7048 = vmatmul.f32.gmra.mxu0 %v121
  %v7049 = vpop.f32.mrf.mxu0
  %v7050 = vadd.f32 0.0, %v7049
  %7051 = vmatmul.f32.gmra.mxu0 %v124
  %v7052 = vpop.f32.mrf.mxu0
  %v7053 = vadd.f32 0.0, %v7052
  %7054 = vmatmul.f32.gmra.mxu0 %v127
  %v7055 = vpop.f32.mrf.mxu0
  %v7056 = vadd.f32 0.0, %v7055
  %7057 = vmatmul.f32.gmra.mxu0 %v130
  %v7058 = vpop.f32.mrf.mxu0
  %v7059 = vadd.f32 0.0, %v7058
  %7060 = vmatmul.f32.gmra.mxu0 %v133
  %v7061 = vpop.f32.mrf.mxu0
  %v7062 = vadd.f32 0.0, %v7061
  %7063 = vmatmul.f32.gmra.mxu0 %v136
  %v7064 = vpop.f32.mrf.mxu0
  %v7065 = vadd.f32 0.0, %v7064
  %7066 = vmatmul.f32.gmra.mxu0 %v139
  %v7067 = vpop.f32.mrf.mxu0
  %v7068 = vadd.f32 0.0, %v7067
  %7069 = vmatmul.f32.gmra.mxu0 %v142
  %v7070 = vpop.f32.mrf.mxu0
  %v7071 = vadd.f32 0.0, %v7070
  %7072 = vmatmul.f32.gmra.mxu0 %v145
  %v7073 = vpop.f32.mrf.mxu0
  %v7074 = vadd.f32 0.0, %v7073
  %7075 = vmatmul.f32.gmra.mxu0 %v148
  %v7076 = vpop.f32.mrf.mxu0
  %v7077 = vadd.f32 0.0, %v7076
  %7078 = vmatmul.f32.gmra.mxu0 %v151
  %v7079 = vpop.f32.mrf.mxu0
  %v7080 = vadd.f32 0.0, %v7079
  %7081 = vmatmul.f32.gmra.mxu0 %v154
  %v7082 = vpop.f32.mrf.mxu0
  %v7083 = vadd.f32 0.0, %v7082
  %7084 = vmatmul.f32.gmra.mxu0 %v157
  %v7085 = vpop.f32.mrf.mxu0
  %v7086 = vadd.f32 0.0, %v7085
  %7087 = vmatmul.f32.gmra.mxu0 %v160
  %v7088 = vpop.f32.mrf.mxu0
  %v7089 = vadd.f32 0.0, %v7088
  %7090 = vmatmul.f32.gmra.mxu0 %v163
  %v7091 = vpop.f32.mrf.mxu0
  %v7092 = vadd.f32 0.0, %v7091
  %7093 = vmatmul.f32.gmra.mxu0 %v166
  %v7094 = vpop.f32.mrf.mxu0
  %v7095 = vadd.f32 0.0, %v7094
  %7096 = vmatmul.f32.gmra.mxu0 %v169
  %v7097 = vpop.f32.mrf.mxu0
  %v7098 = vadd.f32 0.0, %v7097
  %7099 = vmatmul.f32.gmra.mxu0 %v172
  %v7100 = vpop.f32.mrf.mxu0
  %v7101 = vadd.f32 0.0, %v7100
  %7102 = vmatmul.f32.gmra.mxu0 %v175
  %v7103 = vpop.f32.mrf.mxu0
  %v7104 = vadd.f32 0.0, %v7103
  %7105 = vmatmul.f32.gmra.mxu0 %v178
  %v7106 = vpop.f32.mrf.mxu0
  %v7107 = vadd.f32 0.0, %v7106
  %7108 = vmatmul.f32.gmra.mxu0 %v181
  %v7109 = vpop.f32.mrf.mxu0
  %v7110 = vadd.f32 0.0, %v7109
  %7111 = vmatmul.f32.gmra.mxu0 %v184
  %v7112 = vpop.f32.mrf.mxu0
  %v7113 = vadd.f32 0.0, %v7112
  %7114 = vmatmul.f32.gmra.mxu0 %v187
  %v7115 = vpop.f32.mrf.mxu0
  %v7116 = vadd.f32 0.0, %v7115
  %7117 = vmatmul.f32.gmra.mxu0 %v190
  %v7118 = vpop.f32.mrf.mxu0
  %v7119 = vadd.f32 0.0, %v7118
  %7120 = vmatmul.f32.gmra.mxu0 %v193
  %v7121 = vpop.f32.mrf.mxu0
  %v7122 = vadd.f32 0.0, %v7121
  %7123 = vmatmul.f32.gmra.mxu0 %v196
  %v7124 = vpop.f32.mrf.mxu0
  %v7125 = vadd.f32 0.0, %v7124
  %7126 = vmatmul.f32.gmra.mxu0 %v199
  %v7127 = vpop.f32.mrf.mxu0
  %v7128 = vadd.f32 0.0, %v7127
  %7129 = vmatmul.f32.gmra.mxu0 %v202
  %v7130 = vpop.f32.mrf.mxu0
  %v7131 = vadd.f32 0.0, %v7130
  %7132 = vmatmul.f32.gmra.mxu0 %v205
  %v7133 = vpop.f32.mrf.mxu0
  %v7134 = vadd.f32 0.0, %v7133
  %7135 = vmatmul.f32.gmra.mxu0 %v208
  %v7136 = vpop.f32.mrf.mxu0
  %v7137 = vadd.f32 0.0, %v7136
  %7138 = vmatmul.f32.gmra.mxu0 %v211
  %v7139 = vpop.f32.mrf.mxu0
  %v7140 = vadd.f32 0.0, %v7139
  %7141 = vmatmul.f32.gmra.mxu0 %v214
  %v7142 = vpop.f32.mrf.mxu0
  %v7143 = vadd.f32 0.0, %v7142
  %7144 = vmatmul.f32.gmra.mxu0 %v217
  %v7145 = vpop.f32.mrf.mxu0
  %v7146 = vadd.f32 0.0, %v7145
  %7147 = vmatmul.f32.gmra.mxu0 %v220
  %v7148 = vpop.f32.mrf.mxu0
  %v7149 = vadd.f32 0.0, %v7148
  %7150 = vmatmul.f32.gmra.mxu0 %v223
  %v7151 = vpop.f32.mrf.mxu0
  %v7152 = vadd.f32 0.0, %v7151
  %7153 = vmatmul.f32.gmra.mxu0 %v226
  %v7154 = vpop.f32.mrf.mxu0
  %v7155 = vadd.f32 0.0, %v7154
  %7156 = vmatmul.f32.gmra.mxu0 %v229
  %v7157 = vpop.f32.mrf.mxu0
  %v7158 = vadd.f32 0.0, %v7157
  %7159 = vmatmul.f32.gmra.mxu0 %v232
  %v7160 = vpop.f32.mrf.mxu0
  %v7161 = vadd.f32 0.0, %v7160
  %7162 = vmatmul.f32.gmra.mxu0 %v235
  %v7163 = vpop.f32.mrf.mxu0
  %v7164 = vadd.f32 0.0, %v7163
  %7165 = vmatmul.f32.gmra.mxu0 %v238
  %v7166 = vpop.f32.mrf.mxu0
  %v7167 = vadd.f32 0.0, %v7166
  %7168 = vmatmul.f32.gmra.mxu0 %v241
  %v7169 = vpop.f32.mrf.mxu0
  %v7170 = vadd.f32 0.0, %v7169
  %7171 = vmatmul.f32.gmra.mxu0 %v244
  %v7172 = vpop.f32.mrf.mxu0
  %v7173 = vadd.f32 0.0, %v7172
  %7174 = vmatmul.f32.gmra.mxu0 %v247
  %v7175 = vpop.f32.mrf.mxu0
  %v7176 = vadd.f32 0.0, %v7175
  %7177 = vmatmul.f32.gmra.mxu0 %v250
  %v7178 = vpop.f32.mrf.mxu0
  %v7179 = vadd.f32 0.0, %v7178
  %7180 = vmatmul.f32.gmra.mxu0 %v253
  %v7181 = vpop.f32.mrf.mxu0
  %v7182 = vadd.f32 0.0, %v7181
  %7183 = vmatmul.f32.gmra.mxu0 %v256
  %v7184 = vpop.f32.mrf.mxu0
  %v7185 = vadd.f32 0.0, %v7184
  %7186 = vmatmul.f32.gmra.mxu0 %v259
  %v7187 = vpop.f32.mrf.mxu0
  %v7188 = vadd.f32 0.0, %v7187
  %7189 = vmatmul.f32.gmra.mxu0 %v262
  %v7190 = vpop.f32.mrf.mxu0
  %v7191 = vadd.f32 0.0, %v7190
  %7192 = vmatmul.f32.gmra.mxu0 %v265
  %v7193 = vpop.f32.mrf.mxu0
  %v7194 = vadd.f32 0.0, %v7193
  %7195 = vmatmul.f32.gmra.mxu0 %v268
  %v7196 = vpop.f32.mrf.mxu0
  %v7197 = vadd.f32 0.0, %v7196
  %7198 = vmatmul.f32.gmra.mxu0 %v271
  %v7199 = vpop.f32.mrf.mxu0
  %v7200 = vadd.f32 0.0, %v7199
  %7201 = vmatmul.f32.gmra.mxu0 %v274
  %v7202 = vpop.f32.mrf.mxu0
  %v7203 = vadd.f32 0.0, %v7202
  %7204 = vmatmul.f32.gmra.mxu0 %v277
  %v7205 = vpop.f32.mrf.mxu0
  %v7206 = vadd.f32 0.0, %v7205
  %7207 = vmatmul.f32.gmra.mxu0 %v280
  %v7208 = vpop.f32.mrf.mxu0
  %v7209 = vadd.f32 0.0, %v7208
  %7210 = vmatmul.f32.gmra.mxu0 %v283
  %v7211 = vpop.f32.mrf.mxu0
  %v7212 = vadd.f32 0.0, %v7211
  %7213 = vmatmul.f32.gmra.mxu0 %v286
  %v7214 = vpop.f32.mrf.mxu0
  %v7215 = vadd.f32 0.0, %v7214
  %7216 = vmatmul.f32.gmra.mxu0 %v289
  %v7217 = vpop.f32.mrf.mxu0
  %v7218 = vadd.f32 0.0, %v7217
  %7219 = vmatmul.f32.gmra.mxu0 %v292
  %v7220 = vpop.f32.mrf.mxu0
  %v7221 = vadd.f32 0.0, %v7220
  %7222 = vmatmul.f32.gmra.mxu0 %v295
  %v7223 = vpop.f32.mrf.mxu0
  %v7224 = vadd.f32 0.0, %v7223
  %7225 = vmatmul.f32.gmra.mxu0 %v298
  %v7226 = vpop.f32.mrf.mxu0
  %v7227 = vadd.f32 0.0, %v7226
  %7228 = vmatmul.f32.gmra.mxu0 %v301
  %v7229 = vpop.f32.mrf.mxu0
  %v7230 = vadd.f32 0.0, %v7229
  %7231 = vmatmul.f32.gmra.mxu0 %v304
  %v7232 = vpop.f32.mrf.mxu0
  %v7233 = vadd.f32 0.0, %v7232
  %7234 = vmatmul.f32.gmra.mxu0 %v307
  %v7235 = vpop.f32.mrf.mxu0
  %v7236 = vadd.f32 0.0, %v7235
  %7237 = vmatmul.f32.gmra.mxu0 %v310
  %v7238 = vpop.f32.mrf.mxu0
  %v7239 = vadd.f32 0.0, %v7238
  %7240 = vmatmul.f32.gmra.mxu0 %v313
  %v7241 = vpop.f32.mrf.mxu0
  %v7242 = vadd.f32 0.0, %v7241
  %7243 = vmatmul.f32.gmra.mxu0 %v316
  %v7244 = vpop.f32.mrf.mxu0
  %v7245 = vadd.f32 0.0, %v7244
  %7246 = vmatmul.f32.gmra.mxu0 %v319
  %v7247 = vpop.f32.mrf.mxu0
  %v7248 = vadd.f32 0.0, %v7247
  %7249 = vmatmul.f32.gmra.mxu0 %v322
  %v7250 = vpop.f32.mrf.mxu0
  %v7251 = vadd.f32 0.0, %v7250
  %7252 = vmatmul.f32.gmra.mxu0 %v325
  %v7253 = vpop.f32.mrf.mxu0
  %v7254 = vadd.f32 0.0, %v7253
  %7255 = vmatmul.f32.gmra.mxu0 %v328
  %v7256 = vpop.f32.mrf.mxu0
  %v7257 = vadd.f32 0.0, %v7256
  %7258 = vmatmul.f32.gmra.mxu0 %v331
  %v7259 = vpop.f32.mrf.mxu0
  %v7260 = vadd.f32 0.0, %v7259
  %7261 = vmatmul.f32.gmra.mxu0 %v334
  %v7262 = vpop.f32.mrf.mxu0
  %v7263 = vadd.f32 0.0, %v7262
  %7264 = vmatmul.f32.gmra.mxu0 %v337
  %v7265 = vpop.f32.mrf.mxu0
  %v7266 = vadd.f32 0.0, %v7265
  %7267 = vmatmul.f32.gmra.mxu0 %v340
  %v7268 = vpop.f32.mrf.mxu0
  %v7269 = vadd.f32 0.0, %v7268
  %7270 = vmatmul.f32.gmra.mxu0 %v343
  %v7271 = vpop.f32.mrf.mxu0
  %v7272 = vadd.f32 0.0, %v7271
  %7273 = vmatmul.f32.gmra.mxu0 %v346
  %v7274 = vpop.f32.mrf.mxu0
  %v7275 = vadd.f32 0.0, %v7274
  %7276 = vmatmul.f32.gmra.mxu0 %v349
  %v7277 = vpop.f32.mrf.mxu0
  %v7278 = vadd.f32 0.0, %v7277
  %7279 = vdwg.mxu0
  %v7280 = vrot.slane %v28, 6
  %v7281 = vsel %vm1920, %v4562, %v7280
  %7283 = vmatpush.msra.mxu0 0.0
  %7284 = vmatpush.msra.mxu0 0.0
  %7285 = vmatpush.msra.mxu0 0.0
  %7286 = vmatpush.msra.mxu0 0.0
  %7287 = vmatpush.msra.mxu0 0.0
  %7288 = vmatpush.msra.mxu0 0.0
  %7289 = vmatpush.msra.mxu0 0.0
  %7290 = vmatpush.msra.mxu0 0.0
  %7291 = vmatpush.msra.mxu0 0.0
  %7292 = vmatpush.msra.mxu0 0.0
  %7293 = vmatpush.msra.mxu0 0.0
  %7294 = vmatpush.msra.mxu0 0.0
  %7295 = vmatpush.msra.mxu0 0.0
  %7296 = vmatpush.msra.mxu0 0.0
  %7297 = vmatpush.msra.mxu0 0.0
  %7298 = vmatpush.msra.mxu0 %v7281
  %7299 = vmatmul.f32.gmra.mxu0 %v112
  %v7300 = vpop.f32.mrf.mxu0
  %v7301 = vadd.f32 0.0, %v7300
  %7302 = vmatmul.f32.gmra.mxu0 %v115
  %v7303 = vpop.f32.mrf.mxu0
  %v7304 = vadd.f32 0.0, %v7303
  %7305 = vmatmul.f32.gmra.mxu0 %v118
  %v7306 = vpop.f32.mrf.mxu0
  %v7307 = vadd.f32 0.0, %v7306
  %7308 = vmatmul.f32.gmra.mxu0 %v121
  %v7309 = vpop.f32.mrf.mxu0
  %v7310 = vadd.f32 0.0, %v7309
  %7311 = vmatmul.f32.gmra.mxu0 %v124
  %v7312 = vpop.f32.mrf.mxu0
  %v7313 = vadd.f32 0.0, %v7312
  %7314 = vmatmul.f32.gmra.mxu0 %v127
  %v7315 = vpop.f32.mrf.mxu0
  %v7316 = vadd.f32 0.0, %v7315
  %7317 = vmatmul.f32.gmra.mxu0 %v130
  %v7318 = vpop.f32.mrf.mxu0
  %v7319 = vadd.f32 0.0, %v7318
  %7320 = vmatmul.f32.gmra.mxu0 %v133
  %v7321 = vpop.f32.mrf.mxu0
  %v7322 = vadd.f32 0.0, %v7321
  %7323 = vmatmul.f32.gmra.mxu0 %v136
  %v7324 = vpop.f32.mrf.mxu0
  %v7325 = vadd.f32 0.0, %v7324
  %7326 = vmatmul.f32.gmra.mxu0 %v139
  %v7327 = vpop.f32.mrf.mxu0
  %v7328 = vadd.f32 0.0, %v7327
  %7329 = vmatmul.f32.gmra.mxu0 %v142
  %v7330 = vpop.f32.mrf.mxu0
  %v7331 = vadd.f32 0.0, %v7330
  %7332 = vmatmul.f32.gmra.mxu0 %v145
  %v7333 = vpop.f32.mrf.mxu0
  %v7334 = vadd.f32 0.0, %v7333
  %7335 = vmatmul.f32.gmra.mxu0 %v148
  %v7336 = vpop.f32.mrf.mxu0
  %v7337 = vadd.f32 0.0, %v7336
  %7338 = vmatmul.f32.gmra.mxu0 %v151
  %v7339 = vpop.f32.mrf.mxu0
  %v7340 = vadd.f32 0.0, %v7339
  %7341 = vmatmul.f32.gmra.mxu0 %v154
  %v7342 = vpop.f32.mrf.mxu0
  %v7343 = vadd.f32 0.0, %v7342
  %7344 = vmatmul.f32.gmra.mxu0 %v157
  %v7345 = vpop.f32.mrf.mxu0
  %v7346 = vadd.f32 0.0, %v7345
  %7347 = vmatmul.f32.gmra.mxu0 %v160
  %v7348 = vpop.f32.mrf.mxu0
  %v7349 = vadd.f32 0.0, %v7348
  %7350 = vmatmul.f32.gmra.mxu0 %v163
  %v7351 = vpop.f32.mrf.mxu0
  %v7352 = vadd.f32 0.0, %v7351
  %7353 = vmatmul.f32.gmra.mxu0 %v166
  %v7354 = vpop.f32.mrf.mxu0
  %v7355 = vadd.f32 0.0, %v7354
  %7356 = vmatmul.f32.gmra.mxu0 %v169
  %v7357 = vpop.f32.mrf.mxu0
  %v7358 = vadd.f32 0.0, %v7357
  %7359 = vmatmul.f32.gmra.mxu0 %v172
  %v7360 = vpop.f32.mrf.mxu0
  %v7361 = vadd.f32 0.0, %v7360
  %7362 = vmatmul.f32.gmra.mxu0 %v175
  %v7363 = vpop.f32.mrf.mxu0
  %v7364 = vadd.f32 0.0, %v7363
  %7365 = vmatmul.f32.gmra.mxu0 %v178
  %v7366 = vpop.f32.mrf.mxu0
  %v7367 = vadd.f32 0.0, %v7366
  %7368 = vmatmul.f32.gmra.mxu0 %v181
  %v7369 = vpop.f32.mrf.mxu0
  %v7370 = vadd.f32 0.0, %v7369
  %7371 = vmatmul.f32.gmra.mxu0 %v184
  %v7372 = vpop.f32.mrf.mxu0
  %v7373 = vadd.f32 0.0, %v7372
  %7374 = vmatmul.f32.gmra.mxu0 %v187
  %v7375 = vpop.f32.mrf.mxu0
  %v7376 = vadd.f32 0.0, %v7375
  %7377 = vmatmul.f32.gmra.mxu0 %v190
  %v7378 = vpop.f32.mrf.mxu0
  %v7379 = vadd.f32 0.0, %v7378
  %7380 = vmatmul.f32.gmra.mxu0 %v193
  %v7381 = vpop.f32.mrf.mxu0
  %v7382 = vadd.f32 0.0, %v7381
  %7383 = vmatmul.f32.gmra.mxu0 %v196
  %v7384 = vpop.f32.mrf.mxu0
  %v7385 = vadd.f32 0.0, %v7384
  %7386 = vmatmul.f32.gmra.mxu0 %v199
  %v7387 = vpop.f32.mrf.mxu0
  %v7388 = vadd.f32 0.0, %v7387
  %7389 = vmatmul.f32.gmra.mxu0 %v202
  %v7390 = vpop.f32.mrf.mxu0
  %v7391 = vadd.f32 0.0, %v7390
  %7392 = vmatmul.f32.gmra.mxu0 %v205
  %v7393 = vpop.f32.mrf.mxu0
  %v7394 = vadd.f32 0.0, %v7393
  %7395 = vmatmul.f32.gmra.mxu0 %v208
  %v7396 = vpop.f32.mrf.mxu0
  %v7397 = vadd.f32 0.0, %v7396
  %7398 = vmatmul.f32.gmra.mxu0 %v211
  %v7399 = vpop.f32.mrf.mxu0
  %v7400 = vadd.f32 0.0, %v7399
  %7401 = vmatmul.f32.gmra.mxu0 %v214
  %v7402 = vpop.f32.mrf.mxu0
  %v7403 = vadd.f32 0.0, %v7402
  %7404 = vmatmul.f32.gmra.mxu0 %v217
  %v7405 = vpop.f32.mrf.mxu0
  %v7406 = vadd.f32 0.0, %v7405
  %7407 = vmatmul.f32.gmra.mxu0 %v220
  %v7408 = vpop.f32.mrf.mxu0
  %v7409 = vadd.f32 0.0, %v7408
  %7410 = vmatmul.f32.gmra.mxu0 %v223
  %v7411 = vpop.f32.mrf.mxu0
  %v7412 = vadd.f32 0.0, %v7411
  %7413 = vmatmul.f32.gmra.mxu0 %v226
  %v7414 = vpop.f32.mrf.mxu0
  %v7415 = vadd.f32 0.0, %v7414
  %7416 = vmatmul.f32.gmra.mxu0 %v229
  %v7417 = vpop.f32.mrf.mxu0
  %v7418 = vadd.f32 0.0, %v7417
  %7419 = vmatmul.f32.gmra.mxu0 %v232
  %v7420 = vpop.f32.mrf.mxu0
  %v7421 = vadd.f32 0.0, %v7420
  %7422 = vmatmul.f32.gmra.mxu0 %v235
  %v7423 = vpop.f32.mrf.mxu0
  %v7424 = vadd.f32 0.0, %v7423
  %7425 = vmatmul.f32.gmra.mxu0 %v238
  %v7426 = vpop.f32.mrf.mxu0
  %v7427 = vadd.f32 0.0, %v7426
  %7428 = vmatmul.f32.gmra.mxu0 %v241
  %v7429 = vpop.f32.mrf.mxu0
  %v7430 = vadd.f32 0.0, %v7429
  %7431 = vmatmul.f32.gmra.mxu0 %v244
  %v7432 = vpop.f32.mrf.mxu0
  %v7433 = vadd.f32 0.0, %v7432
  %7434 = vmatmul.f32.gmra.mxu0 %v247
  %v7435 = vpop.f32.mrf.mxu0
  %v7436 = vadd.f32 0.0, %v7435
  %7437 = vmatmul.f32.gmra.mxu0 %v250
  %v7438 = vpop.f32.mrf.mxu0
  %v7439 = vadd.f32 0.0, %v7438
  %7440 = vmatmul.f32.gmra.mxu0 %v253
  %v7441 = vpop.f32.mrf.mxu0
  %v7442 = vadd.f32 0.0, %v7441
  %7443 = vmatmul.f32.gmra.mxu0 %v256
  %v7444 = vpop.f32.mrf.mxu0
  %v7445 = vadd.f32 0.0, %v7444
  %7446 = vmatmul.f32.gmra.mxu0 %v259
  %v7447 = vpop.f32.mrf.mxu0
  %v7448 = vadd.f32 0.0, %v7447
  %7449 = vmatmul.f32.gmra.mxu0 %v262
  %v7450 = vpop.f32.mrf.mxu0
  %v7451 = vadd.f32 0.0, %v7450
  %7452 = vmatmul.f32.gmra.mxu0 %v265
  %v7453 = vpop.f32.mrf.mxu0
  %v7454 = vadd.f32 0.0, %v7453
  %7455 = vmatmul.f32.gmra.mxu0 %v268
  %v7456 = vpop.f32.mrf.mxu0
  %v7457 = vadd.f32 0.0, %v7456
  %7458 = vmatmul.f32.gmra.mxu0 %v271
  %v7459 = vpop.f32.mrf.mxu0
  %v7460 = vadd.f32 0.0, %v7459
  %7461 = vmatmul.f32.gmra.mxu0 %v274
  %v7462 = vpop.f32.mrf.mxu0
  %v7463 = vadd.f32 0.0, %v7462
  %7464 = vmatmul.f32.gmra.mxu0 %v277
  %v7465 = vpop.f32.mrf.mxu0
  %v7466 = vadd.f32 0.0, %v7465
  %7467 = vmatmul.f32.gmra.mxu0 %v280
  %v7468 = vpop.f32.mrf.mxu0
  %v7469 = vadd.f32 0.0, %v7468
  %7470 = vmatmul.f32.gmra.mxu0 %v283
  %v7471 = vpop.f32.mrf.mxu0
  %v7472 = vadd.f32 0.0, %v7471
  %7473 = vmatmul.f32.gmra.mxu0 %v286
  %v7474 = vpop.f32.mrf.mxu0
  %v7475 = vadd.f32 0.0, %v7474
  %7476 = vmatmul.f32.gmra.mxu0 %v289
  %v7477 = vpop.f32.mrf.mxu0
  %v7478 = vadd.f32 0.0, %v7477
  %7479 = vmatmul.f32.gmra.mxu0 %v292
  %v7480 = vpop.f32.mrf.mxu0
  %v7481 = vadd.f32 0.0, %v7480
  %7482 = vmatmul.f32.gmra.mxu0 %v295
  %v7483 = vpop.f32.mrf.mxu0
  %v7484 = vadd.f32 0.0, %v7483
  %7485 = vmatmul.f32.gmra.mxu0 %v298
  %v7486 = vpop.f32.mrf.mxu0
  %v7487 = vadd.f32 0.0, %v7486
  %7488 = vmatmul.f32.gmra.mxu0 %v301
  %v7489 = vpop.f32.mrf.mxu0
  %v7490 = vadd.f32 0.0, %v7489
  %7491 = vmatmul.f32.gmra.mxu0 %v304
  %v7492 = vpop.f32.mrf.mxu0
  %v7493 = vadd.f32 0.0, %v7492
  %7494 = vmatmul.f32.gmra.mxu0 %v307
  %v7495 = vpop.f32.mrf.mxu0
  %v7496 = vadd.f32 0.0, %v7495
  %7497 = vmatmul.f32.gmra.mxu0 %v310
  %v7498 = vpop.f32.mrf.mxu0
  %v7499 = vadd.f32 0.0, %v7498
  %7500 = vmatmul.f32.gmra.mxu0 %v313
  %v7501 = vpop.f32.mrf.mxu0
  %v7502 = vadd.f32 0.0, %v7501
  %7503 = vmatmul.f32.gmra.mxu0 %v316
  %v7504 = vpop.f32.mrf.mxu0
  %v7505 = vadd.f32 0.0, %v7504
  %7506 = vmatmul.f32.gmra.mxu0 %v319
  %v7507 = vpop.f32.mrf.mxu0
  %v7508 = vadd.f32 0.0, %v7507
  %7509 = vmatmul.f32.gmra.mxu0 %v322
  %v7510 = vpop.f32.mrf.mxu0
  %v7511 = vadd.f32 0.0, %v7510
  %7512 = vmatmul.f32.gmra.mxu0 %v325
  %v7513 = vpop.f32.mrf.mxu0
  %v7514 = vadd.f32 0.0, %v7513
  %7515 = vmatmul.f32.gmra.mxu0 %v328
  %v7516 = vpop.f32.mrf.mxu0
  %v7517 = vadd.f32 0.0, %v7516
  %7518 = vmatmul.f32.gmra.mxu0 %v331
  %v7519 = vpop.f32.mrf.mxu0
  %v7520 = vadd.f32 0.0, %v7519
  %7521 = vmatmul.f32.gmra.mxu0 %v334
  %v7522 = vpop.f32.mrf.mxu0
  %v7523 = vadd.f32 0.0, %v7522
  %7524 = vmatmul.f32.gmra.mxu0 %v337
  %v7525 = vpop.f32.mrf.mxu0
  %v7526 = vadd.f32 0.0, %v7525
  %7527 = vmatmul.f32.gmra.mxu0 %v340
  %v7528 = vpop.f32.mrf.mxu0
  %v7529 = vadd.f32 0.0, %v7528
  %7530 = vmatmul.f32.gmra.mxu0 %v343
  %v7531 = vpop.f32.mrf.mxu0
  %v7532 = vadd.f32 0.0, %v7531
  %7533 = vmatmul.f32.gmra.mxu0 %v346
  %v7534 = vpop.f32.mrf.mxu0
  %v7535 = vadd.f32 0.0, %v7534
  %7536 = vmatmul.f32.gmra.mxu0 %v349
  %v7537 = vpop.f32.mrf.mxu0
  %v7538 = vadd.f32 0.0, %v7537
  %7539 = vdwg.mxu0
  %v7540 = vrot.slane %v28, 7
  %v7541 = vsel %vm2182, %v4822, %v7540
  %7543 = vmatpush.msra.mxu0 0.0
  %7544 = vmatpush.msra.mxu0 0.0
  %7545 = vmatpush.msra.mxu0 0.0
  %7546 = vmatpush.msra.mxu0 0.0
  %7547 = vmatpush.msra.mxu0 0.0
  %7548 = vmatpush.msra.mxu0 0.0
  %7549 = vmatpush.msra.mxu0 0.0
  %7550 = vmatpush.msra.mxu0 0.0
  %7551 = vmatpush.msra.mxu0 0.0
  %7552 = vmatpush.msra.mxu0 0.0
  %7553 = vmatpush.msra.mxu0 0.0
  %7554 = vmatpush.msra.mxu0 0.0
  %7555 = vmatpush.msra.mxu0 0.0
  %7556 = vmatpush.msra.mxu0 0.0
  %7557 = vmatpush.msra.mxu0 0.0
  %7558 = vmatpush.msra.mxu0 %v7541
  %7559 = vmatmul.f32.gmra.mxu0 %v112
  %v7560 = vpop.f32.mrf.mxu0
  %v7561 = vadd.f32 0.0, %v7560
  %7562 = vmatmul.f32.gmra.mxu0 %v115
  %v7563 = vpop.f32.mrf.mxu0
  %v7564 = vadd.f32 0.0, %v7563
  %7565 = vmatmul.f32.gmra.mxu0 %v118
  %v7566 = vpop.f32.mrf.mxu0
  %v7567 = vadd.f32 0.0, %v7566
  %7568 = vmatmul.f32.gmra.mxu0 %v121
  %v7569 = vpop.f32.mrf.mxu0
  %v7570 = vadd.f32 0.0, %v7569
  %7571 = vmatmul.f32.gmra.mxu0 %v124
  %v7572 = vpop.f32.mrf.mxu0
  %v7573 = vadd.f32 0.0, %v7572
  %7574 = vmatmul.f32.gmra.mxu0 %v127
  %v7575 = vpop.f32.mrf.mxu0
  %v7576 = vadd.f32 0.0, %v7575
  %7577 = vmatmul.f32.gmra.mxu0 %v130
  %v7578 = vpop.f32.mrf.mxu0
  %v7579 = vadd.f32 0.0, %v7578
  %7580 = vmatmul.f32.gmra.mxu0 %v133
  %v7581 = vpop.f32.mrf.mxu0
  %v7582 = vadd.f32 0.0, %v7581
  %7583 = vmatmul.f32.gmra.mxu0 %v136
  %v7584 = vpop.f32.mrf.mxu0
  %v7585 = vadd.f32 0.0, %v7584
  %7586 = vmatmul.f32.gmra.mxu0 %v139
  %v7587 = vpop.f32.mrf.mxu0
  %v7588 = vadd.f32 0.0, %v7587
  %7589 = vmatmul.f32.gmra.mxu0 %v142
  %v7590 = vpop.f32.mrf.mxu0
  %v7591 = vadd.f32 0.0, %v7590
  %7592 = vmatmul.f32.gmra.mxu0 %v145
  %v7593 = vpop.f32.mrf.mxu0
  %v7594 = vadd.f32 0.0, %v7593
  %7595 = vmatmul.f32.gmra.mxu0 %v148
  %v7596 = vpop.f32.mrf.mxu0
  %v7597 = vadd.f32 0.0, %v7596
  %7598 = vmatmul.f32.gmra.mxu0 %v151
  %v7599 = vpop.f32.mrf.mxu0
  %v7600 = vadd.f32 0.0, %v7599
  %7601 = vmatmul.f32.gmra.mxu0 %v154
  %v7602 = vpop.f32.mrf.mxu0
  %v7603 = vadd.f32 0.0, %v7602
  %7604 = vmatmul.f32.gmra.mxu0 %v157
  %v7605 = vpop.f32.mrf.mxu0
  %v7606 = vadd.f32 0.0, %v7605
  %7607 = vmatmul.f32.gmra.mxu0 %v160
  %v7608 = vpop.f32.mrf.mxu0
  %v7609 = vadd.f32 0.0, %v7608
  %7610 = vmatmul.f32.gmra.mxu0 %v163
  %v7611 = vpop.f32.mrf.mxu0
  %v7612 = vadd.f32 0.0, %v7611
  %7613 = vmatmul.f32.gmra.mxu0 %v166
  %v7614 = vpop.f32.mrf.mxu0
  %v7615 = vadd.f32 0.0, %v7614
  %7616 = vmatmul.f32.gmra.mxu0 %v169
  %v7617 = vpop.f32.mrf.mxu0
  %v7618 = vadd.f32 0.0, %v7617
  %7619 = vmatmul.f32.gmra.mxu0 %v172
  %v7620 = vpop.f32.mrf.mxu0
  %v7621 = vadd.f32 0.0, %v7620
  %7622 = vmatmul.f32.gmra.mxu0 %v175
  %v7623 = vpop.f32.mrf.mxu0
  %v7624 = vadd.f32 0.0, %v7623
  %7625 = vmatmul.f32.gmra.mxu0 %v178
  %v7626 = vpop.f32.mrf.mxu0
  %v7627 = vadd.f32 0.0, %v7626
  %7628 = vmatmul.f32.gmra.mxu0 %v181
  %v7629 = vpop.f32.mrf.mxu0
  %v7630 = vadd.f32 0.0, %v7629
  %7631 = vmatmul.f32.gmra.mxu0 %v184
  %v7632 = vpop.f32.mrf.mxu0
  %v7633 = vadd.f32 0.0, %v7632
  %7634 = vmatmul.f32.gmra.mxu0 %v187
  %v7635 = vpop.f32.mrf.mxu0
  %v7636 = vadd.f32 0.0, %v7635
  %7637 = vmatmul.f32.gmra.mxu0 %v190
  %v7638 = vpop.f32.mrf.mxu0
  %v7639 = vadd.f32 0.0, %v7638
  %7640 = vmatmul.f32.gmra.mxu0 %v193
  %v7641 = vpop.f32.mrf.mxu0
  %v7642 = vadd.f32 0.0, %v7641
  %7643 = vmatmul.f32.gmra.mxu0 %v196
  %v7644 = vpop.f32.mrf.mxu0
  %v7645 = vadd.f32 0.0, %v7644
  %7646 = vmatmul.f32.gmra.mxu0 %v199
  %v7647 = vpop.f32.mrf.mxu0
  %v7648 = vadd.f32 0.0, %v7647
  %7649 = vmatmul.f32.gmra.mxu0 %v202
  %v7650 = vpop.f32.mrf.mxu0
  %v7651 = vadd.f32 0.0, %v7650
  %7652 = vmatmul.f32.gmra.mxu0 %v205
  %v7653 = vpop.f32.mrf.mxu0
  %v7654 = vadd.f32 0.0, %v7653
  %7655 = vmatmul.f32.gmra.mxu0 %v208
  %v7656 = vpop.f32.mrf.mxu0
  %v7657 = vadd.f32 0.0, %v7656
  %7658 = vmatmul.f32.gmra.mxu0 %v211
  %v7659 = vpop.f32.mrf.mxu0
  %v7660 = vadd.f32 0.0, %v7659
  %7661 = vmatmul.f32.gmra.mxu0 %v214
  %v7662 = vpop.f32.mrf.mxu0
  %v7663 = vadd.f32 0.0, %v7662
  %7664 = vmatmul.f32.gmra.mxu0 %v217
  %v7665 = vpop.f32.mrf.mxu0
  %v7666 = vadd.f32 0.0, %v7665
  %7667 = vmatmul.f32.gmra.mxu0 %v220
  %v7668 = vpop.f32.mrf.mxu0
  %v7669 = vadd.f32 0.0, %v7668
  %7670 = vmatmul.f32.gmra.mxu0 %v223
  %v7671 = vpop.f32.mrf.mxu0
  %v7672 = vadd.f32 0.0, %v7671
  %7673 = vmatmul.f32.gmra.mxu0 %v226
  %v7674 = vpop.f32.mrf.mxu0
  %v7675 = vadd.f32 0.0, %v7674
  %7676 = vmatmul.f32.gmra.mxu0 %v229
  %v7677 = vpop.f32.mrf.mxu0
  %v7678 = vadd.f32 0.0, %v7677
  %7679 = vmatmul.f32.gmra.mxu0 %v232
  %v7680 = vpop.f32.mrf.mxu0
  %v7681 = vadd.f32 0.0, %v7680
  %7682 = vmatmul.f32.gmra.mxu0 %v235
  %v7683 = vpop.f32.mrf.mxu0
  %v7684 = vadd.f32 0.0, %v7683
  %7685 = vmatmul.f32.gmra.mxu0 %v238
  %v7686 = vpop.f32.mrf.mxu0
  %v7687 = vadd.f32 0.0, %v7686
  %7688 = vmatmul.f32.gmra.mxu0 %v241
  %v7689 = vpop.f32.mrf.mxu0
  %v7690 = vadd.f32 0.0, %v7689
  %7691 = vmatmul.f32.gmra.mxu0 %v244
  %v7692 = vpop.f32.mrf.mxu0
  %v7693 = vadd.f32 0.0, %v7692
  %7694 = vmatmul.f32.gmra.mxu0 %v247
  %v7695 = vpop.f32.mrf.mxu0
  %v7696 = vadd.f32 0.0, %v7695
  %7697 = vmatmul.f32.gmra.mxu0 %v250
  %v7698 = vpop.f32.mrf.mxu0
  %v7699 = vadd.f32 0.0, %v7698
  %7700 = vmatmul.f32.gmra.mxu0 %v253
  %v7701 = vpop.f32.mrf.mxu0
  %v7702 = vadd.f32 0.0, %v7701
  %7703 = vmatmul.f32.gmra.mxu0 %v256
  %v7704 = vpop.f32.mrf.mxu0
  %v7705 = vadd.f32 0.0, %v7704
  %7706 = vmatmul.f32.gmra.mxu0 %v259
  %v7707 = vpop.f32.mrf.mxu0
  %v7708 = vadd.f32 0.0, %v7707
  %7709 = vmatmul.f32.gmra.mxu0 %v262
  %v7710 = vpop.f32.mrf.mxu0
  %v7711 = vadd.f32 0.0, %v7710
  %7712 = vmatmul.f32.gmra.mxu0 %v265
  %v7713 = vpop.f32.mrf.mxu0
  %v7714 = vadd.f32 0.0, %v7713
  %7715 = vmatmul.f32.gmra.mxu0 %v268
  %v7716 = vpop.f32.mrf.mxu0
  %v7717 = vadd.f32 0.0, %v7716
  %7718 = vmatmul.f32.gmra.mxu0 %v271
  %v7719 = vpop.f32.mrf.mxu0
  %v7720 = vadd.f32 0.0, %v7719
  %7721 = vmatmul.f32.gmra.mxu0 %v274
  %v7722 = vpop.f32.mrf.mxu0
  %v7723 = vadd.f32 0.0, %v7722
  %7724 = vmatmul.f32.gmra.mxu0 %v277
  %v7725 = vpop.f32.mrf.mxu0
  %v7726 = vadd.f32 0.0, %v7725
  %7727 = vmatmul.f32.gmra.mxu0 %v280
  %v7728 = vpop.f32.mrf.mxu0
  %v7729 = vadd.f32 0.0, %v7728
  %7730 = vmatmul.f32.gmra.mxu0 %v283
  %v7731 = vpop.f32.mrf.mxu0
  %v7732 = vadd.f32 0.0, %v7731
  %7733 = vmatmul.f32.gmra.mxu0 %v286
  %v7734 = vpop.f32.mrf.mxu0
  %v7735 = vadd.f32 0.0, %v7734
  %7736 = vmatmul.f32.gmra.mxu0 %v289
  %v7737 = vpop.f32.mrf.mxu0
  %v7738 = vadd.f32 0.0, %v7737
  %7739 = vmatmul.f32.gmra.mxu0 %v292
  %v7740 = vpop.f32.mrf.mxu0
  %v7741 = vadd.f32 0.0, %v7740
  %7742 = vmatmul.f32.gmra.mxu0 %v295
  %v7743 = vpop.f32.mrf.mxu0
  %v7744 = vadd.f32 0.0, %v7743
  %7745 = vmatmul.f32.gmra.mxu0 %v298
  %v7746 = vpop.f32.mrf.mxu0
  %v7747 = vadd.f32 0.0, %v7746
  %7748 = vmatmul.f32.gmra.mxu0 %v301
  %v7749 = vpop.f32.mrf.mxu0
  %v7750 = vadd.f32 0.0, %v7749
  %7751 = vmatmul.f32.gmra.mxu0 %v304
  %v7752 = vpop.f32.mrf.mxu0
  %v7753 = vadd.f32 0.0, %v7752
  %7754 = vmatmul.f32.gmra.mxu0 %v307
  %v7755 = vpop.f32.mrf.mxu0
  %v7756 = vadd.f32 0.0, %v7755
  %7757 = vmatmul.f32.gmra.mxu0 %v310
  %v7758 = vpop.f32.mrf.mxu0
  %v7759 = vadd.f32 0.0, %v7758
  %7760 = vmatmul.f32.gmra.mxu0 %v313
  %v7761 = vpop.f32.mrf.mxu0
  %v7762 = vadd.f32 0.0, %v7761
  %7763 = vmatmul.f32.gmra.mxu0 %v316
  %v7764 = vpop.f32.mrf.mxu0
  %v7765 = vadd.f32 0.0, %v7764
  %7766 = vmatmul.f32.gmra.mxu0 %v319
  %v7767 = vpop.f32.mrf.mxu0
  %v7768 = vadd.f32 0.0, %v7767
  %7769 = vmatmul.f32.gmra.mxu0 %v322
  %v7770 = vpop.f32.mrf.mxu0
  %v7771 = vadd.f32 0.0, %v7770
  %7772 = vmatmul.f32.gmra.mxu0 %v325
  %v7773 = vpop.f32.mrf.mxu0
  %v7774 = vadd.f32 0.0, %v7773
  %7775 = vmatmul.f32.gmra.mxu0 %v328
  %v7776 = vpop.f32.mrf.mxu0
  %v7777 = vadd.f32 0.0, %v7776
  %7778 = vmatmul.f32.gmra.mxu0 %v331
  %v7779 = vpop.f32.mrf.mxu0
  %v7780 = vadd.f32 0.0, %v7779
  %7781 = vmatmul.f32.gmra.mxu0 %v334
  %v7782 = vpop.f32.mrf.mxu0
  %v7783 = vadd.f32 0.0, %v7782
  %7784 = vmatmul.f32.gmra.mxu0 %v337
  %v7785 = vpop.f32.mrf.mxu0
  %v7786 = vadd.f32 0.0, %v7785
  %7787 = vmatmul.f32.gmra.mxu0 %v340
  %v7788 = vpop.f32.mrf.mxu0
  %v7789 = vadd.f32 0.0, %v7788
  %7790 = vmatmul.f32.gmra.mxu0 %v343
  %v7791 = vpop.f32.mrf.mxu0
  %v7792 = vadd.f32 0.0, %v7791
  %7793 = vmatmul.f32.gmra.mxu0 %v346
  %v7794 = vpop.f32.mrf.mxu0
  %v7795 = vadd.f32 0.0, %v7794
  %7796 = vmatmul.f32.gmra.mxu0 %v349
  %v7797 = vpop.f32.mrf.mxu0
  %v7798 = vadd.f32 0.0, %v7797
  %7799 = vdwg.mxu0
  %v7800 = vmax.f32 %v5740, %v6001
  %v7801 = vmax.f32 %v5743, %v6004
  %v7802 = vmax.f32 %v5746, %v6007
  %v7803 = vmax.f32 %v5749, %v6010
  %v7804 = vmax.f32 %v5752, %v6013
  %v7805 = vmax.f32 %v5755, %v6016
  %v7806 = vmax.f32 %v5758, %v6019
  %v7807 = vmax.f32 %v5761, %v6022
  %v7808 = vmax.f32 %v5764, %v6025
  %v7809 = vmax.f32 %v5767, %v6028
  %v7810 = vmax.f32 %v5770, %v6031
  %v7811 = vmax.f32 %v5773, %v6034
  %v7812 = vmax.f32 %v5776, %v6037
  %v7813 = vmax.f32 %v5779, %v6040
  %v7814 = vmax.f32 %v5782, %v6043
  %v7815 = vmax.f32 %v5785, %v6046
  %v7816 = vmax.f32 %v5788, %v6049
  %v7817 = vmax.f32 %v5791, %v6052
  %v7818 = vmax.f32 %v5794, %v6055
  %v7819 = vmax.f32 %v5797, %v6058
  %v7820 = vmax.f32 %v5800, %v6061
  %v7821 = vmax.f32 %v5803, %v6064
  %v7822 = vmax.f32 %v5806, %v6067
  %v7823 = vmax.f32 %v5809, %v6070
  %v7824 = vmax.f32 %v5812, %v6073
  %v7825 = vmax.f32 %v5815, %v6076
  %v7826 = vmax.f32 %v5818, %v6079
  %v7827 = vmax.f32 %v5821, %v6082
  %v7828 = vmax.f32 %v5824, %v6085
  %v7829 = vmax.f32 %v5827, %v6088
  %v7830 = vmax.f32 %v5830, %v6091
  %v7831 = vmax.f32 %v5833, %v6094
  %v7832 = vmax.f32 %v5836, %v6097
  %v7833 = vmax.f32 %v5839, %v6100
  %v7834 = vmax.f32 %v5842, %v6103
  %v7835 = vmax.f32 %v5845, %v6106
  %v7836 = vmax.f32 %v5848, %v6109
  %v7837 = vmax.f32 %v5851, %v6112
  %v7838 = vmax.f32 %v5854, %v6115
  %v7839 = vmax.f32 %v5857, %v6118
  %v7840 = vmax.f32 %v5860, %v6121
  %v7841 = vmax.f32 %v5863, %v6124
  %v7842 = vmax.f32 %v5866, %v6127
  %v7843 = vmax.f32 %v5869, %v6130
  %v7844 = vmax.f32 %v5872, %v6133
  %v7845 = vmax.f32 %v5875, %v6136
  %v7846 = vmax.f32 %v5878, %v6139
  %v7847 = vmax.f32 %v5881, %v6142
  %v7848 = vmax.f32 %v5884, %v6145
  %v7849 = vmax.f32 %v5887, %v6148
  %v7850 = vmax.f32 %v5890, %v6151
  %v7851 = vmax.f32 %v5893, %v6154
  %v7852 = vmax.f32 %v5896, %v6157
  %v7853 = vmax.f32 %v5899, %v6160
  %v7854 = vmax.f32 %v5902, %v6163
  %v7855 = vmax.f32 %v5905, %v6166
  %v7856 = vmax.f32 %v5908, %v6169
  %v7857 = vmax.f32 %v5911, %v6172
  %v7858 = vmax.f32 %v5914, %v6175
  %v7859 = vmax.f32 %v5917, %v6178
  %v7860 = vmax.f32 %v5920, %v6181
  %v7861 = vmax.f32 %v5923, %v6184
  %v7862 = vmax.f32 %v5926, %v6187
  %v7863 = vmax.f32 %v5929, %v6190
  %v7864 = vmax.f32 %v5932, %v6193
  %v7865 = vmax.f32 %v5935, %v6196
  %v7866 = vmax.f32 %v5938, %v6199
  %v7867 = vmax.f32 %v5941, %v6202
  %v7868 = vmax.f32 %v5944, %v6205
  %v7869 = vmax.f32 %v5947, %v6208
  %v7870 = vmax.f32 %v5950, %v6211
  %v7871 = vmax.f32 %v5953, %v6214
  %v7872 = vmax.f32 %v5956, %v6217
  %v7873 = vmax.f32 %v5959, %v6220
  %v7874 = vmax.f32 %v5962, %v6223
  %v7875 = vmax.f32 %v5965, %v6226
  %v7876 = vmax.f32 %v5968, %v6229
  %v7877 = vmax.f32 %v5971, %v6232
  %v7878 = vmax.f32 %v5974, %v6235
  %v7879 = vmax.f32 %v5977, %v6238
  %v7880 = vmax.f32 %v6261, %v6521
  %v7881 = vmax.f32 %v6264, %v6524
  %v7882 = vmax.f32 %v6267, %v6527
  %v7883 = vmax.f32 %v6270, %v6530
  %v7884 = vmax.f32 %v6273, %v6533
  %v7885 = vmax.f32 %v6276, %v6536
  %v7886 = vmax.f32 %v6279, %v6539
  %v7887 = vmax.f32 %v6282, %v6542
  %v7888 = vmax.f32 %v6285, %v6545
  %v7889 = vmax.f32 %v6288, %v6548
  %v7890 = vmax.f32 %v6291, %v6551
  %v7891 = vmax.f32 %v6294, %v6554
  %v7892 = vmax.f32 %v6297, %v6557
  %v7893 = vmax.f32 %v6300, %v6560
  %v7894 = vmax.f32 %v6303, %v6563
  %v7895 = vmax.f32 %v6306, %v6566
  %v7896 = vmax.f32 %v6309, %v6569
  %v7897 = vmax.f32 %v6312, %v6572
  %v7898 = vmax.f32 %v6315, %v6575
  %v7899 = vmax.f32 %v6318, %v6578
  %v7900 = vmax.f32 %v6321, %v6581
  %v7901 = vmax.f32 %v6324, %v6584
  %v7902 = vmax.f32 %v6327, %v6587
  %v7903 = vmax.f32 %v6330, %v6590
  %v7904 = vmax.f32 %v6333, %v6593
  %v7905 = vmax.f32 %v6336, %v6596
  %v7906 = vmax.f32 %v6339, %v6599
  %v7907 = vmax.f32 %v6342, %v6602
  %v7908 = vmax.f32 %v6345, %v6605
  %v7909 = vmax.f32 %v6348, %v6608
  %v7910 = vmax.f32 %v6351, %v6611
  %v7911 = vmax.f32 %v6354, %v6614
  %v7912 = vmax.f32 %v6357, %v6617
  %v7913 = vmax.f32 %v6360, %v6620
  %v7914 = vmax.f32 %v6363, %v6623
  %v7915 = vmax.f32 %v6366, %v6626
  %v7916 = vmax.f32 %v6369, %v6629
  %v7917 = vmax.f32 %v6372, %v6632
  %v7918 = vmax.f32 %v6375, %v6635
  %v7919 = vmax.f32 %v6378, %v6638
  %v7920 = vmax.f32 %v6381, %v6641
  %v7921 = vmax.f32 %v6384, %v6644
  %v7922 = vmax.f32 %v6387, %v6647
  %v7923 = vmax.f32 %v6390, %v6650
  %v7924 = vmax.f32 %v6393, %v6653
  %v7925 = vmax.f32 %v6396, %v6656
  %v7926 = vmax.f32 %v6399, %v6659
  %v7927 = vmax.f32 %v6402, %v6662
  %v7928 = vmax.f32 %v6405, %v6665
  %v7929 = vmax.f32 %v6408, %v6668
  %v7930 = vmax.f32 %v6411, %v6671
  %v7931 = vmax.f32 %v6414, %v6674
  %v7932 = vmax.f32 %v6417, %v6677
  %v7933 = vmax.f32 %v6420, %v6680
  %v7934 = vmax.f32 %v6423, %v6683
  %v7935 = vmax.f32 %v6426, %v6686
  %v7936 = vmax.f32 %v6429, %v6689
  %v7937 = vmax.f32 %v6432, %v6692
  %v7938 = vmax.f32 %v6435, %v6695
  %v7939 = vmax.f32 %v6438, %v6698
  %v7940 = vmax.f32 %v6441, %v6701
  %v7941 = vmax.f32 %v6444, %v6704
  %v7942 = vmax.f32 %v6447, %v6707
  %v7943 = vmax.f32 %v6450, %v6710
  %v7944 = vmax.f32 %v6453, %v6713
  %v7945 = vmax.f32 %v6456, %v6716
  %v7946 = vmax.f32 %v6459, %v6719
  %v7947 = vmax.f32 %v6462, %v6722
  %v7948 = vmax.f32 %v6465, %v6725
  %v7949 = vmax.f32 %v6468, %v6728
  %v7950 = vmax.f32 %v6471, %v6731
  %v7951 = vmax.f32 %v6474, %v6734
  %v7952 = vmax.f32 %v6477, %v6737
  %v7953 = vmax.f32 %v6480, %v6740
  %v7954 = vmax.f32 %v6483, %v6743
  %v7955 = vmax.f32 %v6486, %v6746
  %v7956 = vmax.f32 %v6489, %v6749
  %v7957 = vmax.f32 %v6492, %v6752
  %v7958 = vmax.f32 %v6495, %v6755
  %v7959 = vmax.f32 %v6498, %v6758
  %v7960 = vmax.f32 %v6781, %v7041
  %v7961 = vmax.f32 %v6784, %v7044
  %v7962 = vmax.f32 %v6787, %v7047
  %v7963 = vmax.f32 %v6790, %v7050
  %v7964 = vmax.f32 %v6793, %v7053
  %v7965 = vmax.f32 %v6796, %v7056
  %v7966 = vmax.f32 %v6799, %v7059
  %v7967 = vmax.f32 %v6802, %v7062
  %v7968 = vmax.f32 %v6805, %v7065
  %v7969 = vmax.f32 %v6808, %v7068
  %v7970 = vmax.f32 %v6811, %v7071
  %v7971 = vmax.f32 %v6814, %v7074
  %v7972 = vmax.f32 %v6817, %v7077
  %v7973 = vmax.f32 %v6820, %v7080
  %v7974 = vmax.f32 %v6823, %v7083
  %v7975 = vmax.f32 %v6826, %v7086
  %v7976 = vmax.f32 %v6829, %v7089
  %v7977 = vmax.f32 %v6832, %v7092
  %v7978 = vmax.f32 %v6835, %v7095
  %v7979 = vmax.f32 %v6838, %v7098
  %v7980 = vmax.f32 %v6841, %v7101
  %v7981 = vmax.f32 %v6844, %v7104
  %v7982 = vmax.f32 %v6847, %v7107
  %v7983 = vmax.f32 %v6850, %v7110
  %v7984 = vmax.f32 %v6853, %v7113
  %v7985 = vmax.f32 %v6856, %v7116
  %v7986 = vmax.f32 %v6859, %v7119
  %v7987 = vmax.f32 %v6862, %v7122
  %v7988 = vmax.f32 %v6865, %v7125
  %v7989 = vmax.f32 %v6868, %v7128
  %v7990 = vmax.f32 %v6871, %v7131
  %v7991 = vmax.f32 %v6874, %v7134
  %v7992 = vmax.f32 %v6877, %v7137
  %v7993 = vmax.f32 %v6880, %v7140
  %v7994 = vmax.f32 %v6883, %v7143
  %v7995 = vmax.f32 %v6886, %v7146
  %v7996 = vmax.f32 %v6889, %v7149
  %v7997 = vmax.f32 %v6892, %v7152
  %v7998 = vmax.f32 %v6895, %v7155
  %v7999 = vmax.f32 %v6898, %v7158
  %v8000 = vmax.f32 %v6901, %v7161
  %v8001 = vmax.f32 %v6904, %v7164
  %v8002 = vmax.f32 %v6907, %v7167
  %v8003 = vmax.f32 %v6910, %v7170
  %v8004 = vmax.f32 %v6913, %v7173
  %v8005 = vmax.f32 %v6916, %v7176
  %v8006 = vmax.f32 %v6919, %v7179
  %v8007 = vmax.f32 %v6922, %v7182
  %v8008 = vmax.f32 %v6925, %v7185
  %v8009 = vmax.f32 %v6928, %v7188
  %v8010 = vmax.f32 %v6931, %v7191
  %v8011 = vmax.f32 %v6934, %v7194
  %v8012 = vmax.f32 %v6937, %v7197
  %v8013 = vmax.f32 %v6940, %v7200
  %v8014 = vmax.f32 %v6943, %v7203
  %v8015 = vmax.f32 %v6946, %v7206
  %v8016 = vmax.f32 %v6949, %v7209
  %v8017 = vmax.f32 %v6952, %v7212
  %v8018 = vmax.f32 %v6955, %v7215
  %v8019 = vmax.f32 %v6958, %v7218
  %v8020 = vmax.f32 %v6961, %v7221
  %v8021 = vmax.f32 %v6964, %v7224
  %v8022 = vmax.f32 %v6967, %v7227
  %v8023 = vmax.f32 %v6970, %v7230
  %v8024 = vmax.f32 %v6973, %v7233
  %v8025 = vmax.f32 %v6976, %v7236
  %v8026 = vmax.f32 %v6979, %v7239
  %v8027 = vmax.f32 %v6982, %v7242
  %v8028 = vmax.f32 %v6985, %v7245
  %v8029 = vmax.f32 %v6988, %v7248
  %v8030 = vmax.f32 %v6991, %v7251
  %v8031 = vmax.f32 %v6994, %v7254
  %v8032 = vmax.f32 %v6997, %v7257
  %v8033 = vmax.f32 %v7000, %v7260
  %v8034 = vmax.f32 %v7003, %v7263
  %v8035 = vmax.f32 %v7006, %v7266
  %v8036 = vmax.f32 %v7009, %v7269
  %v8037 = vmax.f32 %v7012, %v7272
  %v8038 = vmax.f32 %v7015, %v7275
  %v8039 = vmax.f32 %v7018, %v7278
  %v8040 = vmax.f32 %v7301, %v7561
  %v8041 = vmax.f32 %v7304, %v7564
  %v8042 = vmax.f32 %v7307, %v7567
  %v8043 = vmax.f32 %v7310, %v7570
  %v8044 = vmax.f32 %v7313, %v7573
  %v8045 = vmax.f32 %v7316, %v7576
  %v8046 = vmax.f32 %v7319, %v7579
  %v8047 = vmax.f32 %v7322, %v7582
  %v8048 = vmax.f32 %v7325, %v7585
  %v8049 = vmax.f32 %v7328, %v7588
  %v8050 = vmax.f32 %v7331, %v7591
  %v8051 = vmax.f32 %v7334, %v7594
  %v8052 = vmax.f32 %v7337, %v7597
  %v8053 = vmax.f32 %v7340, %v7600
  %v8054 = vmax.f32 %v7343, %v7603
  %v8055 = vmax.f32 %v7346, %v7606
  %v8056 = vmax.f32 %v7349, %v7609
  %v8057 = vmax.f32 %v7352, %v7612
  %v8058 = vmax.f32 %v7355, %v7615
  %v8059 = vmax.f32 %v7358, %v7618
  %v8060 = vmax.f32 %v7361, %v7621
  %v8061 = vmax.f32 %v7364, %v7624
  %v8062 = vmax.f32 %v7367, %v7627
  %v8063 = vmax.f32 %v7370, %v7630
  %v8064 = vmax.f32 %v7373, %v7633
  %v8065 = vmax.f32 %v7376, %v7636
  %v8066 = vmax.f32 %v7379, %v7639
  %v8067 = vmax.f32 %v7382, %v7642
  %v8068 = vmax.f32 %v7385, %v7645
  %v8069 = vmax.f32 %v7388, %v7648
  %v8070 = vmax.f32 %v7391, %v7651
  %v8071 = vmax.f32 %v7394, %v7654
  %v8072 = vmax.f32 %v7397, %v7657
  %v8073 = vmax.f32 %v7400, %v7660
  %v8074 = vmax.f32 %v7403, %v7663
  %v8075 = vmax.f32 %v7406, %v7666
  %v8076 = vmax.f32 %v7409, %v7669
  %v8077 = vmax.f32 %v7412, %v7672
  %v8078 = vmax.f32 %v7415, %v7675
  %v8079 = vmax.f32 %v7418, %v7678
  %v8080 = vmax.f32 %v7421, %v7681
  %v8081 = vmax.f32 %v7424, %v7684
  %v8082 = vmax.f32 %v7427, %v7687
  %v8083 = vmax.f32 %v7430, %v7690
  %v8084 = vmax.f32 %v7433, %v7693
  %v8085 = vmax.f32 %v7436, %v7696
  %v8086 = vmax.f32 %v7439, %v7699
  %v8087 = vmax.f32 %v7442, %v7702
  %v8088 = vmax.f32 %v7445, %v7705
  %v8089 = vmax.f32 %v7448, %v7708
  %v8090 = vmax.f32 %v7451, %v7711
  %v8091 = vmax.f32 %v7454, %v7714
  %v8092 = vmax.f32 %v7457, %v7717
  %v8093 = vmax.f32 %v7460, %v7720
  %v8094 = vmax.f32 %v7463, %v7723
  %v8095 = vmax.f32 %v7466, %v7726
  %v8096 = vmax.f32 %v7469, %v7729
  %v8097 = vmax.f32 %v7472, %v7732
  %v8098 = vmax.f32 %v7475, %v7735
  %v8099 = vmax.f32 %v7478, %v7738
  %v8100 = vmax.f32 %v7481, %v7741
  %v8101 = vmax.f32 %v7484, %v7744
  %v8102 = vmax.f32 %v7487, %v7747
  %v8103 = vmax.f32 %v7490, %v7750
  %v8104 = vmax.f32 %v7493, %v7753
  %v8105 = vmax.f32 %v7496, %v7756
  %v8106 = vmax.f32 %v7499, %v7759
  %v8107 = vmax.f32 %v7502, %v7762
  %v8108 = vmax.f32 %v7505, %v7765
  %v8109 = vmax.f32 %v7508, %v7768
  %v8110 = vmax.f32 %v7511, %v7771
  %v8111 = vmax.f32 %v7514, %v7774
  %v8112 = vmax.f32 %v7517, %v7777
  %v8113 = vmax.f32 %v7520, %v7780
  %v8114 = vmax.f32 %v7523, %v7783
  %v8115 = vmax.f32 %v7526, %v7786
  %v8116 = vmax.f32 %v7529, %v7789
  %v8117 = vmax.f32 %v7532, %v7792
  %v8118 = vmax.f32 %v7535, %v7795
  %v8119 = vmax.f32 %v7538, %v7798
  %v8120 = vmax.f32 %v7800, %v7880
  %v8121 = vmax.f32 %v7801, %v7881
  %v8122 = vmax.f32 %v7802, %v7882
  %v8123 = vmax.f32 %v7803, %v7883
  %v8124 = vmax.f32 %v7804, %v7884
  %v8125 = vmax.f32 %v7805, %v7885
  %v8126 = vmax.f32 %v7806, %v7886
  %v8127 = vmax.f32 %v7807, %v7887
  %v8128 = vmax.f32 %v7808, %v7888
  %v8129 = vmax.f32 %v7809, %v7889
  %v8130 = vmax.f32 %v7810, %v7890
  %v8131 = vmax.f32 %v7811, %v7891
  %v8132 = vmax.f32 %v7812, %v7892
  %v8133 = vmax.f32 %v7813, %v7893
  %v8134 = vmax.f32 %v7814, %v7894
  %v8135 = vmax.f32 %v7815, %v7895
  %v8136 = vmax.f32 %v7816, %v7896
  %v8137 = vmax.f32 %v7817, %v7897
  %v8138 = vmax.f32 %v7818, %v7898
  %v8139 = vmax.f32 %v7819, %v7899
  %v8140 = vmax.f32 %v7820, %v7900
  %v8141 = vmax.f32 %v7821, %v7901
  %v8142 = vmax.f32 %v7822, %v7902
  %v8143 = vmax.f32 %v7823, %v7903
  %v8144 = vmax.f32 %v7824, %v7904
  %v8145 = vmax.f32 %v7825, %v7905
  %v8146 = vmax.f32 %v7826, %v7906
  %v8147 = vmax.f32 %v7827, %v7907
  %v8148 = vmax.f32 %v7828, %v7908
  %v8149 = vmax.f32 %v7829, %v7909
  %v8150 = vmax.f32 %v7830, %v7910
  %v8151 = vmax.f32 %v7831, %v7911
  %v8152 = vmax.f32 %v7832, %v7912
  %v8153 = vmax.f32 %v7833, %v7913
  %v8154 = vmax.f32 %v7834, %v7914
  %v8155 = vmax.f32 %v7835, %v7915
  %v8156 = vmax.f32 %v7836, %v7916
  %v8157 = vmax.f32 %v7837, %v7917
  %v8158 = vmax.f32 %v7838, %v7918
  %v8159 = vmax.f32 %v7839, %v7919
  %v8160 = vmax.f32 %v7840, %v7920
  %v8161 = vmax.f32 %v7841, %v7921
  %v8162 = vmax.f32 %v7842, %v7922
  %v8163 = vmax.f32 %v7843, %v7923
  %v8164 = vmax.f32 %v7844, %v7924
  %v8165 = vmax.f32 %v7845, %v7925
  %v8166 = vmax.f32 %v7846, %v7926
  %v8167 = vmax.f32 %v7847, %v7927
  %v8168 = vmax.f32 %v7848, %v7928
  %v8169 = vmax.f32 %v7849, %v7929
  %v8170 = vmax.f32 %v7850, %v7930
  %v8171 = vmax.f32 %v7851, %v7931
  %v8172 = vmax.f32 %v7852, %v7932
  %v8173 = vmax.f32 %v7853, %v7933
  %v8174 = vmax.f32 %v7854, %v7934
  %v8175 = vmax.f32 %v7855, %v7935
  %v8176 = vmax.f32 %v7856, %v7936
  %v8177 = vmax.f32 %v7857, %v7937
  %v8178 = vmax.f32 %v7858, %v7938
  %v8179 = vmax.f32 %v7859, %v7939
  %v8180 = vmax.f32 %v7860, %v7940
  %v8181 = vmax.f32 %v7861, %v7941
  %v8182 = vmax.f32 %v7862, %v7942
  %v8183 = vmax.f32 %v7863, %v7943
  %v8184 = vmax.f32 %v7864, %v7944
  %v8185 = vmax.f32 %v7865, %v7945
  %v8186 = vmax.f32 %v7866, %v7946
  %v8187 = vmax.f32 %v7867, %v7947
  %v8188 = vmax.f32 %v7868, %v7948
  %v8189 = vmax.f32 %v7869, %v7949
  %v8190 = vmax.f32 %v7870, %v7950
  %v8191 = vmax.f32 %v7871, %v7951
  %v8192 = vmax.f32 %v7872, %v7952
  %v8193 = vmax.f32 %v7873, %v7953
  %v8194 = vmax.f32 %v7874, %v7954
  %v8195 = vmax.f32 %v7875, %v7955
  %v8196 = vmax.f32 %v7876, %v7956
  %v8197 = vmax.f32 %v7877, %v7957
  %v8198 = vmax.f32 %v7878, %v7958
  %v8199 = vmax.f32 %v7879, %v7959
  %v8200 = vmax.f32 %v7960, %v8040
  %v8201 = vmax.f32 %v7961, %v8041
  %v8202 = vmax.f32 %v7962, %v8042
  %v8203 = vmax.f32 %v7963, %v8043
  %v8204 = vmax.f32 %v7964, %v8044
  %v8205 = vmax.f32 %v7965, %v8045
  %v8206 = vmax.f32 %v7966, %v8046
  %v8207 = vmax.f32 %v7967, %v8047
  %v8208 = vmax.f32 %v7968, %v8048
  %v8209 = vmax.f32 %v7969, %v8049
  %v8210 = vmax.f32 %v7970, %v8050
  %v8211 = vmax.f32 %v7971, %v8051
  %v8212 = vmax.f32 %v7972, %v8052
  %v8213 = vmax.f32 %v7973, %v8053
  %v8214 = vmax.f32 %v7974, %v8054
  %v8215 = vmax.f32 %v7975, %v8055
  %v8216 = vmax.f32 %v7976, %v8056
  %v8217 = vmax.f32 %v7977, %v8057
  %v8218 = vmax.f32 %v7978, %v8058
  %v8219 = vmax.f32 %v7979, %v8059
  %v8220 = vmax.f32 %v7980, %v8060
  %v8221 = vmax.f32 %v7981, %v8061
  %v8222 = vmax.f32 %v7982, %v8062
  %v8223 = vmax.f32 %v7983, %v8063
  %v8224 = vmax.f32 %v7984, %v8064
  %v8225 = vmax.f32 %v7985, %v8065
  %v8226 = vmax.f32 %v7986, %v8066
  %v8227 = vmax.f32 %v7987, %v8067
  %v8228 = vmax.f32 %v7988, %v8068
  %v8229 = vmax.f32 %v7989, %v8069
  %v8230 = vmax.f32 %v7990, %v8070
  %v8231 = vmax.f32 %v7991, %v8071
  %v8232 = vmax.f32 %v7992, %v8072
  %v8233 = vmax.f32 %v7993, %v8073
  %v8234 = vmax.f32 %v7994, %v8074
  %v8235 = vmax.f32 %v7995, %v8075
  %v8236 = vmax.f32 %v7996, %v8076
  %v8237 = vmax.f32 %v7997, %v8077
  %v8238 = vmax.f32 %v7998, %v8078
  %v8239 = vmax.f32 %v7999, %v8079
  %v8240 = vmax.f32 %v8000, %v8080
  %v8241 = vmax.f32 %v8001, %v8081
  %v8242 = vmax.f32 %v8002, %v8082
  %v8243 = vmax.f32 %v8003, %v8083
  %v8244 = vmax.f32 %v8004, %v8084
  %v8245 = vmax.f32 %v8005, %v8085
  %v8246 = vmax.f32 %v8006, %v8086
  %v8247 = vmax.f32 %v8007, %v8087
  %v8248 = vmax.f32 %v8008, %v8088
  %v8249 = vmax.f32 %v8009, %v8089
  %v8250 = vmax.f32 %v8010, %v8090
  %v8251 = vmax.f32 %v8011, %v8091
  %v8252 = vmax.f32 %v8012, %v8092
  %v8253 = vmax.f32 %v8013, %v8093
  %v8254 = vmax.f32 %v8014, %v8094
  %v8255 = vmax.f32 %v8015, %v8095
  %v8256 = vmax.f32 %v8016, %v8096
  %v8257 = vmax.f32 %v8017, %v8097
  %v8258 = vmax.f32 %v8018, %v8098
  %v8259 = vmax.f32 %v8019, %v8099
  %v8260 = vmax.f32 %v8020, %v8100
  %v8261 = vmax.f32 %v8021, %v8101
  %v8262 = vmax.f32 %v8022, %v8102
  %v8263 = vmax.f32 %v8023, %v8103
  %v8264 = vmax.f32 %v8024, %v8104
  %v8265 = vmax.f32 %v8025, %v8105
  %v8266 = vmax.f32 %v8026, %v8106
  %v8267 = vmax.f32 %v8027, %v8107
  %v8268 = vmax.f32 %v8028, %v8108
  %v8269 = vmax.f32 %v8029, %v8109
  %v8270 = vmax.f32 %v8030, %v8110
  %v8271 = vmax.f32 %v8031, %v8111
  %v8272 = vmax.f32 %v8032, %v8112
  %v8273 = vmax.f32 %v8033, %v8113
  %v8274 = vmax.f32 %v8034, %v8114
  %v8275 = vmax.f32 %v8035, %v8115
  %v8276 = vmax.f32 %v8036, %v8116
  %v8277 = vmax.f32 %v8037, %v8117
  %v8278 = vmax.f32 %v8038, %v8118
  %v8279 = vmax.f32 %v8039, %v8119
  %v8280 = vmax.f32 %v8120, %v8200
  %v8281 = vmax.f32 %v8121, %v8201
  %v8282 = vmax.f32 %v8122, %v8202
  %v8283 = vmax.f32 %v8123, %v8203
  %v8284 = vmax.f32 %v8124, %v8204
  %v8285 = vmax.f32 %v8125, %v8205
  %v8286 = vmax.f32 %v8126, %v8206
  %v8287 = vmax.f32 %v8127, %v8207
  %v8288 = vmax.f32 %v8128, %v8208
  %v8289 = vmax.f32 %v8129, %v8209
  %v8290 = vmax.f32 %v8130, %v8210
  %v8291 = vmax.f32 %v8131, %v8211
  %v8292 = vmax.f32 %v8132, %v8212
  %v8293 = vmax.f32 %v8133, %v8213
  %v8294 = vmax.f32 %v8134, %v8214
  %v8295 = vmax.f32 %v8135, %v8215
  %v8296 = vmax.f32 %v8136, %v8216
  %v8297 = vmax.f32 %v8137, %v8217
  %v8298 = vmax.f32 %v8138, %v8218
  %v8299 = vmax.f32 %v8139, %v8219
  %v8300 = vmax.f32 %v8140, %v8220
  %v8301 = vmax.f32 %v8141, %v8221
  %v8302 = vmax.f32 %v8142, %v8222
  %v8303 = vmax.f32 %v8143, %v8223
  %v8304 = vmax.f32 %v8144, %v8224
  %v8305 = vmax.f32 %v8145, %v8225
  %v8306 = vmax.f32 %v8146, %v8226
  %v8307 = vmax.f32 %v8147, %v8227
  %v8308 = vmax.f32 %v8148, %v8228
  %v8309 = vmax.f32 %v8149, %v8229
  %v8310 = vmax.f32 %v8150, %v8230
  %v8311 = vmax.f32 %v8151, %v8231
  %v8312 = vmax.f32 %v8152, %v8232
  %v8313 = vmax.f32 %v8153, %v8233
  %v8314 = vmax.f32 %v8154, %v8234
  %v8315 = vmax.f32 %v8155, %v8235
  %v8316 = vmax.f32 %v8156, %v8236
  %v8317 = vmax.f32 %v8157, %v8237
  %v8318 = vmax.f32 %v8158, %v8238
  %v8319 = vmax.f32 %v8159, %v8239
  %v8320 = vmax.f32 %v8160, %v8240
  %v8321 = vmax.f32 %v8161, %v8241
  %v8322 = vmax.f32 %v8162, %v8242
  %v8323 = vmax.f32 %v8163, %v8243
  %v8324 = vmax.f32 %v8164, %v8244
  %v8325 = vmax.f32 %v8165, %v8245
  %v8326 = vmax.f32 %v8166, %v8246
  %v8327 = vmax.f32 %v8167, %v8247
  %v8328 = vmax.f32 %v8168, %v8248
  %v8329 = vmax.f32 %v8169, %v8249
  %v8330 = vmax.f32 %v8170, %v8250
  %v8331 = vmax.f32 %v8171, %v8251
  %v8332 = vmax.f32 %v8172, %v8252
  %v8333 = vmax.f32 %v8173, %v8253
  %v8334 = vmax.f32 %v8174, %v8254
  %v8335 = vmax.f32 %v8175, %v8255
  %v8336 = vmax.f32 %v8176, %v8256
  %v8337 = vmax.f32 %v8177, %v8257
  %v8338 = vmax.f32 %v8178, %v8258
  %v8339 = vmax.f32 %v8179, %v8259
  %v8340 = vmax.f32 %v8180, %v8260
  %v8341 = vmax.f32 %v8181, %v8261
  %v8342 = vmax.f32 %v8182, %v8262
  %v8343 = vmax.f32 %v8183, %v8263
  %v8344 = vmax.f32 %v8184, %v8264
  %v8345 = vmax.f32 %v8185, %v8265
  %v8346 = vmax.f32 %v8186, %v8266
  %v8347 = vmax.f32 %v8187, %v8267
  %v8348 = vmax.f32 %v8188, %v8268
  %v8349 = vmax.f32 %v8189, %v8269
  %v8350 = vmax.f32 %v8190, %v8270
  %v8351 = vmax.f32 %v8191, %v8271
  %v8352 = vmax.f32 %v8192, %v8272
  %v8353 = vmax.f32 %v8193, %v8273
  %v8354 = vmax.f32 %v8194, %v8274
  %v8355 = vmax.f32 %v8195, %v8275
  %v8356 = vmax.f32 %v8196, %v8276
  %v8357 = vmax.f32 %v8197, %v8277
  %v8358 = vmax.f32 %v8198, %v8278
  %v8359 = vmax.f32 %v8199, %v8279
  %v8360 = vmax.f32 %v5642, %v8280
  %v8361 = vmax.f32 %v5643, %v8281
  %v8362 = vmax.f32 %v5644, %v8282
  %v8363 = vmax.f32 %v5645, %v8283
  %v8364 = vmax.f32 %v5646, %v8284
  %v8365 = vmax.f32 %v5647, %v8285
  %v8366 = vmax.f32 %v5648, %v8286
  %v8367 = vmax.f32 %v5649, %v8287
  %v8368 = vmax.f32 %v5650, %v8288
  %v8369 = vmax.f32 %v5651, %v8289
  %v8370 = vmax.f32 %v5652, %v8290
  %v8371 = vmax.f32 %v5653, %v8291
  %v8372 = vmax.f32 %v5654, %v8292
  %v8373 = vmax.f32 %v5655, %v8293
  %v8374 = vmax.f32 %v5656, %v8294
  %v8375 = vmax.f32 %v5657, %v8295
  %v8376 = vmax.f32 %v5658, %v8296
  %v8377 = vmax.f32 %v5659, %v8297
  %v8378 = vmax.f32 %v5660, %v8298
  %v8379 = vmax.f32 %v5661, %v8299
  %v8380 = vmax.f32 %v5662, %v8300
  %v8381 = vmax.f32 %v5663, %v8301
  %v8382 = vmax.f32 %v5664, %v8302
  %v8383 = vmax.f32 %v5665, %v8303
  %v8384 = vmax.f32 %v5666, %v8304
  %v8385 = vmax.f32 %v5667, %v8305
  %v8386 = vmax.f32 %v5668, %v8306
  %v8387 = vmax.f32 %v5669, %v8307
  %v8388 = vmax.f32 %v5670, %v8308
  %v8389 = vmax.f32 %v5671, %v8309
  %v8390 = vmax.f32 %v5672, %v8310
  %v8391 = vmax.f32 %v5673, %v8311
  %v8392 = vmax.f32 %v5674, %v8312
  %v8393 = vmax.f32 %v5675, %v8313
  %v8394 = vmax.f32 %v5676, %v8314
  %v8395 = vmax.f32 %v5677, %v8315
  %v8396 = vmax.f32 %v5678, %v8316
  %v8397 = vmax.f32 %v5679, %v8317
  %v8398 = vmax.f32 %v5680, %v8318
  %v8399 = vmax.f32 %v5681, %v8319
  %v8400 = vmax.f32 %v5682, %v8320
  %v8401 = vmax.f32 %v5683, %v8321
  %v8402 = vmax.f32 %v5684, %v8322
  %v8403 = vmax.f32 %v5685, %v8323
  %v8404 = vmax.f32 %v5686, %v8324
  %v8405 = vmax.f32 %v5687, %v8325
  %v8406 = vmax.f32 %v5688, %v8326
  %v8407 = vmax.f32 %v5689, %v8327
  %v8408 = vmax.f32 %v5690, %v8328
  %v8409 = vmax.f32 %v5691, %v8329
  %v8410 = vmax.f32 %v5692, %v8330
  %v8411 = vmax.f32 %v5693, %v8331
  %v8412 = vmax.f32 %v5694, %v8332
  %v8413 = vmax.f32 %v5695, %v8333
  %v8414 = vmax.f32 %v5696, %v8334
  %v8415 = vmax.f32 %v5697, %v8335
  %v8416 = vmax.f32 %v5698, %v8336
  %v8417 = vmax.f32 %v5699, %v8337
  %v8418 = vmax.f32 %v5700, %v8338
  %v8419 = vmax.f32 %v5701, %v8339
  %v8420 = vmax.f32 %v5702, %v8340
  %v8421 = vmax.f32 %v5703, %v8341
  %v8422 = vmax.f32 %v5704, %v8342
  %v8423 = vmax.f32 %v5705, %v8343
  %v8424 = vmax.f32 %v5706, %v8344
  %v8425 = vmax.f32 %v5707, %v8345
  %v8426 = vmax.f32 %v5708, %v8346
  %v8427 = vmax.f32 %v5709, %v8347
  %v8428 = vmax.f32 %v5710, %v8348
  %v8429 = vmax.f32 %v5711, %v8349
  %v8430 = vmax.f32 %v5712, %v8350
  %v8431 = vmax.f32 %v5713, %v8351
  %v8432 = vmax.f32 %v5714, %v8352
  %v8433 = vmax.f32 %v5715, %v8353
  %v8434 = vmax.f32 %v5716, %v8354
  %v8435 = vmax.f32 %v5717, %v8355
  %v8436 = vmax.f32 %v5718, %v8356
  %v8437 = vmax.f32 %v5719, %v8357
  %v8438 = vmax.f32 %v5720, %v8358
  %v8439 = vmax.f32 %v5721, %v8359
  %8440 = vmatpush.msra.mxu0 0.0
  %8441 = vmatpush.msra.mxu0 0.0
  %8442 = vmatpush.msra.mxu0 0.0
  %8443 = vmatpush.msra.mxu0 0.0
  %8444 = vmatpush.msra.mxu0 0.0
  %8445 = vmatpush.msra.mxu0 0.0
  %8446 = vmatpush.msra.mxu0 0.0
  %8447 = vmatpush.msra.mxu0 0.0
  %8448 = vmatpush.msra.mxu0 0.0
  %8449 = vmatpush.msra.mxu0 0.0
  %8450 = vmatpush.msra.mxu0 0.0
  %8451 = vmatpush.msra.mxu0 0.0
  %8452 = vmatpush.msra.mxu0 0.0
  %8453 = vmatpush.msra.mxu0 0.0
  %8454 = vmatpush.msra.mxu0 0.0
  %8455 = vmatpush.msra.mxu0 %v28
  %8456 = vmatmul.f32.gmra.mxu0 %v112
  %v8457 = vpop.f32.mrf.mxu0
  %v8458 = vadd.f32 0.0, %v8457
  %8459 = vmatmul.f32.gmra.mxu0 %v115
  %v8460 = vpop.f32.mrf.mxu0
  %v8461 = vadd.f32 0.0, %v8460
  %8462 = vmatmul.f32.gmra.mxu0 %v118
  %v8463 = vpop.f32.mrf.mxu0
  %v8464 = vadd.f32 0.0, %v8463
  %8465 = vmatmul.f32.gmra.mxu0 %v121
  %v8466 = vpop.f32.mrf.mxu0
  %v8467 = vadd.f32 0.0, %v8466
  %8468 = vmatmul.f32.gmra.mxu0 %v124
  %v8469 = vpop.f32.mrf.mxu0
  %v8470 = vadd.f32 0.0, %v8469
  %8471 = vmatmul.f32.gmra.mxu0 %v127
  %v8472 = vpop.f32.mrf.mxu0
  %v8473 = vadd.f32 0.0, %v8472
  %8474 = vmatmul.f32.gmra.mxu0 %v130
  %v8475 = vpop.f32.mrf.mxu0
  %v8476 = vadd.f32 0.0, %v8475
  %8477 = vmatmul.f32.gmra.mxu0 %v133
  %v8478 = vpop.f32.mrf.mxu0
  %v8479 = vadd.f32 0.0, %v8478
  %8480 = vmatmul.f32.gmra.mxu0 %v136
  %v8481 = vpop.f32.mrf.mxu0
  %v8482 = vadd.f32 0.0, %v8481
  %8483 = vmatmul.f32.gmra.mxu0 %v139
  %v8484 = vpop.f32.mrf.mxu0
  %v8485 = vadd.f32 0.0, %v8484
  %8486 = vmatmul.f32.gmra.mxu0 %v142
  %v8487 = vpop.f32.mrf.mxu0
  %v8488 = vadd.f32 0.0, %v8487
  %8489 = vmatmul.f32.gmra.mxu0 %v145
  %v8490 = vpop.f32.mrf.mxu0
  %v8491 = vadd.f32 0.0, %v8490
  %8492 = vmatmul.f32.gmra.mxu0 %v148
  %v8493 = vpop.f32.mrf.mxu0
  %v8494 = vadd.f32 0.0, %v8493
  %8495 = vmatmul.f32.gmra.mxu0 %v151
  %v8496 = vpop.f32.mrf.mxu0
  %v8497 = vadd.f32 0.0, %v8496
  %8498 = vmatmul.f32.gmra.mxu0 %v154
  %v8499 = vpop.f32.mrf.mxu0
  %v8500 = vadd.f32 0.0, %v8499
  %8501 = vmatmul.f32.gmra.mxu0 %v157
  %v8502 = vpop.f32.mrf.mxu0
  %v8503 = vadd.f32 0.0, %v8502
  %8504 = vmatmul.f32.gmra.mxu0 %v160
  %v8505 = vpop.f32.mrf.mxu0
  %v8506 = vadd.f32 0.0, %v8505
  %8507 = vmatmul.f32.gmra.mxu0 %v163
  %v8508 = vpop.f32.mrf.mxu0
  %v8509 = vadd.f32 0.0, %v8508
  %8510 = vmatmul.f32.gmra.mxu0 %v166
  %v8511 = vpop.f32.mrf.mxu0
  %v8512 = vadd.f32 0.0, %v8511
  %8513 = vmatmul.f32.gmra.mxu0 %v169
  %v8514 = vpop.f32.mrf.mxu0
  %v8515 = vadd.f32 0.0, %v8514
  %8516 = vmatmul.f32.gmra.mxu0 %v172
  %v8517 = vpop.f32.mrf.mxu0
  %v8518 = vadd.f32 0.0, %v8517
  %8519 = vmatmul.f32.gmra.mxu0 %v175
  %v8520 = vpop.f32.mrf.mxu0
  %v8521 = vadd.f32 0.0, %v8520
  %8522 = vmatmul.f32.gmra.mxu0 %v178
  %v8523 = vpop.f32.mrf.mxu0
  %v8524 = vadd.f32 0.0, %v8523
  %8525 = vmatmul.f32.gmra.mxu0 %v181
  %v8526 = vpop.f32.mrf.mxu0
  %v8527 = vadd.f32 0.0, %v8526
  %8528 = vmatmul.f32.gmra.mxu0 %v184
  %v8529 = vpop.f32.mrf.mxu0
  %v8530 = vadd.f32 0.0, %v8529
  %8531 = vmatmul.f32.gmra.mxu0 %v187
  %v8532 = vpop.f32.mrf.mxu0
  %v8533 = vadd.f32 0.0, %v8532
  %8534 = vmatmul.f32.gmra.mxu0 %v190
  %v8535 = vpop.f32.mrf.mxu0
  %v8536 = vadd.f32 0.0, %v8535
  %8537 = vmatmul.f32.gmra.mxu0 %v193
  %v8538 = vpop.f32.mrf.mxu0
  %v8539 = vadd.f32 0.0, %v8538
  %8540 = vmatmul.f32.gmra.mxu0 %v196
  %v8541 = vpop.f32.mrf.mxu0
  %v8542 = vadd.f32 0.0, %v8541
  %8543 = vmatmul.f32.gmra.mxu0 %v199
  %v8544 = vpop.f32.mrf.mxu0
  %v8545 = vadd.f32 0.0, %v8544
  %8546 = vmatmul.f32.gmra.mxu0 %v202
  %v8547 = vpop.f32.mrf.mxu0
  %v8548 = vadd.f32 0.0, %v8547
  %8549 = vmatmul.f32.gmra.mxu0 %v205
  %v8550 = vpop.f32.mrf.mxu0
  %v8551 = vadd.f32 0.0, %v8550
  %8552 = vmatmul.f32.gmra.mxu0 %v208
  %v8553 = vpop.f32.mrf.mxu0
  %v8554 = vadd.f32 0.0, %v8553
  %8555 = vmatmul.f32.gmra.mxu0 %v211
  %v8556 = vpop.f32.mrf.mxu0
  %v8557 = vadd.f32 0.0, %v8556
  %8558 = vmatmul.f32.gmra.mxu0 %v214
  %v8559 = vpop.f32.mrf.mxu0
  %v8560 = vadd.f32 0.0, %v8559
  %8561 = vmatmul.f32.gmra.mxu0 %v217
  %v8562 = vpop.f32.mrf.mxu0
  %v8563 = vadd.f32 0.0, %v8562
  %8564 = vmatmul.f32.gmra.mxu0 %v220
  %v8565 = vpop.f32.mrf.mxu0
  %v8566 = vadd.f32 0.0, %v8565
  %8567 = vmatmul.f32.gmra.mxu0 %v223
  %v8568 = vpop.f32.mrf.mxu0
  %v8569 = vadd.f32 0.0, %v8568
  %8570 = vmatmul.f32.gmra.mxu0 %v226
  %v8571 = vpop.f32.mrf.mxu0
  %v8572 = vadd.f32 0.0, %v8571
  %8573 = vmatmul.f32.gmra.mxu0 %v229
  %v8574 = vpop.f32.mrf.mxu0
  %v8575 = vadd.f32 0.0, %v8574
  %8576 = vmatmul.f32.gmra.mxu0 %v232
  %v8577 = vpop.f32.mrf.mxu0
  %v8578 = vadd.f32 0.0, %v8577
  %8579 = vmatmul.f32.gmra.mxu0 %v235
  %v8580 = vpop.f32.mrf.mxu0
  %v8581 = vadd.f32 0.0, %v8580
  %8582 = vmatmul.f32.gmra.mxu0 %v238
  %v8583 = vpop.f32.mrf.mxu0
  %v8584 = vadd.f32 0.0, %v8583
  %8585 = vmatmul.f32.gmra.mxu0 %v241
  %v8586 = vpop.f32.mrf.mxu0
  %v8587 = vadd.f32 0.0, %v8586
  %8588 = vmatmul.f32.gmra.mxu0 %v244
  %v8589 = vpop.f32.mrf.mxu0
  %v8590 = vadd.f32 0.0, %v8589
  %8591 = vmatmul.f32.gmra.mxu0 %v247
  %v8592 = vpop.f32.mrf.mxu0
  %v8593 = vadd.f32 0.0, %v8592
  %8594 = vmatmul.f32.gmra.mxu0 %v250
  %v8595 = vpop.f32.mrf.mxu0
  %v8596 = vadd.f32 0.0, %v8595
  %8597 = vmatmul.f32.gmra.mxu0 %v253
  %v8598 = vpop.f32.mrf.mxu0
  %v8599 = vadd.f32 0.0, %v8598
  %8600 = vmatmul.f32.gmra.mxu0 %v256
  %v8601 = vpop.f32.mrf.mxu0
  %v8602 = vadd.f32 0.0, %v8601
  %8603 = vmatmul.f32.gmra.mxu0 %v259
  %v8604 = vpop.f32.mrf.mxu0
  %v8605 = vadd.f32 0.0, %v8604
  %8606 = vmatmul.f32.gmra.mxu0 %v262
  %v8607 = vpop.f32.mrf.mxu0
  %v8608 = vadd.f32 0.0, %v8607
  %8609 = vmatmul.f32.gmra.mxu0 %v265
  %v8610 = vpop.f32.mrf.mxu0
  %v8611 = vadd.f32 0.0, %v8610
  %8612 = vmatmul.f32.gmra.mxu0 %v268
  %v8613 = vpop.f32.mrf.mxu0
  %v8614 = vadd.f32 0.0, %v8613
  %8615 = vmatmul.f32.gmra.mxu0 %v271
  %v8616 = vpop.f32.mrf.mxu0
  %v8617 = vadd.f32 0.0, %v8616
  %8618 = vmatmul.f32.gmra.mxu0 %v274
  %v8619 = vpop.f32.mrf.mxu0
  %v8620 = vadd.f32 0.0, %v8619
  %8621 = vmatmul.f32.gmra.mxu0 %v277
  %v8622 = vpop.f32.mrf.mxu0
  %v8623 = vadd.f32 0.0, %v8622
  %8624 = vmatmul.f32.gmra.mxu0 %v280
  %v8625 = vpop.f32.mrf.mxu0
  %v8626 = vadd.f32 0.0, %v8625
  %8627 = vmatmul.f32.gmra.mxu0 %v283
  %v8628 = vpop.f32.mrf.mxu0
  %v8629 = vadd.f32 0.0, %v8628
  %8630 = vmatmul.f32.gmra.mxu0 %v286
  %v8631 = vpop.f32.mrf.mxu0
  %v8632 = vadd.f32 0.0, %v8631
  %8633 = vmatmul.f32.gmra.mxu0 %v289
  %v8634 = vpop.f32.mrf.mxu0
  %v8635 = vadd.f32 0.0, %v8634
  %8636 = vmatmul.f32.gmra.mxu0 %v292
  %v8637 = vpop.f32.mrf.mxu0
  %v8638 = vadd.f32 0.0, %v8637
  %8639 = vmatmul.f32.gmra.mxu0 %v295
  %v8640 = vpop.f32.mrf.mxu0
  %v8641 = vadd.f32 0.0, %v8640
  %8642 = vmatmul.f32.gmra.mxu0 %v298
  %v8643 = vpop.f32.mrf.mxu0
  %v8644 = vadd.f32 0.0, %v8643
  %8645 = vmatmul.f32.gmra.mxu0 %v301
  %v8646 = vpop.f32.mrf.mxu0
  %v8647 = vadd.f32 0.0, %v8646
  %8648 = vmatmul.f32.gmra.mxu0 %v304
  %v8649 = vpop.f32.mrf.mxu0
  %v8650 = vadd.f32 0.0, %v8649
  %8651 = vmatmul.f32.gmra.mxu0 %v307
  %v8652 = vpop.f32.mrf.mxu0
  %v8653 = vadd.f32 0.0, %v8652
  %8654 = vmatmul.f32.gmra.mxu0 %v310
  %v8655 = vpop.f32.mrf.mxu0
  %v8656 = vadd.f32 0.0, %v8655
  %8657 = vmatmul.f32.gmra.mxu0 %v313
  %v8658 = vpop.f32.mrf.mxu0
  %v8659 = vadd.f32 0.0, %v8658
  %8660 = vmatmul.f32.gmra.mxu0 %v316
  %v8661 = vpop.f32.mrf.mxu0
  %v8662 = vadd.f32 0.0, %v8661
  %8663 = vmatmul.f32.gmra.mxu0 %v319
  %v8664 = vpop.f32.mrf.mxu0
  %v8665 = vadd.f32 0.0, %v8664
  %8666 = vmatmul.f32.gmra.mxu0 %v322
  %v8667 = vpop.f32.mrf.mxu0
  %v8668 = vadd.f32 0.0, %v8667
  %8669 = vmatmul.f32.gmra.mxu0 %v325
  %v8670 = vpop.f32.mrf.mxu0
  %v8671 = vadd.f32 0.0, %v8670
  %8672 = vmatmul.f32.gmra.mxu0 %v328
  %v8673 = vpop.f32.mrf.mxu0
  %v8674 = vadd.f32 0.0, %v8673
  %8675 = vmatmul.f32.gmra.mxu0 %v331
  %v8676 = vpop.f32.mrf.mxu0
  %v8677 = vadd.f32 0.0, %v8676
  %8678 = vmatmul.f32.gmra.mxu0 %v334
  %v8679 = vpop.f32.mrf.mxu0
  %v8680 = vadd.f32 0.0, %v8679
  %8681 = vmatmul.f32.gmra.mxu0 %v337
  %v8682 = vpop.f32.mrf.mxu0
  %v8683 = vadd.f32 0.0, %v8682
  %8684 = vmatmul.f32.gmra.mxu0 %v340
  %v8685 = vpop.f32.mrf.mxu0
  %v8686 = vadd.f32 0.0, %v8685
  %8687 = vmatmul.f32.gmra.mxu0 %v343
  %v8688 = vpop.f32.mrf.mxu0
  %v8689 = vadd.f32 0.0, %v8688
  %8690 = vmatmul.f32.gmra.mxu0 %v346
  %v8691 = vpop.f32.mrf.mxu0
  %v8692 = vadd.f32 0.0, %v8691
  %8693 = vmatmul.f32.gmra.mxu0 %v349
  %v8694 = vpop.f32.mrf.mxu0
  %v8695 = vadd.f32 0.0, %v8694
  %8696 = vdwg.mxu0
  %v8698 = vrot.slane %v29, 1
  %v8699 = vsel %vm610, %v5980, %v8698
  %8701 = vmatpush.msra.mxu0 0.0
  %8702 = vmatpush.msra.mxu0 0.0
  %8703 = vmatpush.msra.mxu0 0.0
  %8704 = vmatpush.msra.mxu0 0.0
  %8705 = vmatpush.msra.mxu0 0.0
  %8706 = vmatpush.msra.mxu0 0.0
  %8707 = vmatpush.msra.mxu0 0.0
  %8708 = vmatpush.msra.mxu0 0.0
  %8709 = vmatpush.msra.mxu0 0.0
  %8710 = vmatpush.msra.mxu0 0.0
  %8711 = vmatpush.msra.mxu0 0.0
  %8712 = vmatpush.msra.mxu0 0.0
  %8713 = vmatpush.msra.mxu0 0.0
  %8714 = vmatpush.msra.mxu0 0.0
  %8715 = vmatpush.msra.mxu0 0.0
  %8716 = vmatpush.msra.mxu0 %v8699
  %8717 = vmatmul.f32.gmra.mxu0 %v112
  %v8718 = vpop.f32.mrf.mxu0
  %v8719 = vadd.f32 0.0, %v8718
  %8720 = vmatmul.f32.gmra.mxu0 %v115
  %v8721 = vpop.f32.mrf.mxu0
  %v8722 = vadd.f32 0.0, %v8721
  %8723 = vmatmul.f32.gmra.mxu0 %v118
  %v8724 = vpop.f32.mrf.mxu0
  %v8725 = vadd.f32 0.0, %v8724
  %8726 = vmatmul.f32.gmra.mxu0 %v121
  %v8727 = vpop.f32.mrf.mxu0
  %v8728 = vadd.f32 0.0, %v8727
  %8729 = vmatmul.f32.gmra.mxu0 %v124
  %v8730 = vpop.f32.mrf.mxu0
  %v8731 = vadd.f32 0.0, %v8730
  %8732 = vmatmul.f32.gmra.mxu0 %v127
  %v8733 = vpop.f32.mrf.mxu0
  %v8734 = vadd.f32 0.0, %v8733
  %8735 = vmatmul.f32.gmra.mxu0 %v130
  %v8736 = vpop.f32.mrf.mxu0
  %v8737 = vadd.f32 0.0, %v8736
  %8738 = vmatmul.f32.gmra.mxu0 %v133
  %v8739 = vpop.f32.mrf.mxu0
  %v8740 = vadd.f32 0.0, %v8739
  %8741 = vmatmul.f32.gmra.mxu0 %v136
  %v8742 = vpop.f32.mrf.mxu0
  %v8743 = vadd.f32 0.0, %v8742
  %8744 = vmatmul.f32.gmra.mxu0 %v139
  %v8745 = vpop.f32.mrf.mxu0
  %v8746 = vadd.f32 0.0, %v8745
  %8747 = vmatmul.f32.gmra.mxu0 %v142
  %v8748 = vpop.f32.mrf.mxu0
  %v8749 = vadd.f32 0.0, %v8748
  %8750 = vmatmul.f32.gmra.mxu0 %v145
  %v8751 = vpop.f32.mrf.mxu0
  %v8752 = vadd.f32 0.0, %v8751
  %8753 = vmatmul.f32.gmra.mxu0 %v148
  %v8754 = vpop.f32.mrf.mxu0
  %v8755 = vadd.f32 0.0, %v8754
  %8756 = vmatmul.f32.gmra.mxu0 %v151
  %v8757 = vpop.f32.mrf.mxu0
  %v8758 = vadd.f32 0.0, %v8757
  %8759 = vmatmul.f32.gmra.mxu0 %v154
  %v8760 = vpop.f32.mrf.mxu0
  %v8761 = vadd.f32 0.0, %v8760
  %8762 = vmatmul.f32.gmra.mxu0 %v157
  %v8763 = vpop.f32.mrf.mxu0
  %v8764 = vadd.f32 0.0, %v8763
  %8765 = vmatmul.f32.gmra.mxu0 %v160
  %v8766 = vpop.f32.mrf.mxu0
  %v8767 = vadd.f32 0.0, %v8766
  %8768 = vmatmul.f32.gmra.mxu0 %v163
  %v8769 = vpop.f32.mrf.mxu0
  %v8770 = vadd.f32 0.0, %v8769
  %8771 = vmatmul.f32.gmra.mxu0 %v166
  %v8772 = vpop.f32.mrf.mxu0
  %v8773 = vadd.f32 0.0, %v8772
  %8774 = vmatmul.f32.gmra.mxu0 %v169
  %v8775 = vpop.f32.mrf.mxu0
  %v8776 = vadd.f32 0.0, %v8775
  %8777 = vmatmul.f32.gmra.mxu0 %v172
  %v8778 = vpop.f32.mrf.mxu0
  %v8779 = vadd.f32 0.0, %v8778
  %8780 = vmatmul.f32.gmra.mxu0 %v175
  %v8781 = vpop.f32.mrf.mxu0
  %v8782 = vadd.f32 0.0, %v8781
  %8783 = vmatmul.f32.gmra.mxu0 %v178
  %v8784 = vpop.f32.mrf.mxu0
  %v8785 = vadd.f32 0.0, %v8784
  %8786 = vmatmul.f32.gmra.mxu0 %v181
  %v8787 = vpop.f32.mrf.mxu0
  %v8788 = vadd.f32 0.0, %v8787
  %8789 = vmatmul.f32.gmra.mxu0 %v184
  %v8790 = vpop.f32.mrf.mxu0
  %v8791 = vadd.f32 0.0, %v8790
  %8792 = vmatmul.f32.gmra.mxu0 %v187
  %v8793 = vpop.f32.mrf.mxu0
  %v8794 = vadd.f32 0.0, %v8793
  %8795 = vmatmul.f32.gmra.mxu0 %v190
  %v8796 = vpop.f32.mrf.mxu0
  %v8797 = vadd.f32 0.0, %v8796
  %8798 = vmatmul.f32.gmra.mxu0 %v193
  %v8799 = vpop.f32.mrf.mxu0
  %v8800 = vadd.f32 0.0, %v8799
  %8801 = vmatmul.f32.gmra.mxu0 %v196
  %v8802 = vpop.f32.mrf.mxu0
  %v8803 = vadd.f32 0.0, %v8802
  %8804 = vmatmul.f32.gmra.mxu0 %v199
  %v8805 = vpop.f32.mrf.mxu0
  %v8806 = vadd.f32 0.0, %v8805
  %8807 = vmatmul.f32.gmra.mxu0 %v202
  %v8808 = vpop.f32.mrf.mxu0
  %v8809 = vadd.f32 0.0, %v8808
  %8810 = vmatmul.f32.gmra.mxu0 %v205
  %v8811 = vpop.f32.mrf.mxu0
  %v8812 = vadd.f32 0.0, %v8811
  %8813 = vmatmul.f32.gmra.mxu0 %v208
  %v8814 = vpop.f32.mrf.mxu0
  %v8815 = vadd.f32 0.0, %v8814
  %8816 = vmatmul.f32.gmra.mxu0 %v211
  %v8817 = vpop.f32.mrf.mxu0
  %v8818 = vadd.f32 0.0, %v8817
  %8819 = vmatmul.f32.gmra.mxu0 %v214
  %v8820 = vpop.f32.mrf.mxu0
  %v8821 = vadd.f32 0.0, %v8820
  %8822 = vmatmul.f32.gmra.mxu0 %v217
  %v8823 = vpop.f32.mrf.mxu0
  %v8824 = vadd.f32 0.0, %v8823
  %8825 = vmatmul.f32.gmra.mxu0 %v220
  %v8826 = vpop.f32.mrf.mxu0
  %v8827 = vadd.f32 0.0, %v8826
  %8828 = vmatmul.f32.gmra.mxu0 %v223
  %v8829 = vpop.f32.mrf.mxu0
  %v8830 = vadd.f32 0.0, %v8829
  %8831 = vmatmul.f32.gmra.mxu0 %v226
  %v8832 = vpop.f32.mrf.mxu0
  %v8833 = vadd.f32 0.0, %v8832
  %8834 = vmatmul.f32.gmra.mxu0 %v229
  %v8835 = vpop.f32.mrf.mxu0
  %v8836 = vadd.f32 0.0, %v8835
  %8837 = vmatmul.f32.gmra.mxu0 %v232
  %v8838 = vpop.f32.mrf.mxu0
  %v8839 = vadd.f32 0.0, %v8838
  %8840 = vmatmul.f32.gmra.mxu0 %v235
  %v8841 = vpop.f32.mrf.mxu0
  %v8842 = vadd.f32 0.0, %v8841
  %8843 = vmatmul.f32.gmra.mxu0 %v238
  %v8844 = vpop.f32.mrf.mxu0
  %v8845 = vadd.f32 0.0, %v8844
  %8846 = vmatmul.f32.gmra.mxu0 %v241
  %v8847 = vpop.f32.mrf.mxu0
  %v8848 = vadd.f32 0.0, %v8847
  %8849 = vmatmul.f32.gmra.mxu0 %v244
  %v8850 = vpop.f32.mrf.mxu0
  %v8851 = vadd.f32 0.0, %v8850
  %8852 = vmatmul.f32.gmra.mxu0 %v247
  %v8853 = vpop.f32.mrf.mxu0
  %v8854 = vadd.f32 0.0, %v8853
  %8855 = vmatmul.f32.gmra.mxu0 %v250
  %v8856 = vpop.f32.mrf.mxu0
  %v8857 = vadd.f32 0.0, %v8856
  %8858 = vmatmul.f32.gmra.mxu0 %v253
  %v8859 = vpop.f32.mrf.mxu0
  %v8860 = vadd.f32 0.0, %v8859
  %8861 = vmatmul.f32.gmra.mxu0 %v256
  %v8862 = vpop.f32.mrf.mxu0
  %v8863 = vadd.f32 0.0, %v8862
  %8864 = vmatmul.f32.gmra.mxu0 %v259
  %v8865 = vpop.f32.mrf.mxu0
  %v8866 = vadd.f32 0.0, %v8865
  %8867 = vmatmul.f32.gmra.mxu0 %v262
  %v8868 = vpop.f32.mrf.mxu0
  %v8869 = vadd.f32 0.0, %v8868
  %8870 = vmatmul.f32.gmra.mxu0 %v265
  %v8871 = vpop.f32.mrf.mxu0
  %v8872 = vadd.f32 0.0, %v8871
  %8873 = vmatmul.f32.gmra.mxu0 %v268
  %v8874 = vpop.f32.mrf.mxu0
  %v8875 = vadd.f32 0.0, %v8874
  %8876 = vmatmul.f32.gmra.mxu0 %v271
  %v8877 = vpop.f32.mrf.mxu0
  %v8878 = vadd.f32 0.0, %v8877
  %8879 = vmatmul.f32.gmra.mxu0 %v274
  %v8880 = vpop.f32.mrf.mxu0
  %v8881 = vadd.f32 0.0, %v8880
  %8882 = vmatmul.f32.gmra.mxu0 %v277
  %v8883 = vpop.f32.mrf.mxu0
  %v8884 = vadd.f32 0.0, %v8883
  %8885 = vmatmul.f32.gmra.mxu0 %v280
  %v8886 = vpop.f32.mrf.mxu0
  %v8887 = vadd.f32 0.0, %v8886
  %8888 = vmatmul.f32.gmra.mxu0 %v283
  %v8889 = vpop.f32.mrf.mxu0
  %v8890 = vadd.f32 0.0, %v8889
  %8891 = vmatmul.f32.gmra.mxu0 %v286
  %v8892 = vpop.f32.mrf.mxu0
  %v8893 = vadd.f32 0.0, %v8892
  %8894 = vmatmul.f32.gmra.mxu0 %v289
  %v8895 = vpop.f32.mrf.mxu0
  %v8896 = vadd.f32 0.0, %v8895
  %8897 = vmatmul.f32.gmra.mxu0 %v292
  %v8898 = vpop.f32.mrf.mxu0
  %v8899 = vadd.f32 0.0, %v8898
  %8900 = vmatmul.f32.gmra.mxu0 %v295
  %v8901 = vpop.f32.mrf.mxu0
  %v8902 = vadd.f32 0.0, %v8901
  %8903 = vmatmul.f32.gmra.mxu0 %v298
  %v8904 = vpop.f32.mrf.mxu0
  %v8905 = vadd.f32 0.0, %v8904
  %8906 = vmatmul.f32.gmra.mxu0 %v301
  %v8907 = vpop.f32.mrf.mxu0
  %v8908 = vadd.f32 0.0, %v8907
  %8909 = vmatmul.f32.gmra.mxu0 %v304
  %v8910 = vpop.f32.mrf.mxu0
  %v8911 = vadd.f32 0.0, %v8910
  %8912 = vmatmul.f32.gmra.mxu0 %v307
  %v8913 = vpop.f32.mrf.mxu0
  %v8914 = vadd.f32 0.0, %v8913
  %8915 = vmatmul.f32.gmra.mxu0 %v310
  %v8916 = vpop.f32.mrf.mxu0
  %v8917 = vadd.f32 0.0, %v8916
  %8918 = vmatmul.f32.gmra.mxu0 %v313
  %v8919 = vpop.f32.mrf.mxu0
  %v8920 = vadd.f32 0.0, %v8919
  %8921 = vmatmul.f32.gmra.mxu0 %v316
  %v8922 = vpop.f32.mrf.mxu0
  %v8923 = vadd.f32 0.0, %v8922
  %8924 = vmatmul.f32.gmra.mxu0 %v319
  %v8925 = vpop.f32.mrf.mxu0
  %v8926 = vadd.f32 0.0, %v8925
  %8927 = vmatmul.f32.gmra.mxu0 %v322
  %v8928 = vpop.f32.mrf.mxu0
  %v8929 = vadd.f32 0.0, %v8928
  %8930 = vmatmul.f32.gmra.mxu0 %v325
  %v8931 = vpop.f32.mrf.mxu0
  %v8932 = vadd.f32 0.0, %v8931
  %8933 = vmatmul.f32.gmra.mxu0 %v328
  %v8934 = vpop.f32.mrf.mxu0
  %v8935 = vadd.f32 0.0, %v8934
  %8936 = vmatmul.f32.gmra.mxu0 %v331
  %v8937 = vpop.f32.mrf.mxu0
  %v8938 = vadd.f32 0.0, %v8937
  %8939 = vmatmul.f32.gmra.mxu0 %v334
  %v8940 = vpop.f32.mrf.mxu0
  %v8941 = vadd.f32 0.0, %v8940
  %8942 = vmatmul.f32.gmra.mxu0 %v337
  %v8943 = vpop.f32.mrf.mxu0
  %v8944 = vadd.f32 0.0, %v8943
  %8945 = vmatmul.f32.gmra.mxu0 %v340
  %v8946 = vpop.f32.mrf.mxu0
  %v8947 = vadd.f32 0.0, %v8946
  %8948 = vmatmul.f32.gmra.mxu0 %v343
  %v8949 = vpop.f32.mrf.mxu0
  %v8950 = vadd.f32 0.0, %v8949
  %8951 = vmatmul.f32.gmra.mxu0 %v346
  %v8952 = vpop.f32.mrf.mxu0
  %v8953 = vadd.f32 0.0, %v8952
  %8954 = vmatmul.f32.gmra.mxu0 %v349
  %v8955 = vpop.f32.mrf.mxu0
  %v8956 = vadd.f32 0.0, %v8955
  %8957 = vdwg.mxu0
  %v8958 = vrot.slane %v29, 2
  %v8959 = vsel %vm872, %v6240, %v8958
  %8961 = vmatpush.msra.mxu0 0.0
  %8962 = vmatpush.msra.mxu0 0.0
  %8963 = vmatpush.msra.mxu0 0.0
  %8964 = vmatpush.msra.mxu0 0.0
  %8965 = vmatpush.msra.mxu0 0.0
  %8966 = vmatpush.msra.mxu0 0.0
  %8967 = vmatpush.msra.mxu0 0.0
  %8968 = vmatpush.msra.mxu0 0.0
  %8969 = vmatpush.msra.mxu0 0.0
  %8970 = vmatpush.msra.mxu0 0.0
  %8971 = vmatpush.msra.mxu0 0.0
  %8972 = vmatpush.msra.mxu0 0.0
  %8973 = vmatpush.msra.mxu0 0.0
  %8974 = vmatpush.msra.mxu0 0.0
  %8975 = vmatpush.msra.mxu0 0.0
  %8976 = vmatpush.msra.mxu0 %v8959
  %8977 = vmatmul.f32.gmra.mxu0 %v112
  %v8978 = vpop.f32.mrf.mxu0
  %v8979 = vadd.f32 0.0, %v8978
  %8980 = vmatmul.f32.gmra.mxu0 %v115
  %v8981 = vpop.f32.mrf.mxu0
  %v8982 = vadd.f32 0.0, %v8981
  %8983 = vmatmul.f32.gmra.mxu0 %v118
  %v8984 = vpop.f32.mrf.mxu0
  %v8985 = vadd.f32 0.0, %v8984
  %8986 = vmatmul.f32.gmra.mxu0 %v121
  %v8987 = vpop.f32.mrf.mxu0
  %v8988 = vadd.f32 0.0, %v8987
  %8989 = vmatmul.f32.gmra.mxu0 %v124
  %v8990 = vpop.f32.mrf.mxu0
  %v8991 = vadd.f32 0.0, %v8990
  %8992 = vmatmul.f32.gmra.mxu0 %v127
  %v8993 = vpop.f32.mrf.mxu0
  %v8994 = vadd.f32 0.0, %v8993
  %8995 = vmatmul.f32.gmra.mxu0 %v130
  %v8996 = vpop.f32.mrf.mxu0
  %v8997 = vadd.f32 0.0, %v8996
  %8998 = vmatmul.f32.gmra.mxu0 %v133
  %v8999 = vpop.f32.mrf.mxu0
  %v9000 = vadd.f32 0.0, %v8999
  %9001 = vmatmul.f32.gmra.mxu0 %v136
  %v9002 = vpop.f32.mrf.mxu0
  %v9003 = vadd.f32 0.0, %v9002
  %9004 = vmatmul.f32.gmra.mxu0 %v139
  %v9005 = vpop.f32.mrf.mxu0
  %v9006 = vadd.f32 0.0, %v9005
  %9007 = vmatmul.f32.gmra.mxu0 %v142
  %v9008 = vpop.f32.mrf.mxu0
  %v9009 = vadd.f32 0.0, %v9008
  %9010 = vmatmul.f32.gmra.mxu0 %v145
  %v9011 = vpop.f32.mrf.mxu0
  %v9012 = vadd.f32 0.0, %v9011
  %9013 = vmatmul.f32.gmra.mxu0 %v148
  %v9014 = vpop.f32.mrf.mxu0
  %v9015 = vadd.f32 0.0, %v9014
  %9016 = vmatmul.f32.gmra.mxu0 %v151
  %v9017 = vpop.f32.mrf.mxu0
  %v9018 = vadd.f32 0.0, %v9017
  %9019 = vmatmul.f32.gmra.mxu0 %v154
  %v9020 = vpop.f32.mrf.mxu0
  %v9021 = vadd.f32 0.0, %v9020
  %9022 = vmatmul.f32.gmra.mxu0 %v157
  %v9023 = vpop.f32.mrf.mxu0
  %v9024 = vadd.f32 0.0, %v9023
  %9025 = vmatmul.f32.gmra.mxu0 %v160
  %v9026 = vpop.f32.mrf.mxu0
  %v9027 = vadd.f32 0.0, %v9026
  %9028 = vmatmul.f32.gmra.mxu0 %v163
  %v9029 = vpop.f32.mrf.mxu0
  %v9030 = vadd.f32 0.0, %v9029
  %9031 = vmatmul.f32.gmra.mxu0 %v166
  %v9032 = vpop.f32.mrf.mxu0
  %v9033 = vadd.f32 0.0, %v9032
  %9034 = vmatmul.f32.gmra.mxu0 %v169
  %v9035 = vpop.f32.mrf.mxu0
  %v9036 = vadd.f32 0.0, %v9035
  %9037 = vmatmul.f32.gmra.mxu0 %v172
  %v9038 = vpop.f32.mrf.mxu0
  %v9039 = vadd.f32 0.0, %v9038
  %9040 = vmatmul.f32.gmra.mxu0 %v175
  %v9041 = vpop.f32.mrf.mxu0
  %v9042 = vadd.f32 0.0, %v9041
  %9043 = vmatmul.f32.gmra.mxu0 %v178
  %v9044 = vpop.f32.mrf.mxu0
  %v9045 = vadd.f32 0.0, %v9044
  %9046 = vmatmul.f32.gmra.mxu0 %v181
  %v9047 = vpop.f32.mrf.mxu0
  %v9048 = vadd.f32 0.0, %v9047
  %9049 = vmatmul.f32.gmra.mxu0 %v184
  %v9050 = vpop.f32.mrf.mxu0
  %v9051 = vadd.f32 0.0, %v9050
  %9052 = vmatmul.f32.gmra.mxu0 %v187
  %v9053 = vpop.f32.mrf.mxu0
  %v9054 = vadd.f32 0.0, %v9053
  %9055 = vmatmul.f32.gmra.mxu0 %v190
  %v9056 = vpop.f32.mrf.mxu0
  %v9057 = vadd.f32 0.0, %v9056
  %9058 = vmatmul.f32.gmra.mxu0 %v193
  %v9059 = vpop.f32.mrf.mxu0
  %v9060 = vadd.f32 0.0, %v9059
  %9061 = vmatmul.f32.gmra.mxu0 %v196
  %v9062 = vpop.f32.mrf.mxu0
  %v9063 = vadd.f32 0.0, %v9062
  %9064 = vmatmul.f32.gmra.mxu0 %v199
  %v9065 = vpop.f32.mrf.mxu0
  %v9066 = vadd.f32 0.0, %v9065
  %9067 = vmatmul.f32.gmra.mxu0 %v202
  %v9068 = vpop.f32.mrf.mxu0
  %v9069 = vadd.f32 0.0, %v9068
  %9070 = vmatmul.f32.gmra.mxu0 %v205
  %v9071 = vpop.f32.mrf.mxu0
  %v9072 = vadd.f32 0.0, %v9071
  %9073 = vmatmul.f32.gmra.mxu0 %v208
  %v9074 = vpop.f32.mrf.mxu0
  %v9075 = vadd.f32 0.0, %v9074
  %9076 = vmatmul.f32.gmra.mxu0 %v211
  %v9077 = vpop.f32.mrf.mxu0
  %v9078 = vadd.f32 0.0, %v9077
  %9079 = vmatmul.f32.gmra.mxu0 %v214
  %v9080 = vpop.f32.mrf.mxu0
  %v9081 = vadd.f32 0.0, %v9080
  %9082 = vmatmul.f32.gmra.mxu0 %v217
  %v9083 = vpop.f32.mrf.mxu0
  %v9084 = vadd.f32 0.0, %v9083
  %9085 = vmatmul.f32.gmra.mxu0 %v220
  %v9086 = vpop.f32.mrf.mxu0
  %v9087 = vadd.f32 0.0, %v9086
  %9088 = vmatmul.f32.gmra.mxu0 %v223
  %v9089 = vpop.f32.mrf.mxu0
  %v9090 = vadd.f32 0.0, %v9089
  %9091 = vmatmul.f32.gmra.mxu0 %v226
  %v9092 = vpop.f32.mrf.mxu0
  %v9093 = vadd.f32 0.0, %v9092
  %9094 = vmatmul.f32.gmra.mxu0 %v229
  %v9095 = vpop.f32.mrf.mxu0
  %v9096 = vadd.f32 0.0, %v9095
  %9097 = vmatmul.f32.gmra.mxu0 %v232
  %v9098 = vpop.f32.mrf.mxu0
  %v9099 = vadd.f32 0.0, %v9098
  %9100 = vmatmul.f32.gmra.mxu0 %v235
  %v9101 = vpop.f32.mrf.mxu0
  %v9102 = vadd.f32 0.0, %v9101
  %9103 = vmatmul.f32.gmra.mxu0 %v238
  %v9104 = vpop.f32.mrf.mxu0
  %v9105 = vadd.f32 0.0, %v9104
  %9106 = vmatmul.f32.gmra.mxu0 %v241
  %v9107 = vpop.f32.mrf.mxu0
  %v9108 = vadd.f32 0.0, %v9107
  %9109 = vmatmul.f32.gmra.mxu0 %v244
  %v9110 = vpop.f32.mrf.mxu0
  %v9111 = vadd.f32 0.0, %v9110
  %9112 = vmatmul.f32.gmra.mxu0 %v247
  %v9113 = vpop.f32.mrf.mxu0
  %v9114 = vadd.f32 0.0, %v9113
  %9115 = vmatmul.f32.gmra.mxu0 %v250
  %v9116 = vpop.f32.mrf.mxu0
  %v9117 = vadd.f32 0.0, %v9116
  %9118 = vmatmul.f32.gmra.mxu0 %v253
  %v9119 = vpop.f32.mrf.mxu0
  %v9120 = vadd.f32 0.0, %v9119
  %9121 = vmatmul.f32.gmra.mxu0 %v256
  %v9122 = vpop.f32.mrf.mxu0
  %v9123 = vadd.f32 0.0, %v9122
  %9124 = vmatmul.f32.gmra.mxu0 %v259
  %v9125 = vpop.f32.mrf.mxu0
  %v9126 = vadd.f32 0.0, %v9125
  %9127 = vmatmul.f32.gmra.mxu0 %v262
  %v9128 = vpop.f32.mrf.mxu0
  %v9129 = vadd.f32 0.0, %v9128
  %9130 = vmatmul.f32.gmra.mxu0 %v265
  %v9131 = vpop.f32.mrf.mxu0
  %v9132 = vadd.f32 0.0, %v9131
  %9133 = vmatmul.f32.gmra.mxu0 %v268
  %v9134 = vpop.f32.mrf.mxu0
  %v9135 = vadd.f32 0.0, %v9134
  %9136 = vmatmul.f32.gmra.mxu0 %v271
  %v9137 = vpop.f32.mrf.mxu0
  %v9138 = vadd.f32 0.0, %v9137
  %9139 = vmatmul.f32.gmra.mxu0 %v274
  %v9140 = vpop.f32.mrf.mxu0
  %v9141 = vadd.f32 0.0, %v9140
  %9142 = vmatmul.f32.gmra.mxu0 %v277
  %v9143 = vpop.f32.mrf.mxu0
  %v9144 = vadd.f32 0.0, %v9143
  %9145 = vmatmul.f32.gmra.mxu0 %v280
  %v9146 = vpop.f32.mrf.mxu0
  %v9147 = vadd.f32 0.0, %v9146
  %9148 = vmatmul.f32.gmra.mxu0 %v283
  %v9149 = vpop.f32.mrf.mxu0
  %v9150 = vadd.f32 0.0, %v9149
  %9151 = vmatmul.f32.gmra.mxu0 %v286
  %v9152 = vpop.f32.mrf.mxu0
  %v9153 = vadd.f32 0.0, %v9152
  %9154 = vmatmul.f32.gmra.mxu0 %v289
  %v9155 = vpop.f32.mrf.mxu0
  %v9156 = vadd.f32 0.0, %v9155
  %9157 = vmatmul.f32.gmra.mxu0 %v292
  %v9158 = vpop.f32.mrf.mxu0
  %v9159 = vadd.f32 0.0, %v9158
  %9160 = vmatmul.f32.gmra.mxu0 %v295
  %v9161 = vpop.f32.mrf.mxu0
  %v9162 = vadd.f32 0.0, %v9161
  %9163 = vmatmul.f32.gmra.mxu0 %v298
  %v9164 = vpop.f32.mrf.mxu0
  %v9165 = vadd.f32 0.0, %v9164
  %9166 = vmatmul.f32.gmra.mxu0 %v301
  %v9167 = vpop.f32.mrf.mxu0
  %v9168 = vadd.f32 0.0, %v9167
  %9169 = vmatmul.f32.gmra.mxu0 %v304
  %v9170 = vpop.f32.mrf.mxu0
  %v9171 = vadd.f32 0.0, %v9170
  %9172 = vmatmul.f32.gmra.mxu0 %v307
  %v9173 = vpop.f32.mrf.mxu0
  %v9174 = vadd.f32 0.0, %v9173
  %9175 = vmatmul.f32.gmra.mxu0 %v310
  %v9176 = vpop.f32.mrf.mxu0
  %v9177 = vadd.f32 0.0, %v9176
  %9178 = vmatmul.f32.gmra.mxu0 %v313
  %v9179 = vpop.f32.mrf.mxu0
  %v9180 = vadd.f32 0.0, %v9179
  %9181 = vmatmul.f32.gmra.mxu0 %v316
  %v9182 = vpop.f32.mrf.mxu0
  %v9183 = vadd.f32 0.0, %v9182
  %9184 = vmatmul.f32.gmra.mxu0 %v319
  %v9185 = vpop.f32.mrf.mxu0
  %v9186 = vadd.f32 0.0, %v9185
  %9187 = vmatmul.f32.gmra.mxu0 %v322
  %v9188 = vpop.f32.mrf.mxu0
  %v9189 = vadd.f32 0.0, %v9188
  %9190 = vmatmul.f32.gmra.mxu0 %v325
  %v9191 = vpop.f32.mrf.mxu0
  %v9192 = vadd.f32 0.0, %v9191
  %9193 = vmatmul.f32.gmra.mxu0 %v328
  %v9194 = vpop.f32.mrf.mxu0
  %v9195 = vadd.f32 0.0, %v9194
  %9196 = vmatmul.f32.gmra.mxu0 %v331
  %v9197 = vpop.f32.mrf.mxu0
  %v9198 = vadd.f32 0.0, %v9197
  %9199 = vmatmul.f32.gmra.mxu0 %v334
  %v9200 = vpop.f32.mrf.mxu0
  %v9201 = vadd.f32 0.0, %v9200
  %9202 = vmatmul.f32.gmra.mxu0 %v337
  %v9203 = vpop.f32.mrf.mxu0
  %v9204 = vadd.f32 0.0, %v9203
  %9205 = vmatmul.f32.gmra.mxu0 %v340
  %v9206 = vpop.f32.mrf.mxu0
  %v9207 = vadd.f32 0.0, %v9206
  %9208 = vmatmul.f32.gmra.mxu0 %v343
  %v9209 = vpop.f32.mrf.mxu0
  %v9210 = vadd.f32 0.0, %v9209
  %9211 = vmatmul.f32.gmra.mxu0 %v346
  %v9212 = vpop.f32.mrf.mxu0
  %v9213 = vadd.f32 0.0, %v9212
  %9214 = vmatmul.f32.gmra.mxu0 %v349
  %v9215 = vpop.f32.mrf.mxu0
  %v9216 = vadd.f32 0.0, %v9215
  %9217 = vdwg.mxu0
  %v9218 = vrot.slane %v29, 3
  %v9219 = vsel %vm1134, %v6500, %v9218
  %9221 = vmatpush.msra.mxu0 0.0
  %9222 = vmatpush.msra.mxu0 0.0
  %9223 = vmatpush.msra.mxu0 0.0
  %9224 = vmatpush.msra.mxu0 0.0
  %9225 = vmatpush.msra.mxu0 0.0
  %9226 = vmatpush.msra.mxu0 0.0
  %9227 = vmatpush.msra.mxu0 0.0
  %9228 = vmatpush.msra.mxu0 0.0
  %9229 = vmatpush.msra.mxu0 0.0
  %9230 = vmatpush.msra.mxu0 0.0
  %9231 = vmatpush.msra.mxu0 0.0
  %9232 = vmatpush.msra.mxu0 0.0
  %9233 = vmatpush.msra.mxu0 0.0
  %9234 = vmatpush.msra.mxu0 0.0
  %9235 = vmatpush.msra.mxu0 0.0
  %9236 = vmatpush.msra.mxu0 %v9219
  %9237 = vmatmul.f32.gmra.mxu0 %v112
  %v9238 = vpop.f32.mrf.mxu0
  %v9239 = vadd.f32 0.0, %v9238
  %9240 = vmatmul.f32.gmra.mxu0 %v115
  %v9241 = vpop.f32.mrf.mxu0
  %v9242 = vadd.f32 0.0, %v9241
  %9243 = vmatmul.f32.gmra.mxu0 %v118
  %v9244 = vpop.f32.mrf.mxu0
  %v9245 = vadd.f32 0.0, %v9244
  %9246 = vmatmul.f32.gmra.mxu0 %v121
  %v9247 = vpop.f32.mrf.mxu0
  %v9248 = vadd.f32 0.0, %v9247
  %9249 = vmatmul.f32.gmra.mxu0 %v124
  %v9250 = vpop.f32.mrf.mxu0
  %v9251 = vadd.f32 0.0, %v9250
  %9252 = vmatmul.f32.gmra.mxu0 %v127
  %v9253 = vpop.f32.mrf.mxu0
  %v9254 = vadd.f32 0.0, %v9253
  %9255 = vmatmul.f32.gmra.mxu0 %v130
  %v9256 = vpop.f32.mrf.mxu0
  %v9257 = vadd.f32 0.0, %v9256
  %9258 = vmatmul.f32.gmra.mxu0 %v133
  %v9259 = vpop.f32.mrf.mxu0
  %v9260 = vadd.f32 0.0, %v9259
  %9261 = vmatmul.f32.gmra.mxu0 %v136
  %v9262 = vpop.f32.mrf.mxu0
  %v9263 = vadd.f32 0.0, %v9262
  %9264 = vmatmul.f32.gmra.mxu0 %v139
  %v9265 = vpop.f32.mrf.mxu0
  %v9266 = vadd.f32 0.0, %v9265
  %9267 = vmatmul.f32.gmra.mxu0 %v142
  %v9268 = vpop.f32.mrf.mxu0
  %v9269 = vadd.f32 0.0, %v9268
  %9270 = vmatmul.f32.gmra.mxu0 %v145
  %v9271 = vpop.f32.mrf.mxu0
  %v9272 = vadd.f32 0.0, %v9271
  %9273 = vmatmul.f32.gmra.mxu0 %v148
  %v9274 = vpop.f32.mrf.mxu0
  %v9275 = vadd.f32 0.0, %v9274
  %9276 = vmatmul.f32.gmra.mxu0 %v151
  %v9277 = vpop.f32.mrf.mxu0
  %v9278 = vadd.f32 0.0, %v9277
  %9279 = vmatmul.f32.gmra.mxu0 %v154
  %v9280 = vpop.f32.mrf.mxu0
  %v9281 = vadd.f32 0.0, %v9280
  %9282 = vmatmul.f32.gmra.mxu0 %v157
  %v9283 = vpop.f32.mrf.mxu0
  %v9284 = vadd.f32 0.0, %v9283
  %9285 = vmatmul.f32.gmra.mxu0 %v160
  %v9286 = vpop.f32.mrf.mxu0
  %v9287 = vadd.f32 0.0, %v9286
  %9288 = vmatmul.f32.gmra.mxu0 %v163
  %v9289 = vpop.f32.mrf.mxu0
  %v9290 = vadd.f32 0.0, %v9289
  %9291 = vmatmul.f32.gmra.mxu0 %v166
  %v9292 = vpop.f32.mrf.mxu0
  %v9293 = vadd.f32 0.0, %v9292
  %9294 = vmatmul.f32.gmra.mxu0 %v169
  %v9295 = vpop.f32.mrf.mxu0
  %v9296 = vadd.f32 0.0, %v9295
  %9297 = vmatmul.f32.gmra.mxu0 %v172
  %v9298 = vpop.f32.mrf.mxu0
  %v9299 = vadd.f32 0.0, %v9298
  %9300 = vmatmul.f32.gmra.mxu0 %v175
  %v9301 = vpop.f32.mrf.mxu0
  %v9302 = vadd.f32 0.0, %v9301
  %9303 = vmatmul.f32.gmra.mxu0 %v178
  %v9304 = vpop.f32.mrf.mxu0
  %v9305 = vadd.f32 0.0, %v9304
  %9306 = vmatmul.f32.gmra.mxu0 %v181
  %v9307 = vpop.f32.mrf.mxu0
  %v9308 = vadd.f32 0.0, %v9307
  %9309 = vmatmul.f32.gmra.mxu0 %v184
  %v9310 = vpop.f32.mrf.mxu0
  %v9311 = vadd.f32 0.0, %v9310
  %9312 = vmatmul.f32.gmra.mxu0 %v187
  %v9313 = vpop.f32.mrf.mxu0
  %v9314 = vadd.f32 0.0, %v9313
  %9315 = vmatmul.f32.gmra.mxu0 %v190
  %v9316 = vpop.f32.mrf.mxu0
  %v9317 = vadd.f32 0.0, %v9316
  %9318 = vmatmul.f32.gmra.mxu0 %v193
  %v9319 = vpop.f32.mrf.mxu0
  %v9320 = vadd.f32 0.0, %v9319
  %9321 = vmatmul.f32.gmra.mxu0 %v196
  %v9322 = vpop.f32.mrf.mxu0
  %v9323 = vadd.f32 0.0, %v9322
  %9324 = vmatmul.f32.gmra.mxu0 %v199
  %v9325 = vpop.f32.mrf.mxu0
  %v9326 = vadd.f32 0.0, %v9325
  %9327 = vmatmul.f32.gmra.mxu0 %v202
  %v9328 = vpop.f32.mrf.mxu0
  %v9329 = vadd.f32 0.0, %v9328
  %9330 = vmatmul.f32.gmra.mxu0 %v205
  %v9331 = vpop.f32.mrf.mxu0
  %v9332 = vadd.f32 0.0, %v9331
  %9333 = vmatmul.f32.gmra.mxu0 %v208
  %v9334 = vpop.f32.mrf.mxu0
  %v9335 = vadd.f32 0.0, %v9334
  %9336 = vmatmul.f32.gmra.mxu0 %v211
  %v9337 = vpop.f32.mrf.mxu0
  %v9338 = vadd.f32 0.0, %v9337
  %9339 = vmatmul.f32.gmra.mxu0 %v214
  %v9340 = vpop.f32.mrf.mxu0
  %v9341 = vadd.f32 0.0, %v9340
  %9342 = vmatmul.f32.gmra.mxu0 %v217
  %v9343 = vpop.f32.mrf.mxu0
  %v9344 = vadd.f32 0.0, %v9343
  %9345 = vmatmul.f32.gmra.mxu0 %v220
  %v9346 = vpop.f32.mrf.mxu0
  %v9347 = vadd.f32 0.0, %v9346
  %9348 = vmatmul.f32.gmra.mxu0 %v223
  %v9349 = vpop.f32.mrf.mxu0
  %v9350 = vadd.f32 0.0, %v9349
  %9351 = vmatmul.f32.gmra.mxu0 %v226
  %v9352 = vpop.f32.mrf.mxu0
  %v9353 = vadd.f32 0.0, %v9352
  %9354 = vmatmul.f32.gmra.mxu0 %v229
  %v9355 = vpop.f32.mrf.mxu0
  %v9356 = vadd.f32 0.0, %v9355
  %9357 = vmatmul.f32.gmra.mxu0 %v232
  %v9358 = vpop.f32.mrf.mxu0
  %v9359 = vadd.f32 0.0, %v9358
  %9360 = vmatmul.f32.gmra.mxu0 %v235
  %v9361 = vpop.f32.mrf.mxu0
  %v9362 = vadd.f32 0.0, %v9361
  %9363 = vmatmul.f32.gmra.mxu0 %v238
  %v9364 = vpop.f32.mrf.mxu0
  %v9365 = vadd.f32 0.0, %v9364
  %9366 = vmatmul.f32.gmra.mxu0 %v241
  %v9367 = vpop.f32.mrf.mxu0
  %v9368 = vadd.f32 0.0, %v9367
  %9369 = vmatmul.f32.gmra.mxu0 %v244
  %v9370 = vpop.f32.mrf.mxu0
  %v9371 = vadd.f32 0.0, %v9370
  %9372 = vmatmul.f32.gmra.mxu0 %v247
  %v9373 = vpop.f32.mrf.mxu0
  %v9374 = vadd.f32 0.0, %v9373
  %9375 = vmatmul.f32.gmra.mxu0 %v250
  %v9376 = vpop.f32.mrf.mxu0
  %v9377 = vadd.f32 0.0, %v9376
  %9378 = vmatmul.f32.gmra.mxu0 %v253
  %v9379 = vpop.f32.mrf.mxu0
  %v9380 = vadd.f32 0.0, %v9379
  %9381 = vmatmul.f32.gmra.mxu0 %v256
  %v9382 = vpop.f32.mrf.mxu0
  %v9383 = vadd.f32 0.0, %v9382
  %9384 = vmatmul.f32.gmra.mxu0 %v259
  %v9385 = vpop.f32.mrf.mxu0
  %v9386 = vadd.f32 0.0, %v9385
  %9387 = vmatmul.f32.gmra.mxu0 %v262
  %v9388 = vpop.f32.mrf.mxu0
  %v9389 = vadd.f32 0.0, %v9388
  %9390 = vmatmul.f32.gmra.mxu0 %v265
  %v9391 = vpop.f32.mrf.mxu0
  %v9392 = vadd.f32 0.0, %v9391
  %9393 = vmatmul.f32.gmra.mxu0 %v268
  %v9394 = vpop.f32.mrf.mxu0
  %v9395 = vadd.f32 0.0, %v9394
  %9396 = vmatmul.f32.gmra.mxu0 %v271
  %v9397 = vpop.f32.mrf.mxu0
  %v9398 = vadd.f32 0.0, %v9397
  %9399 = vmatmul.f32.gmra.mxu0 %v274
  %v9400 = vpop.f32.mrf.mxu0
  %v9401 = vadd.f32 0.0, %v9400
  %9402 = vmatmul.f32.gmra.mxu0 %v277
  %v9403 = vpop.f32.mrf.mxu0
  %v9404 = vadd.f32 0.0, %v9403
  %9405 = vmatmul.f32.gmra.mxu0 %v280
  %v9406 = vpop.f32.mrf.mxu0
  %v9407 = vadd.f32 0.0, %v9406
  %9408 = vmatmul.f32.gmra.mxu0 %v283
  %v9409 = vpop.f32.mrf.mxu0
  %v9410 = vadd.f32 0.0, %v9409
  %9411 = vmatmul.f32.gmra.mxu0 %v286
  %v9412 = vpop.f32.mrf.mxu0
  %v9413 = vadd.f32 0.0, %v9412
  %9414 = vmatmul.f32.gmra.mxu0 %v289
  %v9415 = vpop.f32.mrf.mxu0
  %v9416 = vadd.f32 0.0, %v9415
  %9417 = vmatmul.f32.gmra.mxu0 %v292
  %v9418 = vpop.f32.mrf.mxu0
  %v9419 = vadd.f32 0.0, %v9418
  %9420 = vmatmul.f32.gmra.mxu0 %v295
  %v9421 = vpop.f32.mrf.mxu0
  %v9422 = vadd.f32 0.0, %v9421
  %9423 = vmatmul.f32.gmra.mxu0 %v298
  %v9424 = vpop.f32.mrf.mxu0
  %v9425 = vadd.f32 0.0, %v9424
  %9426 = vmatmul.f32.gmra.mxu0 %v301
  %v9427 = vpop.f32.mrf.mxu0
  %v9428 = vadd.f32 0.0, %v9427
  %9429 = vmatmul.f32.gmra.mxu0 %v304
  %v9430 = vpop.f32.mrf.mxu0
  %v9431 = vadd.f32 0.0, %v9430
  %9432 = vmatmul.f32.gmra.mxu0 %v307
  %v9433 = vpop.f32.mrf.mxu0
  %v9434 = vadd.f32 0.0, %v9433
  %9435 = vmatmul.f32.gmra.mxu0 %v310
  %v9436 = vpop.f32.mrf.mxu0
  %v9437 = vadd.f32 0.0, %v9436
  %9438 = vmatmul.f32.gmra.mxu0 %v313
  %v9439 = vpop.f32.mrf.mxu0
  %v9440 = vadd.f32 0.0, %v9439
  %9441 = vmatmul.f32.gmra.mxu0 %v316
  %v9442 = vpop.f32.mrf.mxu0
  %v9443 = vadd.f32 0.0, %v9442
  %9444 = vmatmul.f32.gmra.mxu0 %v319
  %v9445 = vpop.f32.mrf.mxu0
  %v9446 = vadd.f32 0.0, %v9445
  %9447 = vmatmul.f32.gmra.mxu0 %v322
  %v9448 = vpop.f32.mrf.mxu0
  %v9449 = vadd.f32 0.0, %v9448
  %9450 = vmatmul.f32.gmra.mxu0 %v325
  %v9451 = vpop.f32.mrf.mxu0
  %v9452 = vadd.f32 0.0, %v9451
  %9453 = vmatmul.f32.gmra.mxu0 %v328
  %v9454 = vpop.f32.mrf.mxu0
  %v9455 = vadd.f32 0.0, %v9454
  %9456 = vmatmul.f32.gmra.mxu0 %v331
  %v9457 = vpop.f32.mrf.mxu0
  %v9458 = vadd.f32 0.0, %v9457
  %9459 = vmatmul.f32.gmra.mxu0 %v334
  %v9460 = vpop.f32.mrf.mxu0
  %v9461 = vadd.f32 0.0, %v9460
  %9462 = vmatmul.f32.gmra.mxu0 %v337
  %v9463 = vpop.f32.mrf.mxu0
  %v9464 = vadd.f32 0.0, %v9463
  %9465 = vmatmul.f32.gmra.mxu0 %v340
  %v9466 = vpop.f32.mrf.mxu0
  %v9467 = vadd.f32 0.0, %v9466
  %9468 = vmatmul.f32.gmra.mxu0 %v343
  %v9469 = vpop.f32.mrf.mxu0
  %v9470 = vadd.f32 0.0, %v9469
  %9471 = vmatmul.f32.gmra.mxu0 %v346
  %v9472 = vpop.f32.mrf.mxu0
  %v9473 = vadd.f32 0.0, %v9472
  %9474 = vmatmul.f32.gmra.mxu0 %v349
  %v9475 = vpop.f32.mrf.mxu0
  %v9476 = vadd.f32 0.0, %v9475
  %9477 = vdwg.mxu0
  %v9478 = vrot.slane %v29, 4
  %v9479 = vsel %vm1396, %v6760, %v9478
  %9481 = vmatpush.msra.mxu0 0.0
  %9482 = vmatpush.msra.mxu0 0.0
  %9483 = vmatpush.msra.mxu0 0.0
  %9484 = vmatpush.msra.mxu0 0.0
  %9485 = vmatpush.msra.mxu0 0.0
  %9486 = vmatpush.msra.mxu0 0.0
  %9487 = vmatpush.msra.mxu0 0.0
  %9488 = vmatpush.msra.mxu0 0.0
  %9489 = vmatpush.msra.mxu0 0.0
  %9490 = vmatpush.msra.mxu0 0.0
  %9491 = vmatpush.msra.mxu0 0.0
  %9492 = vmatpush.msra.mxu0 0.0
  %9493 = vmatpush.msra.mxu0 0.0
  %9494 = vmatpush.msra.mxu0 0.0
  %9495 = vmatpush.msra.mxu0 0.0
  %9496 = vmatpush.msra.mxu0 %v9479
  %9497 = vmatmul.f32.gmra.mxu0 %v112
  %v9498 = vpop.f32.mrf.mxu0
  %v9499 = vadd.f32 0.0, %v9498
  %9500 = vmatmul.f32.gmra.mxu0 %v115
  %v9501 = vpop.f32.mrf.mxu0
  %v9502 = vadd.f32 0.0, %v9501
  %9503 = vmatmul.f32.gmra.mxu0 %v118
  %v9504 = vpop.f32.mrf.mxu0
  %v9505 = vadd.f32 0.0, %v9504
  %9506 = vmatmul.f32.gmra.mxu0 %v121
  %v9507 = vpop.f32.mrf.mxu0
  %v9508 = vadd.f32 0.0, %v9507
  %9509 = vmatmul.f32.gmra.mxu0 %v124
  %v9510 = vpop.f32.mrf.mxu0
  %v9511 = vadd.f32 0.0, %v9510
  %9512 = vmatmul.f32.gmra.mxu0 %v127
  %v9513 = vpop.f32.mrf.mxu0
  %v9514 = vadd.f32 0.0, %v9513
  %9515 = vmatmul.f32.gmra.mxu0 %v130
  %v9516 = vpop.f32.mrf.mxu0
  %v9517 = vadd.f32 0.0, %v9516
  %9518 = vmatmul.f32.gmra.mxu0 %v133
  %v9519 = vpop.f32.mrf.mxu0
  %v9520 = vadd.f32 0.0, %v9519
  %9521 = vmatmul.f32.gmra.mxu0 %v136
  %v9522 = vpop.f32.mrf.mxu0
  %v9523 = vadd.f32 0.0, %v9522
  %9524 = vmatmul.f32.gmra.mxu0 %v139
  %v9525 = vpop.f32.mrf.mxu0
  %v9526 = vadd.f32 0.0, %v9525
  %9527 = vmatmul.f32.gmra.mxu0 %v142
  %v9528 = vpop.f32.mrf.mxu0
  %v9529 = vadd.f32 0.0, %v9528
  %9530 = vmatmul.f32.gmra.mxu0 %v145
  %v9531 = vpop.f32.mrf.mxu0
  %v9532 = vadd.f32 0.0, %v9531
  %9533 = vmatmul.f32.gmra.mxu0 %v148
  %v9534 = vpop.f32.mrf.mxu0
  %v9535 = vadd.f32 0.0, %v9534
  %9536 = vmatmul.f32.gmra.mxu0 %v151
  %v9537 = vpop.f32.mrf.mxu0
  %v9538 = vadd.f32 0.0, %v9537
  %9539 = vmatmul.f32.gmra.mxu0 %v154
  %v9540 = vpop.f32.mrf.mxu0
  %v9541 = vadd.f32 0.0, %v9540
  %9542 = vmatmul.f32.gmra.mxu0 %v157
  %v9543 = vpop.f32.mrf.mxu0
  %v9544 = vadd.f32 0.0, %v9543
  %9545 = vmatmul.f32.gmra.mxu0 %v160
  %v9546 = vpop.f32.mrf.mxu0
  %v9547 = vadd.f32 0.0, %v9546
  %9548 = vmatmul.f32.gmra.mxu0 %v163
  %v9549 = vpop.f32.mrf.mxu0
  %v9550 = vadd.f32 0.0, %v9549
  %9551 = vmatmul.f32.gmra.mxu0 %v166
  %v9552 = vpop.f32.mrf.mxu0
  %v9553 = vadd.f32 0.0, %v9552
  %9554 = vmatmul.f32.gmra.mxu0 %v169
  %v9555 = vpop.f32.mrf.mxu0
  %v9556 = vadd.f32 0.0, %v9555
  %9557 = vmatmul.f32.gmra.mxu0 %v172
  %v9558 = vpop.f32.mrf.mxu0
  %v9559 = vadd.f32 0.0, %v9558
  %9560 = vmatmul.f32.gmra.mxu0 %v175
  %v9561 = vpop.f32.mrf.mxu0
  %v9562 = vadd.f32 0.0, %v9561
  %9563 = vmatmul.f32.gmra.mxu0 %v178
  %v9564 = vpop.f32.mrf.mxu0
  %v9565 = vadd.f32 0.0, %v9564
  %9566 = vmatmul.f32.gmra.mxu0 %v181
  %v9567 = vpop.f32.mrf.mxu0
  %v9568 = vadd.f32 0.0, %v9567
  %9569 = vmatmul.f32.gmra.mxu0 %v184
  %v9570 = vpop.f32.mrf.mxu0
  %v9571 = vadd.f32 0.0, %v9570
  %9572 = vmatmul.f32.gmra.mxu0 %v187
  %v9573 = vpop.f32.mrf.mxu0
  %v9574 = vadd.f32 0.0, %v9573
  %9575 = vmatmul.f32.gmra.mxu0 %v190
  %v9576 = vpop.f32.mrf.mxu0
  %v9577 = vadd.f32 0.0, %v9576
  %9578 = vmatmul.f32.gmra.mxu0 %v193
  %v9579 = vpop.f32.mrf.mxu0
  %v9580 = vadd.f32 0.0, %v9579
  %9581 = vmatmul.f32.gmra.mxu0 %v196
  %v9582 = vpop.f32.mrf.mxu0
  %v9583 = vadd.f32 0.0, %v9582
  %9584 = vmatmul.f32.gmra.mxu0 %v199
  %v9585 = vpop.f32.mrf.mxu0
  %v9586 = vadd.f32 0.0, %v9585
  %9587 = vmatmul.f32.gmra.mxu0 %v202
  %v9588 = vpop.f32.mrf.mxu0
  %v9589 = vadd.f32 0.0, %v9588
  %9590 = vmatmul.f32.gmra.mxu0 %v205
  %v9591 = vpop.f32.mrf.mxu0
  %v9592 = vadd.f32 0.0, %v9591
  %9593 = vmatmul.f32.gmra.mxu0 %v208
  %v9594 = vpop.f32.mrf.mxu0
  %v9595 = vadd.f32 0.0, %v9594
  %9596 = vmatmul.f32.gmra.mxu0 %v211
  %v9597 = vpop.f32.mrf.mxu0
  %v9598 = vadd.f32 0.0, %v9597
  %9599 = vmatmul.f32.gmra.mxu0 %v214
  %v9600 = vpop.f32.mrf.mxu0
  %v9601 = vadd.f32 0.0, %v9600
  %9602 = vmatmul.f32.gmra.mxu0 %v217
  %v9603 = vpop.f32.mrf.mxu0
  %v9604 = vadd.f32 0.0, %v9603
  %9605 = vmatmul.f32.gmra.mxu0 %v220
  %v9606 = vpop.f32.mrf.mxu0
  %v9607 = vadd.f32 0.0, %v9606
  %9608 = vmatmul.f32.gmra.mxu0 %v223
  %v9609 = vpop.f32.mrf.mxu0
  %v9610 = vadd.f32 0.0, %v9609
  %9611 = vmatmul.f32.gmra.mxu0 %v226
  %v9612 = vpop.f32.mrf.mxu0
  %v9613 = vadd.f32 0.0, %v9612
  %9614 = vmatmul.f32.gmra.mxu0 %v229
  %v9615 = vpop.f32.mrf.mxu0
  %v9616 = vadd.f32 0.0, %v9615
  %9617 = vmatmul.f32.gmra.mxu0 %v232
  %v9618 = vpop.f32.mrf.mxu0
  %v9619 = vadd.f32 0.0, %v9618
  %9620 = vmatmul.f32.gmra.mxu0 %v235
  %v9621 = vpop.f32.mrf.mxu0
  %v9622 = vadd.f32 0.0, %v9621
  %9623 = vmatmul.f32.gmra.mxu0 %v238
  %v9624 = vpop.f32.mrf.mxu0
  %v9625 = vadd.f32 0.0, %v9624
  %9626 = vmatmul.f32.gmra.mxu0 %v241
  %v9627 = vpop.f32.mrf.mxu0
  %v9628 = vadd.f32 0.0, %v9627
  %9629 = vmatmul.f32.gmra.mxu0 %v244
  %v9630 = vpop.f32.mrf.mxu0
  %v9631 = vadd.f32 0.0, %v9630
  %9632 = vmatmul.f32.gmra.mxu0 %v247
  %v9633 = vpop.f32.mrf.mxu0
  %v9634 = vadd.f32 0.0, %v9633
  %9635 = vmatmul.f32.gmra.mxu0 %v250
  %v9636 = vpop.f32.mrf.mxu0
  %v9637 = vadd.f32 0.0, %v9636
  %9638 = vmatmul.f32.gmra.mxu0 %v253
  %v9639 = vpop.f32.mrf.mxu0
  %v9640 = vadd.f32 0.0, %v9639
  %9641 = vmatmul.f32.gmra.mxu0 %v256
  %v9642 = vpop.f32.mrf.mxu0
  %v9643 = vadd.f32 0.0, %v9642
  %9644 = vmatmul.f32.gmra.mxu0 %v259
  %v9645 = vpop.f32.mrf.mxu0
  %v9646 = vadd.f32 0.0, %v9645
  %9647 = vmatmul.f32.gmra.mxu0 %v262
  %v9648 = vpop.f32.mrf.mxu0
  %v9649 = vadd.f32 0.0, %v9648
  %9650 = vmatmul.f32.gmra.mxu0 %v265
  %v9651 = vpop.f32.mrf.mxu0
  %v9652 = vadd.f32 0.0, %v9651
  %9653 = vmatmul.f32.gmra.mxu0 %v268
  %v9654 = vpop.f32.mrf.mxu0
  %v9655 = vadd.f32 0.0, %v9654
  %9656 = vmatmul.f32.gmra.mxu0 %v271
  %v9657 = vpop.f32.mrf.mxu0
  %v9658 = vadd.f32 0.0, %v9657
  %9659 = vmatmul.f32.gmra.mxu0 %v274
  %v9660 = vpop.f32.mrf.mxu0
  %v9661 = vadd.f32 0.0, %v9660
  %9662 = vmatmul.f32.gmra.mxu0 %v277
  %v9663 = vpop.f32.mrf.mxu0
  %v9664 = vadd.f32 0.0, %v9663
  %9665 = vmatmul.f32.gmra.mxu0 %v280
  %v9666 = vpop.f32.mrf.mxu0
  %v9667 = vadd.f32 0.0, %v9666
  %9668 = vmatmul.f32.gmra.mxu0 %v283
  %v9669 = vpop.f32.mrf.mxu0
  %v9670 = vadd.f32 0.0, %v9669
  %9671 = vmatmul.f32.gmra.mxu0 %v286
  %v9672 = vpop.f32.mrf.mxu0
  %v9673 = vadd.f32 0.0, %v9672
  %9674 = vmatmul.f32.gmra.mxu0 %v289
  %v9675 = vpop.f32.mrf.mxu0
  %v9676 = vadd.f32 0.0, %v9675
  %9677 = vmatmul.f32.gmra.mxu0 %v292
  %v9678 = vpop.f32.mrf.mxu0
  %v9679 = vadd.f32 0.0, %v9678
  %9680 = vmatmul.f32.gmra.mxu0 %v295
  %v9681 = vpop.f32.mrf.mxu0
  %v9682 = vadd.f32 0.0, %v9681
  %9683 = vmatmul.f32.gmra.mxu0 %v298
  %v9684 = vpop.f32.mrf.mxu0
  %v9685 = vadd.f32 0.0, %v9684
  %9686 = vmatmul.f32.gmra.mxu0 %v301
  %v9687 = vpop.f32.mrf.mxu0
  %v9688 = vadd.f32 0.0, %v9687
  %9689 = vmatmul.f32.gmra.mxu0 %v304
  %v9690 = vpop.f32.mrf.mxu0
  %v9691 = vadd.f32 0.0, %v9690
  %9692 = vmatmul.f32.gmra.mxu0 %v307
  %v9693 = vpop.f32.mrf.mxu0
  %v9694 = vadd.f32 0.0, %v9693
  %9695 = vmatmul.f32.gmra.mxu0 %v310
  %v9696 = vpop.f32.mrf.mxu0
  %v9697 = vadd.f32 0.0, %v9696
  %9698 = vmatmul.f32.gmra.mxu0 %v313
  %v9699 = vpop.f32.mrf.mxu0
  %v9700 = vadd.f32 0.0, %v9699
  %9701 = vmatmul.f32.gmra.mxu0 %v316
  %v9702 = vpop.f32.mrf.mxu0
  %v9703 = vadd.f32 0.0, %v9702
  %9704 = vmatmul.f32.gmra.mxu0 %v319
  %v9705 = vpop.f32.mrf.mxu0
  %v9706 = vadd.f32 0.0, %v9705
  %9707 = vmatmul.f32.gmra.mxu0 %v322
  %v9708 = vpop.f32.mrf.mxu0
  %v9709 = vadd.f32 0.0, %v9708
  %9710 = vmatmul.f32.gmra.mxu0 %v325
  %v9711 = vpop.f32.mrf.mxu0
  %v9712 = vadd.f32 0.0, %v9711
  %9713 = vmatmul.f32.gmra.mxu0 %v328
  %v9714 = vpop.f32.mrf.mxu0
  %v9715 = vadd.f32 0.0, %v9714
  %9716 = vmatmul.f32.gmra.mxu0 %v331
  %v9717 = vpop.f32.mrf.mxu0
  %v9718 = vadd.f32 0.0, %v9717
  %9719 = vmatmul.f32.gmra.mxu0 %v334
  %v9720 = vpop.f32.mrf.mxu0
  %v9721 = vadd.f32 0.0, %v9720
  %9722 = vmatmul.f32.gmra.mxu0 %v337
  %v9723 = vpop.f32.mrf.mxu0
  %v9724 = vadd.f32 0.0, %v9723
  %9725 = vmatmul.f32.gmra.mxu0 %v340
  %v9726 = vpop.f32.mrf.mxu0
  %v9727 = vadd.f32 0.0, %v9726
  %9728 = vmatmul.f32.gmra.mxu0 %v343
  %v9729 = vpop.f32.mrf.mxu0
  %v9730 = vadd.f32 0.0, %v9729
  %9731 = vmatmul.f32.gmra.mxu0 %v346
  %v9732 = vpop.f32.mrf.mxu0
  %v9733 = vadd.f32 0.0, %v9732
  %9734 = vmatmul.f32.gmra.mxu0 %v349
  %v9735 = vpop.f32.mrf.mxu0
  %v9736 = vadd.f32 0.0, %v9735
  %9737 = vdwg.mxu0
  %v9738 = vrot.slane %v29, 5
  %v9739 = vsel %vm1658, %v7020, %v9738
  %9741 = vmatpush.msra.mxu0 0.0
  %9742 = vmatpush.msra.mxu0 0.0
  %9743 = vmatpush.msra.mxu0 0.0
  %9744 = vmatpush.msra.mxu0 0.0
  %9745 = vmatpush.msra.mxu0 0.0
  %9746 = vmatpush.msra.mxu0 0.0
  %9747 = vmatpush.msra.mxu0 0.0
  %9748 = vmatpush.msra.mxu0 0.0
  %9749 = vmatpush.msra.mxu0 0.0
  %9750 = vmatpush.msra.mxu0 0.0
  %9751 = vmatpush.msra.mxu0 0.0
  %9752 = vmatpush.msra.mxu0 0.0
  %9753 = vmatpush.msra.mxu0 0.0
  %9754 = vmatpush.msra.mxu0 0.0
  %9755 = vmatpush.msra.mxu0 0.0
  %9756 = vmatpush.msra.mxu0 %v9739
  %9757 = vmatmul.f32.gmra.mxu0 %v112
  %v9758 = vpop.f32.mrf.mxu0
  %v9759 = vadd.f32 0.0, %v9758
  %9760 = vmatmul.f32.gmra.mxu0 %v115
  %v9761 = vpop.f32.mrf.mxu0
  %v9762 = vadd.f32 0.0, %v9761
  %9763 = vmatmul.f32.gmra.mxu0 %v118
  %v9764 = vpop.f32.mrf.mxu0
  %v9765 = vadd.f32 0.0, %v9764
  %9766 = vmatmul.f32.gmra.mxu0 %v121
  %v9767 = vpop.f32.mrf.mxu0
  %v9768 = vadd.f32 0.0, %v9767
  %9769 = vmatmul.f32.gmra.mxu0 %v124
  %v9770 = vpop.f32.mrf.mxu0
  %v9771 = vadd.f32 0.0, %v9770
  %9772 = vmatmul.f32.gmra.mxu0 %v127
  %v9773 = vpop.f32.mrf.mxu0
  %v9774 = vadd.f32 0.0, %v9773
  %9775 = vmatmul.f32.gmra.mxu0 %v130
  %v9776 = vpop.f32.mrf.mxu0
  %v9777 = vadd.f32 0.0, %v9776
  %9778 = vmatmul.f32.gmra.mxu0 %v133
  %v9779 = vpop.f32.mrf.mxu0
  %v9780 = vadd.f32 0.0, %v9779
  %9781 = vmatmul.f32.gmra.mxu0 %v136
  %v9782 = vpop.f32.mrf.mxu0
  %v9783 = vadd.f32 0.0, %v9782
  %9784 = vmatmul.f32.gmra.mxu0 %v139
  %v9785 = vpop.f32.mrf.mxu0
  %v9786 = vadd.f32 0.0, %v9785
  %9787 = vmatmul.f32.gmra.mxu0 %v142
  %v9788 = vpop.f32.mrf.mxu0
  %v9789 = vadd.f32 0.0, %v9788
  %9790 = vmatmul.f32.gmra.mxu0 %v145
  %v9791 = vpop.f32.mrf.mxu0
  %v9792 = vadd.f32 0.0, %v9791
  %9793 = vmatmul.f32.gmra.mxu0 %v148
  %v9794 = vpop.f32.mrf.mxu0
  %v9795 = vadd.f32 0.0, %v9794
  %9796 = vmatmul.f32.gmra.mxu0 %v151
  %v9797 = vpop.f32.mrf.mxu0
  %v9798 = vadd.f32 0.0, %v9797
  %9799 = vmatmul.f32.gmra.mxu0 %v154
  %v9800 = vpop.f32.mrf.mxu0
  %v9801 = vadd.f32 0.0, %v9800
  %9802 = vmatmul.f32.gmra.mxu0 %v157
  %v9803 = vpop.f32.mrf.mxu0
  %v9804 = vadd.f32 0.0, %v9803
  %9805 = vmatmul.f32.gmra.mxu0 %v160
  %v9806 = vpop.f32.mrf.mxu0
  %v9807 = vadd.f32 0.0, %v9806
  %9808 = vmatmul.f32.gmra.mxu0 %v163
  %v9809 = vpop.f32.mrf.mxu0
  %v9810 = vadd.f32 0.0, %v9809
  %9811 = vmatmul.f32.gmra.mxu0 %v166
  %v9812 = vpop.f32.mrf.mxu0
  %v9813 = vadd.f32 0.0, %v9812
  %9814 = vmatmul.f32.gmra.mxu0 %v169
  %v9815 = vpop.f32.mrf.mxu0
  %v9816 = vadd.f32 0.0, %v9815
  %9817 = vmatmul.f32.gmra.mxu0 %v172
  %v9818 = vpop.f32.mrf.mxu0
  %v9819 = vadd.f32 0.0, %v9818
  %9820 = vmatmul.f32.gmra.mxu0 %v175
  %v9821 = vpop.f32.mrf.mxu0
  %v9822 = vadd.f32 0.0, %v9821
  %9823 = vmatmul.f32.gmra.mxu0 %v178
  %v9824 = vpop.f32.mrf.mxu0
  %v9825 = vadd.f32 0.0, %v9824
  %9826 = vmatmul.f32.gmra.mxu0 %v181
  %v9827 = vpop.f32.mrf.mxu0
  %v9828 = vadd.f32 0.0, %v9827
  %9829 = vmatmul.f32.gmra.mxu0 %v184
  %v9830 = vpop.f32.mrf.mxu0
  %v9831 = vadd.f32 0.0, %v9830
  %9832 = vmatmul.f32.gmra.mxu0 %v187
  %v9833 = vpop.f32.mrf.mxu0
  %v9834 = vadd.f32 0.0, %v9833
  %9835 = vmatmul.f32.gmra.mxu0 %v190
  %v9836 = vpop.f32.mrf.mxu0
  %v9837 = vadd.f32 0.0, %v9836
  %9838 = vmatmul.f32.gmra.mxu0 %v193
  %v9839 = vpop.f32.mrf.mxu0
  %v9840 = vadd.f32 0.0, %v9839
  %9841 = vmatmul.f32.gmra.mxu0 %v196
  %v9842 = vpop.f32.mrf.mxu0
  %v9843 = vadd.f32 0.0, %v9842
  %9844 = vmatmul.f32.gmra.mxu0 %v199
  %v9845 = vpop.f32.mrf.mxu0
  %v9846 = vadd.f32 0.0, %v9845
  %9847 = vmatmul.f32.gmra.mxu0 %v202
  %v9848 = vpop.f32.mrf.mxu0
  %v9849 = vadd.f32 0.0, %v9848
  %9850 = vmatmul.f32.gmra.mxu0 %v205
  %v9851 = vpop.f32.mrf.mxu0
  %v9852 = vadd.f32 0.0, %v9851
  %9853 = vmatmul.f32.gmra.mxu0 %v208
  %v9854 = vpop.f32.mrf.mxu0
  %v9855 = vadd.f32 0.0, %v9854
  %9856 = vmatmul.f32.gmra.mxu0 %v211
  %v9857 = vpop.f32.mrf.mxu0
  %v9858 = vadd.f32 0.0, %v9857
  %9859 = vmatmul.f32.gmra.mxu0 %v214
  %v9860 = vpop.f32.mrf.mxu0
  %v9861 = vadd.f32 0.0, %v9860
  %9862 = vmatmul.f32.gmra.mxu0 %v217
  %v9863 = vpop.f32.mrf.mxu0
  %v9864 = vadd.f32 0.0, %v9863
  %9865 = vmatmul.f32.gmra.mxu0 %v220
  %v9866 = vpop.f32.mrf.mxu0
  %v9867 = vadd.f32 0.0, %v9866
  %9868 = vmatmul.f32.gmra.mxu0 %v223
  %v9869 = vpop.f32.mrf.mxu0
  %v9870 = vadd.f32 0.0, %v9869
  %9871 = vmatmul.f32.gmra.mxu0 %v226
  %v9872 = vpop.f32.mrf.mxu0
  %v9873 = vadd.f32 0.0, %v9872
  %9874 = vmatmul.f32.gmra.mxu0 %v229
  %v9875 = vpop.f32.mrf.mxu0
  %v9876 = vadd.f32 0.0, %v9875
  %9877 = vmatmul.f32.gmra.mxu0 %v232
  %v9878 = vpop.f32.mrf.mxu0
  %v9879 = vadd.f32 0.0, %v9878
  %9880 = vmatmul.f32.gmra.mxu0 %v235
  %v9881 = vpop.f32.mrf.mxu0
  %v9882 = vadd.f32 0.0, %v9881
  %9883 = vmatmul.f32.gmra.mxu0 %v238
  %v9884 = vpop.f32.mrf.mxu0
  %v9885 = vadd.f32 0.0, %v9884
  %9886 = vmatmul.f32.gmra.mxu0 %v241
  %v9887 = vpop.f32.mrf.mxu0
  %v9888 = vadd.f32 0.0, %v9887
  %9889 = vmatmul.f32.gmra.mxu0 %v244
  %v9890 = vpop.f32.mrf.mxu0
  %v9891 = vadd.f32 0.0, %v9890
  %9892 = vmatmul.f32.gmra.mxu0 %v247
  %v9893 = vpop.f32.mrf.mxu0
  %v9894 = vadd.f32 0.0, %v9893
  %9895 = vmatmul.f32.gmra.mxu0 %v250
  %v9896 = vpop.f32.mrf.mxu0
  %v9897 = vadd.f32 0.0, %v9896
  %9898 = vmatmul.f32.gmra.mxu0 %v253
  %v9899 = vpop.f32.mrf.mxu0
  %v9900 = vadd.f32 0.0, %v9899
  %9901 = vmatmul.f32.gmra.mxu0 %v256
  %v9902 = vpop.f32.mrf.mxu0
  %v9903 = vadd.f32 0.0, %v9902
  %9904 = vmatmul.f32.gmra.mxu0 %v259
  %v9905 = vpop.f32.mrf.mxu0
  %v9906 = vadd.f32 0.0, %v9905
  %9907 = vmatmul.f32.gmra.mxu0 %v262
  %v9908 = vpop.f32.mrf.mxu0
  %v9909 = vadd.f32 0.0, %v9908
  %9910 = vmatmul.f32.gmra.mxu0 %v265
  %v9911 = vpop.f32.mrf.mxu0
  %v9912 = vadd.f32 0.0, %v9911
  %9913 = vmatmul.f32.gmra.mxu0 %v268
  %v9914 = vpop.f32.mrf.mxu0
  %v9915 = vadd.f32 0.0, %v9914
  %9916 = vmatmul.f32.gmra.mxu0 %v271
  %v9917 = vpop.f32.mrf.mxu0
  %v9918 = vadd.f32 0.0, %v9917
  %9919 = vmatmul.f32.gmra.mxu0 %v274
  %v9920 = vpop.f32.mrf.mxu0
  %v9921 = vadd.f32 0.0, %v9920
  %9922 = vmatmul.f32.gmra.mxu0 %v277
  %v9923 = vpop.f32.mrf.mxu0
  %v9924 = vadd.f32 0.0, %v9923
  %9925 = vmatmul.f32.gmra.mxu0 %v280
  %v9926 = vpop.f32.mrf.mxu0
  %v9927 = vadd.f32 0.0, %v9926
  %9928 = vmatmul.f32.gmra.mxu0 %v283
  %v9929 = vpop.f32.mrf.mxu0
  %v9930 = vadd.f32 0.0, %v9929
  %9931 = vmatmul.f32.gmra.mxu0 %v286
  %v9932 = vpop.f32.mrf.mxu0
  %v9933 = vadd.f32 0.0, %v9932
  %9934 = vmatmul.f32.gmra.mxu0 %v289
  %v9935 = vpop.f32.mrf.mxu0
  %v9936 = vadd.f32 0.0, %v9935
  %9937 = vmatmul.f32.gmra.mxu0 %v292
  %v9938 = vpop.f32.mrf.mxu0
  %v9939 = vadd.f32 0.0, %v9938
  %9940 = vmatmul.f32.gmra.mxu0 %v295
  %v9941 = vpop.f32.mrf.mxu0
  %v9942 = vadd.f32 0.0, %v9941
  %9943 = vmatmul.f32.gmra.mxu0 %v298
  %v9944 = vpop.f32.mrf.mxu0
  %v9945 = vadd.f32 0.0, %v9944
  %9946 = vmatmul.f32.gmra.mxu0 %v301
  %v9947 = vpop.f32.mrf.mxu0
  %v9948 = vadd.f32 0.0, %v9947
  %9949 = vmatmul.f32.gmra.mxu0 %v304
  %v9950 = vpop.f32.mrf.mxu0
  %v9951 = vadd.f32 0.0, %v9950
  %9952 = vmatmul.f32.gmra.mxu0 %v307
  %v9953 = vpop.f32.mrf.mxu0
  %v9954 = vadd.f32 0.0, %v9953
  %9955 = vmatmul.f32.gmra.mxu0 %v310
  %v9956 = vpop.f32.mrf.mxu0
  %v9957 = vadd.f32 0.0, %v9956
  %9958 = vmatmul.f32.gmra.mxu0 %v313
  %v9959 = vpop.f32.mrf.mxu0
  %v9960 = vadd.f32 0.0, %v9959
  %9961 = vmatmul.f32.gmra.mxu0 %v316
  %v9962 = vpop.f32.mrf.mxu0
  %v9963 = vadd.f32 0.0, %v9962
  %9964 = vmatmul.f32.gmra.mxu0 %v319
  %v9965 = vpop.f32.mrf.mxu0
  %v9966 = vadd.f32 0.0, %v9965
  %9967 = vmatmul.f32.gmra.mxu0 %v322
  %v9968 = vpop.f32.mrf.mxu0
  %v9969 = vadd.f32 0.0, %v9968
  %9970 = vmatmul.f32.gmra.mxu0 %v325
  %v9971 = vpop.f32.mrf.mxu0
  %v9972 = vadd.f32 0.0, %v9971
  %9973 = vmatmul.f32.gmra.mxu0 %v328
  %v9974 = vpop.f32.mrf.mxu0
  %v9975 = vadd.f32 0.0, %v9974
  %9976 = vmatmul.f32.gmra.mxu0 %v331
  %v9977 = vpop.f32.mrf.mxu0
  %v9978 = vadd.f32 0.0, %v9977
  %9979 = vmatmul.f32.gmra.mxu0 %v334
  %v9980 = vpop.f32.mrf.mxu0
  %v9981 = vadd.f32 0.0, %v9980
  %9982 = vmatmul.f32.gmra.mxu0 %v337
  %v9983 = vpop.f32.mrf.mxu0
  %v9984 = vadd.f32 0.0, %v9983
  %9985 = vmatmul.f32.gmra.mxu0 %v340
  %v9986 = vpop.f32.mrf.mxu0
  %v9987 = vadd.f32 0.0, %v9986
  %9988 = vmatmul.f32.gmra.mxu0 %v343
  %v9989 = vpop.f32.mrf.mxu0
  %v9990 = vadd.f32 0.0, %v9989
  %9991 = vmatmul.f32.gmra.mxu0 %v346
  %v9992 = vpop.f32.mrf.mxu0
  %v9993 = vadd.f32 0.0, %v9992
  %9994 = vmatmul.f32.gmra.mxu0 %v349
  %v9995 = vpop.f32.mrf.mxu0
  %v9996 = vadd.f32 0.0, %v9995
  %9997 = vdwg.mxu0
  %v9998 = vrot.slane %v29, 6
  %v9999 = vsel %vm1920, %v7280, %v9998
  %10001 = vmatpush.msra.mxu0 0.0
  %10002 = vmatpush.msra.mxu0 0.0
  %10003 = vmatpush.msra.mxu0 0.0
  %10004 = vmatpush.msra.mxu0 0.0
  %10005 = vmatpush.msra.mxu0 0.0
  %10006 = vmatpush.msra.mxu0 0.0
  %10007 = vmatpush.msra.mxu0 0.0
  %10008 = vmatpush.msra.mxu0 0.0
  %10009 = vmatpush.msra.mxu0 0.0
  %10010 = vmatpush.msra.mxu0 0.0
  %10011 = vmatpush.msra.mxu0 0.0
  %10012 = vmatpush.msra.mxu0 0.0
  %10013 = vmatpush.msra.mxu0 0.0
  %10014 = vmatpush.msra.mxu0 0.0
  %10015 = vmatpush.msra.mxu0 0.0
  %10016 = vmatpush.msra.mxu0 %v9999
  %10017 = vmatmul.f32.gmra.mxu0 %v112
  %v10018 = vpop.f32.mrf.mxu0
  %v10019 = vadd.f32 0.0, %v10018
  %10020 = vmatmul.f32.gmra.mxu0 %v115
  %v10021 = vpop.f32.mrf.mxu0
  %v10022 = vadd.f32 0.0, %v10021
  %10023 = vmatmul.f32.gmra.mxu0 %v118
  %v10024 = vpop.f32.mrf.mxu0
  %v10025 = vadd.f32 0.0, %v10024
  %10026 = vmatmul.f32.gmra.mxu0 %v121
  %v10027 = vpop.f32.mrf.mxu0
  %v10028 = vadd.f32 0.0, %v10027
  %10029 = vmatmul.f32.gmra.mxu0 %v124
  %v10030 = vpop.f32.mrf.mxu0
  %v10031 = vadd.f32 0.0, %v10030
  %10032 = vmatmul.f32.gmra.mxu0 %v127
  %v10033 = vpop.f32.mrf.mxu0
  %v10034 = vadd.f32 0.0, %v10033
  %10035 = vmatmul.f32.gmra.mxu0 %v130
  %v10036 = vpop.f32.mrf.mxu0
  %v10037 = vadd.f32 0.0, %v10036
  %10038 = vmatmul.f32.gmra.mxu0 %v133
  %v10039 = vpop.f32.mrf.mxu0
  %v10040 = vadd.f32 0.0, %v10039
  %10041 = vmatmul.f32.gmra.mxu0 %v136
  %v10042 = vpop.f32.mrf.mxu0
  %v10043 = vadd.f32 0.0, %v10042
  %10044 = vmatmul.f32.gmra.mxu0 %v139
  %v10045 = vpop.f32.mrf.mxu0
  %v10046 = vadd.f32 0.0, %v10045
  %10047 = vmatmul.f32.gmra.mxu0 %v142
  %v10048 = vpop.f32.mrf.mxu0
  %v10049 = vadd.f32 0.0, %v10048
  %10050 = vmatmul.f32.gmra.mxu0 %v145
  %v10051 = vpop.f32.mrf.mxu0
  %v10052 = vadd.f32 0.0, %v10051
  %10053 = vmatmul.f32.gmra.mxu0 %v148
  %v10054 = vpop.f32.mrf.mxu0
  %v10055 = vadd.f32 0.0, %v10054
  %10056 = vmatmul.f32.gmra.mxu0 %v151
  %v10057 = vpop.f32.mrf.mxu0
  %v10058 = vadd.f32 0.0, %v10057
  %10059 = vmatmul.f32.gmra.mxu0 %v154
  %v10060 = vpop.f32.mrf.mxu0
  %v10061 = vadd.f32 0.0, %v10060
  %10062 = vmatmul.f32.gmra.mxu0 %v157
  %v10063 = vpop.f32.mrf.mxu0
  %v10064 = vadd.f32 0.0, %v10063
  %10065 = vmatmul.f32.gmra.mxu0 %v160
  %v10066 = vpop.f32.mrf.mxu0
  %v10067 = vadd.f32 0.0, %v10066
  %10068 = vmatmul.f32.gmra.mxu0 %v163
  %v10069 = vpop.f32.mrf.mxu0
  %v10070 = vadd.f32 0.0, %v10069
  %10071 = vmatmul.f32.gmra.mxu0 %v166
  %v10072 = vpop.f32.mrf.mxu0
  %v10073 = vadd.f32 0.0, %v10072
  %10074 = vmatmul.f32.gmra.mxu0 %v169
  %v10075 = vpop.f32.mrf.mxu0
  %v10076 = vadd.f32 0.0, %v10075
  %10077 = vmatmul.f32.gmra.mxu0 %v172
  %v10078 = vpop.f32.mrf.mxu0
  %v10079 = vadd.f32 0.0, %v10078
  %10080 = vmatmul.f32.gmra.mxu0 %v175
  %v10081 = vpop.f32.mrf.mxu0
  %v10082 = vadd.f32 0.0, %v10081
  %10083 = vmatmul.f32.gmra.mxu0 %v178
  %v10084 = vpop.f32.mrf.mxu0
  %v10085 = vadd.f32 0.0, %v10084
  %10086 = vmatmul.f32.gmra.mxu0 %v181
  %v10087 = vpop.f32.mrf.mxu0
  %v10088 = vadd.f32 0.0, %v10087
  %10089 = vmatmul.f32.gmra.mxu0 %v184
  %v10090 = vpop.f32.mrf.mxu0
  %v10091 = vadd.f32 0.0, %v10090
  %10092 = vmatmul.f32.gmra.mxu0 %v187
  %v10093 = vpop.f32.mrf.mxu0
  %v10094 = vadd.f32 0.0, %v10093
  %10095 = vmatmul.f32.gmra.mxu0 %v190
  %v10096 = vpop.f32.mrf.mxu0
  %v10097 = vadd.f32 0.0, %v10096
  %10098 = vmatmul.f32.gmra.mxu0 %v193
  %v10099 = vpop.f32.mrf.mxu0
  %v10100 = vadd.f32 0.0, %v10099
  %10101 = vmatmul.f32.gmra.mxu0 %v196
  %v10102 = vpop.f32.mrf.mxu0
  %v10103 = vadd.f32 0.0, %v10102
  %10104 = vmatmul.f32.gmra.mxu0 %v199
  %v10105 = vpop.f32.mrf.mxu0
  %v10106 = vadd.f32 0.0, %v10105
  %10107 = vmatmul.f32.gmra.mxu0 %v202
  %v10108 = vpop.f32.mrf.mxu0
  %v10109 = vadd.f32 0.0, %v10108
  %10110 = vmatmul.f32.gmra.mxu0 %v205
  %v10111 = vpop.f32.mrf.mxu0
  %v10112 = vadd.f32 0.0, %v10111
  %10113 = vmatmul.f32.gmra.mxu0 %v208
  %v10114 = vpop.f32.mrf.mxu0
  %v10115 = vadd.f32 0.0, %v10114
  %10116 = vmatmul.f32.gmra.mxu0 %v211
  %v10117 = vpop.f32.mrf.mxu0
  %v10118 = vadd.f32 0.0, %v10117
  %10119 = vmatmul.f32.gmra.mxu0 %v214
  %v10120 = vpop.f32.mrf.mxu0
  %v10121 = vadd.f32 0.0, %v10120
  %10122 = vmatmul.f32.gmra.mxu0 %v217
  %v10123 = vpop.f32.mrf.mxu0
  %v10124 = vadd.f32 0.0, %v10123
  %10125 = vmatmul.f32.gmra.mxu0 %v220
  %v10126 = vpop.f32.mrf.mxu0
  %v10127 = vadd.f32 0.0, %v10126
  %10128 = vmatmul.f32.gmra.mxu0 %v223
  %v10129 = vpop.f32.mrf.mxu0
  %v10130 = vadd.f32 0.0, %v10129
  %10131 = vmatmul.f32.gmra.mxu0 %v226
  %v10132 = vpop.f32.mrf.mxu0
  %v10133 = vadd.f32 0.0, %v10132
  %10134 = vmatmul.f32.gmra.mxu0 %v229
  %v10135 = vpop.f32.mrf.mxu0
  %v10136 = vadd.f32 0.0, %v10135
  %10137 = vmatmul.f32.gmra.mxu0 %v232
  %v10138 = vpop.f32.mrf.mxu0
  %v10139 = vadd.f32 0.0, %v10138
  %10140 = vmatmul.f32.gmra.mxu0 %v235
  %v10141 = vpop.f32.mrf.mxu0
  %v10142 = vadd.f32 0.0, %v10141
  %10143 = vmatmul.f32.gmra.mxu0 %v238
  %v10144 = vpop.f32.mrf.mxu0
  %v10145 = vadd.f32 0.0, %v10144
  %10146 = vmatmul.f32.gmra.mxu0 %v241
  %v10147 = vpop.f32.mrf.mxu0
  %v10148 = vadd.f32 0.0, %v10147
  %10149 = vmatmul.f32.gmra.mxu0 %v244
  %v10150 = vpop.f32.mrf.mxu0
  %v10151 = vadd.f32 0.0, %v10150
  %10152 = vmatmul.f32.gmra.mxu0 %v247
  %v10153 = vpop.f32.mrf.mxu0
  %v10154 = vadd.f32 0.0, %v10153
  %10155 = vmatmul.f32.gmra.mxu0 %v250
  %v10156 = vpop.f32.mrf.mxu0
  %v10157 = vadd.f32 0.0, %v10156
  %10158 = vmatmul.f32.gmra.mxu0 %v253
  %v10159 = vpop.f32.mrf.mxu0
  %v10160 = vadd.f32 0.0, %v10159
  %10161 = vmatmul.f32.gmra.mxu0 %v256
  %v10162 = vpop.f32.mrf.mxu0
  %v10163 = vadd.f32 0.0, %v10162
  %10164 = vmatmul.f32.gmra.mxu0 %v259
  %v10165 = vpop.f32.mrf.mxu0
  %v10166 = vadd.f32 0.0, %v10165
  %10167 = vmatmul.f32.gmra.mxu0 %v262
  %v10168 = vpop.f32.mrf.mxu0
  %v10169 = vadd.f32 0.0, %v10168
  %10170 = vmatmul.f32.gmra.mxu0 %v265
  %v10171 = vpop.f32.mrf.mxu0
  %v10172 = vadd.f32 0.0, %v10171
  %10173 = vmatmul.f32.gmra.mxu0 %v268
  %v10174 = vpop.f32.mrf.mxu0
  %v10175 = vadd.f32 0.0, %v10174
  %10176 = vmatmul.f32.gmra.mxu0 %v271
  %v10177 = vpop.f32.mrf.mxu0
  %v10178 = vadd.f32 0.0, %v10177
  %10179 = vmatmul.f32.gmra.mxu0 %v274
  %v10180 = vpop.f32.mrf.mxu0
  %v10181 = vadd.f32 0.0, %v10180
  %10182 = vmatmul.f32.gmra.mxu0 %v277
  %v10183 = vpop.f32.mrf.mxu0
  %v10184 = vadd.f32 0.0, %v10183
  %10185 = vmatmul.f32.gmra.mxu0 %v280
  %v10186 = vpop.f32.mrf.mxu0
  %v10187 = vadd.f32 0.0, %v10186
  %10188 = vmatmul.f32.gmra.mxu0 %v283
  %v10189 = vpop.f32.mrf.mxu0
  %v10190 = vadd.f32 0.0, %v10189
  %10191 = vmatmul.f32.gmra.mxu0 %v286
  %v10192 = vpop.f32.mrf.mxu0
  %v10193 = vadd.f32 0.0, %v10192
  %10194 = vmatmul.f32.gmra.mxu0 %v289
  %v10195 = vpop.f32.mrf.mxu0
  %v10196 = vadd.f32 0.0, %v10195
  %10197 = vmatmul.f32.gmra.mxu0 %v292
  %v10198 = vpop.f32.mrf.mxu0
  %v10199 = vadd.f32 0.0, %v10198
  %10200 = vmatmul.f32.gmra.mxu0 %v295
  %v10201 = vpop.f32.mrf.mxu0
  %v10202 = vadd.f32 0.0, %v10201
  %10203 = vmatmul.f32.gmra.mxu0 %v298
  %v10204 = vpop.f32.mrf.mxu0
  %v10205 = vadd.f32 0.0, %v10204
  %10206 = vmatmul.f32.gmra.mxu0 %v301
  %v10207 = vpop.f32.mrf.mxu0
  %v10208 = vadd.f32 0.0, %v10207
  %10209 = vmatmul.f32.gmra.mxu0 %v304
  %v10210 = vpop.f32.mrf.mxu0
  %v10211 = vadd.f32 0.0, %v10210
  %10212 = vmatmul.f32.gmra.mxu0 %v307
  %v10213 = vpop.f32.mrf.mxu0
  %v10214 = vadd.f32 0.0, %v10213
  %10215 = vmatmul.f32.gmra.mxu0 %v310
  %v10216 = vpop.f32.mrf.mxu0
  %v10217 = vadd.f32 0.0, %v10216
  %10218 = vmatmul.f32.gmra.mxu0 %v313
  %v10219 = vpop.f32.mrf.mxu0
  %v10220 = vadd.f32 0.0, %v10219
  %10221 = vmatmul.f32.gmra.mxu0 %v316
  %v10222 = vpop.f32.mrf.mxu0
  %v10223 = vadd.f32 0.0, %v10222
  %10224 = vmatmul.f32.gmra.mxu0 %v319
  %v10225 = vpop.f32.mrf.mxu0
  %v10226 = vadd.f32 0.0, %v10225
  %10227 = vmatmul.f32.gmra.mxu0 %v322
  %v10228 = vpop.f32.mrf.mxu0
  %v10229 = vadd.f32 0.0, %v10228
  %10230 = vmatmul.f32.gmra.mxu0 %v325
  %v10231 = vpop.f32.mrf.mxu0
  %v10232 = vadd.f32 0.0, %v10231
  %10233 = vmatmul.f32.gmra.mxu0 %v328
  %v10234 = vpop.f32.mrf.mxu0
  %v10235 = vadd.f32 0.0, %v10234
  %10236 = vmatmul.f32.gmra.mxu0 %v331
  %v10237 = vpop.f32.mrf.mxu0
  %v10238 = vadd.f32 0.0, %v10237
  %10239 = vmatmul.f32.gmra.mxu0 %v334
  %v10240 = vpop.f32.mrf.mxu0
  %v10241 = vadd.f32 0.0, %v10240
  %10242 = vmatmul.f32.gmra.mxu0 %v337
  %v10243 = vpop.f32.mrf.mxu0
  %v10244 = vadd.f32 0.0, %v10243
  %10245 = vmatmul.f32.gmra.mxu0 %v340
  %v10246 = vpop.f32.mrf.mxu0
  %v10247 = vadd.f32 0.0, %v10246
  %10248 = vmatmul.f32.gmra.mxu0 %v343
  %v10249 = vpop.f32.mrf.mxu0
  %v10250 = vadd.f32 0.0, %v10249
  %10251 = vmatmul.f32.gmra.mxu0 %v346
  %v10252 = vpop.f32.mrf.mxu0
  %v10253 = vadd.f32 0.0, %v10252
  %10254 = vmatmul.f32.gmra.mxu0 %v349
  %v10255 = vpop.f32.mrf.mxu0
  %v10256 = vadd.f32 0.0, %v10255
  %10257 = vdwg.mxu0
  %v10258 = vrot.slane %v29, 7
  %v10259 = vsel %vm2182, %v7540, %v10258
  %10261 = vmatpush.msra.mxu0 0.0
  %10262 = vmatpush.msra.mxu0 0.0
  %10263 = vmatpush.msra.mxu0 0.0
  %10264 = vmatpush.msra.mxu0 0.0
  %10265 = vmatpush.msra.mxu0 0.0
  %10266 = vmatpush.msra.mxu0 0.0
  %10267 = vmatpush.msra.mxu0 0.0
  %10268 = vmatpush.msra.mxu0 0.0
  %10269 = vmatpush.msra.mxu0 0.0
  %10270 = vmatpush.msra.mxu0 0.0
  %10271 = vmatpush.msra.mxu0 0.0
  %10272 = vmatpush.msra.mxu0 0.0
  %10273 = vmatpush.msra.mxu0 0.0
  %10274 = vmatpush.msra.mxu0 0.0
  %10275 = vmatpush.msra.mxu0 0.0
  %10276 = vmatpush.msra.mxu0 %v10259
  %10277 = vmatmul.f32.gmra.mxu0 %v112
  %v10278 = vpop.f32.mrf.mxu0
  %v10279 = vadd.f32 0.0, %v10278
  %10280 = vmatmul.f32.gmra.mxu0 %v115
  %v10281 = vpop.f32.mrf.mxu0
  %v10282 = vadd.f32 0.0, %v10281
  %10283 = vmatmul.f32.gmra.mxu0 %v118
  %v10284 = vpop.f32.mrf.mxu0
  %v10285 = vadd.f32 0.0, %v10284
  %10286 = vmatmul.f32.gmra.mxu0 %v121
  %v10287 = vpop.f32.mrf.mxu0
  %v10288 = vadd.f32 0.0, %v10287
  %10289 = vmatmul.f32.gmra.mxu0 %v124
  %v10290 = vpop.f32.mrf.mxu0
  %v10291 = vadd.f32 0.0, %v10290
  %10292 = vmatmul.f32.gmra.mxu0 %v127
  %v10293 = vpop.f32.mrf.mxu0
  %v10294 = vadd.f32 0.0, %v10293
  %10295 = vmatmul.f32.gmra.mxu0 %v130
  %v10296 = vpop.f32.mrf.mxu0
  %v10297 = vadd.f32 0.0, %v10296
  %10298 = vmatmul.f32.gmra.mxu0 %v133
  %v10299 = vpop.f32.mrf.mxu0
  %v10300 = vadd.f32 0.0, %v10299
  %10301 = vmatmul.f32.gmra.mxu0 %v136
  %v10302 = vpop.f32.mrf.mxu0
  %v10303 = vadd.f32 0.0, %v10302
  %10304 = vmatmul.f32.gmra.mxu0 %v139
  %v10305 = vpop.f32.mrf.mxu0
  %v10306 = vadd.f32 0.0, %v10305
  %10307 = vmatmul.f32.gmra.mxu0 %v142
  %v10308 = vpop.f32.mrf.mxu0
  %v10309 = vadd.f32 0.0, %v10308
  %10310 = vmatmul.f32.gmra.mxu0 %v145
  %v10311 = vpop.f32.mrf.mxu0
  %v10312 = vadd.f32 0.0, %v10311
  %10313 = vmatmul.f32.gmra.mxu0 %v148
  %v10314 = vpop.f32.mrf.mxu0
  %v10315 = vadd.f32 0.0, %v10314
  %10316 = vmatmul.f32.gmra.mxu0 %v151
  %v10317 = vpop.f32.mrf.mxu0
  %v10318 = vadd.f32 0.0, %v10317
  %10319 = vmatmul.f32.gmra.mxu0 %v154
  %v10320 = vpop.f32.mrf.mxu0
  %v10321 = vadd.f32 0.0, %v10320
  %10322 = vmatmul.f32.gmra.mxu0 %v157
  %v10323 = vpop.f32.mrf.mxu0
  %v10324 = vadd.f32 0.0, %v10323
  %10325 = vmatmul.f32.gmra.mxu0 %v160
  %v10326 = vpop.f32.mrf.mxu0
  %v10327 = vadd.f32 0.0, %v10326
  %10328 = vmatmul.f32.gmra.mxu0 %v163
  %v10329 = vpop.f32.mrf.mxu0
  %v10330 = vadd.f32 0.0, %v10329
  %10331 = vmatmul.f32.gmra.mxu0 %v166
  %v10332 = vpop.f32.mrf.mxu0
  %v10333 = vadd.f32 0.0, %v10332
  %10334 = vmatmul.f32.gmra.mxu0 %v169
  %v10335 = vpop.f32.mrf.mxu0
  %v10336 = vadd.f32 0.0, %v10335
  %10337 = vmatmul.f32.gmra.mxu0 %v172
  %v10338 = vpop.f32.mrf.mxu0
  %v10339 = vadd.f32 0.0, %v10338
  %10340 = vmatmul.f32.gmra.mxu0 %v175
  %v10341 = vpop.f32.mrf.mxu0
  %v10342 = vadd.f32 0.0, %v10341
  %10343 = vmatmul.f32.gmra.mxu0 %v178
  %v10344 = vpop.f32.mrf.mxu0
  %v10345 = vadd.f32 0.0, %v10344
  %10346 = vmatmul.f32.gmra.mxu0 %v181
  %v10347 = vpop.f32.mrf.mxu0
  %v10348 = vadd.f32 0.0, %v10347
  %10349 = vmatmul.f32.gmra.mxu0 %v184
  %v10350 = vpop.f32.mrf.mxu0
  %v10351 = vadd.f32 0.0, %v10350
  %10352 = vmatmul.f32.gmra.mxu0 %v187
  %v10353 = vpop.f32.mrf.mxu0
  %v10354 = vadd.f32 0.0, %v10353
  %10355 = vmatmul.f32.gmra.mxu0 %v190
  %v10356 = vpop.f32.mrf.mxu0
  %v10357 = vadd.f32 0.0, %v10356
  %10358 = vmatmul.f32.gmra.mxu0 %v193
  %v10359 = vpop.f32.mrf.mxu0
  %v10360 = vadd.f32 0.0, %v10359
  %10361 = vmatmul.f32.gmra.mxu0 %v196
  %v10362 = vpop.f32.mrf.mxu0
  %v10363 = vadd.f32 0.0, %v10362
  %10364 = vmatmul.f32.gmra.mxu0 %v199
  %v10365 = vpop.f32.mrf.mxu0
  %v10366 = vadd.f32 0.0, %v10365
  %10367 = vmatmul.f32.gmra.mxu0 %v202
  %v10368 = vpop.f32.mrf.mxu0
  %v10369 = vadd.f32 0.0, %v10368
  %10370 = vmatmul.f32.gmra.mxu0 %v205
  %v10371 = vpop.f32.mrf.mxu0
  %v10372 = vadd.f32 0.0, %v10371
  %10373 = vmatmul.f32.gmra.mxu0 %v208
  %v10374 = vpop.f32.mrf.mxu0
  %v10375 = vadd.f32 0.0, %v10374
  %10376 = vmatmul.f32.gmra.mxu0 %v211
  %v10377 = vpop.f32.mrf.mxu0
  %v10378 = vadd.f32 0.0, %v10377
  %10379 = vmatmul.f32.gmra.mxu0 %v214
  %v10380 = vpop.f32.mrf.mxu0
  %v10381 = vadd.f32 0.0, %v10380
  %10382 = vmatmul.f32.gmra.mxu0 %v217
  %v10383 = vpop.f32.mrf.mxu0
  %v10384 = vadd.f32 0.0, %v10383
  %10385 = vmatmul.f32.gmra.mxu0 %v220
  %v10386 = vpop.f32.mrf.mxu0
  %v10387 = vadd.f32 0.0, %v10386
  %10388 = vmatmul.f32.gmra.mxu0 %v223
  %v10389 = vpop.f32.mrf.mxu0
  %v10390 = vadd.f32 0.0, %v10389
  %10391 = vmatmul.f32.gmra.mxu0 %v226
  %v10392 = vpop.f32.mrf.mxu0
  %v10393 = vadd.f32 0.0, %v10392
  %10394 = vmatmul.f32.gmra.mxu0 %v229
  %v10395 = vpop.f32.mrf.mxu0
  %v10396 = vadd.f32 0.0, %v10395
  %10397 = vmatmul.f32.gmra.mxu0 %v232
  %v10398 = vpop.f32.mrf.mxu0
  %v10399 = vadd.f32 0.0, %v10398
  %10400 = vmatmul.f32.gmra.mxu0 %v235
  %v10401 = vpop.f32.mrf.mxu0
  %v10402 = vadd.f32 0.0, %v10401
  %10403 = vmatmul.f32.gmra.mxu0 %v238
  %v10404 = vpop.f32.mrf.mxu0
  %v10405 = vadd.f32 0.0, %v10404
  %10406 = vmatmul.f32.gmra.mxu0 %v241
  %v10407 = vpop.f32.mrf.mxu0
  %v10408 = vadd.f32 0.0, %v10407
  %10409 = vmatmul.f32.gmra.mxu0 %v244
  %v10410 = vpop.f32.mrf.mxu0
  %v10411 = vadd.f32 0.0, %v10410
  %10412 = vmatmul.f32.gmra.mxu0 %v247
  %v10413 = vpop.f32.mrf.mxu0
  %v10414 = vadd.f32 0.0, %v10413
  %10415 = vmatmul.f32.gmra.mxu0 %v250
  %v10416 = vpop.f32.mrf.mxu0
  %v10417 = vadd.f32 0.0, %v10416
  %10418 = vmatmul.f32.gmra.mxu0 %v253
  %v10419 = vpop.f32.mrf.mxu0
  %v10420 = vadd.f32 0.0, %v10419
  %10421 = vmatmul.f32.gmra.mxu0 %v256
  %v10422 = vpop.f32.mrf.mxu0
  %v10423 = vadd.f32 0.0, %v10422
  %10424 = vmatmul.f32.gmra.mxu0 %v259
  %v10425 = vpop.f32.mrf.mxu0
  %v10426 = vadd.f32 0.0, %v10425
  %10427 = vmatmul.f32.gmra.mxu0 %v262
  %v10428 = vpop.f32.mrf.mxu0
  %v10429 = vadd.f32 0.0, %v10428
  %10430 = vmatmul.f32.gmra.mxu0 %v265
  %v10431 = vpop.f32.mrf.mxu0
  %v10432 = vadd.f32 0.0, %v10431
  %10433 = vmatmul.f32.gmra.mxu0 %v268
  %v10434 = vpop.f32.mrf.mxu0
  %v10435 = vadd.f32 0.0, %v10434
  %10436 = vmatmul.f32.gmra.mxu0 %v271
  %v10437 = vpop.f32.mrf.mxu0
  %v10438 = vadd.f32 0.0, %v10437
  %10439 = vmatmul.f32.gmra.mxu0 %v274
  %v10440 = vpop.f32.mrf.mxu0
  %v10441 = vadd.f32 0.0, %v10440
  %10442 = vmatmul.f32.gmra.mxu0 %v277
  %v10443 = vpop.f32.mrf.mxu0
  %v10444 = vadd.f32 0.0, %v10443
  %10445 = vmatmul.f32.gmra.mxu0 %v280
  %v10446 = vpop.f32.mrf.mxu0
  %v10447 = vadd.f32 0.0, %v10446
  %10448 = vmatmul.f32.gmra.mxu0 %v283
  %v10449 = vpop.f32.mrf.mxu0
  %v10450 = vadd.f32 0.0, %v10449
  %10451 = vmatmul.f32.gmra.mxu0 %v286
  %v10452 = vpop.f32.mrf.mxu0
  %v10453 = vadd.f32 0.0, %v10452
  %10454 = vmatmul.f32.gmra.mxu0 %v289
  %v10455 = vpop.f32.mrf.mxu0
  %v10456 = vadd.f32 0.0, %v10455
  %10457 = vmatmul.f32.gmra.mxu0 %v292
  %v10458 = vpop.f32.mrf.mxu0
  %v10459 = vadd.f32 0.0, %v10458
  %10460 = vmatmul.f32.gmra.mxu0 %v295
  %v10461 = vpop.f32.mrf.mxu0
  %v10462 = vadd.f32 0.0, %v10461
  %10463 = vmatmul.f32.gmra.mxu0 %v298
  %v10464 = vpop.f32.mrf.mxu0
  %v10465 = vadd.f32 0.0, %v10464
  %10466 = vmatmul.f32.gmra.mxu0 %v301
  %v10467 = vpop.f32.mrf.mxu0
  %v10468 = vadd.f32 0.0, %v10467
  %10469 = vmatmul.f32.gmra.mxu0 %v304
  %v10470 = vpop.f32.mrf.mxu0
  %v10471 = vadd.f32 0.0, %v10470
  %10472 = vmatmul.f32.gmra.mxu0 %v307
  %v10473 = vpop.f32.mrf.mxu0
  %v10474 = vadd.f32 0.0, %v10473
  %10475 = vmatmul.f32.gmra.mxu0 %v310
  %v10476 = vpop.f32.mrf.mxu0
  %v10477 = vadd.f32 0.0, %v10476
  %10478 = vmatmul.f32.gmra.mxu0 %v313
  %v10479 = vpop.f32.mrf.mxu0
  %v10480 = vadd.f32 0.0, %v10479
  %10481 = vmatmul.f32.gmra.mxu0 %v316
  %v10482 = vpop.f32.mrf.mxu0
  %v10483 = vadd.f32 0.0, %v10482
  %10484 = vmatmul.f32.gmra.mxu0 %v319
  %v10485 = vpop.f32.mrf.mxu0
  %v10486 = vadd.f32 0.0, %v10485
  %10487 = vmatmul.f32.gmra.mxu0 %v322
  %v10488 = vpop.f32.mrf.mxu0
  %v10489 = vadd.f32 0.0, %v10488
  %10490 = vmatmul.f32.gmra.mxu0 %v325
  %v10491 = vpop.f32.mrf.mxu0
  %v10492 = vadd.f32 0.0, %v10491
  %10493 = vmatmul.f32.gmra.mxu0 %v328
  %v10494 = vpop.f32.mrf.mxu0
  %v10495 = vadd.f32 0.0, %v10494
  %10496 = vmatmul.f32.gmra.mxu0 %v331
  %v10497 = vpop.f32.mrf.mxu0
  %v10498 = vadd.f32 0.0, %v10497
  %10499 = vmatmul.f32.gmra.mxu0 %v334
  %v10500 = vpop.f32.mrf.mxu0
  %v10501 = vadd.f32 0.0, %v10500
  %10502 = vmatmul.f32.gmra.mxu0 %v337
  %v10503 = vpop.f32.mrf.mxu0
  %v10504 = vadd.f32 0.0, %v10503
  %10505 = vmatmul.f32.gmra.mxu0 %v340
  %v10506 = vpop.f32.mrf.mxu0
  %v10507 = vadd.f32 0.0, %v10506
  %10508 = vmatmul.f32.gmra.mxu0 %v343
  %v10509 = vpop.f32.mrf.mxu0
  %v10510 = vadd.f32 0.0, %v10509
  %10511 = vmatmul.f32.gmra.mxu0 %v346
  %v10512 = vpop.f32.mrf.mxu0
  %v10513 = vadd.f32 0.0, %v10512
  %10514 = vmatmul.f32.gmra.mxu0 %v349
  %v10515 = vpop.f32.mrf.mxu0
  %v10516 = vadd.f32 0.0, %v10515
  %10517 = vdwg.mxu0
  %v10518 = vmax.f32 %v8458, %v8719
  %v10519 = vmax.f32 %v8461, %v8722
  %v10520 = vmax.f32 %v8464, %v8725
  %v10521 = vmax.f32 %v8467, %v8728
  %v10522 = vmax.f32 %v8470, %v8731
  %v10523 = vmax.f32 %v8473, %v8734
  %v10524 = vmax.f32 %v8476, %v8737
  %v10525 = vmax.f32 %v8479, %v8740
  %v10526 = vmax.f32 %v8482, %v8743
  %v10527 = vmax.f32 %v8485, %v8746
  %v10528 = vmax.f32 %v8488, %v8749
  %v10529 = vmax.f32 %v8491, %v8752
  %v10530 = vmax.f32 %v8494, %v8755
  %v10531 = vmax.f32 %v8497, %v8758
  %v10532 = vmax.f32 %v8500, %v8761
  %v10533 = vmax.f32 %v8503, %v8764
  %v10534 = vmax.f32 %v8506, %v8767
  %v10535 = vmax.f32 %v8509, %v8770
  %v10536 = vmax.f32 %v8512, %v8773
  %v10537 = vmax.f32 %v8515, %v8776
  %v10538 = vmax.f32 %v8518, %v8779
  %v10539 = vmax.f32 %v8521, %v8782
  %v10540 = vmax.f32 %v8524, %v8785
  %v10541 = vmax.f32 %v8527, %v8788
  %v10542 = vmax.f32 %v8530, %v8791
  %v10543 = vmax.f32 %v8533, %v8794
  %v10544 = vmax.f32 %v8536, %v8797
  %v10545 = vmax.f32 %v8539, %v8800
  %v10546 = vmax.f32 %v8542, %v8803
  %v10547 = vmax.f32 %v8545, %v8806
  %v10548 = vmax.f32 %v8548, %v8809
  %v10549 = vmax.f32 %v8551, %v8812
  %v10550 = vmax.f32 %v8554, %v8815
  %v10551 = vmax.f32 %v8557, %v8818
  %v10552 = vmax.f32 %v8560, %v8821
  %v10553 = vmax.f32 %v8563, %v8824
  %v10554 = vmax.f32 %v8566, %v8827
  %v10555 = vmax.f32 %v8569, %v8830
  %v10556 = vmax.f32 %v8572, %v8833
  %v10557 = vmax.f32 %v8575, %v8836
  %v10558 = vmax.f32 %v8578, %v8839
  %v10559 = vmax.f32 %v8581, %v8842
  %v10560 = vmax.f32 %v8584, %v8845
  %v10561 = vmax.f32 %v8587, %v8848
  %v10562 = vmax.f32 %v8590, %v8851
  %v10563 = vmax.f32 %v8593, %v8854
  %v10564 = vmax.f32 %v8596, %v8857
  %v10565 = vmax.f32 %v8599, %v8860
  %v10566 = vmax.f32 %v8602, %v8863
  %v10567 = vmax.f32 %v8605, %v8866
  %v10568 = vmax.f32 %v8608, %v8869
  %v10569 = vmax.f32 %v8611, %v8872
  %v10570 = vmax.f32 %v8614, %v8875
  %v10571 = vmax.f32 %v8617, %v8878
  %v10572 = vmax.f32 %v8620, %v8881
  %v10573 = vmax.f32 %v8623, %v8884
  %v10574 = vmax.f32 %v8626, %v8887
  %v10575 = vmax.f32 %v8629, %v8890
  %v10576 = vmax.f32 %v8632, %v8893
  %v10577 = vmax.f32 %v8635, %v8896
  %v10578 = vmax.f32 %v8638, %v8899
  %v10579 = vmax.f32 %v8641, %v8902
  %v10580 = vmax.f32 %v8644, %v8905
  %v10581 = vmax.f32 %v8647, %v8908
  %v10582 = vmax.f32 %v8650, %v8911
  %v10583 = vmax.f32 %v8653, %v8914
  %v10584 = vmax.f32 %v8656, %v8917
  %v10585 = vmax.f32 %v8659, %v8920
  %v10586 = vmax.f32 %v8662, %v8923
  %v10587 = vmax.f32 %v8665, %v8926
  %v10588 = vmax.f32 %v8668, %v8929
  %v10589 = vmax.f32 %v8671, %v8932
  %v10590 = vmax.f32 %v8674, %v8935
  %v10591 = vmax.f32 %v8677, %v8938
  %v10592 = vmax.f32 %v8680, %v8941
  %v10593 = vmax.f32 %v8683, %v8944
  %v10594 = vmax.f32 %v8686, %v8947
  %v10595 = vmax.f32 %v8689, %v8950
  %v10596 = vmax.f32 %v8692, %v8953
  %v10597 = vmax.f32 %v8695, %v8956
  %v10598 = vmax.f32 %v8979, %v9239
  %v10599 = vmax.f32 %v8982, %v9242
  %v10600 = vmax.f32 %v8985, %v9245
  %v10601 = vmax.f32 %v8988, %v9248
  %v10602 = vmax.f32 %v8991, %v9251
  %v10603 = vmax.f32 %v8994, %v9254
  %v10604 = vmax.f32 %v8997, %v9257
  %v10605 = vmax.f32 %v9000, %v9260
  %v10606 = vmax.f32 %v9003, %v9263
  %v10607 = vmax.f32 %v9006, %v9266
  %v10608 = vmax.f32 %v9009, %v9269
  %v10609 = vmax.f32 %v9012, %v9272
  %v10610 = vmax.f32 %v9015, %v9275
  %v10611 = vmax.f32 %v9018, %v9278
  %v10612 = vmax.f32 %v9021, %v9281
  %v10613 = vmax.f32 %v9024, %v9284
  %v10614 = vmax.f32 %v9027, %v9287
  %v10615 = vmax.f32 %v9030, %v9290
  %v10616 = vmax.f32 %v9033, %v9293
  %v10617 = vmax.f32 %v9036, %v9296
  %v10618 = vmax.f32 %v9039, %v9299
  %v10619 = vmax.f32 %v9042, %v9302
  %v10620 = vmax.f32 %v9045, %v9305
  %v10621 = vmax.f32 %v9048, %v9308
  %v10622 = vmax.f32 %v9051, %v9311
  %v10623 = vmax.f32 %v9054, %v9314
  %v10624 = vmax.f32 %v9057, %v9317
  %v10625 = vmax.f32 %v9060, %v9320
  %v10626 = vmax.f32 %v9063, %v9323
  %v10627 = vmax.f32 %v9066, %v9326
  %v10628 = vmax.f32 %v9069, %v9329
  %v10629 = vmax.f32 %v9072, %v9332
  %v10630 = vmax.f32 %v9075, %v9335
  %v10631 = vmax.f32 %v9078, %v9338
  %v10632 = vmax.f32 %v9081, %v9341
  %v10633 = vmax.f32 %v9084, %v9344
  %v10634 = vmax.f32 %v9087, %v9347
  %v10635 = vmax.f32 %v9090, %v9350
  %v10636 = vmax.f32 %v9093, %v9353
  %v10637 = vmax.f32 %v9096, %v9356
  %v10638 = vmax.f32 %v9099, %v9359
  %v10639 = vmax.f32 %v9102, %v9362
  %v10640 = vmax.f32 %v9105, %v9365
  %v10641 = vmax.f32 %v9108, %v9368
  %v10642 = vmax.f32 %v9111, %v9371
  %v10643 = vmax.f32 %v9114, %v9374
  %v10644 = vmax.f32 %v9117, %v9377
  %v10645 = vmax.f32 %v9120, %v9380
  %v10646 = vmax.f32 %v9123, %v9383
  %v10647 = vmax.f32 %v9126, %v9386
  %v10648 = vmax.f32 %v9129, %v9389
  %v10649 = vmax.f32 %v9132, %v9392
  %v10650 = vmax.f32 %v9135, %v9395
  %v10651 = vmax.f32 %v9138, %v9398
  %v10652 = vmax.f32 %v9141, %v9401
  %v10653 = vmax.f32 %v9144, %v9404
  %v10654 = vmax.f32 %v9147, %v9407
  %v10655 = vmax.f32 %v9150, %v9410
  %v10656 = vmax.f32 %v9153, %v9413
  %v10657 = vmax.f32 %v9156, %v9416
  %v10658 = vmax.f32 %v9159, %v9419
  %v10659 = vmax.f32 %v9162, %v9422
  %v10660 = vmax.f32 %v9165, %v9425
  %v10661 = vmax.f32 %v9168, %v9428
  %v10662 = vmax.f32 %v9171, %v9431
  %v10663 = vmax.f32 %v9174, %v9434
  %v10664 = vmax.f32 %v9177, %v9437
  %v10665 = vmax.f32 %v9180, %v9440
  %v10666 = vmax.f32 %v9183, %v9443
  %v10667 = vmax.f32 %v9186, %v9446
  %v10668 = vmax.f32 %v9189, %v9449
  %v10669 = vmax.f32 %v9192, %v9452
  %v10670 = vmax.f32 %v9195, %v9455
  %v10671 = vmax.f32 %v9198, %v9458
  %v10672 = vmax.f32 %v9201, %v9461
  %v10673 = vmax.f32 %v9204, %v9464
  %v10674 = vmax.f32 %v9207, %v9467
  %v10675 = vmax.f32 %v9210, %v9470
  %v10676 = vmax.f32 %v9213, %v9473
  %v10677 = vmax.f32 %v9216, %v9476
  %v10678 = vmax.f32 %v9499, %v9759
  %v10679 = vmax.f32 %v9502, %v9762
  %v10680 = vmax.f32 %v9505, %v9765
  %v10681 = vmax.f32 %v9508, %v9768
  %v10682 = vmax.f32 %v9511, %v9771
  %v10683 = vmax.f32 %v9514, %v9774
  %v10684 = vmax.f32 %v9517, %v9777
  %v10685 = vmax.f32 %v9520, %v9780
  %v10686 = vmax.f32 %v9523, %v9783
  %v10687 = vmax.f32 %v9526, %v9786
  %v10688 = vmax.f32 %v9529, %v9789
  %v10689 = vmax.f32 %v9532, %v9792
  %v10690 = vmax.f32 %v9535, %v9795
  %v10691 = vmax.f32 %v9538, %v9798
  %v10692 = vmax.f32 %v9541, %v9801
  %v10693 = vmax.f32 %v9544, %v9804
  %v10694 = vmax.f32 %v9547, %v9807
  %v10695 = vmax.f32 %v9550, %v9810
  %v10696 = vmax.f32 %v9553, %v9813
  %v10697 = vmax.f32 %v9556, %v9816
  %v10698 = vmax.f32 %v9559, %v9819
  %v10699 = vmax.f32 %v9562, %v9822
  %v10700 = vmax.f32 %v9565, %v9825
  %v10701 = vmax.f32 %v9568, %v9828
  %v10702 = vmax.f32 %v9571, %v9831
  %v10703 = vmax.f32 %v9574, %v9834
  %v10704 = vmax.f32 %v9577, %v9837
  %v10705 = vmax.f32 %v9580, %v9840
  %v10706 = vmax.f32 %v9583, %v9843
  %v10707 = vmax.f32 %v9586, %v9846
  %v10708 = vmax.f32 %v9589, %v9849
  %v10709 = vmax.f32 %v9592, %v9852
  %v10710 = vmax.f32 %v9595, %v9855
  %v10711 = vmax.f32 %v9598, %v9858
  %v10712 = vmax.f32 %v9601, %v9861
  %v10713 = vmax.f32 %v9604, %v9864
  %v10714 = vmax.f32 %v9607, %v9867
  %v10715 = vmax.f32 %v9610, %v9870
  %v10716 = vmax.f32 %v9613, %v9873
  %v10717 = vmax.f32 %v9616, %v9876
  %v10718 = vmax.f32 %v9619, %v9879
  %v10719 = vmax.f32 %v9622, %v9882
  %v10720 = vmax.f32 %v9625, %v9885
  %v10721 = vmax.f32 %v9628, %v9888
  %v10722 = vmax.f32 %v9631, %v9891
  %v10723 = vmax.f32 %v9634, %v9894
  %v10724 = vmax.f32 %v9637, %v9897
  %v10725 = vmax.f32 %v9640, %v9900
  %v10726 = vmax.f32 %v9643, %v9903
  %v10727 = vmax.f32 %v9646, %v9906
  %v10728 = vmax.f32 %v9649, %v9909
  %v10729 = vmax.f32 %v9652, %v9912
  %v10730 = vmax.f32 %v9655, %v9915
  %v10731 = vmax.f32 %v9658, %v9918
  %v10732 = vmax.f32 %v9661, %v9921
  %v10733 = vmax.f32 %v9664, %v9924
  %v10734 = vmax.f32 %v9667, %v9927
  %v10735 = vmax.f32 %v9670, %v9930
  %v10736 = vmax.f32 %v9673, %v9933
  %v10737 = vmax.f32 %v9676, %v9936
  %v10738 = vmax.f32 %v9679, %v9939
  %v10739 = vmax.f32 %v9682, %v9942
  %v10740 = vmax.f32 %v9685, %v9945
  %v10741 = vmax.f32 %v9688, %v9948
  %v10742 = vmax.f32 %v9691, %v9951
  %v10743 = vmax.f32 %v9694, %v9954
  %v10744 = vmax.f32 %v9697, %v9957
  %v10745 = vmax.f32 %v9700, %v9960
  %v10746 = vmax.f32 %v9703, %v9963
  %v10747 = vmax.f32 %v9706, %v9966
  %v10748 = vmax.f32 %v9709, %v9969
  %v10749 = vmax.f32 %v9712, %v9972
  %v10750 = vmax.f32 %v9715, %v9975
  %v10751 = vmax.f32 %v9718, %v9978
  %v10752 = vmax.f32 %v9721, %v9981
  %v10753 = vmax.f32 %v9724, %v9984
  %v10754 = vmax.f32 %v9727, %v9987
  %v10755 = vmax.f32 %v9730, %v9990
  %v10756 = vmax.f32 %v9733, %v9993
  %v10757 = vmax.f32 %v9736, %v9996
  %v10758 = vmax.f32 %v10019, %v10279
  %v10759 = vmax.f32 %v10022, %v10282
  %v10760 = vmax.f32 %v10025, %v10285
  %v10761 = vmax.f32 %v10028, %v10288
  %v10762 = vmax.f32 %v10031, %v10291
  %v10763 = vmax.f32 %v10034, %v10294
  %v10764 = vmax.f32 %v10037, %v10297
  %v10765 = vmax.f32 %v10040, %v10300
  %v10766 = vmax.f32 %v10043, %v10303
  %v10767 = vmax.f32 %v10046, %v10306
  %v10768 = vmax.f32 %v10049, %v10309
  %v10769 = vmax.f32 %v10052, %v10312
  %v10770 = vmax.f32 %v10055, %v10315
  %v10771 = vmax.f32 %v10058, %v10318
  %v10772 = vmax.f32 %v10061, %v10321
  %v10773 = vmax.f32 %v10064, %v10324
  %v10774 = vmax.f32 %v10067, %v10327
  %v10775 = vmax.f32 %v10070, %v10330
  %v10776 = vmax.f32 %v10073, %v10333
  %v10777 = vmax.f32 %v10076, %v10336
  %v10778 = vmax.f32 %v10079, %v10339
  %v10779 = vmax.f32 %v10082, %v10342
  %v10780 = vmax.f32 %v10085, %v10345
  %v10781 = vmax.f32 %v10088, %v10348
  %v10782 = vmax.f32 %v10091, %v10351
  %v10783 = vmax.f32 %v10094, %v10354
  %v10784 = vmax.f32 %v10097, %v10357
  %v10785 = vmax.f32 %v10100, %v10360
  %v10786 = vmax.f32 %v10103, %v10363
  %v10787 = vmax.f32 %v10106, %v10366
  %v10788 = vmax.f32 %v10109, %v10369
  %v10789 = vmax.f32 %v10112, %v10372
  %v10790 = vmax.f32 %v10115, %v10375
  %v10791 = vmax.f32 %v10118, %v10378
  %v10792 = vmax.f32 %v10121, %v10381
  %v10793 = vmax.f32 %v10124, %v10384
  %v10794 = vmax.f32 %v10127, %v10387
  %v10795 = vmax.f32 %v10130, %v10390
  %v10796 = vmax.f32 %v10133, %v10393
  %v10797 = vmax.f32 %v10136, %v10396
  %v10798 = vmax.f32 %v10139, %v10399
  %v10799 = vmax.f32 %v10142, %v10402
  %v10800 = vmax.f32 %v10145, %v10405
  %v10801 = vmax.f32 %v10148, %v10408
  %v10802 = vmax.f32 %v10151, %v10411
  %v10803 = vmax.f32 %v10154, %v10414
  %v10804 = vmax.f32 %v10157, %v10417
  %v10805 = vmax.f32 %v10160, %v10420
  %v10806 = vmax.f32 %v10163, %v10423
  %v10807 = vmax.f32 %v10166, %v10426
  %v10808 = vmax.f32 %v10169, %v10429
  %v10809 = vmax.f32 %v10172, %v10432
  %v10810 = vmax.f32 %v10175, %v10435
  %v10811 = vmax.f32 %v10178, %v10438
  %v10812 = vmax.f32 %v10181, %v10441
  %v10813 = vmax.f32 %v10184, %v10444
  %v10814 = vmax.f32 %v10187, %v10447
  %v10815 = vmax.f32 %v10190, %v10450
  %v10816 = vmax.f32 %v10193, %v10453
  %v10817 = vmax.f32 %v10196, %v10456
  %v10818 = vmax.f32 %v10199, %v10459
  %v10819 = vmax.f32 %v10202, %v10462
  %v10820 = vmax.f32 %v10205, %v10465
  %v10821 = vmax.f32 %v10208, %v10468
  %v10822 = vmax.f32 %v10211, %v10471
  %v10823 = vmax.f32 %v10214, %v10474
  %v10824 = vmax.f32 %v10217, %v10477
  %v10825 = vmax.f32 %v10220, %v10480
  %v10826 = vmax.f32 %v10223, %v10483
  %v10827 = vmax.f32 %v10226, %v10486
  %v10828 = vmax.f32 %v10229, %v10489
  %v10829 = vmax.f32 %v10232, %v10492
  %v10830 = vmax.f32 %v10235, %v10495
  %v10831 = vmax.f32 %v10238, %v10498
  %v10832 = vmax.f32 %v10241, %v10501
  %v10833 = vmax.f32 %v10244, %v10504
  %v10834 = vmax.f32 %v10247, %v10507
  %v10835 = vmax.f32 %v10250, %v10510
  %v10836 = vmax.f32 %v10253, %v10513
  %v10837 = vmax.f32 %v10256, %v10516
  %v10838 = vmax.f32 %v10518, %v10598
  %v10839 = vmax.f32 %v10519, %v10599
  %v10840 = vmax.f32 %v10520, %v10600
  %v10841 = vmax.f32 %v10521, %v10601
  %v10842 = vmax.f32 %v10522, %v10602
  %v10843 = vmax.f32 %v10523, %v10603
  %v10844 = vmax.f32 %v10524, %v10604
  %v10845 = vmax.f32 %v10525, %v10605
  %v10846 = vmax.f32 %v10526, %v10606
  %v10847 = vmax.f32 %v10527, %v10607
  %v10848 = vmax.f32 %v10528, %v10608
  %v10849 = vmax.f32 %v10529, %v10609
  %v10850 = vmax.f32 %v10530, %v10610
  %v10851 = vmax.f32 %v10531, %v10611
  %v10852 = vmax.f32 %v10532, %v10612
  %v10853 = vmax.f32 %v10533, %v10613
  %v10854 = vmax.f32 %v10534, %v10614
  %v10855 = vmax.f32 %v10535, %v10615
  %v10856 = vmax.f32 %v10536, %v10616
  %v10857 = vmax.f32 %v10537, %v10617
  %v10858 = vmax.f32 %v10538, %v10618
  %v10859 = vmax.f32 %v10539, %v10619
  %v10860 = vmax.f32 %v10540, %v10620
  %v10861 = vmax.f32 %v10541, %v10621
  %v10862 = vmax.f32 %v10542, %v10622
  %v10863 = vmax.f32 %v10543, %v10623
  %v10864 = vmax.f32 %v10544, %v10624
  %v10865 = vmax.f32 %v10545, %v10625
  %v10866 = vmax.f32 %v10546, %v10626
  %v10867 = vmax.f32 %v10547, %v10627
  %v10868 = vmax.f32 %v10548, %v10628
  %v10869 = vmax.f32 %v10549, %v10629
  %v10870 = vmax.f32 %v10550, %v10630
  %v10871 = vmax.f32 %v10551, %v10631
  %v10872 = vmax.f32 %v10552, %v10632
  %v10873 = vmax.f32 %v10553, %v10633
  %v10874 = vmax.f32 %v10554, %v10634
  %v10875 = vmax.f32 %v10555, %v10635
  %v10876 = vmax.f32 %v10556, %v10636
  %v10877 = vmax.f32 %v10557, %v10637
  %v10878 = vmax.f32 %v10558, %v10638
  %v10879 = vmax.f32 %v10559, %v10639
  %v10880 = vmax.f32 %v10560, %v10640
  %v10881 = vmax.f32 %v10561, %v10641
  %v10882 = vmax.f32 %v10562, %v10642
  %v10883 = vmax.f32 %v10563, %v10643
  %v10884 = vmax.f32 %v10564, %v10644
  %v10885 = vmax.f32 %v10565, %v10645
  %v10886 = vmax.f32 %v10566, %v10646
  %v10887 = vmax.f32 %v10567, %v10647
  %v10888 = vmax.f32 %v10568, %v10648
  %v10889 = vmax.f32 %v10569, %v10649
  %v10890 = vmax.f32 %v10570, %v10650
  %v10891 = vmax.f32 %v10571, %v10651
  %v10892 = vmax.f32 %v10572, %v10652
  %v10893 = vmax.f32 %v10573, %v10653
  %v10894 = vmax.f32 %v10574, %v10654
  %v10895 = vmax.f32 %v10575, %v10655
  %v10896 = vmax.f32 %v10576, %v10656
  %v10897 = vmax.f32 %v10577, %v10657
  %v10898 = vmax.f32 %v10578, %v10658
  %v10899 = vmax.f32 %v10579, %v10659
  %v10900 = vmax.f32 %v10580, %v10660
  %v10901 = vmax.f32 %v10581, %v10661
  %v10902 = vmax.f32 %v10582, %v10662
  %v10903 = vmax.f32 %v10583, %v10663
  %v10904 = vmax.f32 %v10584, %v10664
  %v10905 = vmax.f32 %v10585, %v10665
  %v10906 = vmax.f32 %v10586, %v10666
  %v10907 = vmax.f32 %v10587, %v10667
  %v10908 = vmax.f32 %v10588, %v10668
  %v10909 = vmax.f32 %v10589, %v10669
  %v10910 = vmax.f32 %v10590, %v10670
  %v10911 = vmax.f32 %v10591, %v10671
  %v10912 = vmax.f32 %v10592, %v10672
  %v10913 = vmax.f32 %v10593, %v10673
  %v10914 = vmax.f32 %v10594, %v10674
  %v10915 = vmax.f32 %v10595, %v10675
  %v10916 = vmax.f32 %v10596, %v10676
  %v10917 = vmax.f32 %v10597, %v10677
  %v10918 = vmax.f32 %v10678, %v10758
  %v10919 = vmax.f32 %v10679, %v10759
  %v10920 = vmax.f32 %v10680, %v10760
  %v10921 = vmax.f32 %v10681, %v10761
  %v10922 = vmax.f32 %v10682, %v10762
  %v10923 = vmax.f32 %v10683, %v10763
  %v10924 = vmax.f32 %v10684, %v10764
  %v10925 = vmax.f32 %v10685, %v10765
  %v10926 = vmax.f32 %v10686, %v10766
  %v10927 = vmax.f32 %v10687, %v10767
  %v10928 = vmax.f32 %v10688, %v10768
  %v10929 = vmax.f32 %v10689, %v10769
  %v10930 = vmax.f32 %v10690, %v10770
  %v10931 = vmax.f32 %v10691, %v10771
  %v10932 = vmax.f32 %v10692, %v10772
  %v10933 = vmax.f32 %v10693, %v10773
  %v10934 = vmax.f32 %v10694, %v10774
  %v10935 = vmax.f32 %v10695, %v10775
  %v10936 = vmax.f32 %v10696, %v10776
  %v10937 = vmax.f32 %v10697, %v10777
  %v10938 = vmax.f32 %v10698, %v10778
  %v10939 = vmax.f32 %v10699, %v10779
  %v10940 = vmax.f32 %v10700, %v10780
  %v10941 = vmax.f32 %v10701, %v10781
  %v10942 = vmax.f32 %v10702, %v10782
  %v10943 = vmax.f32 %v10703, %v10783
  %v10944 = vmax.f32 %v10704, %v10784
  %v10945 = vmax.f32 %v10705, %v10785
  %v10946 = vmax.f32 %v10706, %v10786
  %v10947 = vmax.f32 %v10707, %v10787
  %v10948 = vmax.f32 %v10708, %v10788
  %v10949 = vmax.f32 %v10709, %v10789
  %v10950 = vmax.f32 %v10710, %v10790
  %v10951 = vmax.f32 %v10711, %v10791
  %v10952 = vmax.f32 %v10712, %v10792
  %v10953 = vmax.f32 %v10713, %v10793
  %v10954 = vmax.f32 %v10714, %v10794
  %v10955 = vmax.f32 %v10715, %v10795
  %v10956 = vmax.f32 %v10716, %v10796
  %v10957 = vmax.f32 %v10717, %v10797
  %v10958 = vmax.f32 %v10718, %v10798
  %v10959 = vmax.f32 %v10719, %v10799
  %v10960 = vmax.f32 %v10720, %v10800
  %v10961 = vmax.f32 %v10721, %v10801
  %v10962 = vmax.f32 %v10722, %v10802
  %v10963 = vmax.f32 %v10723, %v10803
  %v10964 = vmax.f32 %v10724, %v10804
  %v10965 = vmax.f32 %v10725, %v10805
  %v10966 = vmax.f32 %v10726, %v10806
  %v10967 = vmax.f32 %v10727, %v10807
  %v10968 = vmax.f32 %v10728, %v10808
  %v10969 = vmax.f32 %v10729, %v10809
  %v10970 = vmax.f32 %v10730, %v10810
  %v10971 = vmax.f32 %v10731, %v10811
  %v10972 = vmax.f32 %v10732, %v10812
  %v10973 = vmax.f32 %v10733, %v10813
  %v10974 = vmax.f32 %v10734, %v10814
  %v10975 = vmax.f32 %v10735, %v10815
  %v10976 = vmax.f32 %v10736, %v10816
  %v10977 = vmax.f32 %v10737, %v10817
  %v10978 = vmax.f32 %v10738, %v10818
  %v10979 = vmax.f32 %v10739, %v10819
  %v10980 = vmax.f32 %v10740, %v10820
  %v10981 = vmax.f32 %v10741, %v10821
  %v10982 = vmax.f32 %v10742, %v10822
  %v10983 = vmax.f32 %v10743, %v10823
  %v10984 = vmax.f32 %v10744, %v10824
  %v10985 = vmax.f32 %v10745, %v10825
  %v10986 = vmax.f32 %v10746, %v10826
  %v10987 = vmax.f32 %v10747, %v10827
  %v10988 = vmax.f32 %v10748, %v10828
  %v10989 = vmax.f32 %v10749, %v10829
  %v10990 = vmax.f32 %v10750, %v10830
  %v10991 = vmax.f32 %v10751, %v10831
  %v10992 = vmax.f32 %v10752, %v10832
  %v10993 = vmax.f32 %v10753, %v10833
  %v10994 = vmax.f32 %v10754, %v10834
  %v10995 = vmax.f32 %v10755, %v10835
  %v10996 = vmax.f32 %v10756, %v10836
  %v10997 = vmax.f32 %v10757, %v10837
  %v10998 = vmax.f32 %v10838, %v10918
  %v10999 = vmax.f32 %v10839, %v10919
  %v11000 = vmax.f32 %v10840, %v10920
  %v11001 = vmax.f32 %v10841, %v10921
  %v11002 = vmax.f32 %v10842, %v10922
  %v11003 = vmax.f32 %v10843, %v10923
  %v11004 = vmax.f32 %v10844, %v10924
  %v11005 = vmax.f32 %v10845, %v10925
  %v11006 = vmax.f32 %v10846, %v10926
  %v11007 = vmax.f32 %v10847, %v10927
  %v11008 = vmax.f32 %v10848, %v10928
  %v11009 = vmax.f32 %v10849, %v10929
  %v11010 = vmax.f32 %v10850, %v10930
  %v11011 = vmax.f32 %v10851, %v10931
  %v11012 = vmax.f32 %v10852, %v10932
  %v11013 = vmax.f32 %v10853, %v10933
  %v11014 = vmax.f32 %v10854, %v10934
  %v11015 = vmax.f32 %v10855, %v10935
  %v11016 = vmax.f32 %v10856, %v10936
  %v11017 = vmax.f32 %v10857, %v10937
  %v11018 = vmax.f32 %v10858, %v10938
  %v11019 = vmax.f32 %v10859, %v10939
  %v11020 = vmax.f32 %v10860, %v10940
  %v11021 = vmax.f32 %v10861, %v10941
  %v11022 = vmax.f32 %v10862, %v10942
  %v11023 = vmax.f32 %v10863, %v10943
  %v11024 = vmax.f32 %v10864, %v10944
  %v11025 = vmax.f32 %v10865, %v10945
  %v11026 = vmax.f32 %v10866, %v10946
  %v11027 = vmax.f32 %v10867, %v10947
  %v11028 = vmax.f32 %v10868, %v10948
  %v11029 = vmax.f32 %v10869, %v10949
  %v11030 = vmax.f32 %v10870, %v10950
  %v11031 = vmax.f32 %v10871, %v10951
  %v11032 = vmax.f32 %v10872, %v10952
  %v11033 = vmax.f32 %v10873, %v10953
  %v11034 = vmax.f32 %v10874, %v10954
  %v11035 = vmax.f32 %v10875, %v10955
  %v11036 = vmax.f32 %v10876, %v10956
  %v11037 = vmax.f32 %v10877, %v10957
  %v11038 = vmax.f32 %v10878, %v10958
  %v11039 = vmax.f32 %v10879, %v10959
  %v11040 = vmax.f32 %v10880, %v10960
  %v11041 = vmax.f32 %v10881, %v10961
  %v11042 = vmax.f32 %v10882, %v10962
  %v11043 = vmax.f32 %v10883, %v10963
  %v11044 = vmax.f32 %v10884, %v10964
  %v11045 = vmax.f32 %v10885, %v10965
  %v11046 = vmax.f32 %v10886, %v10966
  %v11047 = vmax.f32 %v10887, %v10967
  %v11048 = vmax.f32 %v10888, %v10968
  %v11049 = vmax.f32 %v10889, %v10969
  %v11050 = vmax.f32 %v10890, %v10970
  %v11051 = vmax.f32 %v10891, %v10971
  %v11052 = vmax.f32 %v10892, %v10972
  %v11053 = vmax.f32 %v10893, %v10973
  %v11054 = vmax.f32 %v10894, %v10974
  %v11055 = vmax.f32 %v10895, %v10975
  %v11056 = vmax.f32 %v10896, %v10976
  %v11057 = vmax.f32 %v10897, %v10977
  %v11058 = vmax.f32 %v10898, %v10978
  %v11059 = vmax.f32 %v10899, %v10979
  %v11060 = vmax.f32 %v10900, %v10980
  %v11061 = vmax.f32 %v10901, %v10981
  %v11062 = vmax.f32 %v10902, %v10982
  %v11063 = vmax.f32 %v10903, %v10983
  %v11064 = vmax.f32 %v10904, %v10984
  %v11065 = vmax.f32 %v10905, %v10985
  %v11066 = vmax.f32 %v10906, %v10986
  %v11067 = vmax.f32 %v10907, %v10987
  %v11068 = vmax.f32 %v10908, %v10988
  %v11069 = vmax.f32 %v10909, %v10989
  %v11070 = vmax.f32 %v10910, %v10990
  %v11071 = vmax.f32 %v10911, %v10991
  %v11072 = vmax.f32 %v10912, %v10992
  %v11073 = vmax.f32 %v10913, %v10993
  %v11074 = vmax.f32 %v10914, %v10994
  %v11075 = vmax.f32 %v10915, %v10995
  %v11076 = vmax.f32 %v10916, %v10996
  %v11077 = vmax.f32 %v10917, %v10997
  %v11078 = vmax.f32 %v8360, %v10998
  %v11079 = vmax.f32 %v8361, %v10999
  %v11080 = vmax.f32 %v8362, %v11000
  %v11081 = vmax.f32 %v8363, %v11001
  %v11082 = vmax.f32 %v8364, %v11002
  %v11083 = vmax.f32 %v8365, %v11003
  %v11084 = vmax.f32 %v8366, %v11004
  %v11085 = vmax.f32 %v8367, %v11005
  %v11086 = vmax.f32 %v8368, %v11006
  %v11087 = vmax.f32 %v8369, %v11007
  %v11088 = vmax.f32 %v8370, %v11008
  %v11089 = vmax.f32 %v8371, %v11009
  %v11090 = vmax.f32 %v8372, %v11010
  %v11091 = vmax.f32 %v8373, %v11011
  %v11092 = vmax.f32 %v8374, %v11012
  %v11093 = vmax.f32 %v8375, %v11013
  %v11094 = vmax.f32 %v8376, %v11014
  %v11095 = vmax.f32 %v8377, %v11015
  %v11096 = vmax.f32 %v8378, %v11016
  %v11097 = vmax.f32 %v8379, %v11017
  %v11098 = vmax.f32 %v8380, %v11018
  %v11099 = vmax.f32 %v8381, %v11019
  %v11100 = vmax.f32 %v8382, %v11020
  %v11101 = vmax.f32 %v8383, %v11021
  %v11102 = vmax.f32 %v8384, %v11022
  %v11103 = vmax.f32 %v8385, %v11023
  %v11104 = vmax.f32 %v8386, %v11024
  %v11105 = vmax.f32 %v8387, %v11025
  %v11106 = vmax.f32 %v8388, %v11026
  %v11107 = vmax.f32 %v8389, %v11027
  %v11108 = vmax.f32 %v8390, %v11028
  %v11109 = vmax.f32 %v8391, %v11029
  %v11110 = vmax.f32 %v8392, %v11030
  %v11111 = vmax.f32 %v8393, %v11031
  %v11112 = vmax.f32 %v8394, %v11032
  %v11113 = vmax.f32 %v8395, %v11033
  %v11114 = vmax.f32 %v8396, %v11034
  %v11115 = vmax.f32 %v8397, %v11035
  %v11116 = vmax.f32 %v8398, %v11036
  %v11117 = vmax.f32 %v8399, %v11037
  %v11118 = vmax.f32 %v8400, %v11038
  %v11119 = vmax.f32 %v8401, %v11039
  %v11120 = vmax.f32 %v8402, %v11040
  %v11121 = vmax.f32 %v8403, %v11041
  %v11122 = vmax.f32 %v8404, %v11042
  %v11123 = vmax.f32 %v8405, %v11043
  %v11124 = vmax.f32 %v8406, %v11044
  %v11125 = vmax.f32 %v8407, %v11045
  %v11126 = vmax.f32 %v8408, %v11046
  %v11127 = vmax.f32 %v8409, %v11047
  %v11128 = vmax.f32 %v8410, %v11048
  %v11129 = vmax.f32 %v8411, %v11049
  %v11130 = vmax.f32 %v8412, %v11050
  %v11131 = vmax.f32 %v8413, %v11051
  %v11132 = vmax.f32 %v8414, %v11052
  %v11133 = vmax.f32 %v8415, %v11053
  %v11134 = vmax.f32 %v8416, %v11054
  %v11135 = vmax.f32 %v8417, %v11055
  %v11136 = vmax.f32 %v8418, %v11056
  %v11137 = vmax.f32 %v8419, %v11057
  %v11138 = vmax.f32 %v8420, %v11058
  %v11139 = vmax.f32 %v8421, %v11059
  %v11140 = vmax.f32 %v8422, %v11060
  %v11141 = vmax.f32 %v8423, %v11061
  %v11142 = vmax.f32 %v8424, %v11062
  %v11143 = vmax.f32 %v8425, %v11063
  %v11144 = vmax.f32 %v8426, %v11064
  %v11145 = vmax.f32 %v8427, %v11065
  %v11146 = vmax.f32 %v8428, %v11066
  %v11147 = vmax.f32 %v8429, %v11067
  %v11148 = vmax.f32 %v8430, %v11068
  %v11149 = vmax.f32 %v8431, %v11069
  %v11150 = vmax.f32 %v8432, %v11070
  %v11151 = vmax.f32 %v8433, %v11071
  %v11152 = vmax.f32 %v8434, %v11072
  %v11153 = vmax.f32 %v8435, %v11073
  %v11154 = vmax.f32 %v8436, %v11074
  %v11155 = vmax.f32 %v8437, %v11075
  %v11156 = vmax.f32 %v8438, %v11076
  %v11157 = vmax.f32 %v8439, %v11077
  %v11158 = vld [vmem:[%s2] sm:$0xff]
  %v11159 = vld [vmem:[%s2 + $0x8] sm:$0xff]
  %v11160 = vld [vmem:[%s2 + $0x10] sm:$0xff]
  %v11161 = vld [vmem:[%s2 + $0x18] sm:$0xff]
  %v11162 = vld [vmem:[%s2 + $0x20] sm:$0xff]
  %v11163 = vld [vmem:[%s2 + $0x28] sm:$0xff]
  %v11164 = vld [vmem:[%s2 + $0x30] sm:$0xff]
  %v11165 = vld [vmem:[%s2 + $0x38] sm:$0xff]
  %v11166 = vld [vmem:[%s2 + $0x40] sm:$0xff]
  %v11167 = vld [vmem:[%s2 + $0x48] sm:$0xff]
  %v11168 = vld [vmem:[%s2 + $0x50] sm:$0xff]
  %v11169 = vld [vmem:[%s2 + $0x58] sm:$0xff]
  %v11170 = vld [vmem:[%s2 + $0x60] sm:$0xff]
  %v11171 = vld [vmem:[%s2 + $0x68] sm:$0xff]
  %v11172 = vld [vmem:[%s2 + $0x70] sm:$0xff]
  %v11173 = vld [vmem:[%s2 + $0x78] sm:$0xff]
  %v11174 = vld [vmem:[%s2 + $0x80] sm:$0xff]
  %v11175 = vld [vmem:[%s2 + $0x88] sm:$0xff]
  %v11176 = vld [vmem:[%s2 + $0x90] sm:$0xff]
  %v11177 = vld [vmem:[%s2 + $0x98] sm:$0xff]
  %v11178 = vld [vmem:[%s2 + $0xa0] sm:$0xff]
  %v11179 = vld [vmem:[%s2 + $0xa8] sm:$0xff]
  %v11180 = vld [vmem:[%s2 + $0xb0] sm:$0xff]
  %v11181 = vld [vmem:[%s2 + $0xb8] sm:$0xff]
  %v11182 = vld [vmem:[%s2 + $0xc0] sm:$0xff]
  %v11183 = vld [vmem:[%s2 + $0xc8] sm:$0xff]
  %v11184 = vld [vmem:[%s2 + $0xd0] sm:$0xff]
  %v11185 = vld [vmem:[%s2 + $0xd8] sm:$0xff]
  %v11186 = vld [vmem:[%s2 + $0xe0] sm:$0xff]
  %v11187 = vld [vmem:[%s2 + $0xe8] sm:$0xff]
  %v11188 = vld [vmem:[%s2 + $0xf0] sm:$0xff]
  %v11189 = vld [vmem:[%s2 + $0xf8] sm:$0xff]
  %v11190 = vld [vmem:[%s2 + $0x100] sm:$0xff]
  %v11191 = vld [vmem:[%s2 + $0x108] sm:$0xff]
  %v11192 = vld [vmem:[%s2 + $0x110] sm:$0xff]
  %v11193 = vld [vmem:[%s2 + $0x118] sm:$0xff]
  %v11194 = vld [vmem:[%s2 + $0x120] sm:$0xff]
  %v11195 = vld [vmem:[%s2 + $0x128] sm:$0xff]
  %v11196 = vld [vmem:[%s2 + $0x130] sm:$0xff]
  %v11197 = vld [vmem:[%s2 + $0x138] sm:$0xff]
  %v11198 = vld [vmem:[%s2 + $0x140] sm:$0xff]
  %v11199 = vld [vmem:[%s2 + $0x148] sm:$0xff]
  %v11200 = vld [vmem:[%s2 + $0x150] sm:$0xff]
  %v11201 = vld [vmem:[%s2 + $0x158] sm:$0xff]
  %v11202 = vld [vmem:[%s2 + $0x160] sm:$0xff]
  %v11203 = vld [vmem:[%s2 + $0x168] sm:$0xff]
  %v11204 = vld [vmem:[%s2 + $0x170] sm:$0xff]
  %v11205 = vld [vmem:[%s2 + $0x178] sm:$0xff]
  %v11206 = vld [vmem:[%s2 + $0x180] sm:$0xff]
  %v11207 = vld [vmem:[%s2 + $0x188] sm:$0xff]
  %v11208 = vld [vmem:[%s2 + $0x190] sm:$0xff]
  %v11209 = vld [vmem:[%s2 + $0x198] sm:$0xff]
  %v11210 = vld [vmem:[%s2 + $0x1a0] sm:$0xff]
  %v11211 = vld [vmem:[%s2 + $0x1a8] sm:$0xff]
  %v11212 = vld [vmem:[%s2 + $0x1b0] sm:$0xff]
  %v11213 = vld [vmem:[%s2 + $0x1b8] sm:$0xff]
  %v11214 = vld [vmem:[%s2 + $0x1c0] sm:$0xff]
  %v11215 = vld [vmem:[%s2 + $0x1c8] sm:$0xff]
  %v11216 = vld [vmem:[%s2 + $0x1d0] sm:$0xff]
  %v11217 = vld [vmem:[%s2 + $0x1d8] sm:$0xff]
  %v11218 = vld [vmem:[%s2 + $0x1e0] sm:$0xff]
  %v11219 = vld [vmem:[%s2 + $0x1e8] sm:$0xff]
  %v11220 = vld [vmem:[%s2 + $0x1f0] sm:$0xff]
  %v11221 = vld [vmem:[%s2 + $0x1f8] sm:$0xff]
  %v11222 = vld [vmem:[%s2 + $0x200] sm:$0xff]
  %v11223 = vld [vmem:[%s2 + $0x208] sm:$0xff]
  %v11224 = vld [vmem:[%s2 + $0x210] sm:$0xff]
  %v11225 = vld [vmem:[%s2 + $0x218] sm:$0xff]
  %v11226 = vld [vmem:[%s2 + $0x220] sm:$0xff]
  %v11227 = vld [vmem:[%s2 + $0x228] sm:$0xff]
  %v11228 = vld [vmem:[%s2 + $0x230] sm:$0xff]
  %v11229 = vld [vmem:[%s2 + $0x238] sm:$0xff]
  %v11230 = vld [vmem:[%s2 + $0x240] sm:$0xff]
  %v11231 = vld [vmem:[%s2 + $0x248] sm:$0xff]
  %v11232 = vld [vmem:[%s2 + $0x250] sm:$0xff]
  %v11233 = vld [vmem:[%s2 + $0x258] sm:$0xff]
  %v11234 = vld [vmem:[%s2 + $0x260] sm:$0xff]
  %v11235 = vld [vmem:[%s2 + $0x268] sm:$0xff]
  %v11236 = vld [vmem:[%s2 + $0x270] sm:$0xff]
  %v11237 = vld [vmem:[%s2 + $0x278] sm:$0xff]
  %11239 = vset.pattern.permute.xlu0 0
  %11240 = vperm.xlu0 %11239, %v11158
  %v11241 = vpop.permute.xlu0 %11240
  %11244 = vset.pattern.permute.xlu0 0
  %11245 = vperm.xlu0 %11244, %v11159
  %v11246 = vpop.permute.xlu0 %11245
  %11249 = vset.pattern.permute.xlu0 0
  %11250 = vperm.xlu0 %11249, %v11160
  %v11251 = vpop.permute.xlu0 %11250
  %11254 = vset.pattern.permute.xlu0 0
  %11255 = vperm.xlu0 %11254, %v11161
  %v11256 = vpop.permute.xlu0 %11255
  %11259 = vset.pattern.permute.xlu0 0
  %11260 = vperm.xlu0 %11259, %v11162
  %v11261 = vpop.permute.xlu0 %11260
  %11264 = vset.pattern.permute.xlu0 0
  %11265 = vperm.xlu0 %11264, %v11163
  %v11266 = vpop.permute.xlu0 %11265
  %11269 = vset.pattern.permute.xlu0 0
  %11270 = vperm.xlu0 %11269, %v11164
  %v11271 = vpop.permute.xlu0 %11270
  %11274 = vset.pattern.permute.xlu0 0
  %11275 = vperm.xlu0 %11274, %v11165
  %v11276 = vpop.permute.xlu0 %11275
  %11279 = vset.pattern.permute.xlu0 0
  %11280 = vperm.xlu0 %11279, %v11166
  %v11281 = vpop.permute.xlu0 %11280
  %11284 = vset.pattern.permute.xlu0 0
  %11285 = vperm.xlu0 %11284, %v11167
  %v11286 = vpop.permute.xlu0 %11285
  %11289 = vset.pattern.permute.xlu0 0
  %11290 = vperm.xlu0 %11289, %v11168
  %v11291 = vpop.permute.xlu0 %11290
  %11294 = vset.pattern.permute.xlu0 0
  %11295 = vperm.xlu0 %11294, %v11169
  %v11296 = vpop.permute.xlu0 %11295
  %11299 = vset.pattern.permute.xlu0 0
  %11300 = vperm.xlu0 %11299, %v11170
  %v11301 = vpop.permute.xlu0 %11300
  %11304 = vset.pattern.permute.xlu0 0
  %11305 = vperm.xlu0 %11304, %v11171
  %v11306 = vpop.permute.xlu0 %11305
  %11309 = vset.pattern.permute.xlu0 0
  %11310 = vperm.xlu0 %11309, %v11172
  %v11311 = vpop.permute.xlu0 %11310
  %11314 = vset.pattern.permute.xlu0 0
  %11315 = vperm.xlu0 %11314, %v11173
  %v11316 = vpop.permute.xlu0 %11315
  %11319 = vset.pattern.permute.xlu0 0
  %11320 = vperm.xlu0 %11319, %v11174
  %v11321 = vpop.permute.xlu0 %11320
  %11324 = vset.pattern.permute.xlu0 0
  %11325 = vperm.xlu0 %11324, %v11175
  %v11326 = vpop.permute.xlu0 %11325
  %11329 = vset.pattern.permute.xlu0 0
  %11330 = vperm.xlu0 %11329, %v11176
  %v11331 = vpop.permute.xlu0 %11330
  %11334 = vset.pattern.permute.xlu0 0
  %11335 = vperm.xlu0 %11334, %v11177
  %v11336 = vpop.permute.xlu0 %11335
  %11339 = vset.pattern.permute.xlu0 0
  %11340 = vperm.xlu0 %11339, %v11178
  %v11341 = vpop.permute.xlu0 %11340
  %11344 = vset.pattern.permute.xlu0 0
  %11345 = vperm.xlu0 %11344, %v11179
  %v11346 = vpop.permute.xlu0 %11345
  %11349 = vset.pattern.permute.xlu0 0
  %11350 = vperm.xlu0 %11349, %v11180
  %v11351 = vpop.permute.xlu0 %11350
  %11354 = vset.pattern.permute.xlu0 0
  %11355 = vperm.xlu0 %11354, %v11181
  %v11356 = vpop.permute.xlu0 %11355
  %11359 = vset.pattern.permute.xlu0 0
  %11360 = vperm.xlu0 %11359, %v11182
  %v11361 = vpop.permute.xlu0 %11360
  %11364 = vset.pattern.permute.xlu0 0
  %11365 = vperm.xlu0 %11364, %v11183
  %v11366 = vpop.permute.xlu0 %11365
  %11369 = vset.pattern.permute.xlu0 0
  %11370 = vperm.xlu0 %11369, %v11184
  %v11371 = vpop.permute.xlu0 %11370
  %11374 = vset.pattern.permute.xlu0 0
  %11375 = vperm.xlu0 %11374, %v11185
  %v11376 = vpop.permute.xlu0 %11375
  %11379 = vset.pattern.permute.xlu0 0
  %11380 = vperm.xlu0 %11379, %v11186
  %v11381 = vpop.permute.xlu0 %11380
  %11384 = vset.pattern.permute.xlu0 0
  %11385 = vperm.xlu0 %11384, %v11187
  %v11386 = vpop.permute.xlu0 %11385
  %11389 = vset.pattern.permute.xlu0 0
  %11390 = vperm.xlu0 %11389, %v11188
  %v11391 = vpop.permute.xlu0 %11390
  %11394 = vset.pattern.permute.xlu0 0
  %11395 = vperm.xlu0 %11394, %v11189
  %v11396 = vpop.permute.xlu0 %11395
  %11399 = vset.pattern.permute.xlu0 0
  %11400 = vperm.xlu0 %11399, %v11190
  %v11401 = vpop.permute.xlu0 %11400
  %11404 = vset.pattern.permute.xlu0 0
  %11405 = vperm.xlu0 %11404, %v11191
  %v11406 = vpop.permute.xlu0 %11405
  %11409 = vset.pattern.permute.xlu0 0
  %11410 = vperm.xlu0 %11409, %v11192
  %v11411 = vpop.permute.xlu0 %11410
  %11414 = vset.pattern.permute.xlu0 0
  %11415 = vperm.xlu0 %11414, %v11193
  %v11416 = vpop.permute.xlu0 %11415
  %11419 = vset.pattern.permute.xlu0 0
  %11420 = vperm.xlu0 %11419, %v11194
  %v11421 = vpop.permute.xlu0 %11420
  %11424 = vset.pattern.permute.xlu0 0
  %11425 = vperm.xlu0 %11424, %v11195
  %v11426 = vpop.permute.xlu0 %11425
  %11429 = vset.pattern.permute.xlu0 0
  %11430 = vperm.xlu0 %11429, %v11196
  %v11431 = vpop.permute.xlu0 %11430
  %11434 = vset.pattern.permute.xlu0 0
  %11435 = vperm.xlu0 %11434, %v11197
  %v11436 = vpop.permute.xlu0 %11435
  %11439 = vset.pattern.permute.xlu0 0
  %11440 = vperm.xlu0 %11439, %v11198
  %v11441 = vpop.permute.xlu0 %11440
  %11444 = vset.pattern.permute.xlu0 0
  %11445 = vperm.xlu0 %11444, %v11199
  %v11446 = vpop.permute.xlu0 %11445
  %11449 = vset.pattern.permute.xlu0 0
  %11450 = vperm.xlu0 %11449, %v11200
  %v11451 = vpop.permute.xlu0 %11450
  %11454 = vset.pattern.permute.xlu0 0
  %11455 = vperm.xlu0 %11454, %v11201
  %v11456 = vpop.permute.xlu0 %11455
  %11459 = vset.pattern.permute.xlu0 0
  %11460 = vperm.xlu0 %11459, %v11202
  %v11461 = vpop.permute.xlu0 %11460
  %11464 = vset.pattern.permute.xlu0 0
  %11465 = vperm.xlu0 %11464, %v11203
  %v11466 = vpop.permute.xlu0 %11465
  %11469 = vset.pattern.permute.xlu0 0
  %11470 = vperm.xlu0 %11469, %v11204
  %v11471 = vpop.permute.xlu0 %11470
  %11474 = vset.pattern.permute.xlu0 0
  %11475 = vperm.xlu0 %11474, %v11205
  %v11476 = vpop.permute.xlu0 %11475
  %11479 = vset.pattern.permute.xlu0 0
  %11480 = vperm.xlu0 %11479, %v11206
  %v11481 = vpop.permute.xlu0 %11480
  %11484 = vset.pattern.permute.xlu0 0
  %11485 = vperm.xlu0 %11484, %v11207
  %v11486 = vpop.permute.xlu0 %11485
  %11489 = vset.pattern.permute.xlu0 0
  %11490 = vperm.xlu0 %11489, %v11208
  %v11491 = vpop.permute.xlu0 %11490
  %11494 = vset.pattern.permute.xlu0 0
  %11495 = vperm.xlu0 %11494, %v11209
  %v11496 = vpop.permute.xlu0 %11495
  %11499 = vset.pattern.permute.xlu0 0
  %11500 = vperm.xlu0 %11499, %v11210
  %v11501 = vpop.permute.xlu0 %11500
  %11504 = vset.pattern.permute.xlu0 0
  %11505 = vperm.xlu0 %11504, %v11211
  %v11506 = vpop.permute.xlu0 %11505
  %11509 = vset.pattern.permute.xlu0 0
  %11510 = vperm.xlu0 %11509, %v11212
  %v11511 = vpop.permute.xlu0 %11510
  %11514 = vset.pattern.permute.xlu0 0
  %11515 = vperm.xlu0 %11514, %v11213
  %v11516 = vpop.permute.xlu0 %11515
  %11519 = vset.pattern.permute.xlu0 0
  %11520 = vperm.xlu0 %11519, %v11214
  %v11521 = vpop.permute.xlu0 %11520
  %11524 = vset.pattern.permute.xlu0 0
  %11525 = vperm.xlu0 %11524, %v11215
  %v11526 = vpop.permute.xlu0 %11525
  %11529 = vset.pattern.permute.xlu0 0
  %11530 = vperm.xlu0 %11529, %v11216
  %v11531 = vpop.permute.xlu0 %11530
  %11534 = vset.pattern.permute.xlu0 0
  %11535 = vperm.xlu0 %11534, %v11217
  %v11536 = vpop.permute.xlu0 %11535
  %11539 = vset.pattern.permute.xlu0 0
  %11540 = vperm.xlu0 %11539, %v11218
  %v11541 = vpop.permute.xlu0 %11540
  %11544 = vset.pattern.permute.xlu0 0
  %11545 = vperm.xlu0 %11544, %v11219
  %v11546 = vpop.permute.xlu0 %11545
  %11549 = vset.pattern.permute.xlu0 0
  %11550 = vperm.xlu0 %11549, %v11220
  %v11551 = vpop.permute.xlu0 %11550
  %11554 = vset.pattern.permute.xlu0 0
  %11555 = vperm.xlu0 %11554, %v11221
  %v11556 = vpop.permute.xlu0 %11555
  %11559 = vset.pattern.permute.xlu0 0
  %11560 = vperm.xlu0 %11559, %v11222
  %v11561 = vpop.permute.xlu0 %11560
  %11564 = vset.pattern.permute.xlu0 0
  %11565 = vperm.xlu0 %11564, %v11223
  %v11566 = vpop.permute.xlu0 %11565
  %11569 = vset.pattern.permute.xlu0 0
  %11570 = vperm.xlu0 %11569, %v11224
  %v11571 = vpop.permute.xlu0 %11570
  %11574 = vset.pattern.permute.xlu0 0
  %11575 = vperm.xlu0 %11574, %v11225
  %v11576 = vpop.permute.xlu0 %11575
  %11579 = vset.pattern.permute.xlu0 0
  %11580 = vperm.xlu0 %11579, %v11226
  %v11581 = vpop.permute.xlu0 %11580
  %11584 = vset.pattern.permute.xlu0 0
  %11585 = vperm.xlu0 %11584, %v11227
  %v11586 = vpop.permute.xlu0 %11585
  %11589 = vset.pattern.permute.xlu0 0
  %11590 = vperm.xlu0 %11589, %v11228
  %v11591 = vpop.permute.xlu0 %11590
  %11594 = vset.pattern.permute.xlu0 0
  %11595 = vperm.xlu0 %11594, %v11229
  %v11596 = vpop.permute.xlu0 %11595
  %11599 = vset.pattern.permute.xlu0 0
  %11600 = vperm.xlu0 %11599, %v11230
  %v11601 = vpop.permute.xlu0 %11600
  %11604 = vset.pattern.permute.xlu0 0
  %11605 = vperm.xlu0 %11604, %v11231
  %v11606 = vpop.permute.xlu0 %11605
  %11609 = vset.pattern.permute.xlu0 0
  %11610 = vperm.xlu0 %11609, %v11232
  %v11611 = vpop.permute.xlu0 %11610
  %11614 = vset.pattern.permute.xlu0 0
  %11615 = vperm.xlu0 %11614, %v11233
  %v11616 = vpop.permute.xlu0 %11615
  %11619 = vset.pattern.permute.xlu0 0
  %11620 = vperm.xlu0 %11619, %v11234
  %v11621 = vpop.permute.xlu0 %11620
  %11624 = vset.pattern.permute.xlu0 0
  %11625 = vperm.xlu0 %11624, %v11235
  %v11626 = vpop.permute.xlu0 %11625
  %11629 = vset.pattern.permute.xlu0 0
  %11630 = vperm.xlu0 %11629, %v11236
  %v11631 = vpop.permute.xlu0 %11630
  %11634 = vset.pattern.permute.xlu0 0
  %11635 = vperm.xlu0 %11634, %v11237
  %v11636 = vpop.permute.xlu0 %11635
  %v11638 = vadd.f32 %v11078, %v11241
  %v11639 = vadd.f32 %v11079, %v11246
  %v11640 = vadd.f32 %v11080, %v11251
  %v11641 = vadd.f32 %v11081, %v11256
  %v11642 = vadd.f32 %v11082, %v11261
  %v11643 = vadd.f32 %v11083, %v11266
  %v11644 = vadd.f32 %v11084, %v11271
  %v11645 = vadd.f32 %v11085, %v11276
  %v11646 = vadd.f32 %v11086, %v11281
  %v11647 = vadd.f32 %v11087, %v11286
  %v11648 = vadd.f32 %v11088, %v11291
  %v11649 = vadd.f32 %v11089, %v11296
  %v11650 = vadd.f32 %v11090, %v11301
  %v11651 = vadd.f32 %v11091, %v11306
  %v11652 = vadd.f32 %v11092, %v11311
  %v11653 = vadd.f32 %v11093, %v11316
  %v11654 = vadd.f32 %v11094, %v11321
  %v11655 = vadd.f32 %v11095, %v11326
  %v11656 = vadd.f32 %v11096, %v11331
  %v11657 = vadd.f32 %v11097, %v11336
  %v11658 = vadd.f32 %v11098, %v11341
  %v11659 = vadd.f32 %v11099, %v11346
  %v11660 = vadd.f32 %v11100, %v11351
  %v11661 = vadd.f32 %v11101, %v11356
  %v11662 = vadd.f32 %v11102, %v11361
  %v11663 = vadd.f32 %v11103, %v11366
  %v11664 = vadd.f32 %v11104, %v11371
  %v11665 = vadd.f32 %v11105, %v11376
  %v11666 = vadd.f32 %v11106, %v11381
  %v11667 = vadd.f32 %v11107, %v11386
  %v11668 = vadd.f32 %v11108, %v11391
  %v11669 = vadd.f32 %v11109, %v11396
  %v11670 = vadd.f32 %v11110, %v11401
  %v11671 = vadd.f32 %v11111, %v11406
  %v11672 = vadd.f32 %v11112, %v11411
  %v11673 = vadd.f32 %v11113, %v11416
  %v11674 = vadd.f32 %v11114, %v11421
  %v11675 = vadd.f32 %v11115, %v11426
  %v11676 = vadd.f32 %v11116, %v11431
  %v11677 = vadd.f32 %v11117, %v11436
  %v11678 = vadd.f32 %v11118, %v11441
  %v11679 = vadd.f32 %v11119, %v11446
  %v11680 = vadd.f32 %v11120, %v11451
  %v11681 = vadd.f32 %v11121, %v11456
  %v11682 = vadd.f32 %v11122, %v11461
  %v11683 = vadd.f32 %v11123, %v11466
  %v11684 = vadd.f32 %v11124, %v11471
  %v11685 = vadd.f32 %v11125, %v11476
  %v11686 = vadd.f32 %v11126, %v11481
  %v11687 = vadd.f32 %v11127, %v11486
  %v11688 = vadd.f32 %v11128, %v11491
  %v11689 = vadd.f32 %v11129, %v11496
  %v11690 = vadd.f32 %v11130, %v11501
  %v11691 = vadd.f32 %v11131, %v11506
  %v11692 = vadd.f32 %v11132, %v11511
  %v11693 = vadd.f32 %v11133, %v11516
  %v11694 = vadd.f32 %v11134, %v11521
  %v11695 = vadd.f32 %v11135, %v11526
  %v11696 = vadd.f32 %v11136, %v11531
  %v11697 = vadd.f32 %v11137, %v11536
  %v11698 = vadd.f32 %v11138, %v11541
  %v11699 = vadd.f32 %v11139, %v11546
  %v11700 = vadd.f32 %v11140, %v11551
  %v11701 = vadd.f32 %v11141, %v11556
  %v11702 = vadd.f32 %v11142, %v11561
  %v11703 = vadd.f32 %v11143, %v11566
  %v11704 = vadd.f32 %v11144, %v11571
  %v11705 = vadd.f32 %v11145, %v11576
  %v11706 = vadd.f32 %v11146, %v11581
  %v11707 = vadd.f32 %v11147, %v11586
  %v11708 = vadd.f32 %v11148, %v11591
  %v11709 = vadd.f32 %v11149, %v11596
  %v11710 = vadd.f32 %v11150, %v11601
  %v11711 = vadd.f32 %v11151, %v11606
  %v11712 = vadd.f32 %v11152, %v11611
  %v11713 = vadd.f32 %v11153, %v11616
  %v11714 = vadd.f32 %v11154, %v11621
  %v11715 = vadd.f32 %v11155, %v11626
  %v11716 = vadd.f32 %v11156, %v11631
  %v11717 = vadd.f32 %v11157, %v11636
  %v11718 = vmax.f32 %v11638, 0.0
  %v11719 = vmax.f32 %v11639, 0.0
  %v11720 = vmax.f32 %v11640, 0.0
  %v11721 = vmax.f32 %v11641, 0.0
  %v11722 = vmax.f32 %v11642, 0.0
  %v11723 = vmax.f32 %v11643, 0.0
  %v11724 = vmax.f32 %v11644, 0.0
  %v11725 = vmax.f32 %v11645, 0.0
  %v11726 = vmax.f32 %v11646, 0.0
  %v11727 = vmax.f32 %v11647, 0.0
  %v11728 = vmax.f32 %v11648, 0.0
  %v11729 = vmax.f32 %v11649, 0.0
  %v11730 = vmax.f32 %v11650, 0.0
  %v11731 = vmax.f32 %v11651, 0.0
  %v11732 = vmax.f32 %v11652, 0.0
  %v11733 = vmax.f32 %v11653, 0.0
  %v11734 = vmax.f32 %v11654, 0.0
  %v11735 = vmax.f32 %v11655, 0.0
  %v11736 = vmax.f32 %v11656, 0.0
  %v11737 = vmax.f32 %v11657, 0.0
  %v11738 = vmax.f32 %v11658, 0.0
  %v11739 = vmax.f32 %v11659, 0.0
  %v11740 = vmax.f32 %v11660, 0.0
  %v11741 = vmax.f32 %v11661, 0.0
  %v11742 = vmax.f32 %v11662, 0.0
  %v11743 = vmax.f32 %v11663, 0.0
  %v11744 = vmax.f32 %v11664, 0.0
  %v11745 = vmax.f32 %v11665, 0.0
  %v11746 = vmax.f32 %v11666, 0.0
  %v11747 = vmax.f32 %v11667, 0.0
  %v11748 = vmax.f32 %v11668, 0.0
  %v11749 = vmax.f32 %v11669, 0.0
  %v11750 = vmax.f32 %v11670, 0.0
  %v11751 = vmax.f32 %v11671, 0.0
  %v11752 = vmax.f32 %v11672, 0.0
  %v11753 = vmax.f32 %v11673, 0.0
  %v11754 = vmax.f32 %v11674, 0.0
  %v11755 = vmax.f32 %v11675, 0.0
  %v11756 = vmax.f32 %v11676, 0.0
  %v11757 = vmax.f32 %v11677, 0.0
  %v11758 = vmax.f32 %v11678, 0.0
  %v11759 = vmax.f32 %v11679, 0.0
  %v11760 = vmax.f32 %v11680, 0.0
  %v11761 = vmax.f32 %v11681, 0.0
  %v11762 = vmax.f32 %v11682, 0.0
  %v11763 = vmax.f32 %v11683, 0.0
  %v11764 = vmax.f32 %v11684, 0.0
  %v11765 = vmax.f32 %v11685, 0.0
  %v11766 = vmax.f32 %v11686, 0.0
  %v11767 = vmax.f32 %v11687, 0.0
  %v11768 = vmax.f32 %v11688, 0.0
  %v11769 = vmax.f32 %v11689, 0.0
  %v11770 = vmax.f32 %v11690, 0.0
  %v11771 = vmax.f32 %v11691, 0.0
  %v11772 = vmax.f32 %v11692, 0.0
  %v11773 = vmax.f32 %v11693, 0.0
  %v11774 = vmax.f32 %v11694, 0.0
  %v11775 = vmax.f32 %v11695, 0.0
  %v11776 = vmax.f32 %v11696, 0.0
  %v11777 = vmax.f32 %v11697, 0.0
  %v11778 = vmax.f32 %v11698, 0.0
  %v11779 = vmax.f32 %v11699, 0.0
  %v11780 = vmax.f32 %v11700, 0.0
  %v11781 = vmax.f32 %v11701, 0.0
  %v11782 = vmax.f32 %v11702, 0.0
  %v11783 = vmax.f32 %v11703, 0.0
  %v11784 = vmax.f32 %v11704, 0.0
  %v11785 = vmax.f32 %v11705, 0.0
  %v11786 = vmax.f32 %v11706, 0.0
  %v11787 = vmax.f32 %v11707, 0.0
  %v11788 = vmax.f32 %v11708, 0.0
  %v11789 = vmax.f32 %v11709, 0.0
  %v11790 = vmax.f32 %v11710, 0.0
  %v11791 = vmax.f32 %v11711, 0.0
  %v11792 = vmax.f32 %v11712, 0.0
  %v11793 = vmax.f32 %v11713, 0.0
  %v11794 = vmax.f32 %v11714, 0.0
  %v11795 = vmax.f32 %v11715, 0.0
  %v11796 = vmax.f32 %v11716, 0.0
  %v11797 = vmax.f32 %v11717, 0.0
  %v11798 = vld [vmem:[%s3] sm:$0xff]
  %v11799 = vld [vmem:[%s3 + $0x8] sm:$0xff]
  %v11800 = vld [vmem:[%s3 + $0x10] sm:$0xff]
  %v11801 = vld [vmem:[%s3 + $0x18] sm:$0xff]
  %v11802 = vld [vmem:[%s3 + $0x20] sm:$0xff]
  %v11803 = vld [vmem:[%s3 + $0x28] sm:$0xff]
  %v11804 = vld [vmem:[%s3 + $0x30] sm:$0xff]
  %v11805 = vld [vmem:[%s3 + $0x38] sm:$0xff]
  %v11806 = vld [vmem:[%s3 + $0x40] sm:$0xff]
  %v11807 = vld [vmem:[%s3 + $0x48] sm:$0xff]
  %v11808 = vld [vmem:[%s3 + $0x50] sm:$0xff]
  %v11809 = vld [vmem:[%s3 + $0x58] sm:$0xff]
  %v11810 = vld [vmem:[%s3 + $0x60] sm:$0xff]
  %v11811 = vld [vmem:[%s3 + $0x68] sm:$0xff]
  %v11812 = vld [vmem:[%s3 + $0x70] sm:$0xff]
  %v11813 = vld [vmem:[%s3 + $0x78] sm:$0xff]
  %v11814 = vld [vmem:[%s3 + $0x80] sm:$0xff]
  %v11815 = vld [vmem:[%s3 + $0x88] sm:$0xff]
  %v11816 = vld [vmem:[%s3 + $0x90] sm:$0xff]
  %v11817 = vld [vmem:[%s3 + $0x98] sm:$0xff]
  %v11818 = vld [vmem:[%s3 + $0xa0] sm:$0xff]
  %v11819 = vld [vmem:[%s3 + $0xa8] sm:$0xff]
  %v11820 = vld [vmem:[%s3 + $0xb0] sm:$0xff]
  %v11821 = vld [vmem:[%s3 + $0xb8] sm:$0xff]
  %v11822 = vld [vmem:[%s3 + $0xc0] sm:$0xff]
  %v11823 = vld [vmem:[%s3 + $0xc8] sm:$0xff]
  %v11824 = vld [vmem:[%s3 + $0xd0] sm:$0xff]
  %v11825 = vld [vmem:[%s3 + $0xd8] sm:$0xff]
  %v11826 = vld [vmem:[%s3 + $0xe0] sm:$0xff]
  %v11827 = vld [vmem:[%s3 + $0xe8] sm:$0xff]
  %v11828 = vld [vmem:[%s3 + $0xf0] sm:$0xff]
  %v11829 = vld [vmem:[%s3 + $0xf8] sm:$0xff]
  %v11830 = vld [vmem:[%s3 + $0x100] sm:$0xff]
  %v11831 = vld [vmem:[%s3 + $0x108] sm:$0xff]
  %v11832 = vld [vmem:[%s3 + $0x110] sm:$0xff]
  %v11833 = vld [vmem:[%s3 + $0x118] sm:$0xff]
  %v11834 = vld [vmem:[%s3 + $0x120] sm:$0xff]
  %v11835 = vld [vmem:[%s3 + $0x128] sm:$0xff]
  %v11836 = vld [vmem:[%s3 + $0x130] sm:$0xff]
  %v11837 = vld [vmem:[%s3 + $0x138] sm:$0xff]
  %v11838 = vld [vmem:[%s3 + $0x140] sm:$0xff]
  %v11839 = vld [vmem:[%s3 + $0x148] sm:$0xff]
  %v11840 = vld [vmem:[%s3 + $0x150] sm:$0xff]
  %v11841 = vld [vmem:[%s3 + $0x158] sm:$0xff]
  %v11842 = vld [vmem:[%s3 + $0x160] sm:$0xff]
  %v11843 = vld [vmem:[%s3 + $0x168] sm:$0xff]
  %v11844 = vld [vmem:[%s3 + $0x170] sm:$0xff]
  %v11845 = vld [vmem:[%s3 + $0x178] sm:$0xff]
  %v11846 = vld [vmem:[%s3 + $0x180] sm:$0xff]
  %v11847 = vld [vmem:[%s3 + $0x188] sm:$0xff]
  %v11848 = vld [vmem:[%s3 + $0x190] sm:$0xff]
  %v11849 = vld [vmem:[%s3 + $0x198] sm:$0xff]
  %v11850 = vld [vmem:[%s3 + $0x1a0] sm:$0xff]
  %v11851 = vld [vmem:[%s3 + $0x1a8] sm:$0xff]
  %v11852 = vld [vmem:[%s3 + $0x1b0] sm:$0xff]
  %v11853 = vld [vmem:[%s3 + $0x1b8] sm:$0xff]
  %v11854 = vld [vmem:[%s3 + $0x1c0] sm:$0xff]
  %v11855 = vld [vmem:[%s3 + $0x1c8] sm:$0xff]
  %v11856 = vld [vmem:[%s3 + $0x1d0] sm:$0xff]
  %v11857 = vld [vmem:[%s3 + $0x1d8] sm:$0xff]
  %v11858 = vld [vmem:[%s3 + $0x1e0] sm:$0xff]
  %v11859 = vld [vmem:[%s3 + $0x1e8] sm:$0xff]
  %v11860 = vld [vmem:[%s3 + $0x1f0] sm:$0xff]
  %v11861 = vld [vmem:[%s3 + $0x1f8] sm:$0xff]
  %v11862 = vld [vmem:[%s3 + $0x200] sm:$0xff]
  %v11863 = vld [vmem:[%s3 + $0x208] sm:$0xff]
  %v11864 = vld [vmem:[%s3 + $0x210] sm:$0xff]
  %v11865 = vld [vmem:[%s3 + $0x218] sm:$0xff]
  %v11866 = vld [vmem:[%s3 + $0x220] sm:$0xff]
  %v11867 = vld [vmem:[%s3 + $0x228] sm:$0xff]
  %v11868 = vld [vmem:[%s3 + $0x230] sm:$0xff]
  %v11869 = vld [vmem:[%s3 + $0x238] sm:$0xff]
  %v11870 = vld [vmem:[%s3 + $0x240] sm:$0xff]
  %v11871 = vld [vmem:[%s3 + $0x248] sm:$0xff]
  %v11872 = vld [vmem:[%s3 + $0x250] sm:$0xff]
  %v11873 = vld [vmem:[%s3 + $0x258] sm:$0xff]
  %v11874 = vld [vmem:[%s3 + $0x260] sm:$0xff]
  %v11875 = vld [vmem:[%s3 + $0x268] sm:$0xff]
  %v11876 = vld [vmem:[%s3 + $0x270] sm:$0xff]
  %v11877 = vld [vmem:[%s3 + $0x278] sm:$0xff]
  %v11878 = vld [vmem:[%s4] sm:$0xff]
  %v11879 = vld [vmem:[%s4 + $0x8] sm:$0xff]
  %v11880 = vld [vmem:[%s4 + $0x10] sm:$0xff]
  %v11881 = vld [vmem:[%s4 + $0x18] sm:$0xff]
  %v11882 = vld [vmem:[%s4 + $0x20] sm:$0xff]
  %v11883 = vld [vmem:[%s4 + $0x28] sm:$0xff]
  %v11884 = vld [vmem:[%s4 + $0x30] sm:$0xff]
  %v11885 = vld [vmem:[%s4 + $0x38] sm:$0xff]
  %v11886 = vld [vmem:[%s4 + $0x40] sm:$0xff]
  %v11887 = vld [vmem:[%s4 + $0x48] sm:$0xff]
  %v11888 = vld [vmem:[%s4 + $0x50] sm:$0xff]
  %v11889 = vld [vmem:[%s4 + $0x58] sm:$0xff]
  %v11890 = vld [vmem:[%s4 + $0x60] sm:$0xff]
  %v11891 = vld [vmem:[%s4 + $0x68] sm:$0xff]
  %v11892 = vld [vmem:[%s4 + $0x70] sm:$0xff]
  %v11893 = vld [vmem:[%s4 + $0x78] sm:$0xff]
  %11895 = vset.pattern.permute.xlu0 0
  %11896 = vperm.xlu0 %11895, %v11878
  %v11897 = vpop.permute.xlu0 %11896
  %11900 = vset.pattern.permute.xlu0 0
  %11901 = vperm.xlu0 %11900, %v11879
  %v11902 = vpop.permute.xlu0 %11901
  %11905 = vset.pattern.permute.xlu0 0
  %11906 = vperm.xlu0 %11905, %v11880
  %v11907 = vpop.permute.xlu0 %11906
  %11910 = vset.pattern.permute.xlu0 0
  %11911 = vperm.xlu0 %11910, %v11881
  %v11912 = vpop.permute.xlu0 %11911
  %11915 = vset.pattern.permute.xlu0 0
  %11916 = vperm.xlu0 %11915, %v11882
  %v11917 = vpop.permute.xlu0 %11916
  %11920 = vset.pattern.permute.xlu0 0
  %11921 = vperm.xlu0 %11920, %v11883
  %v11922 = vpop.permute.xlu0 %11921
  %11925 = vset.pattern.permute.xlu0 0
  %11926 = vperm.xlu0 %11925, %v11884
  %v11927 = vpop.permute.xlu0 %11926
  %11930 = vset.pattern.permute.xlu0 0
  %11931 = vperm.xlu0 %11930, %v11885
  %v11932 = vpop.permute.xlu0 %11931
  %11935 = vset.pattern.permute.xlu0 0
  %11936 = vperm.xlu0 %11935, %v11886
  %v11937 = vpop.permute.xlu0 %11936
  %11940 = vset.pattern.permute.xlu0 0
  %11941 = vperm.xlu0 %11940, %v11887
  %v11942 = vpop.permute.xlu0 %11941
  %11945 = vset.pattern.permute.xlu0 0
  %11946 = vperm.xlu0 %11945, %v11888
  %v11947 = vpop.permute.xlu0 %11946
  %11950 = vset.pattern.permute.xlu0 0
  %11951 = vperm.xlu0 %11950, %v11889
  %v11952 = vpop.permute.xlu0 %11951
  %11955 = vset.pattern.permute.xlu0 0
  %11956 = vperm.xlu0 %11955, %v11890
  %v11957 = vpop.permute.xlu0 %11956
  %11960 = vset.pattern.permute.xlu0 0
  %11961 = vperm.xlu0 %11960, %v11891
  %v11962 = vpop.permute.xlu0 %11961
  %11965 = vset.pattern.permute.xlu0 0
  %11966 = vperm.xlu0 %11965, %v11892
  %v11967 = vpop.permute.xlu0 %11966
  %11970 = vset.pattern.permute.xlu0 0
  %11971 = vperm.xlu0 %11970, %v11893
  %v11972 = vpop.permute.xlu0 %11971
  %11974 = vmatpush.msra.mxu0 %v11733
  %11975 = vmatpush.msra.mxu0 %v11732
  %11976 = vmatpush.msra.mxu0 %v11731
  %11977 = vmatpush.msra.mxu0 %v11730
  %11978 = vmatpush.msra.mxu0 %v11729
  %11979 = vmatpush.msra.mxu0 %v11728
  %11980 = vmatpush.msra.mxu0 %v11727
  %11981 = vmatpush.msra.mxu0 %v11726
  %11982 = vmatpush.msra.mxu0 %v11725
  %11983 = vmatpush.msra.mxu0 %v11724
  %11984 = vmatpush.msra.mxu0 %v11723
  %11985 = vmatpush.msra.mxu0 %v11722
  %11986 = vmatpush.msra.mxu0 %v11721
  %11987 = vmatpush.msra.mxu0 %v11720
  %11988 = vmatpush.msra.mxu0 %v11719
  %11989 = vmatpush.msra.mxu0 %v11718
  %11990 = vmatmul.f32.gmra.mxu0 %v11798
  %v11991 = vpop.f32.mrf.mxu0
  %v11992 = vadd.f32 %v11897, %v11991
  %11993 = vmatmul.f32.gmra.mxu0 %v11803
  %v11994 = vpop.f32.mrf.mxu0
  %v11995 = vadd.f32 %v11902, %v11994
  %11996 = vmatmul.f32.gmra.mxu0 %v11808
  %v11997 = vpop.f32.mrf.mxu0
  %v11998 = vadd.f32 %v11907, %v11997
  %11999 = vmatmul.f32.gmra.mxu0 %v11813
  %v12000 = vpop.f32.mrf.mxu0
  %v12001 = vadd.f32 %v11912, %v12000
  %12002 = vmatmul.f32.gmra.mxu0 %v11818
  %v12003 = vpop.f32.mrf.mxu0
  %v12004 = vadd.f32 %v11917, %v12003
  %12005 = vmatmul.f32.gmra.mxu0 %v11823
  %v12006 = vpop.f32.mrf.mxu0
  %v12007 = vadd.f32 %v11922, %v12006
  %12008 = vmatmul.f32.gmra.mxu0 %v11828
  %v12009 = vpop.f32.mrf.mxu0
  %v12010 = vadd.f32 %v11927, %v12009
  %12011 = vmatmul.f32.gmra.mxu0 %v11833
  %v12012 = vpop.f32.mrf.mxu0
  %v12013 = vadd.f32 %v11932, %v12012
  %12014 = vmatmul.f32.gmra.mxu0 %v11838
  %v12015 = vpop.f32.mrf.mxu0
  %v12016 = vadd.f32 %v11937, %v12015
  %12017 = vmatmul.f32.gmra.mxu0 %v11843
  %v12018 = vpop.f32.mrf.mxu0
  %v12019 = vadd.f32 %v11942, %v12018
  %12020 = vmatmul.f32.gmra.mxu0 %v11848
  %v12021 = vpop.f32.mrf.mxu0
  %v12022 = vadd.f32 %v11947, %v12021
  %12023 = vmatmul.f32.gmra.mxu0 %v11853
  %v12024 = vpop.f32.mrf.mxu0
  %v12025 = vadd.f32 %v11952, %v12024
  %12026 = vmatmul.f32.gmra.mxu0 %v11858
  %v12027 = vpop.f32.mrf.mxu0
  %v12028 = vadd.f32 %v11957, %v12027
  %12029 = vmatmul.f32.gmra.mxu0 %v11863
  %v12030 = vpop.f32.mrf.mxu0
  %v12031 = vadd.f32 %v11962, %v12030
  %12032 = vmatmul.f32.gmra.mxu0 %v11868
  %v12033 = vpop.f32.mrf.mxu0
  %v12034 = vadd.f32 %v11967, %v12033
  %12035 = vmatmul.f32.gmra.mxu0 %v11873
  %v12036 = vpop.f32.mrf.mxu0
  %v12037 = vadd.f32 %v11972, %v12036
  %12038 = vdwg.mxu0
  %12039 = vmatpush.msra.mxu0 %v11749
  %12040 = vmatpush.msra.mxu0 %v11748
  %12041 = vmatpush.msra.mxu0 %v11747
  %12042 = vmatpush.msra.mxu0 %v11746
  %12043 = vmatpush.msra.mxu0 %v11745
  %12044 = vmatpush.msra.mxu0 %v11744
  %12045 = vmatpush.msra.mxu0 %v11743
  %12046 = vmatpush.msra.mxu0 %v11742
  %12047 = vmatpush.msra.mxu0 %v11741
  %12048 = vmatpush.msra.mxu0 %v11740
  %12049 = vmatpush.msra.mxu0 %v11739
  %12050 = vmatpush.msra.mxu0 %v11738
  %12051 = vmatpush.msra.mxu0 %v11737
  %12052 = vmatpush.msra.mxu0 %v11736
  %12053 = vmatpush.msra.mxu0 %v11735
  %12054 = vmatpush.msra.mxu0 %v11734
  %12055 = vmatmul.f32.gmra.mxu0 %v11799
  %v12056 = vpop.f32.mrf.mxu0
  %v12057 = vadd.f32 %v11992, %v12056
  %12058 = vmatmul.f32.gmra.mxu0 %v11804
  %v12059 = vpop.f32.mrf.mxu0
  %v12060 = vadd.f32 %v11995, %v12059
  %12061 = vmatmul.f32.gmra.mxu0 %v11809
  %v12062 = vpop.f32.mrf.mxu0
  %v12063 = vadd.f32 %v11998, %v12062
  %12064 = vmatmul.f32.gmra.mxu0 %v11814
  %v12065 = vpop.f32.mrf.mxu0
  %v12066 = vadd.f32 %v12001, %v12065
  %12067 = vmatmul.f32.gmra.mxu0 %v11819
  %v12068 = vpop.f32.mrf.mxu0
  %v12069 = vadd.f32 %v12004, %v12068
  %12070 = vmatmul.f32.gmra.mxu0 %v11824
  %v12071 = vpop.f32.mrf.mxu0
  %v12072 = vadd.f32 %v12007, %v12071
  %12073 = vmatmul.f32.gmra.mxu0 %v11829
  %v12074 = vpop.f32.mrf.mxu0
  %v12075 = vadd.f32 %v12010, %v12074
  %12076 = vmatmul.f32.gmra.mxu0 %v11834
  %v12077 = vpop.f32.mrf.mxu0
  %v12078 = vadd.f32 %v12013, %v12077
  %12079 = vmatmul.f32.gmra.mxu0 %v11839
  %v12080 = vpop.f32.mrf.mxu0
  %v12081 = vadd.f32 %v12016, %v12080
  %12082 = vmatmul.f32.gmra.mxu0 %v11844
  %v12083 = vpop.f32.mrf.mxu0
  %v12084 = vadd.f32 %v12019, %v12083
  %12085 = vmatmul.f32.gmra.mxu0 %v11849
  %v12086 = vpop.f32.mrf.mxu0
  %v12087 = vadd.f32 %v12022, %v12086
  %12088 = vmatmul.f32.gmra.mxu0 %v11854
  %v12089 = vpop.f32.mrf.mxu0
  %v12090 = vadd.f32 %v12025, %v12089
  %12091 = vmatmul.f32.gmra.mxu0 %v11859
  %v12092 = vpop.f32.mrf.mxu0
  %v12093 = vadd.f32 %v12028, %v12092
  %12094 = vmatmul.f32.gmra.mxu0 %v11864
  %v12095 = vpop.f32.mrf.mxu0
  %v12096 = vadd.f32 %v12031, %v12095
  %12097 = vmatmul.f32.gmra.mxu0 %v11869
  %v12098 = vpop.f32.mrf.mxu0
  %v12099 = vadd.f32 %v12034, %v12098
  %12100 = vmatmul.f32.gmra.mxu0 %v11874
  %v12101 = vpop.f32.mrf.mxu0
  %v12102 = vadd.f32 %v12037, %v12101
  %12103 = vdwg.mxu0
  %12104 = vmatpush.msra.mxu0 %v11765
  %12105 = vmatpush.msra.mxu0 %v11764
  %12106 = vmatpush.msra.mxu0 %v11763
  %12107 = vmatpush.msra.mxu0 %v11762
  %12108 = vmatpush.msra.mxu0 %v11761
  %12109 = vmatpush.msra.mxu0 %v11760
  %12110 = vmatpush.msra.mxu0 %v11759
  %12111 = vmatpush.msra.mxu0 %v11758
  %12112 = vmatpush.msra.mxu0 %v11757
  %12113 = vmatpush.msra.mxu0 %v11756
  %12114 = vmatpush.msra.mxu0 %v11755
  %12115 = vmatpush.msra.mxu0 %v11754
  %12116 = vmatpush.msra.mxu0 %v11753
  %12117 = vmatpush.msra.mxu0 %v11752
  %12118 = vmatpush.msra.mxu0 %v11751
  %12119 = vmatpush.msra.mxu0 %v11750
  %12120 = vmatmul.f32.gmra.mxu0 %v11800
  %v12121 = vpop.f32.mrf.mxu0
  %v12122 = vadd.f32 %v12057, %v12121
  %12123 = vmatmul.f32.gmra.mxu0 %v11805
  %v12124 = vpop.f32.mrf.mxu0
  %v12125 = vadd.f32 %v12060, %v12124
  %12126 = vmatmul.f32.gmra.mxu0 %v11810
  %v12127 = vpop.f32.mrf.mxu0
  %v12128 = vadd.f32 %v12063, %v12127
  %12129 = vmatmul.f32.gmra.mxu0 %v11815
  %v12130 = vpop.f32.mrf.mxu0
  %v12131 = vadd.f32 %v12066, %v12130
  %12132 = vmatmul.f32.gmra.mxu0 %v11820
  %v12133 = vpop.f32.mrf.mxu0
  %v12134 = vadd.f32 %v12069, %v12133
  %12135 = vmatmul.f32.gmra.mxu0 %v11825
  %v12136 = vpop.f32.mrf.mxu0
  %v12137 = vadd.f32 %v12072, %v12136
  %12138 = vmatmul.f32.gmra.mxu0 %v11830
  %v12139 = vpop.f32.mrf.mxu0
  %v12140 = vadd.f32 %v12075, %v12139
  %12141 = vmatmul.f32.gmra.mxu0 %v11835
  %v12142 = vpop.f32.mrf.mxu0
  %v12143 = vadd.f32 %v12078, %v12142
  %12144 = vmatmul.f32.gmra.mxu0 %v11840
  %v12145 = vpop.f32.mrf.mxu0
  %v12146 = vadd.f32 %v12081, %v12145
  %12147 = vmatmul.f32.gmra.mxu0 %v11845
  %v12148 = vpop.f32.mrf.mxu0
  %v12149 = vadd.f32 %v12084, %v12148
  %12150 = vmatmul.f32.gmra.mxu0 %v11850
  %v12151 = vpop.f32.mrf.mxu0
  %v12152 = vadd.f32 %v12087, %v12151
  %12153 = vmatmul.f32.gmra.mxu0 %v11855
  %v12154 = vpop.f32.mrf.mxu0
  %v12155 = vadd.f32 %v12090, %v12154
  %12156 = vmatmul.f32.gmra.mxu0 %v11860
  %v12157 = vpop.f32.mrf.mxu0
  %v12158 = vadd.f32 %v12093, %v12157
  %12159 = vmatmul.f32.gmra.mxu0 %v11865
  %v12160 = vpop.f32.mrf.mxu0
  %v12161 = vadd.f32 %v12096, %v12160
  %12162 = vmatmul.f32.gmra.mxu0 %v11870
  %v12163 = vpop.f32.mrf.mxu0
  %v12164 = vadd.f32 %v12099, %v12163
  %12165 = vmatmul.f32.gmra.mxu0 %v11875
  %v12166 = vpop.f32.mrf.mxu0
  %v12167 = vadd.f32 %v12102, %v12166
  %12168 = vdwg.mxu0
  %12169 = vmatpush.msra.mxu0 %v11781
  %12170 = vmatpush.msra.mxu0 %v11780
  %12171 = vmatpush.msra.mxu0 %v11779
  %12172 = vmatpush.msra.mxu0 %v11778
  %12173 = vmatpush.msra.mxu0 %v11777
  %12174 = vmatpush.msra.mxu0 %v11776
  %12175 = vmatpush.msra.mxu0 %v11775
  %12176 = vmatpush.msra.mxu0 %v11774
  %12177 = vmatpush.msra.mxu0 %v11773
  %12178 = vmatpush.msra.mxu0 %v11772
  %12179 = vmatpush.msra.mxu0 %v11771
  %12180 = vmatpush.msra.mxu0 %v11770
  %12181 = vmatpush.msra.mxu0 %v11769
  %12182 = vmatpush.msra.mxu0 %v11768
  %12183 = vmatpush.msra.mxu0 %v11767
  %12184 = vmatpush.msra.mxu0 %v11766
  %12185 = vmatmul.f32.gmra.mxu0 %v11801
  %v12186 = vpop.f32.mrf.mxu0
  %v12187 = vadd.f32 %v12122, %v12186
  %12188 = vmatmul.f32.gmra.mxu0 %v11806
  %v12189 = vpop.f32.mrf.mxu0
  %v12190 = vadd.f32 %v12125, %v12189
  %12191 = vmatmul.f32.gmra.mxu0 %v11811
  %v12192 = vpop.f32.mrf.mxu0
  %v12193 = vadd.f32 %v12128, %v12192
  %12194 = vmatmul.f32.gmra.mxu0 %v11816
  %v12195 = vpop.f32.mrf.mxu0
  %v12196 = vadd.f32 %v12131, %v12195
  %12197 = vmatmul.f32.gmra.mxu0 %v11821
  %v12198 = vpop.f32.mrf.mxu0
  %v12199 = vadd.f32 %v12134, %v12198
  %12200 = vmatmul.f32.gmra.mxu0 %v11826
  %v12201 = vpop.f32.mrf.mxu0
  %v12202 = vadd.f32 %v12137, %v12201
  %12203 = vmatmul.f32.gmra.mxu0 %v11831
  %v12204 = vpop.f32.mrf.mxu0
  %v12205 = vadd.f32 %v12140, %v12204
  %12206 = vmatmul.f32.gmra.mxu0 %v11836
  %v12207 = vpop.f32.mrf.mxu0
  %v12208 = vadd.f32 %v12143, %v12207
  %12209 = vmatmul.f32.gmra.mxu0 %v11841
  %v12210 = vpop.f32.mrf.mxu0
  %v12211 = vadd.f32 %v12146, %v12210
  %12212 = vmatmul.f32.gmra.mxu0 %v11846
  %v12213 = vpop.f32.mrf.mxu0
  %v12214 = vadd.f32 %v12149, %v12213
  %12215 = vmatmul.f32.gmra.mxu0 %v11851
  %v12216 = vpop.f32.mrf.mxu0
  %v12217 = vadd.f32 %v12152, %v12216
  %12218 = vmatmul.f32.gmra.mxu0 %v11856
  %v12219 = vpop.f32.mrf.mxu0
  %v12220 = vadd.f32 %v12155, %v12219
  %12221 = vmatmul.f32.gmra.mxu0 %v11861
  %v12222 = vpop.f32.mrf.mxu0
  %v12223 = vadd.f32 %v12158, %v12222
  %12224 = vmatmul.f32.gmra.mxu0 %v11866
  %v12225 = vpop.f32.mrf.mxu0
  %v12226 = vadd.f32 %v12161, %v12225
  %12227 = vmatmul.f32.gmra.mxu0 %v11871
  %v12228 = vpop.f32.mrf.mxu0
  %v12229 = vadd.f32 %v12164, %v12228
  %12230 = vmatmul.f32.gmra.mxu0 %v11876
  %v12231 = vpop.f32.mrf.mxu0
  %v12232 = vadd.f32 %v12167, %v12231
  %12233 = vdwg.mxu0
  %12234 = vmatpush.msra.mxu0 %v11797
  %12235 = vmatpush.msra.mxu0 %v11796
  %12236 = vmatpush.msra.mxu0 %v11795
  %12237 = vmatpush.msra.mxu0 %v11794
  %12238 = vmatpush.msra.mxu0 %v11793
  %12239 = vmatpush.msra.mxu0 %v11792
  %12240 = vmatpush.msra.mxu0 %v11791
  %12241 = vmatpush.msra.mxu0 %v11790
  %12242 = vmatpush.msra.mxu0 %v11789
  %12243 = vmatpush.msra.mxu0 %v11788
  %12244 = vmatpush.msra.mxu0 %v11787
  %12245 = vmatpush.msra.mxu0 %v11786
  %12246 = vmatpush.msra.mxu0 %v11785
  %12247 = vmatpush.msra.mxu0 %v11784
  %12248 = vmatpush.msra.mxu0 %v11783
  %12249 = vmatpush.msra.mxu0 %v11782
  %12250 = vmatmul.f32.gmra.mxu0 %v11802
  %v12251 = vpop.f32.mrf.mxu0
  %v12252 = vadd.f32 %v12187, %v12251
  %12253 = vmatmul.f32.gmra.mxu0 %v11807
  %v12254 = vpop.f32.mrf.mxu0
  %v12255 = vadd.f32 %v12190, %v12254
  %12256 = vmatmul.f32.gmra.mxu0 %v11812
  %v12257 = vpop.f32.mrf.mxu0
  %v12258 = vadd.f32 %v12193, %v12257
  %12259 = vmatmul.f32.gmra.mxu0 %v11817
  %v12260 = vpop.f32.mrf.mxu0
  %v12261 = vadd.f32 %v12196, %v12260
  %12262 = vmatmul.f32.gmra.mxu0 %v11822
  %v12263 = vpop.f32.mrf.mxu0
  %v12264 = vadd.f32 %v12199, %v12263
  %12265 = vmatmul.f32.gmra.mxu0 %v11827
  %v12266 = vpop.f32.mrf.mxu0
  %v12267 = vadd.f32 %v12202, %v12266
  %12268 = vmatmul.f32.gmra.mxu0 %v11832
  %v12269 = vpop.f32.mrf.mxu0
  %v12270 = vadd.f32 %v12205, %v12269
  %12271 = vmatmul.f32.gmra.mxu0 %v11837
  %v12272 = vpop.f32.mrf.mxu0
  %v12273 = vadd.f32 %v12208, %v12272
  %12274 = vmatmul.f32.gmra.mxu0 %v11842
  %v12275 = vpop.f32.mrf.mxu0
  %v12276 = vadd.f32 %v12211, %v12275
  %12277 = vmatmul.f32.gmra.mxu0 %v11847
  %v12278 = vpop.f32.mrf.mxu0
  %v12279 = vadd.f32 %v12214, %v12278
  %12280 = vmatmul.f32.gmra.mxu0 %v11852
  %v12281 = vpop.f32.mrf.mxu0
  %v12282 = vadd.f32 %v12217, %v12281
  %12283 = vmatmul.f32.gmra.mxu0 %v11857
  %v12284 = vpop.f32.mrf.mxu0
  %v12285 = vadd.f32 %v12220, %v12284
  %12286 = vmatmul.f32.gmra.mxu0 %v11862
  %v12287 = vpop.f32.mrf.mxu0
  %v12288 = vadd.f32 %v12223, %v12287
  %12289 = vmatmul.f32.gmra.mxu0 %v11867
  %v12290 = vpop.f32.mrf.mxu0
  %v12291 = vadd.f32 %v12226, %v12290
  %12292 = vmatmul.f32.gmra.mxu0 %v11872
  %v12293 = vpop.f32.mrf.mxu0
  %v12294 = vadd.f32 %v12229, %v12293
  %12295 = vmatmul.f32.gmra.mxu0 %v11877
  %v12296 = vpop.f32.mrf.mxu0
  %v12297 = vadd.f32 %v12232, %v12296
  %12298 = vdwg.mxu0
  %12299 = vst.msk [vmem:[%s5] sm:$0xff] %vm110, %v12252
  %12300 = vst.msk [vmem:[%s5 + $0x8] sm:$0xff] %vm110, %v12255
  %12301 = vst.msk [vmem:[%s5 + $0x10] sm:$0xff] %vm110, %v12258
  %12302 = vst.msk [vmem:[%s5 + $0x18] sm:$0xff] %vm110, %v12261
  %12303 = vst.msk [vmem:[%s5 + $0x20] sm:$0xff] %vm110, %v12264
  %12304 = vst.msk [vmem:[%s5 + $0x28] sm:$0xff] %vm110, %v12267
  %12305 = vst.msk [vmem:[%s5 + $0x30] sm:$0xff] %vm110, %v12270
  %12306 = vst.msk [vmem:[%s5 + $0x38] sm:$0xff] %vm110, %v12273
  %12307 = vst.msk [vmem:[%s5 + $0x40] sm:$0xff] %vm110, %v12276
  %12308 = vst.msk [vmem:[%s5 + $0x48] sm:$0xff] %vm110, %v12279
  %12309 = vst.msk [vmem:[%s5 + $0x50] sm:$0xff] %vm110, %v12282
  %12310 = vst.msk [vmem:[%s5 + $0x58] sm:$0xff] %vm110, %v12285
  %12311 = vst.msk [vmem:[%s5 + $0x60] sm:$0xff] %vm110, %v12288
  %12312 = vst.msk [vmem:[%s5 + $0x68] sm:$0xff] %vm110, %v12291
  %12313 = vst.msk [vmem:[%s5 + $0x70] sm:$0xff] %vm110, %v12294
  %12314 = vst.msk [vmem:[%s5 + $0x78] sm:$0xff] %vm110, %v12297
  // Predicated region
  $region22: #{tpu_custom_call.1} parent=0 // pred_check
    _
  $region23: #{tpu_custom_call.1} parent=0 // pred_check_branch
    %12316 = sbr.rel (0) target = $region25
  $region24: #{tpu_custom_call.1} parent=0 // pred_region
    _
  $region25: #{tpu_custom_call.1} parent=0 // pred_fallthru
    _
  // Predicated region
  $region26: #{tpu_custom_call.1} parent=0 // pred_check
    _
  $region27: #{tpu_custom_call.1} parent=0 // pred_check_branch
    %12318 = sbr.rel (0) target = $region29
  $region28: #{tpu_custom_call.1} parent=0 // pred_region
    _
  $region29: #{tpu_custom_call.1} parent=0 // pred_fallthru
    _

</llo_original>
